<compile_context>
chip_gen: v6e
topology: v6e:2x2x1
jax: 0.10.0
libtpu: 0.0.40
codegen_flags: <defaults>
</compile_context>

<pallas_src>
import math
import functools

import jax
import jax.numpy as jnp
from jax.experimental import pallas as pl
from jax.experimental.pallas import tpu as pltpu


# ----------------------------------------------------------------------------
# In-kernel helpers (pure jnp, traced inside the Pallas body)
# ----------------------------------------------------------------------------

def _gelu_tanh(x):
    # tanh-approximate GELU (EUP-friendly)
    c = math.sqrt(2.0 / math.pi)
    return 0.5 * x * (1.0 + jnp.tanh(c * (x + 0.044715 * x * x * x)))


def _layernorm(x, g, b, eps):
    x = x.astype(jnp.float32)
    mu = jnp.mean(x, axis=-1, keepdims=True)
    xc = x - mu
    var = jnp.mean(xc * xc, axis=-1, keepdims=True)
    return xc * jax.lax.rsqrt(var + eps) * g.astype(jnp.float32) + b.astype(jnp.float32)


def _mha_packed(qkv_q, qkv_kv, mask, *, num_heads, head_dim, all_head):
    """Multi-head cross attention on packed (S, 3*all_head) QKV slabs.

    qkv_q : (Sq, 3*all_head) f32 -- query slab is columns [0 : all_head]
    qkv_kv: (Sk, 3*all_head) f32 -- key slab [all_head : 2*all_head],
                                    value slab [2*all_head : 3*all_head]
    mask  : (1, Sk) additive padding mask, broadcast over queries and heads.
    Returns (Sq, all_head) f32 context with heads packed contiguously (== HF merge-heads).
    """
    scale = 1.0 / math.sqrt(head_dim)
    sq, sk = qkv_q.shape[0], qkv_kv.shape[0]
    # Hoist the (1, Sk) -> (Sq, Sk) mask broadcast out of the head loop: JAX does not
    # CSE broadcast_in_dim, so doing it per-head re-materializes it num_heads times.
    mask_b = jnp.broadcast_to(mask.astype(jnp.float32), (sq, sk))
    # TODO(synk): at production dh=64 replace this unrolled static-slice head loop with
    # a single batched einsum over a (nH, S, dh) relayout so the MXU contraction is fed
    # full-width and lane-unaligned 64-wide slices are avoided.
    ctx_heads = []
    for h in range(num_heads):                      # static, small -> fully unrolled
        lo, hi = h * head_dim, (h + 1) * head_dim
        q = qkv_q[:, lo:hi].astype(jnp.bfloat16)
        k = qkv_kv[:, all_head + lo:all_head + hi].astype(jnp.bfloat16)
        v = qkv_kv[:, 2 * all_head + lo:2 * all_head + hi].astype(jnp.bfloat16)
        s = jnp.dot(q, k.T, preferred_element_type=jnp.float32) * scale + mask_b
        s = s - jnp.max(s, axis=-1, keepdims=True)
        p = jnp.exp(s)
        p = p * pl.reciprocal(jnp.sum(p, axis=-1, keepdims=True), approx=True)
        ctx_heads.append(
            jnp.dot(p.astype(jnp.bfloat16), v, preferred_element_type=jnp.float32))
    return jnp.concatenate(ctx_heads, axis=-1)      # (Sq, all_head)


# ----------------------------------------------------------------------------
# Fused BertCrossLayer kernel (one grid step = one batch element, both streams)
# ----------------------------------------------------------------------------

def _cross_layer_kernel(
    # per-batch activations & masks
    h_txt_ref, h_smi_ref, m_txt_ref, m_smi_ref,
    # fused QKV projections (weights bf16, biases f32)
    qkv_txt_w_ref, qkv_txt_b_ref, qkv_smi_w_ref, qkv_smi_b_ref,
    # BertBiSelfOutput dense + LayerNorm
    so_txt_w_ref, so_txt_b_ref, so_ln_txt_g_ref, so_ln_txt_b_ref,
    so_smi_w_ref, so_smi_b_ref, so_ln_smi_g_ref, so_ln_smi_b_ref,
    # FFN txt (intermediate + output)
    int_txt_w_ref, int_txt_b_ref, out_txt_w_ref, out_txt_b_ref,
    out_ln_txt_g_ref, out_ln_txt_b_ref,
    # FFN smi (intermediate + output)
    int_smi_w_ref, int_smi_b_ref, out_smi_w_ref, out_smi_b_ref,
    out_ln_smi_g_ref, out_ln_smi_b_ref,
    # outputs
    o_txt_ref, o_smi_ref,
    *, num_heads, head_dim, all_head, eps_txt, eps_smi):

    x_txt = h_txt_ref[0]                       # (S_txt, H_txt) f32
    x_smi = h_smi_ref[0]                       # (S_smi, H_smi) f32
    m_txt = m_txt_ref[0]                       # (1, S_txt) additive mask
    m_smi = m_smi_ref[0]                       # (1, S_smi) additive mask

    # f32 (1, D) bias / LayerNorm parameter rows, each read exactly once.
    qkv_txt_b = qkv_txt_b_ref[...]
    qkv_smi_b = qkv_smi_b_ref[...]
    so_txt_b = so_txt_b_ref[...]
    so_ln_txt_g, so_ln_txt_b = so_ln_txt_g_ref[...], so_ln_txt_b_ref[...]
    so_smi_b = so_smi_b_ref[...]
    so_ln_smi_g, so_ln_smi_b = so_ln_smi_g_ref[...], so_ln_smi_b_ref[...]
    int_txt_b, out_txt_b = int_txt_b_ref[...], out_txt_b_ref[...]
    out_ln_txt_g, out_ln_txt_b = out_ln_txt_g_ref[...], out_ln_txt_b_ref[...]
    int_smi_b, out_smi_b = int_smi_b_ref[...], out_smi_b_ref[...]
    out_ln_smi_g, out_ln_smi_b = out_ln_smi_g_ref[...], out_ln_smi_b_ref[...]

    # bf16 MXU operands, f32 accumulation; residual adds stay f32.
    x_txt_bf = x_txt.astype(jnp.bfloat16)
    x_smi_bf = x_smi.astype(jnp.bfloat16)

    # --- fused Q/K/V projections: one bf16 matmul per input stream ---
    qkv_txt = jnp.dot(x_txt_bf, qkv_txt_w_ref[...],
                      preferred_element_type=jnp.float32) + qkv_txt_b
    qkv_smi = jnp.dot(x_smi_bf, qkv_smi_w_ref[...],
                      preferred_element_type=jnp.float32) + qkv_smi_b

    # --- bi-directional cross attention (txt queries -> smi K/V, and vice versa) ---
    ctx_txt = _mha_packed(qkv_txt, qkv_smi, m_smi,
                          num_heads=num_heads, head_dim=head_dim, all_head=all_head)
    ctx_smi = _mha_packed(qkv_smi, qkv_txt, m_txt,
                          num_heads=num_heads, head_dim=head_dim, all_head=all_head)

    # --- BertBiSelfOutput: dense -> (dropout=identity) -> add & LayerNorm ---
    att_txt = _layernorm(
        jnp.dot(ctx_txt.astype(jnp.bfloat16), so_txt_w_ref[...],
                preferred_element_type=jnp.float32)
        + so_txt_b + x_txt.astype(jnp.float32),
        so_ln_txt_g, so_ln_txt_b, eps_txt)
    att_smi = _layernorm(
        jnp.dot(ctx_smi.astype(jnp.bfloat16), so_smi_w_ref[...],
                preferred_element_type=jnp.float32)
        + so_smi_b + x_smi.astype(jnp.float32),
        so_ln_smi_g, so_ln_smi_b, eps_smi)

    # --- feed_forward_chunk: intermediate(GELU) + output dense + add & LN ---
    inter_txt = _gelu_tanh(
        jnp.dot(att_txt.astype(jnp.bfloat16), int_txt_w_ref[...],
                preferred_element_type=jnp.float32) + int_txt_b)
    out_txt = _layernorm(
        jnp.dot(inter_txt.astype(jnp.bfloat16), out_txt_w_ref[...],
                preferred_element_type=jnp.float32) + out_txt_b + att_txt,
        out_ln_txt_g, out_ln_txt_b, eps_txt)

    inter_smi = _gelu_tanh(
        jnp.dot(att_smi.astype(jnp.bfloat16), int_smi_w_ref[...],
                preferred_element_type=jnp.float32) + int_smi_b)
    out_smi = _layernorm(
        jnp.dot(inter_smi.astype(jnp.bfloat16), out_smi_w_ref[...],
                preferred_element_type=jnp.float32) + out_smi_b + att_smi,
        out_ln_smi_g, out_ln_smi_b, eps_smi)

    o_txt_ref[0] = out_txt.astype(o_txt_ref.dtype)
    o_smi_ref[0] = out_smi.astype(o_smi_ref.dtype)


_WEIGHT_ORDER = [
    "qkv_txt_w", "qkv_txt_b", "qkv_smi_w", "qkv_smi_b",
    "so_txt_w", "so_txt_b", "so_ln_txt_g", "so_ln_txt_b",
    "so_smi_w", "so_smi_b", "so_ln_smi_g", "so_ln_smi_b",
    "int_txt_w", "int_txt_b", "out_txt_w", "out_txt_b",
    "out_ln_txt_g", "out_ln_txt_b",
    "int_smi_w", "int_smi_b", "out_smi_w", "out_smi_b",
    "out_ln_smi_g", "out_ln_smi_b",
]


def bert_cross_layer_forward(packed, cfg, h_txt, h_smi, mask_txt, mask_smi,
                             *, single_buffer_weights=True):
    """Fused Pallas forward.  h_txt: (B,S_txt,H_txt), h_smi: (B,S_smi,H_smi),
    masks in HF additive format (B,1,1,S_kv)."""
    B, S_txt, H_txt = h_txt.shape
    _, S_smi, H_smi = h_smi.shape
    nH = cfg["bi_num_attention_heads"]
    bi = cfg["bi_hidden_size"]
    dh = bi // nH
    ti, si = cfg["txt_intermediate_size"], cfg["smi_intermediate_size"]

    # Present masks as (B, 1, S_kv): last-two block dims equal full array dims.
    m_txt = mask_txt.reshape(B, 1, S_txt)
    m_smi = mask_smi.reshape(B, 1, S_smi)

    kernel = functools.partial(
        _cross_layer_kernel,
        num_heads=nH, head_dim=dh, all_head=bi,
        eps_txt=cfg["txt_layer_norm_eps"], eps_smi=cfg["smi_layer_norm_eps"])

    weights = [packed[n] for n in _WEIGHT_ORDER]

    # Constant index_map => weight blocks never change across the batch grid; a single
    # pipeline buffer halves resident weight VMEM vs. the default double-buffering.
    weight_mode = pl.Buffered(1) if single_buffer_weights else None

    def _const_spec(a):
        zeros = (0,) * a.ndim
        if weight_mode is None:
            return pl.BlockSpec(a.shape, lambda b, z=zeros: z)
        return pl.BlockSpec(a.shape, lambda b, z=zeros: z, pipeline_mode=weight_mode)

    in_specs = [
        pl.BlockSpec((1, S_txt, H_txt), lambda b: (b, 0, 0)),
        pl.BlockSpec((1, S_smi, H_smi), lambda b: (b, 0, 0)),
        pl.BlockSpec((1, 1, S_txt), lambda b: (b, 0, 0)),
        pl.BlockSpec((1, 1, S_smi), lambda b: (b, 0, 0)),
    ] + [_const_spec(w) for w in weights]

    out_specs = [
        pl.BlockSpec((1, S_txt, H_txt), lambda b: (b, 0, 0)),
        pl.BlockSpec((1, S_smi, H_smi), lambda b: (b, 0, 0)),
    ]

    # Explicit VMEM budget: weights (single/double buffered) + double-buffered
    # activation blocks + f32 intermediates, 2x headroom, clamped to a range that is
    # safe on v5e (16 MiB default scoped) through v7x (64 MiB physical).
    def _nbytes(a):
        return int(a.size) * a.dtype.itemsize
    weight_bytes = sum(_nbytes(w) for w in weights)
    act_block_bytes = 4 * (S_txt * H_txt + S_smi * H_smi + S_txt + S_smi)
    out_block_bytes = 4 * (S_txt * H_txt + S_smi * H_smi)
    inter_bytes = 4 * (3 * bi * (S_txt + S_smi)              # fused QKV slabs
                       + 2 * S_txt * S_smi                    # attention score/prob tiles
                       + S_txt * ti + S_smi * si              # FFN intermediates
                       + 4 * (S_txt * H_txt + S_smi * H_smi)) # ctx/att/out temporaries
    wb = 1 if single_buffer_weights else 2
    est = wb * weight_bytes + 2 * (act_block_bytes + out_block_bytes) + inter_bytes
    vmem_limit_bytes = int(min(max(2 * est, 16 << 20), 48 << 20))

    # Advisory cost estimate so XLA schedules surrounding ops around the fused call.
    flops = 0
    for (S, H, I, Sk) in ((S_txt, H_txt, ti, S_smi), (S_smi, H_smi, si, S_txt)):
        flops += 2 * S * H * 3 * bi + 4 * S * Sk * bi + 2 * S * bi * H + 4 * S * H * I
    flops *= B
    transcendentals = B * (2 * nH * S_txt * S_smi + S_txt * ti + S_smi * si)
    bytes_accessed = weight_bytes + B * (act_block_bytes + out_block_bytes)
    cost = pl.CostEstimate(flops=int(flops), transcendentals=int(transcendentals),
                           bytes_accessed=int(bytes_accessed))

    return pl.pallas_call(
        kernel,
        out_shape=(jax.ShapeDtypeStruct((B, S_txt, H_txt), h_txt.dtype),
                   jax.ShapeDtypeStruct((B, S_smi, H_smi), h_smi.dtype)),
        grid=(B,),
        in_specs=in_specs,
        out_specs=out_specs,
        compiler_params=pltpu.CompilerParams(
            dimension_semantics=("parallel",),   # shards batch across 2 TCs on v7x
            vmem_limit_bytes=vmem_limit_bytes),
        cost_estimate=cost,
    )(h_txt, h_smi, m_txt, m_smi, *weights)


# ----------------------------------------------------------------------------
# Parameter handling
# ----------------------------------------------------------------------------

def init_params(key, cfg):
    """Torch-style params: separate q/k/v weights stored as (in, out) = W^T."""
    bi = cfg["bi_hidden_size"]
    th, sh = cfg["txt_hidden_size"], cfg["smi_hidden_size"]
    ti, si = cfg["txt_intermediate_size"], cfg["smi_intermediate_size"]

    shapes = {
        "q_txt_w": (th, bi), "k_txt_w": (th, bi), "v_txt_w": (th, bi),
        "q_smi_w": (sh, bi), "k_smi_w": (sh, bi), "v_smi_w": (sh, bi),
        "so_txt_w": (bi, th), "so_smi_w": (bi, sh),
        "int_txt_w": (th, ti), "out_txt_w": (ti, th),
        "int_smi_w": (sh, si), "out_smi_w": (si, sh),
    }
    bias_dims = {
        "q_txt_b": bi, "k_txt_b": bi, "v_txt_b": bi,
        "q_smi_b": bi, "k_smi_b": bi, "v_smi_b": bi,
        "so_txt_b": th, "so_smi_b": sh,
        "int_txt_b": ti, "out_txt_b": th,
        "int_smi_b": si, "out_smi_b": sh,
    }
    params = {}
    keys = jax.random.split(key, len(shapes))
    for k_, (name, shp) in zip(keys, sorted(shapes.items())):
        params[name] = (0.02 * jax.random.normal(k_, shp)).astype(jnp.float32)
    for name, d in bias_dims.items():
        params[name] = jnp.zeros((d,), jnp.float32)
    for stream, h in (("txt", th), ("smi", sh)):
        params[f"so_ln_{stream}_g"] = jnp.ones((h,), jnp.float32)
        params[f"so_ln_{stream}_b"] = jnp.zeros((h,), jnp.float32)
        params[f"out_ln_{stream}_g"] = jnp.ones((h,), jnp.float32)
        params[f"out_ln_{stream}_b"] = jnp.zeros((h,), jnp.float32)
    return params


def pack_params(params, *, matmul_dtype=jnp.bfloat16):
    """Fuse Q/K/V weights per stream, cast matmul weights to bf16 (MXU operands), and
    reshape 1-D bias / LayerNorm vectors to lane-oriented f32 (1, D) rows."""
    def mat(x):
        return x.astype(matmul_dtype)

    def row(x):
        return x.reshape(1, -1).astype(jnp.float32)

    packed = {
        "qkv_txt_w": mat(jnp.concatenate(
            [params["q_txt_w"], params["k_txt_w"], params["v_txt_w"]], axis=1)),
        "qkv_txt_b": row(jnp.concatenate(
            [params["q_txt_b"], params["k_txt_b"], params["v_txt_b"]])),
        "qkv_smi_w": mat(jnp.concatenate(
            [params["q_smi_w"], params["k_smi_w"], params["v_smi_w"]], axis=1)),
        "qkv_smi_b": row(jnp.concatenate(
            [params["q_smi_b"], params["k_smi_b"], params["v_smi_b"]])),
    }
    for n in ["so_txt_w", "so_smi_w", "int_txt_w", "out_txt_w", "int_smi_w", "out_smi_w"]:
        packed[n] = mat(params[n])
    for n in ["so_txt_b", "so_smi_b", "int_txt_b", "out_txt_b", "int_smi_b", "out_smi_b",
              "so_ln_txt_g", "so_ln_txt_b", "so_ln_smi_g", "so_ln_smi_b",
              "out_ln_txt_g", "out_ln_txt_b", "out_ln_smi_g", "out_ln_smi_b"]:
        packed[n] = row(params[n])
    return packed


# ----------------------------------------------------------------------------
# Pure-JAX f32 reference (same math as the PyTorch module) for verification
# ----------------------------------------------------------------------------

def _split_heads(x, num_heads):
    B, S, H = x.shape
    dh = H // num_heads
    return x.reshape(B, S, num_heads, dh).transpose(0, 2, 1, 3)


def _merge_heads(x):
    B, nH, S, dh = x.shape
    return x.transpose(0, 2, 1, 3).reshape(B, S, nH * dh)


def _ref_linear(x, w, b, act="none"):
    y = jnp.einsum("bsi,io->bso", x, w) + b
    if act == "gelu":
        y = _gelu_tanh(y)
    return y


def _ref_attn(q, k, v, mask, dh):
    s = jnp.einsum("bhqd,bhkd->bhqk", q, k) / math.sqrt(dh) + mask
    p = jax.nn.softmax(s, axis=-1)
    return jnp.einsum("bhqk,bhkd->bhqd", p, v)


def _ref_add_ln(x, r, g, b, eps):
    y = x + r
    mu = jnp.mean(y, axis=-1, keepdims=True)
    var = jnp.mean((y - mu) ** 2, axis=-1, keepdims=True)
    return (y - mu) * jax.lax.rsqrt(var + eps) * g + b


def bert_cross_layer_reference(params, cfg, h_txt, h_smi, mask_txt, mask_smi):
    nH = cfg["bi_num_attention_heads"]
    dh = cfg["bi_hidden_size"] // nH
    q_txt = _ref_linear(h_txt, params["q_txt_w"], params["q_txt_b"])
    k_smi = _ref_linear(h_smi, params["k_smi_w"], params["k_smi_b"])
    v_smi = _ref_linear(h_smi, params["v_smi_w"], params["v_smi_b"])
    q_smi = _ref_linear(h_smi, params["q_smi_w"], params["q_smi_b"])
    k_txt = _ref_linear(h_txt, params["k_txt_w"], params["k_txt_b"])
    v_txt = _ref_linear(h_txt, params["v_txt_w"], params["v_txt_b"])
    ctx_txt = _merge_heads(_ref_attn(_split_heads(q_txt, nH), _split_heads(k_smi, nH),
                                     _split_heads(v_smi, nH), mask_smi, dh))
    ctx_smi = _merge_heads(_ref_attn(_split_heads(q_smi, nH), _split_heads(k_txt, nH),
                                     _split_heads(v_txt, nH), mask_txt, dh))
    att_txt = _ref_add_ln(_ref_linear(ctx_txt, params["so_txt_w"], params["so_txt_b"]),
                          h_txt, params["so_ln_txt_g"], params["so_ln_txt_b"],
                          cfg["txt_layer_norm_eps"])
    att_smi = _ref_add_ln(_ref_linear(ctx_smi, params["so_smi_w"], params["so_smi_b"]),
                          h_smi, params["so_ln_smi_g"], params["so_ln_smi_b"],
                          cfg["smi_layer_norm_eps"])
    out_txt = _ref_add_ln(
        _ref_linear(_ref_linear(att_txt, params["int_txt_w"], params["int_txt_b"], "gelu"),
                    params["out_txt_w"], params["out_txt_b"]),
        att_txt, params["out_ln_txt_g"], params["out_ln_txt_b"], cfg["txt_layer_norm_eps"])
    out_smi = _ref_add_ln(
        _ref_linear(_ref_linear(att_smi, params["int_smi_w"], params["int_smi_b"], "gelu"),
                    params["out_smi_w"], params["out_smi_b"]),
        att_smi, params["out_ln_smi_g"], params["out_ln_smi_b"], cfg["smi_layer_norm_eps"])
    return out_txt, out_smi


# ----------------------------------------------------------------------------
# Main
# ----------------------------------------------------------------------------

if __name__ == "__main__":
    cfg = dict(
        bi_hidden_size=32,
        bi_num_attention_heads=2,
        txt_hidden_size=32,
        smi_hidden_size=64,
        txt_intermediate_size=64,
        smi_intermediate_size=128,
        txt_layer_norm_eps=1e-12,
        smi_layer_norm_eps=1e-12,
    )
    B, S_txt, S_smi = 2, 8, 16

    root = jax.random.PRNGKey(0)
    k_p, k_t, k_s = jax.random.split(root, 3)
    params = init_params(k_p, cfg)
    packed = pack_params(params)

    h_txt = jax.random.normal(k_t, (B, S_txt, cfg["txt_hidden_size"]), jnp.float32)
    h_smi = jax.random.normal(k_s, (B, S_smi, cfg["smi_hidden_size"]), jnp.float32)

    # Additive attention masks in HF extended format (B, 1, 1, S_kv): 0 = keep, -1e4 = mask.
    txt_valid = jnp.array([S_txt, S_txt - 2])
    smi_valid = jnp.array([S_smi - 3, S_smi])
    mask_txt = jnp.where(jnp.arange(S_txt)[None, :] < txt_valid[:, None], 0.0, -1e4
                         ).astype(jnp.float32).reshape(B, 1, 1, S_txt)
    mask_smi = jnp.where(jnp.arange(S_smi)[None, :] < smi_valid[:, None], 0.0, -1e4
                         ).astype(jnp.float32).reshape(B, 1, 1, S_smi)

    try:
        fwd = jax.jit(functools.partial(bert_cross_layer_forward, packed, cfg))
        out_txt, out_smi = fwd(h_txt, h_smi, mask_txt, mask_smi)
        jax.block_until_ready((out_txt, out_smi))
    except Exception:
        # TODO(synk): this jax build rejected single-buffered weight specs
        # (pipeline_mode=pl.Buffered(1)); fall back to default double-buffered weights.
        fwd = jax.jit(functools.partial(bert_cross_layer_forward, packed, cfg,
                                        single_buffer_weights=False))
        out_txt, out_smi = fwd(h_txt, h_smi, mask_txt, mask_smi)
        jax.block_until_ready((out_txt, out_smi))

    ref_txt, ref_smi = bert_cross_layer_reference(params, cfg, h_txt, h_smi,
                                                  mask_txt, mask_smi)
    assert out_txt.shape == (B, S_txt, cfg["txt_hidden_size"])
    assert out_smi.shape == (B, S_smi, cfg["smi_hidden_size"])
    # Tolerance accounts for bf16 MXU operands (f32 accumulation) and the EUP
    # approximate reciprocal in the softmax normalizer; the reference is pure f32.
    assert jnp.allclose(out_txt, ref_txt, atol=2e-2, rtol=2e-2)
    assert jnp.allclose(out_smi, ref_smi, atol=2e-2, rtol=2e-2)

    print("KERNEL_OK")
</pallas_src>

<mosaic_0001>
module attributes {stable_mosaic.version = 11 : i64} {
  func.func @_cross_layer_kernel(%arg0: i32, %arg1: memref<1x8x32xf32, #tpu.memory_space<vmem>>, %arg2: memref<1x16x64xf32, #tpu.memory_space<vmem>>, %arg3: memref<1x1x8xf32, #tpu.memory_space<vmem>>, %arg4: memref<1x1x16xf32, #tpu.memory_space<vmem>>, %arg5: memref<32x96xbf16, #tpu.memory_space<vmem>>, %arg6: memref<1x96xf32, #tpu.memory_space<vmem>>, %arg7: memref<64x96xbf16, #tpu.memory_space<vmem>>, %arg8: memref<1x96xf32, #tpu.memory_space<vmem>>, %arg9: memref<32x32xbf16, #tpu.memory_space<vmem>>, %arg10: memref<1x32xf32, #tpu.memory_space<vmem>>, %arg11: memref<1x32xf32, #tpu.memory_space<vmem>>, %arg12: memref<1x32xf32, #tpu.memory_space<vmem>>, %arg13: memref<32x64xbf16, #tpu.memory_space<vmem>>, %arg14: memref<1x64xf32, #tpu.memory_space<vmem>>, %arg15: memref<1x64xf32, #tpu.memory_space<vmem>>, %arg16: memref<1x64xf32, #tpu.memory_space<vmem>>, %arg17: memref<32x64xbf16, #tpu.memory_space<vmem>>, %arg18: memref<1x64xf32, #tpu.memory_space<vmem>>, %arg19: memref<64x32xbf16, #tpu.memory_space<vmem>>, %arg20: memref<1x32xf32, #tpu.memory_space<vmem>>, %arg21: memref<1x32xf32, #tpu.memory_space<vmem>>, %arg22: memref<1x32xf32, #tpu.memory_space<vmem>>, %arg23: memref<64x128xbf16, #tpu.memory_space<vmem>>, %arg24: memref<1x128xf32, #tpu.memory_space<vmem>>, %arg25: memref<128x64xbf16, #tpu.memory_space<vmem>>, %arg26: memref<1x64xf32, #tpu.memory_space<vmem>>, %arg27: memref<1x64xf32, #tpu.memory_space<vmem>>, %arg28: memref<1x64xf32, #tpu.memory_space<vmem>>, %arg29: memref<1x8x32xf32, #tpu.memory_space<vmem>>, %arg30: memref<1x16x64xf32, #tpu.memory_space<vmem>>) attributes {dimension_semantics = [#tpu.dimension_semantics<parallel>], iteration_bounds = array<i64: 2>, scalar_prefetch = 0 : i64, scratch_operands = 0 : i64, tpu.core_type = #tpu.core_type<tc>, window_params = [{transform_indices = @transform_0, window_bounds = array<i64: 1, 8, 32>}, {transform_indices = @transform_1, window_bounds = array<i64: 1, 16, 64>}, {transform_indices = @transform_2, window_bounds = array<i64: 1, 1, 8>}, {transform_indices = @transform_3, window_bounds = array<i64: 1, 1, 16>}, {pipeline_mode = #tpu.pipeline_mode<synchronous>, transform_indices = @transform_4, window_bounds = array<i64: 32, 96>}, {pipeline_mode = #tpu.pipeline_mode<synchronous>, transform_indices = @transform_5, window_bounds = array<i64: 1, 96>}, {pipeline_mode = #tpu.pipeline_mode<synchronous>, transform_indices = @transform_6, window_bounds = array<i64: 64, 96>}, {pipeline_mode = #tpu.pipeline_mode<synchronous>, transform_indices = @transform_7, window_bounds = array<i64: 1, 96>}, {pipeline_mode = #tpu.pipeline_mode<synchronous>, transform_indices = @transform_8, window_bounds = array<i64: 32, 32>}, {pipeline_mode = #tpu.pipeline_mode<synchronous>, transform_indices = @transform_9, window_bounds = array<i64: 1, 32>}, {pipeline_mode = #tpu.pipeline_mode<synchronous>, transform_indices = @transform_10, window_bounds = array<i64: 1, 32>}, {pipeline_mode = #tpu.pipeline_mode<synchronous>, transform_indices = @transform_11, window_bounds = array<i64: 1, 32>}, {pipeline_mode = #tpu.pipeline_mode<synchronous>, transform_indices = @transform_12, window_bounds = array<i64: 32, 64>}, {pipeline_mode = #tpu.pipeline_mode<synchronous>, transform_indices = @transform_13, window_bounds = array<i64: 1, 64>}, {pipeline_mode = #tpu.pipeline_mode<synchronous>, transform_indices = @transform_14, window_bounds = array<i64: 1, 64>}, {pipeline_mode = #tpu.pipeline_mode<synchronous>, transform_indices = @transform_15, window_bounds = array<i64: 1, 64>}, {pipeline_mode = #tpu.pipeline_mode<synchronous>, transform_indices = @transform_16, window_bounds = array<i64: 32, 64>}, {pipeline_mode = #tpu.pipeline_mode<synchronous>, transform_indices = @transform_17, window_bounds = array<i64: 1, 64>}, {pipeline_mode = #tpu.pipeline_mode<synchronous>, transform_indices = @transform_18, window_bounds = array<i64: 64, 32>}, {pipeline_mode = #tpu.pipeline_mode<synchronous>, transform_indices = @transform_19, window_bounds = array<i64: 1, 32>}, {pipeline_mode = #tpu.pipeline_mode<synchronous>, transform_indices = @transform_20, window_bounds = array<i64: 1, 32>}, {pipeline_mode = #tpu.pipeline_mode<synchronous>, transform_indices = @transform_21, window_bounds = array<i64: 1, 32>}, {pipeline_mode = #tpu.pipeline_mode<synchronous>, transform_indices = @transform_22, window_bounds = array<i64: 64, 128>}, {pipeline_mode = #tpu.pipeline_mode<synchronous>, transform_indices = @transform_23, window_bounds = array<i64: 1, 128>}, {pipeline_mode = #tpu.pipeline_mode<synchronous>, transform_indices = @transform_24, window_bounds = array<i64: 128, 64>}, {pipeline_mode = #tpu.pipeline_mode<synchronous>, transform_indices = @transform_25, window_bounds = array<i64: 1, 64>}, {pipeline_mode = #tpu.pipeline_mode<synchronous>, transform_indices = @transform_26, window_bounds = array<i64: 1, 64>}, {pipeline_mode = #tpu.pipeline_mode<synchronous>, transform_indices = @transform_27, window_bounds = array<i64: 1, 64>}, {transform_indices = @transform_28, window_bounds = array<i64: 1, 8, 32>}, {transform_indices = @transform_29, window_bounds = array<i64: 1, 16, 64>}]} {
    %c0 = arith.constant 0 : index
    %c0_0 = arith.constant 0 : index
    %c0_1 = arith.constant 0 : index
    %0 = vector.load %arg1[%c0, %c0_0, %c0_1] : memref<1x8x32xf32, #tpu.memory_space<vmem>>, vector<1x8x32xf32>
    %1 = vector.shape_cast %0 : vector<1x8x32xf32> to vector<8x32xf32>
    %c0_2 = arith.constant 0 : index
    %c0_3 = arith.constant 0 : index
    %c0_4 = arith.constant 0 : index
    %2 = vector.load %arg2[%c0_2, %c0_3, %c0_4] : memref<1x16x64xf32, #tpu.memory_space<vmem>>, vector<1x16x64xf32>
    %3 = vector.shape_cast %2 : vector<1x16x64xf32> to vector<16x64xf32>
    %c0_5 = arith.constant 0 : index
    %c0_6 = arith.constant 0 : index
    %c0_7 = arith.constant 0 : index
    %4 = vector.load %arg3[%c0_5, %c0_6, %c0_7] : memref<1x1x8xf32, #tpu.memory_space<vmem>>, vector<1x1x8xf32>
    %5 = vector.shape_cast %4 : vector<1x1x8xf32> to vector<1x8xf32>
    %c0_8 = arith.constant 0 : index
    %c0_9 = arith.constant 0 : index
    %c0_10 = arith.constant 0 : index
    %6 = vector.load %arg4[%c0_8, %c0_9, %c0_10] : memref<1x1x16xf32, #tpu.memory_space<vmem>>, vector<1x1x16xf32>
    %7 = vector.shape_cast %6 : vector<1x1x16xf32> to vector<1x16xf32>
    %c0_11 = arith.constant 0 : index
    %c0_12 = arith.constant 0 : index
    %8 = vector.load %arg6[%c0_11, %c0_12] : memref<1x96xf32, #tpu.memory_space<vmem>>, vector<1x96xf32>
    %c0_13 = arith.constant 0 : index
    %c0_14 = arith.constant 0 : index
    %9 = vector.load %arg8[%c0_13, %c0_14] : memref<1x96xf32, #tpu.memory_space<vmem>>, vector<1x96xf32>
    %c0_15 = arith.constant 0 : index
    %c0_16 = arith.constant 0 : index
    %10 = vector.load %arg10[%c0_15, %c0_16] : memref<1x32xf32, #tpu.memory_space<vmem>>, vector<1x32xf32>
    %c0_17 = arith.constant 0 : index
    %c0_18 = arith.constant 0 : index
    %11 = vector.load %arg11[%c0_17, %c0_18] : memref<1x32xf32, #tpu.memory_space<vmem>>, vector<1x32xf32>
    %c0_19 = arith.constant 0 : index
    %c0_20 = arith.constant 0 : index
    %12 = vector.load %arg12[%c0_19, %c0_20] : memref<1x32xf32, #tpu.memory_space<vmem>>, vector<1x32xf32>
    %c0_21 = arith.constant 0 : index
    %c0_22 = arith.constant 0 : index
    %13 = vector.load %arg14[%c0_21, %c0_22] : memref<1x64xf32, #tpu.memory_space<vmem>>, vector<1x64xf32>
    %c0_23 = arith.constant 0 : index
    %c0_24 = arith.constant 0 : index
    %14 = vector.load %arg15[%c0_23, %c0_24] : memref<1x64xf32, #tpu.memory_space<vmem>>, vector<1x64xf32>
    %c0_25 = arith.constant 0 : index
    %c0_26 = arith.constant 0 : index
    %15 = vector.load %arg16[%c0_25, %c0_26] : memref<1x64xf32, #tpu.memory_space<vmem>>, vector<1x64xf32>
    %c0_27 = arith.constant 0 : index
    %c0_28 = arith.constant 0 : index
    %16 = vector.load %arg18[%c0_27, %c0_28] : memref<1x64xf32, #tpu.memory_space<vmem>>, vector<1x64xf32>
    %c0_29 = arith.constant 0 : index
    %c0_30 = arith.constant 0 : index
    %17 = vector.load %arg20[%c0_29, %c0_30] : memref<1x32xf32, #tpu.memory_space<vmem>>, vector<1x32xf32>
    %c0_31 = arith.constant 0 : index
    %c0_32 = arith.constant 0 : index
    %18 = vector.load %arg21[%c0_31, %c0_32] : memref<1x32xf32, #tpu.memory_space<vmem>>, vector<1x32xf32>
    %c0_33 = arith.constant 0 : index
    %c0_34 = arith.constant 0 : index
    %19 = vector.load %arg22[%c0_33, %c0_34] : memref<1x32xf32, #tpu.memory_space<vmem>>, vector<1x32xf32>
    %c0_35 = arith.constant 0 : index
    %c0_36 = arith.constant 0 : index
    %20 = vector.load %arg24[%c0_35, %c0_36] : memref<1x128xf32, #tpu.memory_space<vmem>>, vector<1x128xf32>
    %c0_37 = arith.constant 0 : index
    %c0_38 = arith.constant 0 : index
    %21 = vector.load %arg26[%c0_37, %c0_38] : memref<1x64xf32, #tpu.memory_space<vmem>>, vector<1x64xf32>
    %c0_39 = arith.constant 0 : index
    %c0_40 = arith.constant 0 : index
    %22 = vector.load %arg27[%c0_39, %c0_40] : memref<1x64xf32, #tpu.memory_space<vmem>>, vector<1x64xf32>
    %c0_41 = arith.constant 0 : index
    %c0_42 = arith.constant 0 : index
    %23 = vector.load %arg28[%c0_41, %c0_42] : memref<1x64xf32, #tpu.memory_space<vmem>>, vector<1x64xf32>
    %24 = arith.truncf %1 : vector<8x32xf32> to vector<8x32xbf16>
    %25 = arith.truncf %3 : vector<16x64xf32> to vector<16x64xbf16>
    %c0_43 = arith.constant 0 : index
    %c0_44 = arith.constant 0 : index
    %26 = vector.load %arg5[%c0_43, %c0_44] : memref<32x96xbf16, #tpu.memory_space<vmem>>, vector<32x96xbf16>
    %cst = arith.constant dense<0.000000e+00> : vector<8x96xf32>
    %27 = tpu.matmul %24, %26, %cst {dimension_numbers = #tpu.dot_dimension_numbers<[1], [0], [0], [1], [0, 0, 1, 1], [], []>} : vector<8x32xbf16>, vector<32x96xbf16>, vector<8x96xf32> -> vector<8x96xf32>
    %28 = vector.broadcast %8 : vector<1x96xf32> to vector<8x96xf32>
    %29 = arith.addf %27, %28 : vector<8x96xf32>
    %c0_45 = arith.constant 0 : index
    %c0_46 = arith.constant 0 : index
    %30 = vector.load %arg7[%c0_45, %c0_46] : memref<64x96xbf16, #tpu.memory_space<vmem>>, vector<64x96xbf16>
    %cst_47 = arith.constant dense<0.000000e+00> : vector<16x96xf32>
    %31 = tpu.matmul %25, %30, %cst_47 {dimension_numbers = #tpu.dot_dimension_numbers<[1], [0], [0], [1], [0, 0, 1, 1], [], []>} : vector<16x64xbf16>, vector<64x96xbf16>, vector<16x96xf32> -> vector<16x96xf32>
    %32 = vector.broadcast %9 : vector<1x96xf32> to vector<16x96xf32>
    %33 = arith.addf %31, %32 : vector<16x96xf32>
    %34 = vector.shape_cast %7 : vector<1x16xf32> to vector<1x16xf32>
    %35 = vector.broadcast %34 : vector<1x16xf32> to vector<8x16xf32>
    %36 = vector.extract_strided_slice %29 {offsets = [0, 0], sizes = [8, 16], strides = [1, 1]} : vector<8x96xf32> to vector<8x16xf32>
    %37 = arith.truncf %36 : vector<8x16xf32> to vector<8x16xbf16>
    %38 = vector.extract_strided_slice %33 {offsets = [0, 32], sizes = [16, 16], strides = [1, 1]} : vector<16x96xf32> to vector<16x16xf32>
    %39 = arith.truncf %38 : vector<16x16xf32> to vector<16x16xbf16>
    %40 = vector.extract_strided_slice %33 {offsets = [0, 64], sizes = [16, 16], strides = [1, 1]} : vector<16x96xf32> to vector<16x16xf32>
    %41 = arith.truncf %40 : vector<16x16xf32> to vector<16x16xbf16>
    %42 = tpu.transpose %39, [1, 0] : vector<16x16xbf16> -> vector<16x16xbf16>
    %cst_48 = arith.constant dense<0.000000e+00> : vector<8x16xf32>
    %43 = tpu.matmul %37, %42, %cst_48 {dimension_numbers = #tpu.dot_dimension_numbers<[1], [0], [0], [1], [0, 0, 1, 1], [], []>} : vector<8x16xbf16>, vector<16x16xbf16>, vector<8x16xf32> -> vector<8x16xf32>
    %cst_49 = arith.constant 2.500000e-01 : f32
    %44 = vector.broadcast %cst_49 : f32 to vector<8x16xf32>
    %45 = arith.mulf %43, %44 : vector<8x16xf32>
    %46 = arith.addf %45, %35 : vector<8x16xf32>
    %cst_50 = arith.constant dense<0xFF800000> : vector<8xf32>
    %47 = vector.multi_reduction <maximumf>, %46, %cst_50 [1] : vector<8x16xf32> to vector<8xf32>
    %48 = vector.shape_cast %47 : vector<8xf32> to vector<8x1xf32>
    %49 = vector.broadcast %48 : vector<8x1xf32> to vector<8x16xf32>
    %50 = arith.subf %46, %49 : vector<8x16xf32>
    %51 = math.exp %50 : vector<8x16xf32>
    %cst_51 = arith.constant dense<0.000000e+00> : vector<8xf32>
    %52 = vector.multi_reduction <add>, %51, %cst_51 [1] : vector<8x16xf32> to vector<8xf32>
    %53 = vector.shape_cast %52 : vector<8xf32> to vector<8x1xf32>
    %54 = tpu.reciprocal %53 {approx = true} : vector<8x1xf32> -> vector<8x1xf32>
    %55 = vector.broadcast %54 : vector<8x1xf32> to vector<8x16xf32>
    %56 = arith.mulf %51, %55 : vector<8x16xf32>
    %57 = arith.truncf %56 : vector<8x16xf32> to vector<8x16xbf16>
    %cst_52 = arith.constant dense<0.000000e+00> : vector<8x16xf32>
    %58 = tpu.matmul %57, %41, %cst_52 {dimension_numbers = #tpu.dot_dimension_numbers<[1], [0], [0], [1], [0, 0, 1, 1], [], []>} : vector<8x16xbf16>, vector<16x16xbf16>, vector<8x16xf32> -> vector<8x16xf32>
    %59 = vector.extract_strided_slice %29 {offsets = [0, 16], sizes = [8, 16], strides = [1, 1]} : vector<8x96xf32> to vector<8x16xf32>
    %60 = arith.truncf %59 : vector<8x16xf32> to vector<8x16xbf16>
    %61 = vector.extract_strided_slice %33 {offsets = [0, 48], sizes = [16, 16], strides = [1, 1]} : vector<16x96xf32> to vector<16x16xf32>
    %62 = arith.truncf %61 : vector<16x16xf32> to vector<16x16xbf16>
    %63 = vector.extract_strided_slice %33 {offsets = [0, 80], sizes = [16, 16], strides = [1, 1]} : vector<16x96xf32> to vector<16x16xf32>
    %64 = arith.truncf %63 : vector<16x16xf32> to vector<16x16xbf16>
    %65 = tpu.transpose %62, [1, 0] : vector<16x16xbf16> -> vector<16x16xbf16>
    %cst_53 = arith.constant dense<0.000000e+00> : vector<8x16xf32>
    %66 = tpu.matmul %60, %65, %cst_53 {dimension_numbers = #tpu.dot_dimension_numbers<[1], [0], [0], [1], [0, 0, 1, 1], [], []>} : vector<8x16xbf16>, vector<16x16xbf16>, vector<8x16xf32> -> vector<8x16xf32>
    %cst_54 = arith.constant 2.500000e-01 : f32
    %67 = vector.broadcast %cst_54 : f32 to vector<8x16xf32>
    %68 = arith.mulf %66, %67 : vector<8x16xf32>
    %69 = arith.addf %68, %35 : vector<8x16xf32>
    %cst_55 = arith.constant dense<0xFF800000> : vector<8xf32>
    %70 = vector.multi_reduction <maximumf>, %69, %cst_55 [1] : vector<8x16xf32> to vector<8xf32>
    %71 = vector.shape_cast %70 : vector<8xf32> to vector<8x1xf32>
    %72 = vector.broadcast %71 : vector<8x1xf32> to vector<8x16xf32>
    %73 = arith.subf %69, %72 : vector<8x16xf32>
    %74 = math.exp %73 : vector<8x16xf32>
    %cst_56 = arith.constant dense<0.000000e+00> : vector<8xf32>
    %75 = vector.multi_reduction <add>, %74, %cst_56 [1] : vector<8x16xf32> to vector<8xf32>
    %76 = vector.shape_cast %75 : vector<8xf32> to vector<8x1xf32>
    %77 = tpu.reciprocal %76 {approx = true} : vector<8x1xf32> -> vector<8x1xf32>
    %78 = vector.broadcast %77 : vector<8x1xf32> to vector<8x16xf32>
    %79 = arith.mulf %74, %78 : vector<8x16xf32>
    %80 = arith.truncf %79 : vector<8x16xf32> to vector<8x16xbf16>
    %cst_57 = arith.constant dense<0.000000e+00> : vector<8x16xf32>
    %81 = tpu.matmul %80, %64, %cst_57 {dimension_numbers = #tpu.dot_dimension_numbers<[1], [0], [0], [1], [0, 0, 1, 1], [], []>} : vector<8x16xbf16>, vector<16x16xbf16>, vector<8x16xf32> -> vector<8x16xf32>
    %82 = tpu.concatenate %58, %81 in 1 : vector<8x16xf32>, vector<8x16xf32> -> vector<8x32xf32>
    %83 = vector.shape_cast %5 : vector<1x8xf32> to vector<1x8xf32>
    %84 = vector.broadcast %83 : vector<1x8xf32> to vector<16x8xf32>
    %85 = vector.extract_strided_slice %33 {offsets = [0, 0], sizes = [16, 16], strides = [1, 1]} : vector<16x96xf32> to vector<16x16xf32>
    %86 = arith.truncf %85 : vector<16x16xf32> to vector<16x16xbf16>
    %87 = vector.extract_strided_slice %29 {offsets = [0, 32], sizes = [8, 16], strides = [1, 1]} : vector<8x96xf32> to vector<8x16xf32>
    %88 = arith.truncf %87 : vector<8x16xf32> to vector<8x16xbf16>
    %89 = vector.extract_strided_slice %29 {offsets = [0, 64], sizes = [8, 16], strides = [1, 1]} : vector<8x96xf32> to vector<8x16xf32>
    %90 = arith.truncf %89 : vector<8x16xf32> to vector<8x16xbf16>
    %91 = tpu.transpose %88, [1, 0] : vector<8x16xbf16> -> vector<16x8xbf16>
    %cst_58 = arith.constant dense<0.000000e+00> : vector<16x8xf32>
    %92 = tpu.matmul %86, %91, %cst_58 {dimension_numbers = #tpu.dot_dimension_numbers<[1], [0], [0], [1], [0, 0, 1, 1], [], []>} : vector<16x16xbf16>, vector<16x8xbf16>, vector<16x8xf32> -> vector<16x8xf32>
    %cst_59 = arith.constant 2.500000e-01 : f32
    %93 = vector.broadcast %cst_59 : f32 to vector<16x8xf32>
    %94 = arith.mulf %92, %93 : vector<16x8xf32>
    %95 = arith.addf %94, %84 : vector<16x8xf32>
    %cst_60 = arith.constant dense<0xFF800000> : vector<16xf32>
    %96 = vector.multi_reduction <maximumf>, %95, %cst_60 [1] : vector<16x8xf32> to vector<16xf32>
    %97 = vector.shape_cast %96 : vector<16xf32> to vector<16x1xf32>
    %98 = vector.broadcast %97 : vector<16x1xf32> to vector<16x8xf32>
    %99 = arith.subf %95, %98 : vector<16x8xf32>
    %100 = math.exp %99 : vector<16x8xf32>
    %cst_61 = arith.constant dense<0.000000e+00> : vector<16xf32>
    %101 = vector.multi_reduction <add>, %100, %cst_61 [1] : vector<16x8xf32> to vector<16xf32>
    %102 = vector.shape_cast %101 : vector<16xf32> to vector<16x1xf32>
    %103 = tpu.reciprocal %102 {approx = true} : vector<16x1xf32> -> vector<16x1xf32>
    %104 = vector.broadcast %103 : vector<16x1xf32> to vector<16x8xf32>
    %105 = arith.mulf %100, %104 : vector<16x8xf32>
    %106 = arith.truncf %105 : vector<16x8xf32> to vector<16x8xbf16>
    %cst_62 = arith.constant dense<0.000000e+00> : vector<16x16xf32>
    %107 = tpu.matmul %106, %90, %cst_62 {dimension_numbers = #tpu.dot_dimension_numbers<[1], [0], [0], [1], [0, 0, 1, 1], [], []>} : vector<16x8xbf16>, vector<8x16xbf16>, vector<16x16xf32> -> vector<16x16xf32>
    %108 = vector.extract_strided_slice %33 {offsets = [0, 16], sizes = [16, 16], strides = [1, 1]} : vector<16x96xf32> to vector<16x16xf32>
    %109 = arith.truncf %108 : vector<16x16xf32> to vector<16x16xbf16>
    %110 = vector.extract_strided_slice %29 {offsets = [0, 48], sizes = [8, 16], strides = [1, 1]} : vector<8x96xf32> to vector<8x16xf32>
    %111 = arith.truncf %110 : vector<8x16xf32> to vector<8x16xbf16>
    %112 = vector.extract_strided_slice %29 {offsets = [0, 80], sizes = [8, 16], strides = [1, 1]} : vector<8x96xf32> to vector<8x16xf32>
    %113 = arith.truncf %112 : vector<8x16xf32> to vector<8x16xbf16>
    %114 = tpu.transpose %111, [1, 0] : vector<8x16xbf16> -> vector<16x8xbf16>
    %cst_63 = arith.constant dense<0.000000e+00> : vector<16x8xf32>
    %115 = tpu.matmul %109, %114, %cst_63 {dimension_numbers = #tpu.dot_dimension_numbers<[1], [0], [0], [1], [0, 0, 1, 1], [], []>} : vector<16x16xbf16>, vector<16x8xbf16>, vector<16x8xf32> -> vector<16x8xf32>
    %cst_64 = arith.constant 2.500000e-01 : f32
    %116 = vector.broadcast %cst_64 : f32 to vector<16x8xf32>
    %117 = arith.mulf %115, %116 : vector<16x8xf32>
    %118 = arith.addf %117, %84 : vector<16x8xf32>
    %cst_65 = arith.constant dense<0xFF800000> : vector<16xf32>
    %119 = vector.multi_reduction <maximumf>, %118, %cst_65 [1] : vector<16x8xf32> to vector<16xf32>
    %120 = vector.shape_cast %119 : vector<16xf32> to vector<16x1xf32>
    %121 = vector.broadcast %120 : vector<16x1xf32> to vector<16x8xf32>
    %122 = arith.subf %118, %121 : vector<16x8xf32>
    %123 = math.exp %122 : vector<16x8xf32>
    %cst_66 = arith.constant dense<0.000000e+00> : vector<16xf32>
    %124 = vector.multi_reduction <add>, %123, %cst_66 [1] : vector<16x8xf32> to vector<16xf32>
    %125 = vector.shape_cast %124 : vector<16xf32> to vector<16x1xf32>
    %126 = tpu.reciprocal %125 {approx = true} : vector<16x1xf32> -> vector<16x1xf32>
    %127 = vector.broadcast %126 : vector<16x1xf32> to vector<16x8xf32>
    %128 = arith.mulf %123, %127 : vector<16x8xf32>
    %129 = arith.truncf %128 : vector<16x8xf32> to vector<16x8xbf16>
    %cst_67 = arith.constant dense<0.000000e+00> : vector<16x16xf32>
    %130 = tpu.matmul %129, %113, %cst_67 {dimension_numbers = #tpu.dot_dimension_numbers<[1], [0], [0], [1], [0, 0, 1, 1], [], []>} : vector<16x8xbf16>, vector<8x16xbf16>, vector<16x16xf32> -> vector<16x16xf32>
    %131 = tpu.concatenate %107, %130 in 1 : vector<16x16xf32>, vector<16x16xf32> -> vector<16x32xf32>
    %132 = arith.truncf %82 : vector<8x32xf32> to vector<8x32xbf16>
    %c0_68 = arith.constant 0 : index
    %c0_69 = arith.constant 0 : index
    %133 = vector.load %arg9[%c0_68, %c0_69] : memref<32x32xbf16, #tpu.memory_space<vmem>>, vector<32x32xbf16>
    %cst_70 = arith.constant dense<0.000000e+00> : vector<8x32xf32>
    %134 = tpu.matmul %132, %133, %cst_70 {dimension_numbers = #tpu.dot_dimension_numbers<[1], [0], [0], [1], [0, 0, 1, 1], [], []>} : vector<8x32xbf16>, vector<32x32xbf16>, vector<8x32xf32> -> vector<8x32xf32>
    %135 = vector.broadcast %10 : vector<1x32xf32> to vector<8x32xf32>
    %136 = arith.addf %134, %135 : vector<8x32xf32>
    %137 = arith.addf %136, %1 : vector<8x32xf32>
    %cst_71 = arith.constant dense<0.000000e+00> : vector<8xf32>
    %138 = vector.multi_reduction <add>, %137, %cst_71 [1] : vector<8x32xf32> to vector<8xf32>
    %139 = vector.shape_cast %138 : vector<8xf32> to vector<8x1xf32>
    %cst_72 = arith.constant 3.200000e+01 : f32
    %140 = vector.broadcast %cst_72 : f32 to vector<8x1xf32>
    %141 = arith.divf %139, %140 : vector<8x1xf32>
    %142 = vector.broadcast %141 : vector<8x1xf32> to vector<8x32xf32>
    %143 = arith.subf %137, %142 : vector<8x32xf32>
    %144 = arith.mulf %143, %143 : vector<8x32xf32>
    %cst_73 = arith.constant dense<0.000000e+00> : vector<8xf32>
    %145 = vector.multi_reduction <add>, %144, %cst_73 [1] : vector<8x32xf32> to vector<8xf32>
    %146 = vector.shape_cast %145 : vector<8xf32> to vector<8x1xf32>
    %cst_74 = arith.constant 3.200000e+01 : f32
    %147 = vector.broadcast %cst_74 : f32 to vector<8x1xf32>
    %148 = arith.divf %146, %147 : vector<8x1xf32>
    %cst_75 = arith.constant 9.99999996E-13 : f32
    %149 = vector.broadcast %cst_75 : f32 to vector<8x1xf32>
    %150 = arith.addf %148, %149 : vector<8x1xf32>
    %151 = math.rsqrt %150 : vector<8x1xf32>
    %152 = vector.broadcast %151 : vector<8x1xf32> to vector<8x32xf32>
    %153 = arith.mulf %143, %152 : vector<8x32xf32>
    %154 = vector.broadcast %11 : vector<1x32xf32> to vector<8x32xf32>
    %155 = arith.mulf %153, %154 : vector<8x32xf32>
    %156 = vector.broadcast %12 : vector<1x32xf32> to vector<8x32xf32>
    %157 = arith.addf %155, %156 : vector<8x32xf32>
    %158 = arith.truncf %131 : vector<16x32xf32> to vector<16x32xbf16>
    %c0_76 = arith.constant 0 : index
    %c0_77 = arith.constant 0 : index
    %159 = vector.load %arg13[%c0_76, %c0_77] : memref<32x64xbf16, #tpu.memory_space<vmem>>, vector<32x64xbf16>
    %cst_78 = arith.constant dense<0.000000e+00> : vector<16x64xf32>
    %160 = tpu.matmul %158, %159, %cst_78 {dimension_numbers = #tpu.dot_dimension_numbers<[1], [0], [0], [1], [0, 0, 1, 1], [], []>} : vector<16x32xbf16>, vector<32x64xbf16>, vector<16x64xf32> -> vector<16x64xf32>
    %161 = vector.broadcast %13 : vector<1x64xf32> to vector<16x64xf32>
    %162 = arith.addf %160, %161 : vector<16x64xf32>
    %163 = arith.addf %162, %3 : vector<16x64xf32>
    %cst_79 = arith.constant dense<0.000000e+00> : vector<16xf32>
    %164 = vector.multi_reduction <add>, %163, %cst_79 [1] : vector<16x64xf32> to vector<16xf32>
    %165 = vector.shape_cast %164 : vector<16xf32> to vector<16x1xf32>
    %cst_80 = arith.constant 6.400000e+01 : f32
    %166 = vector.broadcast %cst_80 : f32 to vector<16x1xf32>
    %167 = arith.divf %165, %166 : vector<16x1xf32>
    %168 = vector.broadcast %167 : vector<16x1xf32> to vector<16x64xf32>
    %169 = arith.subf %163, %168 : vector<16x64xf32>
    %170 = arith.mulf %169, %169 : vector<16x64xf32>
    %cst_81 = arith.constant dense<0.000000e+00> : vector<16xf32>
    %171 = vector.multi_reduction <add>, %170, %cst_81 [1] : vector<16x64xf32> to vector<16xf32>
    %172 = vector.shape_cast %171 : vector<16xf32> to vector<16x1xf32>
    %cst_82 = arith.constant 6.400000e+01 : f32
    %173 = vector.broadcast %cst_82 : f32 to vector<16x1xf32>
    %174 = arith.divf %172, %173 : vector<16x1xf32>
    %cst_83 = arith.constant 9.99999996E-13 : f32
    %175 = vector.broadcast %cst_83 : f32 to vector<16x1xf32>
    %176 = arith.addf %174, %175 : vector<16x1xf32>
    %177 = math.rsqrt %176 : vector<16x1xf32>
    %178 = vector.broadcast %177 : vector<16x1xf32> to vector<16x64xf32>
    %179 = arith.mulf %169, %178 : vector<16x64xf32>
    %180 = vector.broadcast %14 : vector<1x64xf32> to vector<16x64xf32>
    %181 = arith.mulf %179, %180 : vector<16x64xf32>
    %182 = vector.broadcast %15 : vector<1x64xf32> to vector<16x64xf32>
    %183 = arith.addf %181, %182 : vector<16x64xf32>
    %184 = arith.truncf %157 : vector<8x32xf32> to vector<8x32xbf16>
    %c0_84 = arith.constant 0 : index
    %c0_85 = arith.constant 0 : index
    %185 = vector.load %arg17[%c0_84, %c0_85] : memref<32x64xbf16, #tpu.memory_space<vmem>>, vector<32x64xbf16>
    %cst_86 = arith.constant dense<0.000000e+00> : vector<8x64xf32>
    %186 = tpu.matmul %184, %185, %cst_86 {dimension_numbers = #tpu.dot_dimension_numbers<[1], [0], [0], [1], [0, 0, 1, 1], [], []>} : vector<8x32xbf16>, vector<32x64xbf16>, vector<8x64xf32> -> vector<8x64xf32>
    %187 = vector.broadcast %16 : vector<1x64xf32> to vector<8x64xf32>
    %188 = arith.addf %186, %187 : vector<8x64xf32>
    %cst_87 = arith.constant 5.000000e-01 : f32
    %189 = vector.broadcast %cst_87 : f32 to vector<8x64xf32>
    %190 = arith.mulf %189, %188 : vector<8x64xf32>
    %cst_88 = arith.constant 4.471500e-02 : f32
    %191 = vector.broadcast %cst_88 : f32 to vector<8x64xf32>
    %192 = arith.mulf %191, %188 : vector<8x64xf32>
    %193 = arith.mulf %192, %188 : vector<8x64xf32>
    %194 = arith.mulf %193, %188 : vector<8x64xf32>
    %195 = arith.addf %188, %194 : vector<8x64xf32>
    %cst_89 = arith.constant 0.797884583 : f32
    %196 = vector.broadcast %cst_89 : f32 to vector<8x64xf32>
    %197 = arith.mulf %196, %195 : vector<8x64xf32>
    %198 = math.tanh %197 : vector<8x64xf32>
    %cst_90 = arith.constant 1.000000e+00 : f32
    %199 = vector.broadcast %cst_90 : f32 to vector<8x64xf32>
    %200 = arith.addf %199, %198 : vector<8x64xf32>
    %201 = arith.mulf %190, %200 : vector<8x64xf32>
    %202 = arith.truncf %201 : vector<8x64xf32> to vector<8x64xbf16>
    %c0_91 = arith.constant 0 : index
    %c0_92 = arith.constant 0 : index
    %203 = vector.load %arg19[%c0_91, %c0_92] : memref<64x32xbf16, #tpu.memory_space<vmem>>, vector<64x32xbf16>
    %cst_93 = arith.constant dense<0.000000e+00> : vector<8x32xf32>
    %204 = tpu.matmul %202, %203, %cst_93 {dimension_numbers = #tpu.dot_dimension_numbers<[1], [0], [0], [1], [0, 0, 1, 1], [], []>} : vector<8x64xbf16>, vector<64x32xbf16>, vector<8x32xf32> -> vector<8x32xf32>
    %205 = vector.broadcast %17 : vector<1x32xf32> to vector<8x32xf32>
    %206 = arith.addf %204, %205 : vector<8x32xf32>
    %207 = arith.addf %206, %157 : vector<8x32xf32>
    %cst_94 = arith.constant dense<0.000000e+00> : vector<8xf32>
    %208 = vector.multi_reduction <add>, %207, %cst_94 [1] : vector<8x32xf32> to vector<8xf32>
    %209 = vector.shape_cast %208 : vector<8xf32> to vector<8x1xf32>
    %cst_95 = arith.constant 3.200000e+01 : f32
    %210 = vector.broadcast %cst_95 : f32 to vector<8x1xf32>
    %211 = arith.divf %209, %210 : vector<8x1xf32>
    %212 = vector.broadcast %211 : vector<8x1xf32> to vector<8x32xf32>
    %213 = arith.subf %207, %212 : vector<8x32xf32>
    %214 = arith.mulf %213, %213 : vector<8x32xf32>
    %cst_96 = arith.constant dense<0.000000e+00> : vector<8xf32>
    %215 = vector.multi_reduction <add>, %214, %cst_96 [1] : vector<8x32xf32> to vector<8xf32>
    %216 = vector.shape_cast %215 : vector<8xf32> to vector<8x1xf32>
    %cst_97 = arith.constant 3.200000e+01 : f32
    %217 = vector.broadcast %cst_97 : f32 to vector<8x1xf32>
    %218 = arith.divf %216, %217 : vector<8x1xf32>
    %cst_98 = arith.constant 9.99999996E-13 : f32
    %219 = vector.broadcast %cst_98 : f32 to vector<8x1xf32>
    %220 = arith.addf %218, %219 : vector<8x1xf32>
    %221 = math.rsqrt %220 : vector<8x1xf32>
    %222 = vector.broadcast %221 : vector<8x1xf32> to vector<8x32xf32>
    %223 = arith.mulf %213, %222 : vector<8x32xf32>
    %224 = vector.broadcast %18 : vector<1x32xf32> to vector<8x32xf32>
    %225 = arith.mulf %223, %224 : vector<8x32xf32>
    %226 = vector.broadcast %19 : vector<1x32xf32> to vector<8x32xf32>
    %227 = arith.addf %225, %226 : vector<8x32xf32>
    %228 = arith.truncf %183 : vector<16x64xf32> to vector<16x64xbf16>
    %c0_99 = arith.constant 0 : index
    %c0_100 = arith.constant 0 : index
    %229 = vector.load %arg23[%c0_99, %c0_100] : memref<64x128xbf16, #tpu.memory_space<vmem>>, vector<64x128xbf16>
    %cst_101 = arith.constant dense<0.000000e+00> : vector<16x128xf32>
    %230 = tpu.matmul %228, %229, %cst_101 {dimension_numbers = #tpu.dot_dimension_numbers<[1], [0], [0], [1], [0, 0, 1, 1], [], []>} : vector<16x64xbf16>, vector<64x128xbf16>, vector<16x128xf32> -> vector<16x128xf32>
    %231 = vector.broadcast %20 : vector<1x128xf32> to vector<16x128xf32>
    %232 = arith.addf %230, %231 : vector<16x128xf32>
    %cst_102 = arith.constant 5.000000e-01 : f32
    %233 = vector.broadcast %cst_102 : f32 to vector<16x128xf32>
    %234 = arith.mulf %233, %232 : vector<16x128xf32>
    %cst_103 = arith.constant 4.471500e-02 : f32
    %235 = vector.broadcast %cst_103 : f32 to vector<16x128xf32>
    %236 = arith.mulf %235, %232 : vector<16x128xf32>
    %237 = arith.mulf %236, %232 : vector<16x128xf32>
    %238 = arith.mulf %237, %232 : vector<16x128xf32>
    %239 = arith.addf %232, %238 : vector<16x128xf32>
    %cst_104 = arith.constant 0.797884583 : f32
    %240 = vector.broadcast %cst_104 : f32 to vector<16x128xf32>
    %241 = arith.mulf %240, %239 : vector<16x128xf32>
    %242 = math.tanh %241 : vector<16x128xf32>
    %cst_105 = arith.constant 1.000000e+00 : f32
    %243 = vector.broadcast %cst_105 : f32 to vector<16x128xf32>
    %244 = arith.addf %243, %242 : vector<16x128xf32>
    %245 = arith.mulf %234, %244 : vector<16x128xf32>
    %246 = arith.truncf %245 : vector<16x128xf32> to vector<16x128xbf16>
    %c0_106 = arith.constant 0 : index
    %c0_107 = arith.constant 0 : index
    %247 = vector.load %arg25[%c0_106, %c0_107] : memref<128x64xbf16, #tpu.memory_space<vmem>>, vector<128x64xbf16>
    %cst_108 = arith.constant dense<0.000000e+00> : vector<16x64xf32>
    %248 = tpu.matmul %246, %247, %cst_108 {dimension_numbers = #tpu.dot_dimension_numbers<[1], [0], [0], [1], [0, 0, 1, 1], [], []>} : vector<16x128xbf16>, vector<128x64xbf16>, vector<16x64xf32> -> vector<16x64xf32>
    %249 = vector.broadcast %21 : vector<1x64xf32> to vector<16x64xf32>
    %250 = arith.addf %248, %249 : vector<16x64xf32>
    %251 = arith.addf %250, %183 : vector<16x64xf32>
    %cst_109 = arith.constant dense<0.000000e+00> : vector<16xf32>
    %252 = vector.multi_reduction <add>, %251, %cst_109 [1] : vector<16x64xf32> to vector<16xf32>
    %253 = vector.shape_cast %252 : vector<16xf32> to vector<16x1xf32>
    %cst_110 = arith.constant 6.400000e+01 : f32
    %254 = vector.broadcast %cst_110 : f32 to vector<16x1xf32>
    %255 = arith.divf %253, %254 : vector<16x1xf32>
    %256 = vector.broadcast %255 : vector<16x1xf32> to vector<16x64xf32>
    %257 = arith.subf %251, %256 : vector<16x64xf32>
    %258 = arith.mulf %257, %257 : vector<16x64xf32>
    %cst_111 = arith.constant dense<0.000000e+00> : vector<16xf32>
    %259 = vector.multi_reduction <add>, %258, %cst_111 [1] : vector<16x64xf32> to vector<16xf32>
    %260 = vector.shape_cast %259 : vector<16xf32> to vector<16x1xf32>
    %cst_112 = arith.constant 6.400000e+01 : f32
    %261 = vector.broadcast %cst_112 : f32 to vector<16x1xf32>
    %262 = arith.divf %260, %261 : vector<16x1xf32>
    %cst_113 = arith.constant 9.99999996E-13 : f32
    %263 = vector.broadcast %cst_113 : f32 to vector<16x1xf32>
    %264 = arith.addf %262, %263 : vector<16x1xf32>
    %265 = math.rsqrt %264 : vector<16x1xf32>
    %266 = vector.broadcast %265 : vector<16x1xf32> to vector<16x64xf32>
    %267 = arith.mulf %257, %266 : vector<16x64xf32>
    %268 = vector.broadcast %22 : vector<1x64xf32> to vector<16x64xf32>
    %269 = arith.mulf %267, %268 : vector<16x64xf32>
    %270 = vector.broadcast %23 : vector<1x64xf32> to vector<16x64xf32>
    %271 = arith.addf %269, %270 : vector<16x64xf32>
    %c0_114 = arith.constant 0 : index
    %c0_115 = arith.constant 0 : index
    %c0_116 = arith.constant 0 : index
    %272 = vector.load %arg29[%c0_114, %c0_115, %c0_116] : memref<1x8x32xf32, #tpu.memory_space<vmem>>, vector<1x8x32xf32>
    %273 = vector.shape_cast %272 : vector<1x8x32xf32> to vector<8x32xf32>
    %274 = vector.shape_cast %227 : vector<8x32xf32> to vector<1x8x32xf32>
    tpu.vector_store %arg29[%c0_114, %c0_115, %c0_116], %274 {strides = array<i32>} : memref<1x8x32xf32, #tpu.memory_space<vmem>>, vector<1x8x32xf32>,
    %c0_117 = arith.constant 0 : index
    %c0_118 = arith.constant 0 : index
    %c0_119 = arith.constant 0 : index
    %275 = vector.load %arg30[%c0_117, %c0_118, %c0_119] : memref<1x16x64xf32, #tpu.memory_space<vmem>>, vector<1x16x64xf32>
    %276 = vector.shape_cast %275 : vector<1x16x64xf32> to vector<16x64xf32>
    %277 = vector.shape_cast %271 : vector<16x64xf32> to vector<1x16x64xf32>
    tpu.vector_store %arg30[%c0_117, %c0_118, %c0_119], %277 {strides = array<i32>} : memref<1x16x64xf32, #tpu.memory_space<vmem>>, vector<1x16x64xf32>,
    return
  }
  func.func @transform_0(%arg0: i32) -> (i32, i32, i32) {
    %c0_i32 = arith.constant 0 : i32
    %c0_i32_0 = arith.constant 0 : i32
    %c0_i32_1 = arith.constant 0 : i32
    return %arg0, %c0_i32, %c0_i32_0 : i32, i32, i32
  }
  func.func @transform_1(%arg0: i32) -> (i32, i32, i32) {
    %c0_i32 = arith.constant 0 : i32
    %c0_i32_0 = arith.constant 0 : i32
    %c0_i32_1 = arith.constant 0 : i32
    return %arg0, %c0_i32, %c0_i32_0 : i32, i32, i32
  }
  func.func @transform_2(%arg0: i32) -> (i32, i32, i32) {
    %c0_i32 = arith.constant 0 : i32
    %c0_i32_0 = arith.constant 0 : i32
    %c0_i32_1 = arith.constant 0 : i32
    return %arg0, %c0_i32, %c0_i32_0 : i32, i32, i32
  }
  func.func @transform_3(%arg0: i32) -> (i32, i32, i32) {
    %c0_i32 = arith.constant 0 : i32
    %c0_i32_0 = arith.constant 0 : i32
    %c0_i32_1 = arith.constant 0 : i32
    return %arg0, %c0_i32, %c0_i32_0 : i32, i32, i32
  }
  func.func @transform_4(%arg0: i32) -> (i32, i32) {
    %c0_i32 = arith.constant 0 : i32
    %c0_i32_0 = arith.constant 0 : i32
    %c0_i32_1 = arith.constant 0 : i32
    return %c0_i32, %c0_i32_0 : i32, i32
  }
  func.func @transform_5(%arg0: i32) -> (i32, i32) {
    %c0_i32 = arith.constant 0 : i32
    %c0_i32_0 = arith.constant 0 : i32
    %c0_i32_1 = arith.constant 0 : i32
    return %c0_i32, %c0_i32_0 : i32, i32
  }
  func.func @transform_6(%arg0: i32) -> (i32, i32) {
    %c0_i32 = arith.constant 0 : i32
    %c0_i32_0 = arith.constant 0 : i32
    %c0_i32_1 = arith.constant 0 : i32
    return %c0_i32, %c0_i32_0 : i32, i32
  }
  func.func @transform_7(%arg0: i32) -> (i32, i32) {
    %c0_i32 = arith.constant 0 : i32
    %c0_i32_0 = arith.constant 0 : i32
    %c0_i32_1 = arith.constant 0 : i32
    return %c0_i32, %c0_i32_0 : i32, i32
  }
  func.func @transform_8(%arg0: i32) -> (i32, i32) {
    %c0_i32 = arith.constant 0 : i32
    %c0_i32_0 = arith.constant 0 : i32
    %c0_i32_1 = arith.constant 0 : i32
    return %c0_i32, %c0_i32_0 : i32, i32
  }
  func.func @transform_9(%arg0: i32) -> (i32, i32) {
    %c0_i32 = arith.constant 0 : i32
    %c0_i32_0 = arith.constant 0 : i32
    %c0_i32_1 = arith.constant 0 : i32
    return %c0_i32, %c0_i32_0 : i32, i32
  }
  func.func @transform_10(%arg0: i32) -> (i32, i32) {
    %c0_i32 = arith.constant 0 : i32
    %c0_i32_0 = arith.constant 0 : i32
    %c0_i32_1 = arith.constant 0 : i32
    return %c0_i32, %c0_i32_0 : i32, i32
  }
  func.func @transform_11(%arg0: i32) -> (i32, i32) {
    %c0_i32 = arith.constant 0 : i32
    %c0_i32_0 = arith.constant 0 : i32
    %c0_i32_1 = arith.constant 0 : i32
    return %c0_i32, %c0_i32_0 : i32, i32
  }
  func.func @transform_12(%arg0: i32) -> (i32, i32) {
    %c0_i32 = arith.constant 0 : i32
    %c0_i32_0 = arith.constant 0 : i32
    %c0_i32_1 = arith.constant 0 : i32
    return %c0_i32, %c0_i32_0 : i32, i32
  }
  func.func @transform_13(%arg0: i32) -> (i32, i32) {
    %c0_i32 = arith.constant 0 : i32
    %c0_i32_0 = arith.constant 0 : i32
    %c0_i32_1 = arith.constant 0 : i32
    return %c0_i32, %c0_i32_0 : i32, i32
  }
  func.func @transform_14(%arg0: i32) -> (i32, i32) {
    %c0_i32 = arith.constant 0 : i32
    %c0_i32_0 = arith.constant 0 : i32
    %c0_i32_1 = arith.constant 0 : i32
    return %c0_i32, %c0_i32_0 : i32, i32
  }
  func.func @transform_15(%arg0: i32) -> (i32, i32) {
    %c0_i32 = arith.constant 0 : i32
    %c0_i32_0 = arith.constant 0 : i32
    %c0_i32_1 = arith.constant 0 : i32
    return %c0_i32, %c0_i32_0 : i32, i32
  }
  func.func @transform_16(%arg0: i32) -> (i32, i32) {
    %c0_i32 = arith.constant 0 : i32
    %c0_i32_0 = arith.constant 0 : i32
    %c0_i32_1 = arith.constant 0 : i32
    return %c0_i32, %c0_i32_0 : i32, i32
  }
  func.func @transform_17(%arg0: i32) -> (i32, i32) {
    %c0_i32 = arith.constant 0 : i32
    %c0_i32_0 = arith.constant 0 : i32
    %c0_i32_1 = arith.constant 0 : i32
    return %c0_i32, %c0_i32_0 : i32, i32
  }
  func.func @transform_18(%arg0: i32) -> (i32, i32) {
    %c0_i32 = arith.constant 0 : i32
    %c0_i32_0 = arith.constant 0 : i32
    %c0_i32_1 = arith.constant 0 : i32
    return %c0_i32, %c0_i32_0 : i32, i32
  }
  func.func @transform_19(%arg0: i32) -> (i32, i32) {
    %c0_i32 = arith.constant 0 : i32
    %c0_i32_0 = arith.constant 0 : i32
    %c0_i32_1 = arith.constant 0 : i32
    return %c0_i32, %c0_i32_0 : i32, i32
  }
  func.func @transform_20(%arg0: i32) -> (i32, i32) {
    %c0_i32 = arith.constant 0 : i32
    %c0_i32_0 = arith.constant 0 : i32
    %c0_i32_1 = arith.constant 0 : i32
    return %c0_i32, %c0_i32_0 : i32, i32
  }
  func.func @transform_21(%arg0: i32) -> (i32, i32) {
    %c0_i32 = arith.constant 0 : i32
    %c0_i32_0 = arith.constant 0 : i32
    %c0_i32_1 = arith.constant 0 : i32
    return %c0_i32, %c0_i32_0 : i32, i32
  }
  func.func @transform_22(%arg0: i32) -> (i32, i32) {
    %c0_i32 = arith.constant 0 : i32
    %c0_i32_0 = arith.constant 0 : i32
    %c0_i32_1 = arith.constant 0 : i32
    return %c0_i32, %c0_i32_0 : i32, i32
  }
  func.func @transform_23(%arg0: i32) -> (i32, i32) {
    %c0_i32 = arith.constant 0 : i32
    %c0_i32_0 = arith.constant 0 : i32
    %c0_i32_1 = arith.constant 0 : i32
    return %c0_i32, %c0_i32_0 : i32, i32
  }
  func.func @transform_24(%arg0: i32) -> (i32, i32) {
    %c0_i32 = arith.constant 0 : i32
    %c0_i32_0 = arith.constant 0 : i32
    %c0_i32_1 = arith.constant 0 : i32
    return %c0_i32, %c0_i32_0 : i32, i32
  }
  func.func @transform_25(%arg0: i32) -> (i32, i32) {
    %c0_i32 = arith.constant 0 : i32
    %c0_i32_0 = arith.constant 0 : i32
    %c0_i32_1 = arith.constant 0 : i32
    return %c0_i32, %c0_i32_0 : i32, i32
  }
  func.func @transform_26(%arg0: i32) -> (i32, i32) {
    %c0_i32 = arith.constant 0 : i32
    %c0_i32_0 = arith.constant 0 : i32
    %c0_i32_1 = arith.constant 0 : i32
    return %c0_i32, %c0_i32_0 : i32, i32
  }
  func.func @transform_27(%arg0: i32) -> (i32, i32) {
    %c0_i32 = arith.constant 0 : i32
    %c0_i32_0 = arith.constant 0 : i32
    %c0_i32_1 = arith.constant 0 : i32
    return %c0_i32, %c0_i32_0 : i32, i32
  }
  func.func @transform_28(%arg0: i32) -> (i32, i32, i32) {
    %c0_i32 = arith.constant 0 : i32
    %c0_i32_0 = arith.constant 0 : i32
    %c0_i32_1 = arith.constant 0 : i32
    return %arg0, %c0_i32, %c0_i32_0 : i32, i32, i32
  }
  func.func @transform_29(%arg0: i32) -> (i32, i32, i32) {
    %c0_i32 = arith.constant 0 : i32
    %c0_i32_0 = arith.constant 0 : i32
    %c0_i32_1 = arith.constant 0 : i32
    return %arg0, %c0_i32, %c0_i32_0 : i32, i32, i32
  }
}

module attributes {stable_mosaic.version = 11 : i64} {
  func.func @_cross_layer_kernel(%arg0: i32, %arg1: memref<1x8x32xf32, #tpu.memory_space<vmem>>, %arg2: memref<1x16x64xf32, #tpu.memory_space<vmem>>, %arg3: memref<1x1x8xf32, #tpu.memory_space<vmem>>, %arg4: memref<1x1x16xf32, #tpu.memory_space<vmem>>, %arg5: memref<32x96xbf16, #tpu.memory_space<vmem>>, %arg6: memref<1x96xf32, #tpu.memory_space<vmem>>, %arg7: memref<64x96xbf16, #tpu.memory_space<vmem>>, %arg8: memref<1x96xf32, #tpu.memory_space<vmem>>, %arg9: memref<32x32xbf16, #tpu.memory_space<vmem>>, %arg10: memref<1x32xf32, #tpu.memory_space<vmem>>, %arg11: memref<1x32xf32, #tpu.memory_space<vmem>>, %arg12: memref<1x32xf32, #tpu.memory_space<vmem>>, %arg13: memref<32x64xbf16, #tpu.memory_space<vmem>>, %arg14: memref<1x64xf32, #tpu.memory_space<vmem>>, %arg15: memref<1x64xf32, #tpu.memory_space<vmem>>, %arg16: memref<1x64xf32, #tpu.memory_space<vmem>>, %arg17: memref<32x64xbf16, #tpu.memory_space<vmem>>, %arg18: memref<1x64xf32, #tpu.memory_space<vmem>>, %arg19: memref<64x32xbf16, #tpu.memory_space<vmem>>, %arg20: memref<1x32xf32, #tpu.memory_space<vmem>>, %arg21: memref<1x32xf32, #tpu.memory_space<vmem>>, %arg22: memref<1x32xf32, #tpu.memory_space<vmem>>, %arg23: memref<64x128xbf16, #tpu.memory_space<vmem>>, %arg24: memref<1x128xf32, #tpu.memory_space<vmem>>, %arg25: memref<128x64xbf16, #tpu.memory_space<vmem>>, %arg26: memref<1x64xf32, #tpu.memory_space<vmem>>, %arg27: memref<1x64xf32, #tpu.memory_space<vmem>>, %arg28: memref<1x64xf32, #tpu.memory_space<vmem>>, %arg29: memref<1x8x32xf32, #tpu.memory_space<vmem>>, %arg30: memref<1x16x64xf32, #tpu.memory_space<vmem>>) attributes {dimension_semantics = [#tpu.dimension_semantics<parallel>], iteration_bounds = array<i64: 2>, scalar_prefetch = 0 : i64, scratch_operands = 0 : i64, tpu.core_type = #tpu.core_type<tc>, window_params = [{transform_indices = @transform_0, window_bounds = array<i64: 1, 8, 32>}, {transform_indices = @transform_1, window_bounds = array<i64: 1, 16, 64>}, {transform_indices = @transform_2, window_bounds = array<i64: 1, 1, 8>}, {transform_indices = @transform_3, window_bounds = array<i64: 1, 1, 16>}, {pipeline_mode = #tpu.pipeline_mode<synchronous>, transform_indices = @transform_4, window_bounds = array<i64: 32, 96>}, {pipeline_mode = #tpu.pipeline_mode<synchronous>, transform_indices = @transform_5, window_bounds = array<i64: 1, 96>}, {pipeline_mode = #tpu.pipeline_mode<synchronous>, transform_indices = @transform_6, window_bounds = array<i64: 64, 96>}, {pipeline_mode = #tpu.pipeline_mode<synchronous>, transform_indices = @transform_7, window_bounds = array<i64: 1, 96>}, {pipeline_mode = #tpu.pipeline_mode<synchronous>, transform_indices = @transform_8, window_bounds = array<i64: 32, 32>}, {pipeline_mode = #tpu.pipeline_mode<synchronous>, transform_indices = @transform_9, window_bounds = array<i64: 1, 32>}, {pipeline_mode = #tpu.pipeline_mode<synchronous>, transform_indices = @transform_10, window_bounds = array<i64: 1, 32>}, {pipeline_mode = #tpu.pipeline_mode<synchronous>, transform_indices = @transform_11, window_bounds = array<i64: 1, 32>}, {pipeline_mode = #tpu.pipeline_mode<synchronous>, transform_indices = @transform_12, window_bounds = array<i64: 32, 64>}, {pipeline_mode = #tpu.pipeline_mode<synchronous>, transform_indices = @transform_13, window_bounds = array<i64: 1, 64>}, {pipeline_mode = #tpu.pipeline_mode<synchronous>, transform_indices = @transform_14, window_bounds = array<i64: 1, 64>}, {pipeline_mode = #tpu.pipeline_mode<synchronous>, transform_indices = @transform_15, window_bounds = array<i64: 1, 64>}, {pipeline_mode = #tpu.pipeline_mode<synchronous>, transform_indices = @transform_16, window_bounds = array<i64: 32, 64>}, {pipeline_mode = #tpu.pipeline_mode<synchronous>, transform_indices = @transform_17, window_bounds = array<i64: 1, 64>}, {pipeline_mode = #tpu.pipeline_mode<synchronous>, transform_indices = @transform_18, window_bounds = array<i64: 64, 32>}, {pipeline_mode = #tpu.pipeline_mode<synchronous>, transform_indices = @transform_19, window_bounds = array<i64: 1, 32>}, {pipeline_mode = #tpu.pipeline_mode<synchronous>, transform_indices = @transform_20, window_bounds = array<i64: 1, 32>}, {pipeline_mode = #tpu.pipeline_mode<synchronous>, transform_indices = @transform_21, window_bounds = array<i64: 1, 32>}, {pipeline_mode = #tpu.pipeline_mode<synchronous>, transform_indices = @transform_22, window_bounds = array<i64: 64, 128>}, {pipeline_mode = #tpu.pipeline_mode<synchronous>, transform_indices = @transform_23, window_bounds = array<i64: 1, 128>}, {pipeline_mode = #tpu.pipeline_mode<synchronous>, transform_indices = @transform_24, window_bounds = array<i64: 128, 64>}, {pipeline_mode = #tpu.pipeline_mode<synchronous>, transform_indices = @transform_25, window_bounds = array<i64: 1, 64>}, {pipeline_mode = #tpu.pipeline_mode<synchronous>, transform_indices = @transform_26, window_bounds = array<i64: 1, 64>}, {pipeline_mode = #tpu.pipeline_mode<synchronous>, transform_indices = @transform_27, window_bounds = array<i64: 1, 64>}, {transform_indices = @transform_28, window_bounds = array<i64: 1, 8, 32>}, {transform_indices = @transform_29, window_bounds = array<i64: 1, 16, 64>}]} {
    %c0 = arith.constant 0 : index
    %c0_0 = arith.constant 0 : index
    %c0_1 = arith.constant 0 : index
    %0 = vector.load %arg1[%c0, %c0_0, %c0_1] : memref<1x8x32xf32, #tpu.memory_space<vmem>>, vector<1x8x32xf32>
    %1 = vector.shape_cast %0 : vector<1x8x32xf32> to vector<8x32xf32>
    %c0_2 = arith.constant 0 : index
    %c0_3 = arith.constant 0 : index
    %c0_4 = arith.constant 0 : index
    %2 = vector.load %arg2[%c0_2, %c0_3, %c0_4] : memref<1x16x64xf32, #tpu.memory_space<vmem>>, vector<1x16x64xf32>
    %3 = vector.shape_cast %2 : vector<1x16x64xf32> to vector<16x64xf32>
    %c0_5 = arith.constant 0 : index
    %c0_6 = arith.constant 0 : index
    %c0_7 = arith.constant 0 : index
    %4 = vector.load %arg3[%c0_5, %c0_6, %c0_7] : memref<1x1x8xf32, #tpu.memory_space<vmem>>, vector<1x1x8xf32>
    %5 = vector.shape_cast %4 : vector<1x1x8xf32> to vector<1x8xf32>
    %c0_8 = arith.constant 0 : index
    %c0_9 = arith.constant 0 : index
    %c0_10 = arith.constant 0 : index
    %6 = vector.load %arg4[%c0_8, %c0_9, %c0_10] : memref<1x1x16xf32, #tpu.memory_space<vmem>>, vector<1x1x16xf32>
    %7 = vector.shape_cast %6 : vector<1x1x16xf32> to vector<1x16xf32>
    %c0_11 = arith.constant 0 : index
    %c0_12 = arith.constant 0 : index
    %8 = vector.load %arg6[%c0_11, %c0_12] : memref<1x96xf32, #tpu.memory_space<vmem>>, vector<1x96xf32>
    %c0_13 = arith.constant 0 : index
    %c0_14 = arith.constant 0 : index
    %9 = vector.load %arg8[%c0_13, %c0_14] : memref<1x96xf32, #tpu.memory_space<vmem>>, vector<1x96xf32>
    %c0_15 = arith.constant 0 : index
    %c0_16 = arith.constant 0 : index
    %10 = vector.load %arg10[%c0_15, %c0_16] : memref<1x32xf32, #tpu.memory_space<vmem>>, vector<1x32xf32>
    %c0_17 = arith.constant 0 : index
    %c0_18 = arith.constant 0 : index
    %11 = vector.load %arg11[%c0_17, %c0_18] : memref<1x32xf32, #tpu.memory_space<vmem>>, vector<1x32xf32>
    %c0_19 = arith.constant 0 : index
    %c0_20 = arith.constant 0 : index
    %12 = vector.load %arg12[%c0_19, %c0_20] : memref<1x32xf32, #tpu.memory_space<vmem>>, vector<1x32xf32>
    %c0_21 = arith.constant 0 : index
    %c0_22 = arith.constant 0 : index
    %13 = vector.load %arg14[%c0_21, %c0_22] : memref<1x64xf32, #tpu.memory_space<vmem>>, vector<1x64xf32>
    %c0_23 = arith.constant 0 : index
    %c0_24 = arith.constant 0 : index
    %14 = vector.load %arg15[%c0_23, %c0_24] : memref<1x64xf32, #tpu.memory_space<vmem>>, vector<1x64xf32>
    %c0_25 = arith.constant 0 : index
    %c0_26 = arith.constant 0 : index
    %15 = vector.load %arg16[%c0_25, %c0_26] : memref<1x64xf32, #tpu.memory_space<vmem>>, vector<1x64xf32>
    %c0_27 = arith.constant 0 : index
    %c0_28 = arith.constant 0 : index
    %16 = vector.load %arg18[%c0_27, %c0_28] : memref<1x64xf32, #tpu.memory_space<vmem>>, vector<1x64xf32>
    %c0_29 = arith.constant 0 : index
    %c0_30 = arith.constant 0 : index
    %17 = vector.load %arg20[%c0_29, %c0_30] : memref<1x32xf32, #tpu.memory_space<vmem>>, vector<1x32xf32>
    %c0_31 = arith.constant 0 : index
    %c0_32 = arith.constant 0 : index
    %18 = vector.load %arg21[%c0_31, %c0_32] : memref<1x32xf32, #tpu.memory_space<vmem>>, vector<1x32xf32>
    %c0_33 = arith.constant 0 : index
    %c0_34 = arith.constant 0 : index
    %19 = vector.load %arg22[%c0_33, %c0_34] : memref<1x32xf32, #tpu.memory_space<vmem>>, vector<1x32xf32>
    %c0_35 = arith.constant 0 : index
    %c0_36 = arith.constant 0 : index
    %20 = vector.load %arg24[%c0_35, %c0_36] : memref<1x128xf32, #tpu.memory_space<vmem>>, vector<1x128xf32>
    %c0_37 = arith.constant 0 : index
    %c0_38 = arith.constant 0 : index
    %21 = vector.load %arg26[%c0_37, %c0_38] : memref<1x64xf32, #tpu.memory_space<vmem>>, vector<1x64xf32>
    %c0_39 = arith.constant 0 : index
    %c0_40 = arith.constant 0 : index
    %22 = vector.load %arg27[%c0_39, %c0_40] : memref<1x64xf32, #tpu.memory_space<vmem>>, vector<1x64xf32>
    %c0_41 = arith.constant 0 : index
    %c0_42 = arith.constant 0 : index
    %23 = vector.load %arg28[%c0_41, %c0_42] : memref<1x64xf32, #tpu.memory_space<vmem>>, vector<1x64xf32>
    %24 = arith.truncf %1 : vector<8x32xf32> to vector<8x32xbf16>
    %25 = arith.truncf %3 : vector<16x64xf32> to vector<16x64xbf16>
    %c0_43 = arith.constant 0 : index
    %c0_44 = arith.constant 0 : index
    %26 = vector.load %arg5[%c0_43, %c0_44] : memref<32x96xbf16, #tpu.memory_space<vmem>>, vector<32x96xbf16>
    %cst = arith.constant dense<0.000000e+00> : vector<8x96xf32>
    %27 = tpu.matmul %24, %26, %cst {dimension_numbers = #tpu.dot_dimension_numbers<[1], [0], [0], [1], [0, 0, 1, 1], [], []>} : vector<8x32xbf16>, vector<32x96xbf16>, vector<8x96xf32> -> vector<8x96xf32>
    %28 = vector.broadcast %8 : vector<1x96xf32> to vector<8x96xf32>
    %29 = arith.addf %27, %28 : vector<8x96xf32>
    %c0_45 = arith.constant 0 : index
    %c0_46 = arith.constant 0 : index
    %30 = vector.load %arg7[%c0_45, %c0_46] : memref<64x96xbf16, #tpu.memory_space<vmem>>, vector<64x96xbf16>
    %cst_47 = arith.constant dense<0.000000e+00> : vector<16x96xf32>
    %31 = tpu.matmul %25, %30, %cst_47 {dimension_numbers = #tpu.dot_dimension_numbers<[1], [0], [0], [1], [0, 0, 1, 1], [], []>} : vector<16x64xbf16>, vector<64x96xbf16>, vector<16x96xf32> -> vector<16x96xf32>
    %32 = vector.broadcast %9 : vector<1x96xf32> to vector<16x96xf32>
    %33 = arith.addf %31, %32 : vector<16x96xf32>
    %34 = vector.shape_cast %7 : vector<1x16xf32> to vector<1x16xf32>
    %35 = vector.broadcast %34 : vector<1x16xf32> to vector<8x16xf32>
    %36 = vector.extract_strided_slice %29 {offsets = [0, 0], sizes = [8, 16], strides = [1, 1]} : vector<8x96xf32> to vector<8x16xf32>
    %37 = arith.truncf %36 : vector<8x16xf32> to vector<8x16xbf16>
    %38 = vector.extract_strided_slice %33 {offsets = [0, 32], sizes = [16, 16], strides = [1, 1]} : vector<16x96xf32> to vector<16x16xf32>
    %39 = arith.truncf %38 : vector<16x16xf32> to vector<16x16xbf16>
    %40 = vector.extract_strided_slice %33 {offsets = [0, 64], sizes = [16, 16], strides = [1, 1]} : vector<16x96xf32> to vector<16x16xf32>
    %41 = arith.truncf %40 : vector<16x16xf32> to vector<16x16xbf16>
    %42 = tpu.transpose %39, [1, 0] : vector<16x16xbf16> -> vector<16x16xbf16>
    %cst_48 = arith.constant dense<0.000000e+00> : vector<8x16xf32>
    %43 = tpu.matmul %37, %42, %cst_48 {dimension_numbers = #tpu.dot_dimension_numbers<[1], [0], [0], [1], [0, 0, 1, 1], [], []>} : vector<8x16xbf16>, vector<16x16xbf16>, vector<8x16xf32> -> vector<8x16xf32>
    %cst_49 = arith.constant 2.500000e-01 : f32
    %44 = vector.broadcast %cst_49 : f32 to vector<8x16xf32>
    %45 = arith.mulf %43, %44 : vector<8x16xf32>
    %46 = arith.addf %45, %35 : vector<8x16xf32>
    %cst_50 = arith.constant dense<0xFF800000> : vector<8xf32>
    %47 = vector.multi_reduction <maximumf>, %46, %cst_50 [1] : vector<8x16xf32> to vector<8xf32>
    %48 = vector.shape_cast %47 : vector<8xf32> to vector<8x1xf32>
    %49 = vector.broadcast %48 : vector<8x1xf32> to vector<8x16xf32>
    %50 = arith.subf %46, %49 : vector<8x16xf32>
    %51 = math.exp %50 : vector<8x16xf32>
    %cst_51 = arith.constant dense<0.000000e+00> : vector<8xf32>
    %52 = vector.multi_reduction <add>, %51, %cst_51 [1] : vector<8x16xf32> to vector<8xf32>
    %53 = vector.shape_cast %52 : vector<8xf32> to vector<8x1xf32>
    %54 = tpu.reciprocal %53 {approx = true} : vector<8x1xf32> -> vector<8x1xf32>
    %55 = vector.broadcast %54 : vector<8x1xf32> to vector<8x16xf32>
    %56 = arith.mulf %51, %55 : vector<8x16xf32>
    %57 = arith.truncf %56 : vector<8x16xf32> to vector<8x16xbf16>
    %cst_52 = arith.constant dense<0.000000e+00> : vector<8x16xf32>
    %58 = tpu.matmul %57, %41, %cst_52 {dimension_numbers = #tpu.dot_dimension_numbers<[1], [0], [0], [1], [0, 0, 1, 1], [], []>} : vector<8x16xbf16>, vector<16x16xbf16>, vector<8x16xf32> -> vector<8x16xf32>
    %59 = vector.extract_strided_slice %29 {offsets = [0, 16], sizes = [8, 16], strides = [1, 1]} : vector<8x96xf32> to vector<8x16xf32>
    %60 = arith.truncf %59 : vector<8x16xf32> to vector<8x16xbf16>
    %61 = vector.extract_strided_slice %33 {offsets = [0, 48], sizes = [16, 16], strides = [1, 1]} : vector<16x96xf32> to vector<16x16xf32>
    %62 = arith.truncf %61 : vector<16x16xf32> to vector<16x16xbf16>
    %63 = vector.extract_strided_slice %33 {offsets = [0, 80], sizes = [16, 16], strides = [1, 1]} : vector<16x96xf32> to vector<16x16xf32>
    %64 = arith.truncf %63 : vector<16x16xf32> to vector<16x16xbf16>
    %65 = tpu.transpose %62, [1, 0] : vector<16x16xbf16> -> vector<16x16xbf16>
    %cst_53 = arith.constant dense<0.000000e+00> : vector<8x16xf32>
    %66 = tpu.matmul %60, %65, %cst_53 {dimension_numbers = #tpu.dot_dimension_numbers<[1], [0], [0], [1], [0, 0, 1, 1], [], []>} : vector<8x16xbf16>, vector<16x16xbf16>, vector<8x16xf32> -> vector<8x16xf32>
    %cst_54 = arith.constant 2.500000e-01 : f32
    %67 = vector.broadcast %cst_54 : f32 to vector<8x16xf32>
    %68 = arith.mulf %66, %67 : vector<8x16xf32>
    %69 = arith.addf %68, %35 : vector<8x16xf32>
    %cst_55 = arith.constant dense<0xFF800000> : vector<8xf32>
    %70 = vector.multi_reduction <maximumf>, %69, %cst_55 [1] : vector<8x16xf32> to vector<8xf32>
    %71 = vector.shape_cast %70 : vector<8xf32> to vector<8x1xf32>
    %72 = vector.broadcast %71 : vector<8x1xf32> to vector<8x16xf32>
    %73 = arith.subf %69, %72 : vector<8x16xf32>
    %74 = math.exp %73 : vector<8x16xf32>
    %cst_56 = arith.constant dense<0.000000e+00> : vector<8xf32>
    %75 = vector.multi_reduction <add>, %74, %cst_56 [1] : vector<8x16xf32> to vector<8xf32>
    %76 = vector.shape_cast %75 : vector<8xf32> to vector<8x1xf32>
    %77 = tpu.reciprocal %76 {approx = true} : vector<8x1xf32> -> vector<8x1xf32>
    %78 = vector.broadcast %77 : vector<8x1xf32> to vector<8x16xf32>
    %79 = arith.mulf %74, %78 : vector<8x16xf32>
    %80 = arith.truncf %79 : vector<8x16xf32> to vector<8x16xbf16>
    %cst_57 = arith.constant dense<0.000000e+00> : vector<8x16xf32>
    %81 = tpu.matmul %80, %64, %cst_57 {dimension_numbers = #tpu.dot_dimension_numbers<[1], [0], [0], [1], [0, 0, 1, 1], [], []>} : vector<8x16xbf16>, vector<16x16xbf16>, vector<8x16xf32> -> vector<8x16xf32>
    %82 = tpu.concatenate %58, %81 in 1 : vector<8x16xf32>, vector<8x16xf32> -> vector<8x32xf32>
    %83 = vector.shape_cast %5 : vector<1x8xf32> to vector<1x8xf32>
    %84 = vector.broadcast %83 : vector<1x8xf32> to vector<16x8xf32>
    %85 = vector.extract_strided_slice %33 {offsets = [0, 0], sizes = [16, 16], strides = [1, 1]} : vector<16x96xf32> to vector<16x16xf32>
    %86 = arith.truncf %85 : vector<16x16xf32> to vector<16x16xbf16>
    %87 = vector.extract_strided_slice %29 {offsets = [0, 32], sizes = [8, 16], strides = [1, 1]} : vector<8x96xf32> to vector<8x16xf32>
    %88 = arith.truncf %87 : vector<8x16xf32> to vector<8x16xbf16>
    %89 = vector.extract_strided_slice %29 {offsets = [0, 64], sizes = [8, 16], strides = [1, 1]} : vector<8x96xf32> to vector<8x16xf32>
    %90 = arith.truncf %89 : vector<8x16xf32> to vector<8x16xbf16>
    %91 = tpu.transpose %88, [1, 0] : vector<8x16xbf16> -> vector<16x8xbf16>
    %cst_58 = arith.constant dense<0.000000e+00> : vector<16x8xf32>
    %92 = tpu.matmul %86, %91, %cst_58 {dimension_numbers = #tpu.dot_dimension_numbers<[1], [0], [0], [1], [0, 0, 1, 1], [], []>} : vector<16x16xbf16>, vector<16x8xbf16>, vector<16x8xf32> -> vector<16x8xf32>
    %cst_59 = arith.constant 2.500000e-01 : f32
    %93 = vector.broadcast %cst_59 : f32 to vector<16x8xf32>
    %94 = arith.mulf %92, %93 : vector<16x8xf32>
    %95 = arith.addf %94, %84 : vector<16x8xf32>
    %cst_60 = arith.constant dense<0xFF800000> : vector<16xf32>
    %96 = vector.multi_reduction <maximumf>, %95, %cst_60 [1] : vector<16x8xf32> to vector<16xf32>
    %97 = vector.shape_cast %96 : vector<16xf32> to vector<16x1xf32>
    %98 = vector.broadcast %97 : vector<16x1xf32> to vector<16x8xf32>
    %99 = arith.subf %95, %98 : vector<16x8xf32>
    %100 = math.exp %99 : vector<16x8xf32>
    %cst_61 = arith.constant dense<0.000000e+00> : vector<16xf32>
    %101 = vector.multi_reduction <add>, %100, %cst_61 [1] : vector<16x8xf32> to vector<16xf32>
    %102 = vector.shape_cast %101 : vector<16xf32> to vector<16x1xf32>
    %103 = tpu.reciprocal %102 {approx = true} : vector<16x1xf32> -> vector<16x1xf32>
    %104 = vector.broadcast %103 : vector<16x1xf32> to vector<16x8xf32>
    %105 = arith.mulf %100, %104 : vector<16x8xf32>
    %106 = arith.truncf %105 : vector<16x8xf32> to vector<16x8xbf16>
    %cst_62 = arith.constant dense<0.000000e+00> : vector<16x16xf32>
    %107 = tpu.matmul %106, %90, %cst_62 {dimension_numbers = #tpu.dot_dimension_numbers<[1], [0], [0], [1], [0, 0, 1, 1], [], []>} : vector<16x8xbf16>, vector<8x16xbf16>, vector<16x16xf32> -> vector<16x16xf32>
    %108 = vector.extract_strided_slice %33 {offsets = [0, 16], sizes = [16, 16], strides = [1, 1]} : vector<16x96xf32> to vector<16x16xf32>
    %109 = arith.truncf %108 : vector<16x16xf32> to vector<16x16xbf16>
    %110 = vector.extract_strided_slice %29 {offsets = [0, 48], sizes = [8, 16], strides = [1, 1]} : vector<8x96xf32> to vector<8x16xf32>
    %111 = arith.truncf %110 : vector<8x16xf32> to vector<8x16xbf16>
    %112 = vector.extract_strided_slice %29 {offsets = [0, 80], sizes = [8, 16], strides = [1, 1]} : vector<8x96xf32> to vector<8x16xf32>
    %113 = arith.truncf %112 : vector<8x16xf32> to vector<8x16xbf16>
    %114 = tpu.transpose %111, [1, 0] : vector<8x16xbf16> -> vector<16x8xbf16>
    %cst_63 = arith.constant dense<0.000000e+00> : vector<16x8xf32>
    %115 = tpu.matmul %109, %114, %cst_63 {dimension_numbers = #tpu.dot_dimension_numbers<[1], [0], [0], [1], [0, 0, 1, 1], [], []>} : vector<16x16xbf16>, vector<16x8xbf16>, vector<16x8xf32> -> vector<16x8xf32>
    %cst_64 = arith.constant 2.500000e-01 : f32
    %116 = vector.broadcast %cst_64 : f32 to vector<16x8xf32>
    %117 = arith.mulf %115, %116 : vector<16x8xf32>
    %118 = arith.addf %117, %84 : vector<16x8xf32>
    %cst_65 = arith.constant dense<0xFF800000> : vector<16xf32>
    %119 = vector.multi_reduction <maximumf>, %118, %cst_65 [1] : vector<16x8xf32> to vector<16xf32>
    %120 = vector.shape_cast %119 : vector<16xf32> to vector<16x1xf32>
    %121 = vector.broadcast %120 : vector<16x1xf32> to vector<16x8xf32>
    %122 = arith.subf %118, %121 : vector<16x8xf32>
    %123 = math.exp %122 : vector<16x8xf32>
    %cst_66 = arith.constant dense<0.000000e+00> : vector<16xf32>
    %124 = vector.multi_reduction <add>, %123, %cst_66 [1] : vector<16x8xf32> to vector<16xf32>
    %125 = vector.shape_cast %124 : vector<16xf32> to vector<16x1xf32>
    %126 = tpu.reciprocal %125 {approx = true} : vector<16x1xf32> -> vector<16x1xf32>
    %127 = vector.broadcast %126 : vector<16x1xf32> to vector<16x8xf32>
    %128 = arith.mulf %123, %127 : vector<16x8xf32>
    %129 = arith.truncf %128 : vector<16x8xf32> to vector<16x8xbf16>
    %cst_67 = arith.constant dense<0.000000e+00> : vector<16x16xf32>
    %130 = tpu.matmul %129, %113, %cst_67 {dimension_numbers = #tpu.dot_dimension_numbers<[1], [0], [0], [1], [0, 0, 1, 1], [], []>} : vector<16x8xbf16>, vector<8x16xbf16>, vector<16x16xf32> -> vector<16x16xf32>
    %131 = tpu.concatenate %107, %130 in 1 : vector<16x16xf32>, vector<16x16xf32> -> vector<16x32xf32>
    %132 = arith.truncf %82 : vector<8x32xf32> to vector<8x32xbf16>
    %c0_68 = arith.constant 0 : index
    %c0_69 = arith.constant 0 : index
    %133 = vector.load %arg9[%c0_68, %c0_69] : memref<32x32xbf16, #tpu.memory_space<vmem>>, vector<32x32xbf16>
    %cst_70 = arith.constant dense<0.000000e+00> : vector<8x32xf32>
    %134 = tpu.matmul %132, %133, %cst_70 {dimension_numbers = #tpu.dot_dimension_numbers<[1], [0], [0], [1], [0, 0, 1, 1], [], []>} : vector<8x32xbf16>, vector<32x32xbf16>, vector<8x32xf32> -> vector<8x32xf32>
    %135 = vector.broadcast %10 : vector<1x32xf32> to vector<8x32xf32>
    %136 = arith.addf %134, %135 : vector<8x32xf32>
    %137 = arith.addf %136, %1 : vector<8x32xf32>
    %cst_71 = arith.constant dense<0.000000e+00> : vector<8xf32>
    %138 = vector.multi_reduction <add>, %137, %cst_71 [1] : vector<8x32xf32> to vector<8xf32>
    %139 = vector.shape_cast %138 : vector<8xf32> to vector<8x1xf32>
    %cst_72 = arith.constant 3.200000e+01 : f32
    %140 = vector.broadcast %cst_72 : f32 to vector<8x1xf32>
    %141 = arith.divf %139, %140 : vector<8x1xf32>
    %142 = vector.broadcast %141 : vector<8x1xf32> to vector<8x32xf32>
    %143 = arith.subf %137, %142 : vector<8x32xf32>
    %144 = arith.mulf %143, %143 : vector<8x32xf32>
    %cst_73 = arith.constant dense<0.000000e+00> : vector<8xf32>
    %145 = vector.multi_reduction <add>, %144, %cst_73 [1] : vector<8x32xf32> to vector<8xf32>
    %146 = vector.shape_cast %145 : vector<8xf32> to vector<8x1xf32>
    %cst_74 = arith.constant 3.200000e+01 : f32
    %147 = vector.broadcast %cst_74 : f32 to vector<8x1xf32>
    %148 = arith.divf %146, %147 : vector<8x1xf32>
    %cst_75 = arith.constant 9.99999996E-13 : f32
    %149 = vector.broadcast %cst_75 : f32 to vector<8x1xf32>
    %150 = arith.addf %148, %149 : vector<8x1xf32>
    %151 = math.rsqrt %150 : vector<8x1xf32>
    %152 = vector.broadcast %151 : vector<8x1xf32> to vector<8x32xf32>
    %153 = arith.mulf %143, %152 : vector<8x32xf32>
    %154 = vector.broadcast %11 : vector<1x32xf32> to vector<8x32xf32>
    %155 = arith.mulf %153, %154 : vector<8x32xf32>
    %156 = vector.broadcast %12 : vector<1x32xf32> to vector<8x32xf32>
    %157 = arith.addf %155, %156 : vector<8x32xf32>
    %158 = arith.truncf %131 : vector<16x32xf32> to vector<16x32xbf16>
    %c0_76 = arith.constant 0 : index
    %c0_77 = arith.constant 0 : index
    %159 = vector.load %arg13[%c0_76, %c0_77] : memref<32x64xbf16, #tpu.memory_space<vmem>>, vector<32x64xbf16>
    %cst_78 = arith.constant dense<0.000000e+00> : vector<16x64xf32>
    %160 = tpu.matmul %158, %159, %cst_78 {dimension_numbers = #tpu.dot_dimension_numbers<[1], [0], [0], [1], [0, 0, 1, 1], [], []>} : vector<16x32xbf16>, vector<32x64xbf16>, vector<16x64xf32> -> vector<16x64xf32>
    %161 = vector.broadcast %13 : vector<1x64xf32> to vector<16x64xf32>
    %162 = arith.addf %160, %161 : vector<16x64xf32>
    %163 = arith.addf %162, %3 : vector<16x64xf32>
    %cst_79 = arith.constant dense<0.000000e+00> : vector<16xf32>
    %164 = vector.multi_reduction <add>, %163, %cst_79 [1] : vector<16x64xf32> to vector<16xf32>
    %165 = vector.shape_cast %164 : vector<16xf32> to vector<16x1xf32>
    %cst_80 = arith.constant 6.400000e+01 : f32
    %166 = vector.broadcast %cst_80 : f32 to vector<16x1xf32>
    %167 = arith.divf %165, %166 : vector<16x1xf32>
    %168 = vector.broadcast %167 : vector<16x1xf32> to vector<16x64xf32>
    %169 = arith.subf %163, %168 : vector<16x64xf32>
    %170 = arith.mulf %169, %169 : vector<16x64xf32>
    %cst_81 = arith.constant dense<0.000000e+00> : vector<16xf32>
    %171 = vector.multi_reduction <add>, %170, %cst_81 [1] : vector<16x64xf32> to vector<16xf32>
    %172 = vector.shape_cast %171 : vector<16xf32> to vector<16x1xf32>
    %cst_82 = arith.constant 6.400000e+01 : f32
    %173 = vector.broadcast %cst_82 : f32 to vector<16x1xf32>
    %174 = arith.divf %172, %173 : vector<16x1xf32>
    %cst_83 = arith.constant 9.99999996E-13 : f32
    %175 = vector.broadcast %cst_83 : f32 to vector<16x1xf32>
    %176 = arith.addf %174, %175 : vector<16x1xf32>
    %177 = math.rsqrt %176 : vector<16x1xf32>
    %178 = vector.broadcast %177 : vector<16x1xf32> to vector<16x64xf32>
    %179 = arith.mulf %169, %178 : vector<16x64xf32>
    %180 = vector.broadcast %14 : vector<1x64xf32> to vector<16x64xf32>
    %181 = arith.mulf %179, %180 : vector<16x64xf32>
    %182 = vector.broadcast %15 : vector<1x64xf32> to vector<16x64xf32>
    %183 = arith.addf %181, %182 : vector<16x64xf32>
    %184 = arith.truncf %157 : vector<8x32xf32> to vector<8x32xbf16>
    %c0_84 = arith.constant 0 : index
    %c0_85 = arith.constant 0 : index
    %185 = vector.load %arg17[%c0_84, %c0_85] : memref<32x64xbf16, #tpu.memory_space<vmem>>, vector<32x64xbf16>
    %cst_86 = arith.constant dense<0.000000e+00> : vector<8x64xf32>
    %186 = tpu.matmul %184, %185, %cst_86 {dimension_numbers = #tpu.dot_dimension_numbers<[1], [0], [0], [1], [0, 0, 1, 1], [], []>} : vector<8x32xbf16>, vector<32x64xbf16>, vector<8x64xf32> -> vector<8x64xf32>
    %187 = vector.broadcast %16 : vector<1x64xf32> to vector<8x64xf32>
    %188 = arith.addf %186, %187 : vector<8x64xf32>
    %cst_87 = arith.constant 5.000000e-01 : f32
    %189 = vector.broadcast %cst_87 : f32 to vector<8x64xf32>
    %190 = arith.mulf %189, %188 : vector<8x64xf32>
    %cst_88 = arith.constant 4.471500e-02 : f32
    %191 = vector.broadcast %cst_88 : f32 to vector<8x64xf32>
    %192 = arith.mulf %191, %188 : vector<8x64xf32>
    %193 = arith.mulf %192, %188 : vector<8x64xf32>
    %194 = arith.mulf %193, %188 : vector<8x64xf32>
    %195 = arith.addf %188, %194 : vector<8x64xf32>
    %cst_89 = arith.constant 0.797884583 : f32
    %196 = vector.broadcast %cst_89 : f32 to vector<8x64xf32>
    %197 = arith.mulf %196, %195 : vector<8x64xf32>
    %198 = math.tanh %197 : vector<8x64xf32>
    %cst_90 = arith.constant 1.000000e+00 : f32
    %199 = vector.broadcast %cst_90 : f32 to vector<8x64xf32>
    %200 = arith.addf %199, %198 : vector<8x64xf32>
    %201 = arith.mulf %190, %200 : vector<8x64xf32>
    %202 = arith.truncf %201 : vector<8x64xf32> to vector<8x64xbf16>
    %c0_91 = arith.constant 0 : index
    %c0_92 = arith.constant 0 : index
    %203 = vector.load %arg19[%c0_91, %c0_92] : memref<64x32xbf16, #tpu.memory_space<vmem>>, vector<64x32xbf16>
    %cst_93 = arith.constant dense<0.000000e+00> : vector<8x32xf32>
    %204 = tpu.matmul %202, %203, %cst_93 {dimension_numbers = #tpu.dot_dimension_numbers<[1], [0], [0], [1], [0, 0, 1, 1], [], []>} : vector<8x64xbf16>, vector<64x32xbf16>, vector<8x32xf32> -> vector<8x32xf32>
    %205 = vector.broadcast %17 : vector<1x32xf32> to vector<8x32xf32>
    %206 = arith.addf %204, %205 : vector<8x32xf32>
    %207 = arith.addf %206, %157 : vector<8x32xf32>
    %cst_94 = arith.constant dense<0.000000e+00> : vector<8xf32>
    %208 = vector.multi_reduction <add>, %207, %cst_94 [1] : vector<8x32xf32> to vector<8xf32>
    %209 = vector.shape_cast %208 : vector<8xf32> to vector<8x1xf32>
    %cst_95 = arith.constant 3.200000e+01 : f32
    %210 = vector.broadcast %cst_95 : f32 to vector<8x1xf32>
    %211 = arith.divf %209, %210 : vector<8x1xf32>
    %212 = vector.broadcast %211 : vector<8x1xf32> to vector<8x32xf32>
    %213 = arith.subf %207, %212 : vector<8x32xf32>
    %214 = arith.mulf %213, %213 : vector<8x32xf32>
    %cst_96 = arith.constant dense<0.000000e+00> : vector<8xf32>
    %215 = vector.multi_reduction <add>, %214, %cst_96 [1] : vector<8x32xf32> to vector<8xf32>
    %216 = vector.shape_cast %215 : vector<8xf32> to vector<8x1xf32>
    %cst_97 = arith.constant 3.200000e+01 : f32
    %217 = vector.broadcast %cst_97 : f32 to vector<8x1xf32>
    %218 = arith.divf %216, %217 : vector<8x1xf32>
    %cst_98 = arith.constant 9.99999996E-13 : f32
    %219 = vector.broadcast %cst_98 : f32 to vector<8x1xf32>
    %220 = arith.addf %218, %219 : vector<8x1xf32>
    %221 = math.rsqrt %220 : vector<8x1xf32>
    %222 = vector.broadcast %221 : vector<8x1xf32> to vector<8x32xf32>
    %223 = arith.mulf %213, %222 : vector<8x32xf32>
    %224 = vector.broadcast %18 : vector<1x32xf32> to vector<8x32xf32>
    %225 = arith.mulf %223, %224 : vector<8x32xf32>
    %226 = vector.broadcast %19 : vector<1x32xf32> to vector<8x32xf32>
    %227 = arith.addf %225, %226 : vector<8x32xf32>
    %228 = arith.truncf %183 : vector<16x64xf32> to vector<16x64xbf16>
    %c0_99 = arith.constant 0 : index
    %c0_100 = arith.constant 0 : index
    %229 = vector.load %arg23[%c0_99, %c0_100] : memref<64x128xbf16, #tpu.memory_space<vmem>>, vector<64x128xbf16>
    %cst_101 = arith.constant dense<0.000000e+00> : vector<16x128xf32>
    %230 = tpu.matmul %228, %229, %cst_101 {dimension_numbers = #tpu.dot_dimension_numbers<[1], [0], [0], [1], [0, 0, 1, 1], [], []>} : vector<16x64xbf16>, vector<64x128xbf16>, vector<16x128xf32> -> vector<16x128xf32>
    %231 = vector.broadcast %20 : vector<1x128xf32> to vector<16x128xf32>
    %232 = arith.addf %230, %231 : vector<16x128xf32>
    %cst_102 = arith.constant 5.000000e-01 : f32
    %233 = vector.broadcast %cst_102 : f32 to vector<16x128xf32>
    %234 = arith.mulf %233, %232 : vector<16x128xf32>
    %cst_103 = arith.constant 4.471500e-02 : f32
    %235 = vector.broadcast %cst_103 : f32 to vector<16x128xf32>
    %236 = arith.mulf %235, %232 : vector<16x128xf32>
    %237 = arith.mulf %236, %232 : vector<16x128xf32>
    %238 = arith.mulf %237, %232 : vector<16x128xf32>
    %239 = arith.addf %232, %238 : vector<16x128xf32>
    %cst_104 = arith.constant 0.797884583 : f32
    %240 = vector.broadcast %cst_104 : f32 to vector<16x128xf32>
    %241 = arith.mulf %240, %239 : vector<16x128xf32>
    %242 = math.tanh %241 : vector<16x128xf32>
    %cst_105 = arith.constant 1.000000e+00 : f32
    %243 = vector.broadcast %cst_105 : f32 to vector<16x128xf32>
    %244 = arith.addf %243, %242 : vector<16x128xf32>
    %245 = arith.mulf %234, %244 : vector<16x128xf32>
    %246 = arith.truncf %245 : vector<16x128xf32> to vector<16x128xbf16>
    %c0_106 = arith.constant 0 : index
    %c0_107 = arith.constant 0 : index
    %247 = vector.load %arg25[%c0_106, %c0_107] : memref<128x64xbf16, #tpu.memory_space<vmem>>, vector<128x64xbf16>
    %cst_108 = arith.constant dense<0.000000e+00> : vector<16x64xf32>
    %248 = tpu.matmul %246, %247, %cst_108 {dimension_numbers = #tpu.dot_dimension_numbers<[1], [0], [0], [1], [0, 0, 1, 1], [], []>} : vector<16x128xbf16>, vector<128x64xbf16>, vector<16x64xf32> -> vector<16x64xf32>
    %249 = vector.broadcast %21 : vector<1x64xf32> to vector<16x64xf32>
    %250 = arith.addf %248, %249 : vector<16x64xf32>
    %251 = arith.addf %250, %183 : vector<16x64xf32>
    %cst_109 = arith.constant dense<0.000000e+00> : vector<16xf32>
    %252 = vector.multi_reduction <add>, %251, %cst_109 [1] : vector<16x64xf32> to vector<16xf32>
    %253 = vector.shape_cast %252 : vector<16xf32> to vector<16x1xf32>
    %cst_110 = arith.constant 6.400000e+01 : f32
    %254 = vector.broadcast %cst_110 : f32 to vector<16x1xf32>
    %255 = arith.divf %253, %254 : vector<16x1xf32>
    %256 = vector.broadcast %255 : vector<16x1xf32> to vector<16x64xf32>
    %257 = arith.subf %251, %256 : vector<16x64xf32>
    %258 = arith.mulf %257, %257 : vector<16x64xf32>
    %cst_111 = arith.constant dense<0.000000e+00> : vector<16xf32>
    %259 = vector.multi_reduction <add>, %258, %cst_111 [1] : vector<16x64xf32> to vector<16xf32>
    %260 = vector.shape_cast %259 : vector<16xf32> to vector<16x1xf32>
    %cst_112 = arith.constant 6.400000e+01 : f32
    %261 = vector.broadcast %cst_112 : f32 to vector<16x1xf32>
    %262 = arith.divf %260, %261 : vector<16x1xf32>
    %cst_113 = arith.constant 9.99999996E-13 : f32
    %263 = vector.broadcast %cst_113 : f32 to vector<16x1xf32>
    %264 = arith.addf %262, %263 : vector<16x1xf32>
    %265 = math.rsqrt %264 : vector<16x1xf32>
    %266 = vector.broadcast %265 : vector<16x1xf32> to vector<16x64xf32>
    %267 = arith.mulf %257, %266 : vector<16x64xf32>
    %268 = vector.broadcast %22 : vector<1x64xf32> to vector<16x64xf32>
    %269 = arith.mulf %267, %268 : vector<16x64xf32>
    %270 = vector.broadcast %23 : vector<1x64xf32> to vector<16x64xf32>
    %271 = arith.addf %269, %270 : vector<16x64xf32>
    %c0_114 = arith.constant 0 : index
    %c0_115 = arith.constant 0 : index
    %c0_116 = arith.constant 0 : index
    %272 = vector.load %arg29[%c0_114, %c0_115, %c0_116] : memref<1x8x32xf32, #tpu.memory_space<vmem>>, vector<1x8x32xf32>
    %273 = vector.shape_cast %272 : vector<1x8x32xf32> to vector<8x32xf32>
    %274 = vector.shape_cast %227 : vector<8x32xf32> to vector<1x8x32xf32>
    tpu.vector_store %arg29[%c0_114, %c0_115, %c0_116], %274 {strides = array<i32>} : memref<1x8x32xf32, #tpu.memory_space<vmem>>, vector<1x8x32xf32>,
    %c0_117 = arith.constant 0 : index
    %c0_118 = arith.constant 0 : index
    %c0_119 = arith.constant 0 : index
    %275 = vector.load %arg30[%c0_117, %c0_118, %c0_119] : memref<1x16x64xf32, #tpu.memory_space<vmem>>, vector<1x16x64xf32>
    %276 = vector.shape_cast %275 : vector<1x16x64xf32> to vector<16x64xf32>
    %277 = vector.shape_cast %271 : vector<16x64xf32> to vector<1x16x64xf32>
    tpu.vector_store %arg30[%c0_117, %c0_118, %c0_119], %277 {strides = array<i32>} : memref<1x16x64xf32, #tpu.memory_space<vmem>>, vector<1x16x64xf32>,
    return
  }
  func.func @transform_0(%arg0: i32) -> (i32, i32, i32) {
    %c0_i32 = arith.constant 0 : i32
    %c0_i32_0 = arith.constant 0 : i32
    %c0_i32_1 = arith.constant 0 : i32
    return %arg0, %c0_i32, %c0_i32_0 : i32, i32, i32
  }
  func.func @transform_1(%arg0: i32) -> (i32, i32, i32) {
    %c0_i32 = arith.constant 0 : i32
    %c0_i32_0 = arith.constant 0 : i32
    %c0_i32_1 = arith.constant 0 : i32
    return %arg0, %c0_i32, %c0_i32_0 : i32, i32, i32
  }
  func.func @transform_2(%arg0: i32) -> (i32, i32, i32) {
    %c0_i32 = arith.constant 0 : i32
    %c0_i32_0 = arith.constant 0 : i32
    %c0_i32_1 = arith.constant 0 : i32
    return %arg0, %c0_i32, %c0_i32_0 : i32, i32, i32
  }
  func.func @transform_3(%arg0: i32) -> (i32, i32, i32) {
    %c0_i32 = arith.constant 0 : i32
    %c0_i32_0 = arith.constant 0 : i32
    %c0_i32_1 = arith.constant 0 : i32
    return %arg0, %c0_i32, %c0_i32_0 : i32, i32, i32
  }
  func.func @transform_4(%arg0: i32) -> (i32, i32) {
    %c0_i32 = arith.constant 0 : i32
    %c0_i32_0 = arith.constant 0 : i32
    %c0_i32_1 = arith.constant 0 : i32
    return %c0_i32, %c0_i32_0 : i32, i32
  }
  func.func @transform_5(%arg0: i32) -> (i32, i32) {
    %c0_i32 = arith.constant 0 : i32
    %c0_i32_0 = arith.constant 0 : i32
    %c0_i32_1 = arith.constant 0 : i32
    return %c0_i32, %c0_i32_0 : i32, i32
  }
  func.func @transform_6(%arg0: i32) -> (i32, i32) {
    %c0_i32 = arith.constant 0 : i32
    %c0_i32_0 = arith.constant 0 : i32
    %c0_i32_1 = arith.constant 0 : i32
    return %c0_i32, %c0_i32_0 : i32, i32
  }
  func.func @transform_7(%arg0: i32) -> (i32, i32) {
    %c0_i32 = arith.constant 0 : i32
    %c0_i32_0 = arith.constant 0 : i32
    %c0_i32_1 = arith.constant 0 : i32
    return %c0_i32, %c0_i32_0 : i32, i32
  }
  func.func @transform_8(%arg0: i32) -> (i32, i32) {
    %c0_i32 = arith.constant 0 : i32
    %c0_i32_0 = arith.constant 0 : i32
    %c0_i32_1 = arith.constant 0 : i32
    return %c0_i32, %c0_i32_0 : i32, i32
  }
  func.func @transform_9(%arg0: i32) -> (i32, i32) {
    %c0_i32 = arith.constant 0 : i32
    %c0_i32_0 = arith.constant 0 : i32
    %c0_i32_1 = arith.constant 0 : i32
    return %c0_i32, %c0_i32_0 : i32, i32
  }
  func.func @transform_10(%arg0: i32) -> (i32, i32) {
    %c0_i32 = arith.constant 0 : i32
    %c0_i32_0 = arith.constant 0 : i32
    %c0_i32_1 = arith.constant 0 : i32
    return %c0_i32, %c0_i32_0 : i32, i32
  }
  func.func @transform_11(%arg0: i32) -> (i32, i32) {
    %c0_i32 = arith.constant 0 : i32
    %c0_i32_0 = arith.constant 0 : i32
    %c0_i32_1 = arith.constant 0 : i32
    return %c0_i32, %c0_i32_0 : i32, i32
  }
  func.func @transform_12(%arg0: i32) -> (i32, i32) {
    %c0_i32 = arith.constant 0 : i32
    %c0_i32_0 = arith.constant 0 : i32
    %c0_i32_1 = arith.constant 0 : i32
    return %c0_i32, %c0_i32_0 : i32, i32
  }
  func.func @transform_13(%arg0: i32) -> (i32, i32) {
    %c0_i32 = arith.constant 0 : i32
    %c0_i32_0 = arith.constant 0 : i32
    %c0_i32_1 = arith.constant 0 : i32
    return %c0_i32, %c0_i32_0 : i32, i32
  }
  func.func @transform_14(%arg0: i32) -> (i32, i32) {
    %c0_i32 = arith.constant 0 : i32
    %c0_i32_0 = arith.constant 0 : i32
    %c0_i32_1 = arith.constant 0 : i32
    return %c0_i32, %c0_i32_0 : i32, i32
  }
  func.func @transform_15(%arg0: i32) -> (i32, i32) {
    %c0_i32 = arith.constant 0 : i32
    %c0_i32_0 = arith.constant 0 : i32
    %c0_i32_1 = arith.constant 0 : i32
    return %c0_i32, %c0_i32_0 : i32, i32
  }
  func.func @transform_16(%arg0: i32) -> (i32, i32) {
    %c0_i32 = arith.constant 0 : i32
    %c0_i32_0 = arith.constant 0 : i32
    %c0_i32_1 = arith.constant 0 : i32
    return %c0_i32, %c0_i32_0 : i32, i32
  }
  func.func @transform_17(%arg0: i32) -> (i32, i32) {
    %c0_i32 = arith.constant 0 : i32
    %c0_i32_0 = arith.constant 0 : i32
    %c0_i32_1 = arith.constant 0 : i32
    return %c0_i32, %c0_i32_0 : i32, i32
  }
  func.func @transform_18(%arg0: i32) -> (i32, i32) {
    %c0_i32 = arith.constant 0 : i32
    %c0_i32_0 = arith.constant 0 : i32
    %c0_i32_1 = arith.constant 0 : i32
    return %c0_i32, %c0_i32_0 : i32, i32
  }
  func.func @transform_19(%arg0: i32) -> (i32, i32) {
    %c0_i32 = arith.constant 0 : i32
    %c0_i32_0 = arith.constant 0 : i32
    %c0_i32_1 = arith.constant 0 : i32
    return %c0_i32, %c0_i32_0 : i32, i32
  }
  func.func @transform_20(%arg0: i32) -> (i32, i32) {
    %c0_i32 = arith.constant 0 : i32
    %c0_i32_0 = arith.constant 0 : i32
    %c0_i32_1 = arith.constant 0 : i32
    return %c0_i32, %c0_i32_0 : i32, i32
  }
  func.func @transform_21(%arg0: i32) -> (i32, i32) {
    %c0_i32 = arith.constant 0 : i32
    %c0_i32_0 = arith.constant 0 : i32
    %c0_i32_1 = arith.constant 0 : i32
    return %c0_i32, %c0_i32_0 : i32, i32
  }
  func.func @transform_22(%arg0: i32) -> (i32, i32) {
    %c0_i32 = arith.constant 0 : i32
    %c0_i32_0 = arith.constant 0 : i32
    %c0_i32_1 = arith.constant 0 : i32
    return %c0_i32, %c0_i32_0 : i32, i32
  }
  func.func @transform_23(%arg0: i32) -> (i32, i32) {
    %c0_i32 = arith.constant 0 : i32
    %c0_i32_0 = arith.constant 0 : i32
    %c0_i32_1 = arith.constant 0 : i32
    return %c0_i32, %c0_i32_0 : i32, i32
  }
  func.func @transform_24(%arg0: i32) -> (i32, i32) {
    %c0_i32 = arith.constant 0 : i32
    %c0_i32_0 = arith.constant 0 : i32
    %c0_i32_1 = arith.constant 0 : i32
    return %c0_i32, %c0_i32_0 : i32, i32
  }
  func.func @transform_25(%arg0: i32) -> (i32, i32) {
    %c0_i32 = arith.constant 0 : i32
    %c0_i32_0 = arith.constant 0 : i32
    %c0_i32_1 = arith.constant 0 : i32
    return %c0_i32, %c0_i32_0 : i32, i32
  }
  func.func @transform_26(%arg0: i32) -> (i32, i32) {
    %c0_i32 = arith.constant 0 : i32
    %c0_i32_0 = arith.constant 0 : i32
    %c0_i32_1 = arith.constant 0 : i32
    return %c0_i32, %c0_i32_0 : i32, i32
  }
  func.func @transform_27(%arg0: i32) -> (i32, i32) {
    %c0_i32 = arith.constant 0 : i32
    %c0_i32_0 = arith.constant 0 : i32
    %c0_i32_1 = arith.constant 0 : i32
    return %c0_i32, %c0_i32_0 : i32, i32
  }
  func.func @transform_28(%arg0: i32) -> (i32, i32, i32) {
    %c0_i32 = arith.constant 0 : i32
    %c0_i32_0 = arith.constant 0 : i32
    %c0_i32_1 = arith.constant 0 : i32
    return %arg0, %c0_i32, %c0_i32_0 : i32, i32, i32
  }
  func.func @transform_29(%arg0: i32) -> (i32, i32, i32) {
    %c0_i32 = arith.constant 0 : i32
    %c0_i32_0 = arith.constant 0 : i32
    %c0_i32_1 = arith.constant 0 : i32
    return %arg0, %c0_i32, %c0_i32_0 : i32, i32, i32
  }
}

</mosaic_0001>

<llo_original>
// kernel: bert_cross_layer_forward.1
$region0: #{bert_cross_layer_forward.1}
  #allocation0 [shape = 'u32[]', space=smem, size = 0x4, offset = 0x4, fixed_abs, tag = 'smem constant byte address 0x4 - core index']
  #allocation1 [shape = 'u32[144,128]{1,0:T(1,128)}', space=vmem, size = 0x12000, scoped, tag = 'internal scratch']
  %s0 = inlined_call_operand.smem [shape: u32[30], index: -1, kind: input, shape index: {}]
  %s1 = sld [smem:[%s0]]
  %s2 = scalar_lea.smem %s0, 1
  %s3 = sld [smem:[%s2]]
  %s4 = scalar_lea.smem %s0, 2
  %s5 = sld [smem:[%s4]]
  %s6 = scalar_lea.smem %s0, 3
  %s7 = sld [smem:[%s6]]
  %s8 = scalar_lea.smem %s0, 4
  %s9 = sld [smem:[%s8]]
  %s10 = scalar_lea.smem %s0, 5
  %s11 = sld [smem:[%s10]]
  %s12 = scalar_lea.smem %s0, 6
  %s13 = sld [smem:[%s12]]
  %s14 = scalar_lea.smem %s0, 7
  %s15 = sld [smem:[%s14]]
  %s16 = scalar_lea.smem %s0, 8
  %s17 = sld [smem:[%s16]]
  %s18 = scalar_lea.smem %s0, 9
  %s19 = sld [smem:[%s18]]
  %s20 = scalar_lea.smem %s0, 10
  %s21 = sld [smem:[%s20]]
  %s22 = scalar_lea.smem %s0, 11
  %s23 = sld [smem:[%s22]]
  %s24 = scalar_lea.smem %s0, 12
  %s25 = sld [smem:[%s24]]
  %s26 = scalar_lea.smem %s0, 13
  %s27 = sld [smem:[%s26]]
  %s28 = scalar_lea.smem %s0, 14
  %s29 = sld [smem:[%s28]]
  %s30 = scalar_lea.smem %s0, 15
  %s31 = sld [smem:[%s30]]
  %s32 = scalar_lea.smem %s0, 16
  %s33 = sld [smem:[%s32]]
  %s34 = scalar_lea.smem %s0, 17
  %s35 = sld [smem:[%s34]]
  %s36 = scalar_lea.smem %s0, 18
  %s37 = sld [smem:[%s36]]
  %s38 = scalar_lea.smem %s0, 19
  %s39 = sld [smem:[%s38]]
  %s40 = scalar_lea.smem %s0, 20
  %s41 = sld [smem:[%s40]]
  %s42 = scalar_lea.smem %s0, 21
  %s43 = sld [smem:[%s42]]
  %s44 = scalar_lea.smem %s0, 22
  %s45 = sld [smem:[%s44]]
  %s46 = scalar_lea.smem %s0, 23
  %s47 = sld [smem:[%s46]]
  %s48 = scalar_lea.smem %s0, 24
  %s49 = sld [smem:[%s48]]
  %s50 = scalar_lea.smem %s0, 25
  %s51 = sld [smem:[%s50]]
  %s52 = scalar_lea.smem %s0, 26
  %s53 = sld [smem:[%s52]]
  %s54 = scalar_lea.smem %s0, 27
  %s55 = sld [smem:[%s54]]
  %s56 = scalar_lea.smem %s0, 28
  %s57 = sld [smem:[%s56]]
  %s58 = scalar_lea.smem %s0, 29
  %s59 = sld [smem:[%s58]]
  %60 = xla_tuple %s57, %s59
  %s61 = sld [smem:[#allocation0]]
  $region189: #{bert_cross_layer_forward.1} parent=0
    _
  %s63 = ssub.s32 1, %s61
  %s64 = scalar_select 0, %s63, %s61
  $region1: #{bert_cross_layer_forward.1} parent=0
    #allocation2 [shape = 'u8[8192]{0}', space=vmem, size = 0x2000, scoped, tag = 'input window, operand 0']
    #allocation3 [shape = 's32[2]{0}', space=sflag, size = 0x8, scoped, tag = 'scoped memory for bert_cross_layer_forward.1']
    #allocation4 [shape = 's32[2]{0}', space=sflag, size = 0x8, scoped, tag = 'scoped memory for bert_cross_layer_forward.1']
    #allocation5 [shape = 'u8[16384]{0}', space=vmem, size = 0x4000, scoped, tag = 'input window, operand 1']
    #allocation6 [shape = 's32[2]{0}', space=sflag, size = 0x8, scoped, tag = 'scoped memory for bert_cross_layer_forward.1']
    #allocation7 [shape = 'u8[8192]{0}', space=vmem, size = 0x2000, scoped, tag = 'input window, operand 4, single buffered']
    #allocation8 [shape = 'u8[16384]{0}', space=vmem, size = 0x4000, scoped, tag = 'input window, operand 6, single buffered']
    #allocation9 [shape = 's32[1]{0}', space=sflag, size = 0x4, scoped, tag = 'scoped memory for bert_cross_layer_forward.1']
    #allocation10 [shape = 'u8[8192]{0}', space=vmem, size = 0x2000, scoped, tag = 'input window, operand 8, single buffered']
    #allocation11 [shape = 'u8[8192]{0}', space=vmem, size = 0x2000, scoped, tag = 'input window, operand 12, single buffered']
    #allocation12 [shape = 's32[1]{0}', space=sflag, size = 0x4, scoped, tag = 'scoped memory for bert_cross_layer_forward.1']
    #allocation13 [shape = 'u8[8192]{0}', space=vmem, size = 0x2000, scoped, tag = 'input window, operand 16, single buffered']
    #allocation14 [shape = 'u8[16384]{0}', space=vmem, size = 0x4000, scoped, tag = 'input window, operand 18, single buffered']
    #allocation15 [shape = 's32[1]{0}', space=sflag, size = 0x4, scoped, tag = 'scoped memory for bert_cross_layer_forward.1']
    #allocation16 [shape = 'u8[32768]{0}', space=vmem, size = 0x8000, scoped, tag = 'input window, operand 24, single buffered']
    #allocation17 [shape = 'u8[8192]{0}', space=vmem, size = 0x2000, scoped, tag = 'output window, operand 0']
    #allocation18 [shape = 'u8[16384]{0}', space=vmem, size = 0x4000, scoped, tag = 'output window, operand 1']
    #allocation19 [shape = 's32[2]{0}', space=sflag, size = 0x8, scoped, tag = 'scoped memory for bert_cross_layer_forward.1']
    %65 = vsyncpa [#allocation3], 0
    %s66 = scalar_lea.sflag [#allocation3], 1
    %67 = vsyncpa %s66, 0
    %68 = vsyncpa [#allocation6], 0
    %s69 = scalar_lea.sflag [#allocation6], 1
    %70 = vsyncpa %s69, 0
    %71 = vsyncpa [#allocation9], 0
    %72 = vsyncpa [#allocation12], 0
    %73 = vsyncpa [#allocation15], 0
    %74 = vsyncpa [#allocation4], 0
    %s75 = scalar_lea.sflag [#allocation4], 1
    %76 = vsyncpa %s75, 0
    %77 = vsyncpa [#allocation19], 0
    %s78 = scalar_lea.sflag [#allocation19], 1
    %79 = vsyncpa %s78, 0
    loop: start=0, step=1, limit=4
    $region2: #{bert_cross_layer_forward.1} parent=1 // loop_pre_header
      _
    $region3: #{bert_cross_layer_forward.1} parent=1 // loop_header
      %s81 = sphi 0, %s85
      %p82 = scmp.ge.s32.totalorder %s81, 4
      %s91 = sphi 0, %s93
      %s94 = sphi 0, %s91
      %s95 = sphi 0, %s94
      %s111 = sphi 0, %s95
      %s117 = sphi 0, %s119
      %s120 = sphi 0, %s117
      %s121 = sphi 0, %s120
      %s137 = sphi 0, %s121
      %s143 = sphi 0, %s145
      %s146 = sphi 0, %s143
      %s147 = sphi 0, %s146
      %s163 = sphi 0, %s147
      %s169 = sphi 0, %s171
      %s172 = sphi 0, %s169
      %s173 = sphi 0, %s172
      %s189 = sphi 0, %s173
      %s193 = sphi 0, %s193
      %s195 = sphi 0, %s193
      %s196 = sphi 0, %s195
      %s210 = sphi 0, %s196
      %s214 = sphi 0, %s214
      %s216 = sphi 0, %s214
      %s217 = sphi 0, %s216
      %s231 = sphi 0, %s217
      %s235 = sphi 0, %s235
      %s237 = sphi 0, %s235
      %s238 = sphi 0, %s237
      %s252 = sphi 0, %s238
      %s256 = sphi 0, %s256
      %s258 = sphi 0, %s256
      %s259 = sphi 0, %s258
      %s273 = sphi 0, %s259
      %s277 = sphi 0, %s277
      %s279 = sphi 0, %s277
      %s280 = sphi 0, %s279
      %s294 = sphi 0, %s280
      %s298 = sphi 0, %s298
      %s300 = sphi 0, %s298
      %s301 = sphi 0, %s300
      %s315 = sphi 0, %s301
      %s319 = sphi 0, %s319
      %s321 = sphi 0, %s319
      %s322 = sphi 0, %s321
      %s336 = sphi 0, %s322
      %s340 = sphi 0, %s340
      %s342 = sphi 0, %s340
      %s343 = sphi 0, %s342
      %s357 = sphi 0, %s343
      %s361 = sphi 0, %s361
      %s363 = sphi 0, %s361
      %s364 = sphi 0, %s363
      %s378 = sphi 0, %s364
      %s382 = sphi 0, %s382
      %s384 = sphi 0, %s382
      %s385 = sphi 0, %s384
      %s399 = sphi 0, %s385
      %s403 = sphi 0, %s403
      %s405 = sphi 0, %s403
      %s406 = sphi 0, %s405
      %s420 = sphi 0, %s406
      %s424 = sphi 0, %s424
      %s426 = sphi 0, %s424
      %s427 = sphi 0, %s426
      %s441 = sphi 0, %s427
      %s445 = sphi 0, %s445
      %s447 = sphi 0, %s445
      %s448 = sphi 0, %s447
      %s462 = sphi 0, %s448
      %s466 = sphi 0, %s466
      %s468 = sphi 0, %s466
      %s469 = sphi 0, %s468
      %s483 = sphi 0, %s469
      %s487 = sphi 0, %s487
      %s489 = sphi 0, %s487
      %s490 = sphi 0, %s489
      %s504 = sphi 0, %s490
      %s508 = sphi 0, %s508
      %s510 = sphi 0, %s508
      %s511 = sphi 0, %s510
      %s525 = sphi 0, %s511
      %s529 = sphi 0, %s529
      %s531 = sphi 0, %s529
      %s532 = sphi 0, %s531
      %s546 = sphi 0, %s532
      %s550 = sphi 0, %s550
      %s552 = sphi 0, %s550
      %s553 = sphi 0, %s552
      %s567 = sphi 0, %s553
      %s571 = sphi 0, %s571
      %s573 = sphi 0, %s571
      %s574 = sphi 0, %s573
      %s588 = sphi 0, %s574
      %s592 = sphi 0, %s592
      %s594 = sphi 0, %s592
      %s595 = sphi 0, %s594
      %s609 = sphi 0, %s595
      %s613 = sphi 0, %s613
      %s615 = sphi 0, %s613
      %s616 = sphi 0, %s615
      %s630 = sphi 0, %s616
      %s634 = sphi 0, %s634
      %s636 = sphi 0, %s634
      %s637 = sphi 0, %s636
      %s651 = sphi 0, %s637
      %s655 = sphi 0, %s655
      %s657 = sphi 0, %s655
      %s658 = sphi 0, %s657
      %s672 = sphi 0, %s658
      %s676 = sphi 0, %s676
      %s678 = sphi 0, %s676
      %s679 = sphi 0, %s678
      %s693 = sphi 0, %s679
      %s699 = sphi 0, %s701
      %s702 = sphi 0, %s699
      %s703 = sphi 0, %s702
      %s719 = sphi 0, %s703
      %s725 = sphi 0, %s727
      %s728 = sphi 0, %s725
      %s729 = sphi 0, %s728
      %s745 = sphi 0, %s729
    $region4: #{bert_cross_layer_forward.1} parent=1 // loop_header_branch
      %84 = sbr.rel (%p82) target = $region8
    $region5: #{bert_cross_layer_forward.1} parent=1 // loop_body
      %s86 = ssub.s32 %s81, 1
      %s87 = ssub.s32 %s81, 2
      %s88 = sadd.s32 %s81, 1
      %s89 = ssub.s32 %s81, %s88
      %p90 = scmp.eq.s32.totalorder %s89, 0
      %s92 = sadd.s32 %s91, 1
      %s93 = scalar_select %p90, %s91, %s92
      %p96 = pneg %p90
      %p97 = scmp.eq.s32.totalorder %s81, 1
      %p98 = por %p96, %p97
      %p99 = scmp.ne.s32.totalorder %s91, %s94
      %p100 = scmp.eq.s32.totalorder %s81, 0
      %p101 = por %p99, %p100
      %p102 = scmp.ne.s32.totalorder %s91, %s94
      %p103 = scmp.eq.s32.totalorder %s86, 1
      %p104 = por %p102, %p103
      %p105 = scmp.ne.s32.totalorder %s94, %s95
      %p106 = scmp.eq.s32.totalorder %s86, 0
      %p107 = por %p105, %p106
      %p108 = scmp.ne.s32.totalorder %s94, %s95
      %p109 = scmp.eq.s32.totalorder %s87, 1
      %p110 = por %p108, %p109
      %p112 = scmp.ne.s32.totalorder %s95, %s111
      %p113 = scmp.eq.s32.totalorder %s87, 0
      %p114 = por %p112, %p113
      %s115 = ssub.s32 %s81, %s88
      %p116 = scmp.eq.s32.totalorder %s115, 0
      %s118 = sadd.s32 %s117, 1
      %s119 = scalar_select %p116, %s117, %s118
      %p122 = pneg %p116
      %p123 = scmp.eq.s32.totalorder %s81, 1
      %p124 = por %p122, %p123
      %p125 = scmp.ne.s32.totalorder %s117, %s120
      %p126 = scmp.eq.s32.totalorder %s81, 0
      %p127 = por %p125, %p126
      %p128 = scmp.ne.s32.totalorder %s117, %s120
      %p129 = scmp.eq.s32.totalorder %s86, 1
      %p130 = por %p128, %p129
      %p131 = scmp.ne.s32.totalorder %s120, %s121
      %p132 = scmp.eq.s32.totalorder %s86, 0
      %p133 = por %p131, %p132
      %p134 = scmp.ne.s32.totalorder %s120, %s121
      %p135 = scmp.eq.s32.totalorder %s87, 1
      %p136 = por %p134, %p135
      %p138 = scmp.ne.s32.totalorder %s121, %s137
      %p139 = scmp.eq.s32.totalorder %s87, 0
      %p140 = por %p138, %p139
      %s141 = ssub.s32 %s81, %s88
      %p142 = scmp.eq.s32.totalorder %s141, 0
      %s144 = sadd.s32 %s143, 1
      %s145 = scalar_select %p142, %s143, %s144
      %p148 = pneg %p142
      %p149 = scmp.eq.s32.totalorder %s81, 1
      %p150 = por %p148, %p149
      %p151 = scmp.ne.s32.totalorder %s143, %s146
      %p152 = scmp.eq.s32.totalorder %s81, 0
      %p153 = por %p151, %p152
      %p154 = scmp.ne.s32.totalorder %s143, %s146
      %p155 = scmp.eq.s32.totalorder %s86, 1
      %p156 = por %p154, %p155
      %p157 = scmp.ne.s32.totalorder %s146, %s147
      %p158 = scmp.eq.s32.totalorder %s86, 0
      %p159 = por %p157, %p158
      %p160 = scmp.ne.s32.totalorder %s146, %s147
      %p161 = scmp.eq.s32.totalorder %s87, 1
      %p162 = por %p160, %p161
      %p164 = scmp.ne.s32.totalorder %s147, %s163
      %p165 = scmp.eq.s32.totalorder %s87, 0
      %p166 = por %p164, %p165
      %s167 = ssub.s32 %s81, %s88
      %p168 = scmp.eq.s32.totalorder %s167, 0
      %s170 = sadd.s32 %s169, 1
      %s171 = scalar_select %p168, %s169, %s170
      %p174 = pneg %p168
      %p175 = scmp.eq.s32.totalorder %s81, 1
      %p176 = por %p174, %p175
      %p177 = scmp.ne.s32.totalorder %s169, %s172
      %p178 = scmp.eq.s32.totalorder %s81, 0
      %p179 = por %p177, %p178
      %p180 = scmp.ne.s32.totalorder %s169, %s172
      %p181 = scmp.eq.s32.totalorder %s86, 1
      %p182 = por %p180, %p181
      %p183 = scmp.ne.s32.totalorder %s172, %s173
      %p184 = scmp.eq.s32.totalorder %s86, 0
      %p185 = por %p183, %p184
      %p186 = scmp.ne.s32.totalorder %s172, %s173
      %p187 = scmp.eq.s32.totalorder %s87, 1
      %p188 = por %p186, %p187
      %p190 = scmp.ne.s32.totalorder %s173, %s189
      %p191 = scmp.eq.s32.totalorder %s87, 0
      %p192 = por %p190, %p191
      %s194 = sadd.s32 %s193, 1
      %p197 = scmp.eq.s32.totalorder %s81, 1
      %p198 = scmp.ne.s32.totalorder %s193, %s195
      %p199 = scmp.eq.s32.totalorder %s81, 0
      %p200 = por %p198, %p199
      %p201 = scmp.ne.s32.totalorder %s193, %s195
      %p202 = scmp.eq.s32.totalorder %s86, 1
      %p203 = por %p201, %p202
      %p204 = scmp.ne.s32.totalorder %s195, %s196
      %p205 = scmp.eq.s32.totalorder %s86, 0
      %p206 = por %p204, %p205
      %p207 = scmp.ne.s32.totalorder %s195, %s196
      %p208 = scmp.eq.s32.totalorder %s87, 1
      %p209 = por %p207, %p208
      %p211 = scmp.ne.s32.totalorder %s196, %s210
      %p212 = scmp.eq.s32.totalorder %s87, 0
      %p213 = por %p211, %p212
      %s215 = sadd.s32 %s214, 1
      %p218 = scmp.eq.s32.totalorder %s81, 1
      %p219 = scmp.ne.s32.totalorder %s214, %s216
      %p220 = scmp.eq.s32.totalorder %s81, 0
      %p221 = por %p219, %p220
      %p222 = scmp.ne.s32.totalorder %s214, %s216
      %p223 = scmp.eq.s32.totalorder %s86, 1
      %p224 = por %p222, %p223
      %p225 = scmp.ne.s32.totalorder %s216, %s217
      %p226 = scmp.eq.s32.totalorder %s86, 0
      %p227 = por %p225, %p226
      %p228 = scmp.ne.s32.totalorder %s216, %s217
      %p229 = scmp.eq.s32.totalorder %s87, 1
      %p230 = por %p228, %p229
      %p232 = scmp.ne.s32.totalorder %s217, %s231
      %p233 = scmp.eq.s32.totalorder %s87, 0
      %p234 = por %p232, %p233
      %s236 = sadd.s32 %s235, 1
      %p239 = scmp.eq.s32.totalorder %s81, 1
      %p240 = scmp.ne.s32.totalorder %s235, %s237
      %p241 = scmp.eq.s32.totalorder %s81, 0
      %p242 = por %p240, %p241
      %p243 = scmp.ne.s32.totalorder %s235, %s237
      %p244 = scmp.eq.s32.totalorder %s86, 1
      %p245 = por %p243, %p244
      %p246 = scmp.ne.s32.totalorder %s237, %s238
      %p247 = scmp.eq.s32.totalorder %s86, 0
      %p248 = por %p246, %p247
      %p249 = scmp.ne.s32.totalorder %s237, %s238
      %p250 = scmp.eq.s32.totalorder %s87, 1
      %p251 = por %p249, %p250
      %p253 = scmp.ne.s32.totalorder %s238, %s252
      %p254 = scmp.eq.s32.totalorder %s87, 0
      %p255 = por %p253, %p254
      %s257 = sadd.s32 %s256, 1
      %p260 = scmp.eq.s32.totalorder %s81, 1
      %p261 = scmp.ne.s32.totalorder %s256, %s258
      %p262 = scmp.eq.s32.totalorder %s81, 0
      %p263 = por %p261, %p262
      %p264 = scmp.ne.s32.totalorder %s256, %s258
      %p265 = scmp.eq.s32.totalorder %s86, 1
      %p266 = por %p264, %p265
      %p267 = scmp.ne.s32.totalorder %s258, %s259
      %p268 = scmp.eq.s32.totalorder %s86, 0
      %p269 = por %p267, %p268
      %p270 = scmp.ne.s32.totalorder %s258, %s259
      %p271 = scmp.eq.s32.totalorder %s87, 1
      %p272 = por %p270, %p271
      %p274 = scmp.ne.s32.totalorder %s259, %s273
      %p275 = scmp.eq.s32.totalorder %s87, 0
      %p276 = por %p274, %p275
      %s278 = sadd.s32 %s277, 1
      %p281 = scmp.eq.s32.totalorder %s81, 1
      %p282 = scmp.ne.s32.totalorder %s277, %s279
      %p283 = scmp.eq.s32.totalorder %s81, 0
      %p284 = por %p282, %p283
      %p285 = scmp.ne.s32.totalorder %s277, %s279
      %p286 = scmp.eq.s32.totalorder %s86, 1
      %p287 = por %p285, %p286
      %p288 = scmp.ne.s32.totalorder %s279, %s280
      %p289 = scmp.eq.s32.totalorder %s86, 0
      %p290 = por %p288, %p289
      %p291 = scmp.ne.s32.totalorder %s279, %s280
      %p292 = scmp.eq.s32.totalorder %s87, 1
      %p293 = por %p291, %p292
      %p295 = scmp.ne.s32.totalorder %s280, %s294
      %p296 = scmp.eq.s32.totalorder %s87, 0
      %p297 = por %p295, %p296
      %s299 = sadd.s32 %s298, 1
      %p302 = scmp.eq.s32.totalorder %s81, 1
      %p303 = scmp.ne.s32.totalorder %s298, %s300
      %p304 = scmp.eq.s32.totalorder %s81, 0
      %p305 = por %p303, %p304
      %p306 = scmp.ne.s32.totalorder %s298, %s300
      %p307 = scmp.eq.s32.totalorder %s86, 1
      %p308 = por %p306, %p307
      %p309 = scmp.ne.s32.totalorder %s300, %s301
      %p310 = scmp.eq.s32.totalorder %s86, 0
      %p311 = por %p309, %p310
      %p312 = scmp.ne.s32.totalorder %s300, %s301
      %p313 = scmp.eq.s32.totalorder %s87, 1
      %p314 = por %p312, %p313
      %p316 = scmp.ne.s32.totalorder %s301, %s315
      %p317 = scmp.eq.s32.totalorder %s87, 0
      %p318 = por %p316, %p317
      %s320 = sadd.s32 %s319, 1
      %p323 = scmp.eq.s32.totalorder %s81, 1
      %p324 = scmp.ne.s32.totalorder %s319, %s321
      %p325 = scmp.eq.s32.totalorder %s81, 0
      %p326 = por %p324, %p325
      %p327 = scmp.ne.s32.totalorder %s319, %s321
      %p328 = scmp.eq.s32.totalorder %s86, 1
      %p329 = por %p327, %p328
      %p330 = scmp.ne.s32.totalorder %s321, %s322
      %p331 = scmp.eq.s32.totalorder %s86, 0
      %p332 = por %p330, %p331
      %p333 = scmp.ne.s32.totalorder %s321, %s322
      %p334 = scmp.eq.s32.totalorder %s87, 1
      %p335 = por %p333, %p334
      %p337 = scmp.ne.s32.totalorder %s322, %s336
      %p338 = scmp.eq.s32.totalorder %s87, 0
      %p339 = por %p337, %p338
      %s341 = sadd.s32 %s340, 1
      %p344 = scmp.eq.s32.totalorder %s81, 1
      %p345 = scmp.ne.s32.totalorder %s340, %s342
      %p346 = scmp.eq.s32.totalorder %s81, 0
      %p347 = por %p345, %p346
      %p348 = scmp.ne.s32.totalorder %s340, %s342
      %p349 = scmp.eq.s32.totalorder %s86, 1
      %p350 = por %p348, %p349
      %p351 = scmp.ne.s32.totalorder %s342, %s343
      %p352 = scmp.eq.s32.totalorder %s86, 0
      %p353 = por %p351, %p352
      %p354 = scmp.ne.s32.totalorder %s342, %s343
      %p355 = scmp.eq.s32.totalorder %s87, 1
      %p356 = por %p354, %p355
      %p358 = scmp.ne.s32.totalorder %s343, %s357
      %p359 = scmp.eq.s32.totalorder %s87, 0
      %p360 = por %p358, %p359
      %s362 = sadd.s32 %s361, 1
      %p365 = scmp.eq.s32.totalorder %s81, 1
      %p366 = scmp.ne.s32.totalorder %s361, %s363
      %p367 = scmp.eq.s32.totalorder %s81, 0
      %p368 = por %p366, %p367
      %p369 = scmp.ne.s32.totalorder %s361, %s363
      %p370 = scmp.eq.s32.totalorder %s86, 1
      %p371 = por %p369, %p370
      %p372 = scmp.ne.s32.totalorder %s363, %s364
      %p373 = scmp.eq.s32.totalorder %s86, 0
      %p374 = por %p372, %p373
      %p375 = scmp.ne.s32.totalorder %s363, %s364
      %p376 = scmp.eq.s32.totalorder %s87, 1
      %p377 = por %p375, %p376
      %p379 = scmp.ne.s32.totalorder %s364, %s378
      %p380 = scmp.eq.s32.totalorder %s87, 0
      %p381 = por %p379, %p380
      %s383 = sadd.s32 %s382, 1
      %p386 = scmp.eq.s32.totalorder %s81, 1
      %p387 = scmp.ne.s32.totalorder %s382, %s384
      %p388 = scmp.eq.s32.totalorder %s81, 0
      %p389 = por %p387, %p388
      %p390 = scmp.ne.s32.totalorder %s382, %s384
      %p391 = scmp.eq.s32.totalorder %s86, 1
      %p392 = por %p390, %p391
      %p393 = scmp.ne.s32.totalorder %s384, %s385
      %p394 = scmp.eq.s32.totalorder %s86, 0
      %p395 = por %p393, %p394
      %p396 = scmp.ne.s32.totalorder %s384, %s385
      %p397 = scmp.eq.s32.totalorder %s87, 1
      %p398 = por %p396, %p397
      %p400 = scmp.ne.s32.totalorder %s385, %s399
      %p401 = scmp.eq.s32.totalorder %s87, 0
      %p402 = por %p400, %p401
      %s404 = sadd.s32 %s403, 1
      %p407 = scmp.eq.s32.totalorder %s81, 1
      %p408 = scmp.ne.s32.totalorder %s403, %s405
      %p409 = scmp.eq.s32.totalorder %s81, 0
      %p410 = por %p408, %p409
      %p411 = scmp.ne.s32.totalorder %s403, %s405
      %p412 = scmp.eq.s32.totalorder %s86, 1
      %p413 = por %p411, %p412
      %p414 = scmp.ne.s32.totalorder %s405, %s406
      %p415 = scmp.eq.s32.totalorder %s86, 0
      %p416 = por %p414, %p415
      %p417 = scmp.ne.s32.totalorder %s405, %s406
      %p418 = scmp.eq.s32.totalorder %s87, 1
      %p419 = por %p417, %p418
      %p421 = scmp.ne.s32.totalorder %s406, %s420
      %p422 = scmp.eq.s32.totalorder %s87, 0
      %p423 = por %p421, %p422
      %s425 = sadd.s32 %s424, 1
      %p428 = scmp.eq.s32.totalorder %s81, 1
      %p429 = scmp.ne.s32.totalorder %s424, %s426
      %p430 = scmp.eq.s32.totalorder %s81, 0
      %p431 = por %p429, %p430
      %p432 = scmp.ne.s32.totalorder %s424, %s426
      %p433 = scmp.eq.s32.totalorder %s86, 1
      %p434 = por %p432, %p433
      %p435 = scmp.ne.s32.totalorder %s426, %s427
      %p436 = scmp.eq.s32.totalorder %s86, 0
      %p437 = por %p435, %p436
      %p438 = scmp.ne.s32.totalorder %s426, %s427
      %p439 = scmp.eq.s32.totalorder %s87, 1
      %p440 = por %p438, %p439
      %p442 = scmp.ne.s32.totalorder %s427, %s441
      %p443 = scmp.eq.s32.totalorder %s87, 0
      %p444 = por %p442, %p443
      %s446 = sadd.s32 %s445, 1
      %p449 = scmp.eq.s32.totalorder %s81, 1
      %p450 = scmp.ne.s32.totalorder %s445, %s447
      %p451 = scmp.eq.s32.totalorder %s81, 0
      %p452 = por %p450, %p451
      %p453 = scmp.ne.s32.totalorder %s445, %s447
      %p454 = scmp.eq.s32.totalorder %s86, 1
      %p455 = por %p453, %p454
      %p456 = scmp.ne.s32.totalorder %s447, %s448
      %p457 = scmp.eq.s32.totalorder %s86, 0
      %p458 = por %p456, %p457
      %p459 = scmp.ne.s32.totalorder %s447, %s448
      %p460 = scmp.eq.s32.totalorder %s87, 1
      %p461 = por %p459, %p460
      %p463 = scmp.ne.s32.totalorder %s448, %s462
      %p464 = scmp.eq.s32.totalorder %s87, 0
      %p465 = por %p463, %p464
      %s467 = sadd.s32 %s466, 1
      %p470 = scmp.eq.s32.totalorder %s81, 1
      %p471 = scmp.ne.s32.totalorder %s466, %s468
      %p472 = scmp.eq.s32.totalorder %s81, 0
      %p473 = por %p471, %p472
      %p474 = scmp.ne.s32.totalorder %s466, %s468
      %p475 = scmp.eq.s32.totalorder %s86, 1
      %p476 = por %p474, %p475
      %p477 = scmp.ne.s32.totalorder %s468, %s469
      %p478 = scmp.eq.s32.totalorder %s86, 0
      %p479 = por %p477, %p478
      %p480 = scmp.ne.s32.totalorder %s468, %s469
      %p481 = scmp.eq.s32.totalorder %s87, 1
      %p482 = por %p480, %p481
      %p484 = scmp.ne.s32.totalorder %s469, %s483
      %p485 = scmp.eq.s32.totalorder %s87, 0
      %p486 = por %p484, %p485
      %s488 = sadd.s32 %s487, 1
      %p491 = scmp.eq.s32.totalorder %s81, 1
      %p492 = scmp.ne.s32.totalorder %s487, %s489
      %p493 = scmp.eq.s32.totalorder %s81, 0
      %p494 = por %p492, %p493
      %p495 = scmp.ne.s32.totalorder %s487, %s489
      %p496 = scmp.eq.s32.totalorder %s86, 1
      %p497 = por %p495, %p496
      %p498 = scmp.ne.s32.totalorder %s489, %s490
      %p499 = scmp.eq.s32.totalorder %s86, 0
      %p500 = por %p498, %p499
      %p501 = scmp.ne.s32.totalorder %s489, %s490
      %p502 = scmp.eq.s32.totalorder %s87, 1
      %p503 = por %p501, %p502
      %p505 = scmp.ne.s32.totalorder %s490, %s504
      %p506 = scmp.eq.s32.totalorder %s87, 0
      %p507 = por %p505, %p506
      %s509 = sadd.s32 %s508, 1
      %p512 = scmp.eq.s32.totalorder %s81, 1
      %p513 = scmp.ne.s32.totalorder %s508, %s510
      %p514 = scmp.eq.s32.totalorder %s81, 0
      %p515 = por %p513, %p514
      %p516 = scmp.ne.s32.totalorder %s508, %s510
      %p517 = scmp.eq.s32.totalorder %s86, 1
      %p518 = por %p516, %p517
      %p519 = scmp.ne.s32.totalorder %s510, %s511
      %p520 = scmp.eq.s32.totalorder %s86, 0
      %p521 = por %p519, %p520
      %p522 = scmp.ne.s32.totalorder %s510, %s511
      %p523 = scmp.eq.s32.totalorder %s87, 1
      %p524 = por %p522, %p523
      %p526 = scmp.ne.s32.totalorder %s511, %s525
      %p527 = scmp.eq.s32.totalorder %s87, 0
      %p528 = por %p526, %p527
      %s530 = sadd.s32 %s529, 1
      %p533 = scmp.eq.s32.totalorder %s81, 1
      %p534 = scmp.ne.s32.totalorder %s529, %s531
      %p535 = scmp.eq.s32.totalorder %s81, 0
      %p536 = por %p534, %p535
      %p537 = scmp.ne.s32.totalorder %s529, %s531
      %p538 = scmp.eq.s32.totalorder %s86, 1
      %p539 = por %p537, %p538
      %p540 = scmp.ne.s32.totalorder %s531, %s532
      %p541 = scmp.eq.s32.totalorder %s86, 0
      %p542 = por %p540, %p541
      %p543 = scmp.ne.s32.totalorder %s531, %s532
      %p544 = scmp.eq.s32.totalorder %s87, 1
      %p545 = por %p543, %p544
      %p547 = scmp.ne.s32.totalorder %s532, %s546
      %p548 = scmp.eq.s32.totalorder %s87, 0
      %p549 = por %p547, %p548
      %s551 = sadd.s32 %s550, 1
      %p554 = scmp.eq.s32.totalorder %s81, 1
      %p555 = scmp.ne.s32.totalorder %s550, %s552
      %p556 = scmp.eq.s32.totalorder %s81, 0
      %p557 = por %p555, %p556
      %p558 = scmp.ne.s32.totalorder %s550, %s552
      %p559 = scmp.eq.s32.totalorder %s86, 1
      %p560 = por %p558, %p559
      %p561 = scmp.ne.s32.totalorder %s552, %s553
      %p562 = scmp.eq.s32.totalorder %s86, 0
      %p563 = por %p561, %p562
      %p564 = scmp.ne.s32.totalorder %s552, %s553
      %p565 = scmp.eq.s32.totalorder %s87, 1
      %p566 = por %p564, %p565
      %p568 = scmp.ne.s32.totalorder %s553, %s567
      %p569 = scmp.eq.s32.totalorder %s87, 0
      %p570 = por %p568, %p569
      %s572 = sadd.s32 %s571, 1
      %p575 = scmp.eq.s32.totalorder %s81, 1
      %p576 = scmp.ne.s32.totalorder %s571, %s573
      %p577 = scmp.eq.s32.totalorder %s81, 0
      %p578 = por %p576, %p577
      %p579 = scmp.ne.s32.totalorder %s571, %s573
      %p580 = scmp.eq.s32.totalorder %s86, 1
      %p581 = por %p579, %p580
      %p582 = scmp.ne.s32.totalorder %s573, %s574
      %p583 = scmp.eq.s32.totalorder %s86, 0
      %p584 = por %p582, %p583
      %p585 = scmp.ne.s32.totalorder %s573, %s574
      %p586 = scmp.eq.s32.totalorder %s87, 1
      %p587 = por %p585, %p586
      %p589 = scmp.ne.s32.totalorder %s574, %s588
      %p590 = scmp.eq.s32.totalorder %s87, 0
      %p591 = por %p589, %p590
      %s593 = sadd.s32 %s592, 1
      %p596 = scmp.eq.s32.totalorder %s81, 1
      %p597 = scmp.ne.s32.totalorder %s592, %s594
      %p598 = scmp.eq.s32.totalorder %s81, 0
      %p599 = por %p597, %p598
      %p600 = scmp.ne.s32.totalorder %s592, %s594
      %p601 = scmp.eq.s32.totalorder %s86, 1
      %p602 = por %p600, %p601
      %p603 = scmp.ne.s32.totalorder %s594, %s595
      %p604 = scmp.eq.s32.totalorder %s86, 0
      %p605 = por %p603, %p604
      %p606 = scmp.ne.s32.totalorder %s594, %s595
      %p607 = scmp.eq.s32.totalorder %s87, 1
      %p608 = por %p606, %p607
      %p610 = scmp.ne.s32.totalorder %s595, %s609
      %p611 = scmp.eq.s32.totalorder %s87, 0
      %p612 = por %p610, %p611
      %s614 = sadd.s32 %s613, 1
      %p617 = scmp.eq.s32.totalorder %s81, 1
      %p618 = scmp.ne.s32.totalorder %s613, %s615
      %p619 = scmp.eq.s32.totalorder %s81, 0
      %p620 = por %p618, %p619
      %p621 = scmp.ne.s32.totalorder %s613, %s615
      %p622 = scmp.eq.s32.totalorder %s86, 1
      %p623 = por %p621, %p622
      %p624 = scmp.ne.s32.totalorder %s615, %s616
      %p625 = scmp.eq.s32.totalorder %s86, 0
      %p626 = por %p624, %p625
      %p627 = scmp.ne.s32.totalorder %s615, %s616
      %p628 = scmp.eq.s32.totalorder %s87, 1
      %p629 = por %p627, %p628
      %p631 = scmp.ne.s32.totalorder %s616, %s630
      %p632 = scmp.eq.s32.totalorder %s87, 0
      %p633 = por %p631, %p632
      %s635 = sadd.s32 %s634, 1
      %p638 = scmp.eq.s32.totalorder %s81, 1
      %p639 = scmp.ne.s32.totalorder %s634, %s636
      %p640 = scmp.eq.s32.totalorder %s81, 0
      %p641 = por %p639, %p640
      %p642 = scmp.ne.s32.totalorder %s634, %s636
      %p643 = scmp.eq.s32.totalorder %s86, 1
      %p644 = por %p642, %p643
      %p645 = scmp.ne.s32.totalorder %s636, %s637
      %p646 = scmp.eq.s32.totalorder %s86, 0
      %p647 = por %p645, %p646
      %p648 = scmp.ne.s32.totalorder %s636, %s637
      %p649 = scmp.eq.s32.totalorder %s87, 1
      %p650 = por %p648, %p649
      %p652 = scmp.ne.s32.totalorder %s637, %s651
      %p653 = scmp.eq.s32.totalorder %s87, 0
      %p654 = por %p652, %p653
      %s656 = sadd.s32 %s655, 1
      %p659 = scmp.eq.s32.totalorder %s81, 1
      %p660 = scmp.ne.s32.totalorder %s655, %s657
      %p661 = scmp.eq.s32.totalorder %s81, 0
      %p662 = por %p660, %p661
      %p663 = scmp.ne.s32.totalorder %s655, %s657
      %p664 = scmp.eq.s32.totalorder %s86, 1
      %p665 = por %p663, %p664
      %p666 = scmp.ne.s32.totalorder %s657, %s658
      %p667 = scmp.eq.s32.totalorder %s86, 0
      %p668 = por %p666, %p667
      %p669 = scmp.ne.s32.totalorder %s657, %s658
      %p670 = scmp.eq.s32.totalorder %s87, 1
      %p671 = por %p669, %p670
      %p673 = scmp.ne.s32.totalorder %s658, %s672
      %p674 = scmp.eq.s32.totalorder %s87, 0
      %p675 = por %p673, %p674
      %s677 = sadd.s32 %s676, 1
      %p680 = scmp.eq.s32.totalorder %s81, 1
      %p681 = scmp.ne.s32.totalorder %s676, %s678
      %p682 = scmp.eq.s32.totalorder %s81, 0
      %p683 = por %p681, %p682
      %p684 = scmp.ne.s32.totalorder %s676, %s678
      %p685 = scmp.eq.s32.totalorder %s86, 1
      %p686 = por %p684, %p685
      %p687 = scmp.ne.s32.totalorder %s678, %s679
      %p688 = scmp.eq.s32.totalorder %s86, 0
      %p689 = por %p687, %p688
      %p690 = scmp.ne.s32.totalorder %s678, %s679
      %p691 = scmp.eq.s32.totalorder %s87, 1
      %p692 = por %p690, %p691
      %p694 = scmp.ne.s32.totalorder %s679, %s693
      %p695 = scmp.eq.s32.totalorder %s87, 0
      %p696 = por %p694, %p695
      %s697 = ssub.s32 %s81, %s88
      %p698 = scmp.eq.s32.totalorder %s697, 0
      %s700 = sadd.s32 %s699, 1
      %s701 = scalar_select %p698, %s699, %s700
      %p704 = pneg %p698
      %p705 = scmp.eq.s32.totalorder %s81, 1
      %p706 = por %p704, %p705
      %p707 = scmp.ne.s32.totalorder %s699, %s702
      %p708 = scmp.eq.s32.totalorder %s81, 0
      %p709 = por %p707, %p708
      %p710 = scmp.ne.s32.totalorder %s699, %s702
      %p711 = scmp.eq.s32.totalorder %s86, 1
      %p712 = por %p710, %p711
      %p713 = scmp.ne.s32.totalorder %s702, %s703
      %p714 = scmp.eq.s32.totalorder %s86, 0
      %p715 = por %p713, %p714
      %p716 = scmp.ne.s32.totalorder %s702, %s703
      %p717 = scmp.eq.s32.totalorder %s87, 1
      %p718 = por %p716, %p717
      %p720 = scmp.ne.s32.totalorder %s703, %s719
      %p721 = scmp.eq.s32.totalorder %s87, 0
      %p722 = por %p720, %p721
      %s723 = ssub.s32 %s81, %s88
      %p724 = scmp.eq.s32.totalorder %s723, 0
      %s726 = sadd.s32 %s725, 1
      %s727 = scalar_select %p724, %s725, %s726
      %p730 = pneg %p724
      %p731 = scmp.eq.s32.totalorder %s81, 1
      %p732 = por %p730, %p731
      %p733 = scmp.ne.s32.totalorder %s725, %s728
      %p734 = scmp.eq.s32.totalorder %s81, 0
      %p735 = por %p733, %p734
      %p736 = scmp.ne.s32.totalorder %s725, %s728
      %p737 = scmp.eq.s32.totalorder %s86, 1
      %p738 = por %p736, %p737
      %p739 = scmp.ne.s32.totalorder %s728, %s729
      %p740 = scmp.eq.s32.totalorder %s86, 0
      %p741 = por %p739, %p740
      %p742 = scmp.ne.s32.totalorder %s728, %s729
      %p743 = scmp.eq.s32.totalorder %s87, 1
      %p744 = por %p742, %p743
      %p746 = scmp.ne.s32.totalorder %s729, %s745
      %p747 = scmp.eq.s32.totalorder %s87, 0
      %p748 = por %p746, %p747
      %p749 = scmp.le.s32.totalorder 1, %s81
      %p750 = scmp.lt.s32.totalorder %s81, 3
      %p751 = pnand %p749, %p750
      %p752 = pneg %p751
      // Predicated region
      $region9: #{bert_cross_layer_forward.1} parent=5 // pred_check
        _
      $region10: #{bert_cross_layer_forward.1} parent=5 // pred_check_branch
        %754 = sbr.rel (%p751) target = $region12
      $region11: #{bert_cross_layer_forward.1} parent=5 // pred_region
        %s755 = ssub.s32 %s81, 1
        // Predicated region
        $region13: #{bert_cross_layer_forward.1} parent=11 // pred_check
          %p756 = pneg %p206
        $region14: #{bert_cross_layer_forward.1} parent=11 // pred_check_branch
          %758 = sbr.rel (%p756) target = $region16
        $region15: #{bert_cross_layer_forward.1} parent=11 // pred_region
          %s760 = ssub.s32 256, 256
          %761 = vsyncadd [#allocation6], %s760
          %s762 = sshll.u32 [#allocation7], 4
          %s763 = int_to_ptr.vmem [resolvable:$true] %s762
          %768 = dma.hbm_to_vmem [thread:$0]  %s9, 256, %s763, [#allocation6], 64, 64, 4
        $region16: #{bert_cross_layer_forward.1} parent=11 // pred_fallthru
          _
        // Predicated region
        $region17: #{bert_cross_layer_forward.1} parent=11 // pred_check
          %p769 = pneg %p227
        $region18: #{bert_cross_layer_forward.1} parent=11 // pred_check_branch
          %771 = sbr.rel (%p769) target = $region20
        $region19: #{bert_cross_layer_forward.1} parent=11 // pred_region
          _
        $region20: #{bert_cross_layer_forward.1} parent=11 // pred_fallthru
          _
        // Predicated region
        $region21: #{bert_cross_layer_forward.1} parent=11 // pred_check
          %p772 = pneg %p248
        $region22: #{bert_cross_layer_forward.1} parent=11 // pred_check_branch
          %774 = sbr.rel (%p772) target = $region24
        $region23: #{bert_cross_layer_forward.1} parent=11 // pred_region
          %s776 = ssub.s32 512, 512
          %777 = vsyncadd [#allocation9], %s776
          %s778 = sshll.u32 [#allocation8], 4
          %s779 = int_to_ptr.vmem [resolvable:$true] %s778
          %784 = dma.hbm_to_vmem [thread:$0]  %s13, 512, %s779, [#allocation9], 64, 64, 4
        $region24: #{bert_cross_layer_forward.1} parent=11 // pred_fallthru
          _
        // Predicated region
        $region25: #{bert_cross_layer_forward.1} parent=11 // pred_check
          %p785 = pneg %p269
        $region26: #{bert_cross_layer_forward.1} parent=11 // pred_check_branch
          %787 = sbr.rel (%p785) target = $region28
        $region27: #{bert_cross_layer_forward.1} parent=11 // pred_region
          _
        $region28: #{bert_cross_layer_forward.1} parent=11 // pred_fallthru
          _
        // Predicated region
        $region29: #{bert_cross_layer_forward.1} parent=11 // pred_check
          %p788 = pneg %p290
        $region30: #{bert_cross_layer_forward.1} parent=11 // pred_check_branch
          %790 = sbr.rel (%p788) target = $region32
        $region31: #{bert_cross_layer_forward.1} parent=11 // pred_region
          %s792 = ssub.s32 256, 256
          %793 = vsyncadd [#allocation9], %s792
          %s794 = sshll.u32 [#allocation10], 4
          %s795 = int_to_ptr.vmem [resolvable:$true] %s794
          %800 = dma.hbm_to_vmem [thread:$0]  %s17, 256, %s795, [#allocation9], 64, 64, 4
        $region32: #{bert_cross_layer_forward.1} parent=11 // pred_fallthru
          _
        // Predicated region
        $region33: #{bert_cross_layer_forward.1} parent=11 // pred_check
          %p801 = pneg %p311
        $region34: #{bert_cross_layer_forward.1} parent=11 // pred_check_branch
          %803 = sbr.rel (%p801) target = $region36
        $region35: #{bert_cross_layer_forward.1} parent=11 // pred_region
          _
        $region36: #{bert_cross_layer_forward.1} parent=11 // pred_fallthru
          _
        // Predicated region
        $region37: #{bert_cross_layer_forward.1} parent=11 // pred_check
          %p804 = pneg %p332
        $region38: #{bert_cross_layer_forward.1} parent=11 // pred_check_branch
          %806 = sbr.rel (%p804) target = $region40
        $region39: #{bert_cross_layer_forward.1} parent=11 // pred_region
          _
        $region40: #{bert_cross_layer_forward.1} parent=11 // pred_fallthru
          _
        // Predicated region
        $region41: #{bert_cross_layer_forward.1} parent=11 // pred_check
          %p807 = pneg %p353
        $region42: #{bert_cross_layer_forward.1} parent=11 // pred_check_branch
          %809 = sbr.rel (%p807) target = $region44
        $region43: #{bert_cross_layer_forward.1} parent=11 // pred_region
          _
        $region44: #{bert_cross_layer_forward.1} parent=11 // pred_fallthru
          _
        // Predicated region
        $region45: #{bert_cross_layer_forward.1} parent=11 // pred_check
          %p810 = pneg %p374
        $region46: #{bert_cross_layer_forward.1} parent=11 // pred_check_branch
          %812 = sbr.rel (%p810) target = $region48
        $region47: #{bert_cross_layer_forward.1} parent=11 // pred_region
          %s814 = ssub.s32 256, 256
          %815 = vsyncadd [#allocation12], %s814
          %s816 = sshll.u32 [#allocation11], 4
          %s817 = int_to_ptr.vmem [resolvable:$true] %s816
          %822 = dma.hbm_to_vmem [thread:$0]  %s25, 256, %s817, [#allocation12], 64, 64, 4
        $region48: #{bert_cross_layer_forward.1} parent=11 // pred_fallthru
          _
        // Predicated region
        $region49: #{bert_cross_layer_forward.1} parent=11 // pred_check
          %p823 = pneg %p395
        $region50: #{bert_cross_layer_forward.1} parent=11 // pred_check_branch
          %825 = sbr.rel (%p823) target = $region52
        $region51: #{bert_cross_layer_forward.1} parent=11 // pred_region
          _
        $region52: #{bert_cross_layer_forward.1} parent=11 // pred_fallthru
          _
        // Predicated region
        $region53: #{bert_cross_layer_forward.1} parent=11 // pred_check
          %p826 = pneg %p416
        $region54: #{bert_cross_layer_forward.1} parent=11 // pred_check_branch
          %828 = sbr.rel (%p826) target = $region56
        $region55: #{bert_cross_layer_forward.1} parent=11 // pred_region
          _
        $region56: #{bert_cross_layer_forward.1} parent=11 // pred_fallthru
          _
        // Predicated region
        $region57: #{bert_cross_layer_forward.1} parent=11 // pred_check
          %p829 = pneg %p437
        $region58: #{bert_cross_layer_forward.1} parent=11 // pred_check_branch
          %831 = sbr.rel (%p829) target = $region60
        $region59: #{bert_cross_layer_forward.1} parent=11 // pred_region
          _
        $region60: #{bert_cross_layer_forward.1} parent=11 // pred_fallthru
          _
        // Predicated region
        $region61: #{bert_cross_layer_forward.1} parent=11 // pred_check
          %p832 = pneg %p458
        $region62: #{bert_cross_layer_forward.1} parent=11 // pred_check_branch
          %834 = sbr.rel (%p832) target = $region64
        $region63: #{bert_cross_layer_forward.1} parent=11 // pred_region
          %s836 = ssub.s32 256, 256
          %837 = vsyncadd [#allocation12], %s836
          %s838 = sshll.u32 [#allocation13], 4
          %s839 = int_to_ptr.vmem [resolvable:$true] %s838
          %844 = dma.hbm_to_vmem [thread:$0]  %s33, 256, %s839, [#allocation12], 64, 64, 4
        $region64: #{bert_cross_layer_forward.1} parent=11 // pred_fallthru
          _
        // Predicated region
        $region65: #{bert_cross_layer_forward.1} parent=11 // pred_check
          %p845 = pneg %p479
        $region66: #{bert_cross_layer_forward.1} parent=11 // pred_check_branch
          %847 = sbr.rel (%p845) target = $region68
        $region67: #{bert_cross_layer_forward.1} parent=11 // pred_region
          _
        $region68: #{bert_cross_layer_forward.1} parent=11 // pred_fallthru
          _
        // Predicated region
        $region69: #{bert_cross_layer_forward.1} parent=11 // pred_check
          %p848 = pneg %p500
        $region70: #{bert_cross_layer_forward.1} parent=11 // pred_check_branch
          %850 = sbr.rel (%p848) target = $region72
        $region71: #{bert_cross_layer_forward.1} parent=11 // pred_region
          %s852 = ssub.s32 512, 512
          %853 = vsyncadd [#allocation15], %s852
          %s854 = sshll.u32 [#allocation14], 4
          %s855 = int_to_ptr.vmem [resolvable:$true] %s854
          %860 = dma.hbm_to_vmem [thread:$0]  %s37, 512, %s855, [#allocation15], 64, 64, 4
        $region72: #{bert_cross_layer_forward.1} parent=11 // pred_fallthru
          _
        // Predicated region
        $region73: #{bert_cross_layer_forward.1} parent=11 // pred_check
          %p861 = pneg %p521
        $region74: #{bert_cross_layer_forward.1} parent=11 // pred_check_branch
          %863 = sbr.rel (%p861) target = $region76
        $region75: #{bert_cross_layer_forward.1} parent=11 // pred_region
          _
        $region76: #{bert_cross_layer_forward.1} parent=11 // pred_fallthru
          _
        // Predicated region
        $region77: #{bert_cross_layer_forward.1} parent=11 // pred_check
          %p864 = pneg %p542
        $region78: #{bert_cross_layer_forward.1} parent=11 // pred_check_branch
          %866 = sbr.rel (%p864) target = $region80
        $region79: #{bert_cross_layer_forward.1} parent=11 // pred_region
          _
        $region80: #{bert_cross_layer_forward.1} parent=11 // pred_fallthru
          _
        // Predicated region
        $region81: #{bert_cross_layer_forward.1} parent=11 // pred_check
          %p867 = pneg %p563
        $region82: #{bert_cross_layer_forward.1} parent=11 // pred_check_branch
          %869 = sbr.rel (%p867) target = $region84
        $region83: #{bert_cross_layer_forward.1} parent=11 // pred_region
          _
        $region84: #{bert_cross_layer_forward.1} parent=11 // pred_fallthru
          _
        // Predicated region
        $region85: #{bert_cross_layer_forward.1} parent=11 // pred_check
          %p870 = pneg %p584
        $region86: #{bert_cross_layer_forward.1} parent=11 // pred_check_branch
          %872 = sbr.rel (%p870) target = $region88
        $region87: #{bert_cross_layer_forward.1} parent=11 // pred_region
          _
        $region88: #{bert_cross_layer_forward.1} parent=11 // pred_fallthru
          _
        // Predicated region
        $region89: #{bert_cross_layer_forward.1} parent=11 // pred_check
          %p873 = pneg %p605
        $region90: #{bert_cross_layer_forward.1} parent=11 // pred_check_branch
          %875 = sbr.rel (%p873) target = $region92
        $region91: #{bert_cross_layer_forward.1} parent=11 // pred_region
          _
        $region92: #{bert_cross_layer_forward.1} parent=11 // pred_fallthru
          _
        // Predicated region
        $region93: #{bert_cross_layer_forward.1} parent=11 // pred_check
          %p876 = pneg %p626
        $region94: #{bert_cross_layer_forward.1} parent=11 // pred_check_branch
          %878 = sbr.rel (%p876) target = $region96
        $region95: #{bert_cross_layer_forward.1} parent=11 // pred_region
          %s880 = ssub.s32 1024, 1024
          %881 = vsyncadd [#allocation15], %s880
          %s882 = sshll.u32 [#allocation16], 4
          %s883 = int_to_ptr.vmem [resolvable:$true] %s882
          %888 = dma.hbm_to_vmem [thread:$0]  %s49, 1024, %s883, [#allocation15], 64, 64, 4
        $region96: #{bert_cross_layer_forward.1} parent=11 // pred_fallthru
          _
        // Predicated region
        $region97: #{bert_cross_layer_forward.1} parent=11 // pred_check
          %p889 = pneg %p647
        $region98: #{bert_cross_layer_forward.1} parent=11 // pred_check_branch
          %891 = sbr.rel (%p889) target = $region100
        $region99: #{bert_cross_layer_forward.1} parent=11 // pred_region
          _
        $region100: #{bert_cross_layer_forward.1} parent=11 // pred_fallthru
          _
        // Predicated region
        $region101: #{bert_cross_layer_forward.1} parent=11 // pred_check
          %p892 = pneg %p668
        $region102: #{bert_cross_layer_forward.1} parent=11 // pred_check_branch
          %894 = sbr.rel (%p892) target = $region104
        $region103: #{bert_cross_layer_forward.1} parent=11 // pred_region
          _
        $region104: #{bert_cross_layer_forward.1} parent=11 // pred_fallthru
          _
        // Predicated region
        $region105: #{bert_cross_layer_forward.1} parent=11 // pred_check
          %p895 = pneg %p689
        $region106: #{bert_cross_layer_forward.1} parent=11 // pred_check_branch
          %897 = sbr.rel (%p895) target = $region108
        $region107: #{bert_cross_layer_forward.1} parent=11 // pred_region
          _
        $region108: #{bert_cross_layer_forward.1} parent=11 // pred_fallthru
          _
      $region12: #{bert_cross_layer_forward.1} parent=5 // pred_fallthru
        _
      %p898 = scmp.lt.s32.totalorder %s81, 2
      // Predicated region
      $region109: #{bert_cross_layer_forward.1} parent=5 // pred_check
        %p899 = pneg %p898
      $region110: #{bert_cross_layer_forward.1} parent=5 // pred_check_branch
        %901 = sbr.rel (%p899) target = $region112
      $region111: #{bert_cross_layer_forward.1} parent=5 // pred_region
        // Predicated region
        $region113: #{bert_cross_layer_forward.1} parent=111 // pred_check
          %p902 = pneg %p101
        $region114: #{bert_cross_layer_forward.1} parent=111 // pred_check_branch
          %904 = sbr.rel (%p902) target = $region116
        $region115: #{bert_cross_layer_forward.1} parent=111 // pred_region
          %s905 = sand.u32 %s91, 1
          %s906 = scalar_lea.sflag [#allocation3], %s905
          %s907 = sand.u32 %s91, 1
          %s908 = smul.addr %s907, 8
          %s909 = scalar_lea.vmem [#allocation2], %s908
          %s911 = ssub.s32 128, 128
          %912 = vsyncadd %s906, %s911
          %s913 = smul.addr %s81, 128
          %s914 = scalar_lea.hbm %s1, %s913
          %s916 = sshll.u32 %s909, 4
          %s917 = int_to_ptr.vmem [resolvable:$true] %s916
          %919 = dma.hbm_to_vmem [thread:$0]  %s914, 128, %s917, %s906
        $region116: #{bert_cross_layer_forward.1} parent=111 // pred_fallthru
          _
        // Predicated region
        $region117: #{bert_cross_layer_forward.1} parent=111 // pred_check
          %p920 = pneg %p127
        $region118: #{bert_cross_layer_forward.1} parent=111 // pred_check_branch
          %922 = sbr.rel (%p920) target = $region120
        $region119: #{bert_cross_layer_forward.1} parent=111 // pred_region
          %s923 = sand.u32 %s81, 1
          %s924 = scalar_lea.sflag [#allocation6], %s923
          %s925 = sand.u32 %s117, 1
          %s926 = smul.addr %s925, 16
          %s927 = scalar_lea.vmem [#allocation5], %s926
          %s929 = ssub.s32 256, 256
          %930 = vsyncadd %s924, %s929
          %s931 = smul.addr %s81, 2
          %s932 = smul.addr %s931, 128
          %s933 = scalar_lea.hbm %s3, %s932
          %s934 = sshll.u32 %s927, 4
          %s935 = int_to_ptr.vmem [resolvable:$true] %s934
          %940 = dma.hbm_to_vmem [thread:$0]  %s933, 256, %s935, %s924, 128, 128, 8
        $region120: #{bert_cross_layer_forward.1} parent=111 // pred_fallthru
          _
        // Predicated region
        $region121: #{bert_cross_layer_forward.1} parent=111 // pred_check
          %p941 = pneg %p153
        $region122: #{bert_cross_layer_forward.1} parent=111 // pred_check_branch
          %943 = sbr.rel (%p941) target = $region124
        $region123: #{bert_cross_layer_forward.1} parent=111 // pred_region
          %p944 = scmp.lt.s32.totalorder %s81, 1
          %s945 = scalar_select %p944, %s81, 1
          %s946 = scalar_lea.vmem %s5, %s945
        $region124: #{bert_cross_layer_forward.1} parent=111 // pred_fallthru
          _
        // Predicated region
        $region125: #{bert_cross_layer_forward.1} parent=111 // pred_check
          %p947 = pneg %p179
        $region126: #{bert_cross_layer_forward.1} parent=111 // pred_check_branch
          %949 = sbr.rel (%p947) target = $region128
        $region127: #{bert_cross_layer_forward.1} parent=111 // pred_region
          %p950 = scmp.lt.s32.totalorder %s81, 1
          %s951 = scalar_select %p950, %s81, 1
          %s952 = scalar_lea.vmem %s7, %s951
        $region128: #{bert_cross_layer_forward.1} parent=111 // pred_fallthru
          _
      $region112: #{bert_cross_layer_forward.1} parent=5 // pred_fallthru
        _
      %p953 = scmp.le.s32.totalorder 1, %s81
      %p954 = scmp.lt.s32.totalorder %s81, 3
      %p955 = pnand %p953, %p954
      %p956 = pneg %p955
      // Predicated region
      $region129: #{bert_cross_layer_forward.1} parent=5 // pred_check
        _
      $region130: #{bert_cross_layer_forward.1} parent=5 // pred_check_branch
        %958 = sbr.rel (%p955) target = $region132
      $region131: #{bert_cross_layer_forward.1} parent=5 // pred_region
        %s959 = ssub.s32 %s81, 1
        %s960 = sand.u32 %s94, 1
        %s961 = scalar_lea.sflag [#allocation3], %s960
        %s962 = sand.u32 %s94, 1
        %s963 = smul.addr %s962, 8
        %s964 = scalar_lea.vmem [#allocation2], %s963
        // Predicated region
        $region133: #{bert_cross_layer_forward.1} parent=131 // pred_check
          %p965 = pneg %p107
        $region134: #{bert_cross_layer_forward.1} parent=131 // pred_check_branch
          %967 = sbr.rel (%p965) target = $region136
        $region135: #{bert_cross_layer_forward.1} parent=131 // pred_region
          %968 = dma.done %s961, 128
        $region136: #{bert_cross_layer_forward.1} parent=131 // pred_fallthru
          _
        %s969 = sand.u32 %s86, 1
        %s970 = scalar_lea.sflag [#allocation6], %s969
        %s971 = sand.u32 %s120, 1
        %s972 = smul.addr %s971, 16
        %s973 = scalar_lea.vmem [#allocation5], %s972
        // Predicated region
        $region137: #{bert_cross_layer_forward.1} parent=131 // pred_check
          %p974 = pneg %p133
        $region138: #{bert_cross_layer_forward.1} parent=131 // pred_check_branch
          %976 = sbr.rel (%p974) target = $region140
        $region139: #{bert_cross_layer_forward.1} parent=131 // pred_region
          %977 = dma.done %s970, 256
        $region140: #{bert_cross_layer_forward.1} parent=131 // pred_fallthru
          _
        // Predicated region
        $region141: #{bert_cross_layer_forward.1} parent=131 // pred_check
          %p978 = pneg %p206
        $region142: #{bert_cross_layer_forward.1} parent=131 // pred_check_branch
          %980 = sbr.rel (%p978) target = $region144
        $region143: #{bert_cross_layer_forward.1} parent=131 // pred_region
          %981 = dma.done [#allocation6], 256
        $region144: #{bert_cross_layer_forward.1} parent=131 // pred_fallthru
          _
        // Predicated region
        $region145: #{bert_cross_layer_forward.1} parent=131 // pred_check
          %p982 = pneg %p248
        $region146: #{bert_cross_layer_forward.1} parent=131 // pred_check_branch
          %984 = sbr.rel (%p982) target = $region148
        $region147: #{bert_cross_layer_forward.1} parent=131 // pred_region
          %985 = dma.done [#allocation9], 512
        $region148: #{bert_cross_layer_forward.1} parent=131 // pred_fallthru
          _
        // Predicated region
        $region149: #{bert_cross_layer_forward.1} parent=131 // pred_check
          %p986 = pneg %p290
        $region150: #{bert_cross_layer_forward.1} parent=131 // pred_check_branch
          %988 = sbr.rel (%p986) target = $region152
        $region151: #{bert_cross_layer_forward.1} parent=131 // pred_region
          %989 = dma.done [#allocation9], 256
        $region152: #{bert_cross_layer_forward.1} parent=131 // pred_fallthru
          _
        // Predicated region
        $region153: #{bert_cross_layer_forward.1} parent=131 // pred_check
          %p990 = pneg %p374
        $region154: #{bert_cross_layer_forward.1} parent=131 // pred_check_branch
          %992 = sbr.rel (%p990) target = $region156
        $region155: #{bert_cross_layer_forward.1} parent=131 // pred_region
          %993 = dma.done [#allocation12], 256
        $region156: #{bert_cross_layer_forward.1} parent=131 // pred_fallthru
          _
        // Predicated region
        $region157: #{bert_cross_layer_forward.1} parent=131 // pred_check
          %p994 = pneg %p458
        $region158: #{bert_cross_layer_forward.1} parent=131 // pred_check_branch
          %996 = sbr.rel (%p994) target = $region160
        $region159: #{bert_cross_layer_forward.1} parent=131 // pred_region
          %997 = dma.done [#allocation12], 256
        $region160: #{bert_cross_layer_forward.1} parent=131 // pred_fallthru
          _
        // Predicated region
        $region161: #{bert_cross_layer_forward.1} parent=131 // pred_check
          %p998 = pneg %p500
        $region162: #{bert_cross_layer_forward.1} parent=131 // pred_check_branch
          %1000 = sbr.rel (%p998) target = $region164
        $region163: #{bert_cross_layer_forward.1} parent=131 // pred_region
          %1001 = dma.done [#allocation15], 512
        $region164: #{bert_cross_layer_forward.1} parent=131 // pred_fallthru
          _
        // Predicated region
        $region165: #{bert_cross_layer_forward.1} parent=131 // pred_check
          %p1002 = pneg %p626
        $region166: #{bert_cross_layer_forward.1} parent=131 // pred_check_branch
          %1004 = sbr.rel (%p1002) target = $region168
        $region167: #{bert_cross_layer_forward.1} parent=131 // pred_region
          %1005 = dma.done [#allocation15], 1024
        $region168: #{bert_cross_layer_forward.1} parent=131 // pred_fallthru
          _
        %s1006 = sand.u32 %s94, 1
        %s1007 = scalar_lea.sflag [#allocation3], %s1006
        %s1008 = sand.u32 %s94, 1
        %s1009 = smul.addr %s1008, 8
        %s1010 = scalar_lea.vmem [#allocation2], %s1009
        %p1011 = pneg %p107
        %p1012 = pneg %p104
        %s1013 = sand.u32 %s86, 1
        %s1014 = scalar_lea.sflag [#allocation6], %s1013
        %s1015 = sand.u32 %s120, 1
        %s1016 = smul.addr %s1015, 16
        %s1017 = scalar_lea.vmem [#allocation5], %s1016
        %p1018 = pneg %p133
        %p1019 = pneg %p130
        %p1020 = scmp.lt.s32.totalorder %s86, 1
        %s1021 = scalar_select %p1020, %s86, 1
        %s1022 = scalar_lea.vmem %s5, %s1021
        %p1023 = pneg %p159
        %p1024 = pneg %p156
        %p1025 = scmp.lt.s32.totalorder %s86, 1
        %s1026 = scalar_select %p1025, %s86, 1
        %s1027 = scalar_lea.vmem %s7, %s1026
        %p1028 = pneg %p185
        %p1029 = pneg %p182
        %p1030 = pneg %p206
        %p1031 = pneg %p203
        %p1032 = pneg %p227
        %p1033 = pneg %p224
        %p1034 = pneg %p248
        %p1035 = pneg %p245
        %p1036 = pneg %p269
        %p1037 = pneg %p266
        %p1038 = pneg %p290
        %p1039 = pneg %p287
        %p1040 = pneg %p311
        %p1041 = pneg %p308
        %p1042 = pneg %p332
        %p1043 = pneg %p329
        %p1044 = pneg %p353
        %p1045 = pneg %p350
        %p1046 = pneg %p374
        %p1047 = pneg %p371
        %p1048 = pneg %p395
        %p1049 = pneg %p392
        %p1050 = pneg %p416
        %p1051 = pneg %p413
        %p1052 = pneg %p437
        %p1053 = pneg %p434
        %p1054 = pneg %p458
        %p1055 = pneg %p455
        %p1056 = pneg %p479
        %p1057 = pneg %p476
        %p1058 = pneg %p500
        %p1059 = pneg %p497
        %p1060 = pneg %p521
        %p1061 = pneg %p518
        %p1062 = pneg %p542
        %p1063 = pneg %p539
        %p1064 = pneg %p563
        %p1065 = pneg %p560
        %p1066 = pneg %p584
        %p1067 = pneg %p581
        %p1068 = pneg %p605
        %p1069 = pneg %p602
        %p1070 = pneg %p626
        %p1071 = pneg %p623
        %p1072 = pneg %p647
        %p1073 = pneg %p644
        %p1074 = pneg %p668
        %p1075 = pneg %p665
        %p1076 = pneg %p689
        %p1077 = pneg %p686
        %p1078 = pneg %p715
        %p1079 = pneg %p712
        %s1080 = sand.u32 %s702, 1
        %s1081 = scalar_lea.sflag [#allocation4], %s1080
        %s1082 = sand.u32 %s702, 1
        %s1083 = smul.addr %s1082, 8
        %s1084 = scalar_lea.vmem [#allocation17], %s1083
        %p1085 = pneg %p741
        %p1086 = pneg %p738
        %s1087 = sand.u32 %s728, 1
        %s1088 = scalar_lea.sflag [#allocation19], %s1087
        %s1089 = sand.u32 %s728, 1
        %s1090 = smul.addr %s1089, 16
        %s1091 = scalar_lea.vmem [#allocation18], %s1090
        %p1092 = scmp.lt.s32.totalorder %s86, 1
        %s1093 = scalar_select %p1092, %s86, 1
        %s1094 = scalar_lea.vmem %s5, %s1093
        %p1095 = scmp.lt.s32.totalorder %s86, 1
        %s1096 = scalar_select %p1095, %s86, 1
        %s1097 = scalar_lea.vmem %s7, %s1096
        %v1099 = vld [vmem:[%s964] sm:$0xff]
        %v1100 = vld [vmem:[%s973] sm:$0xff]
        %v1101 = vld [vmem:[%s973 + $0x8] sm:$0xff]
        %v1102 = vld [vmem:[%s1094] sm:$0x1]
        %v1103 = vld [vmem:[%s1097] sm:$0x1]
        %v1104 = vld [vmem:[%s11] sm:$0x1]
        %v1105 = vld [vmem:[%s15] sm:$0x1]
        %v1106 = vld [vmem:[%s19] sm:$0x1]
        %v1107 = vld [vmem:[%s21] sm:$0x1]
        %v1108 = vld [vmem:[%s23] sm:$0x1]
        %v1109 = vld [vmem:[%s27] sm:$0x1]
        %v1110 = vld [vmem:[%s29] sm:$0x1]
        %v1111 = vld [vmem:[%s31] sm:$0x1]
        %v1112 = vld [vmem:[%s35] sm:$0x1]
        %v1113 = vld [vmem:[%s39] sm:$0x1]
        %v1114 = vld [vmem:[%s41] sm:$0x1]
        %v1115 = vld [vmem:[%s43] sm:$0x1]
        %v1116 = vld [vmem:[%s47] sm:$0x1]
        %v1117 = vld [vmem:[%s51] sm:$0x1]
        %v1118 = vld [vmem:[%s53] sm:$0x1]
        %v1119 = vld [vmem:[%s55] sm:$0x1]
        %v1120 = vpack.c.bf16 %v1099, %v1099
        %v1121 = vpack.c.bf16 %v1101, %v1100
        %v1122 = vld [vmem:[#allocation7] sm:$0xf]
        %v1123 = vld [vmem:[#allocation7 + $0x4] sm:$0xf]
        %v1124 = vld [vmem:[#allocation7 + $0x8] sm:$0xf]
        %v1125 = vld [vmem:[#allocation7 + $0xc] sm:$0xf]
        %v1127 = vlaneseq
        %v1128 = vshrl.u32 %v1127, 7
        %v1129 = vsub.s32 0, %v1128
        %v1130 = vrot.slane %v1104, %v1129
        %v1136 = vunpack.c.l.b16 %v1122
        %v1137 = vunpack.c.l.b16 %v1123
        %v1138 = vunpack.c.l.b16 %v1124
        %v1139 = vunpack.c.l.b16 %v1125
        %v1140 = vpack.c.b16 %v1137, %v1136
        %v1141 = vpack.c.b16 %v1139, %v1138
        %vm1144 = vcmask 261120
        %v1146 = vsel %vm1144, %v1120, 0
        %1148 = vmatprep.subr.bf16.mxu0 0
        %1149 = vmatpush1.bf16.msra.mxu0 0
        %1150 = vmatprep.subr.bf16.mxu0 0
        %1151 = vmatpush1.bf16.msra.mxu0 0
        %1152 = vmatprep.subr.bf16.mxu0 0
        %1153 = vmatpush1.bf16.msra.mxu0 0
        %1154 = vmatprep.subr.bf16.mxu0 0
        %1155 = vmatpush1.bf16.msra.mxu0 0
        %1156 = vmatprep.subr.bf16.mxu0 0
        %1157 = vmatpush1.bf16.msra.mxu0 0
        %1158 = vmatprep.subr.bf16.mxu0 0
        %1159 = vmatpush1.bf16.msra.mxu0 0
        %1160 = vmatprep.subr.bf16.mxu0 0
        %1161 = vmatpush1.bf16.msra.mxu0 %v1141
        %1162 = vmatprep.subr.bf16.mxu0 0
        %1163 = vmatpush1.bf16.msra.mxu0 %v1140
        %1164 = vmatprep.subr.bf16.mxu0 0
        %1165 = vmatpush2.bf16.msra.mxu0 0
        %1166 = vmatprep.subr.bf16.mxu0 0
        %1167 = vmatpush2.bf16.msra.mxu0 0
        %1168 = vmatprep.subr.bf16.mxu0 0
        %1169 = vmatpush2.bf16.msra.mxu0 0
        %1170 = vmatprep.subr.bf16.mxu0 0
        %1171 = vmatpush2.bf16.msra.mxu0 0
        %1172 = vmatprep.subr.bf16.mxu0 0
        %1173 = vmatpush2.bf16.msra.mxu0 0
        %1174 = vmatprep.subr.bf16.mxu0 0
        %1175 = vmatpush2.bf16.msra.mxu0 0
        %1176 = vmatprep.subr.bf16.mxu0 0
        %1177 = vmatpush2.bf16.msra.mxu0 0
        %1178 = vmatprep.subr.bf16.mxu0 0
        %1179 = vmatpush2.bf16.msra.mxu0 0
        %1180 = vmatprep.mubr.bf16.mxu0 0
        %1181 = vmatmul.mubr.bf16.gmra.mxu0 %v1146
        %v1182 = vpop.f32.mrf.mxu0
        %v1183 = vadd.f32 %v1130, %v1182
        %v1184 = vpop.f32.mrf.mxu0
        %v1185 = vpop.f32.mrf.mxu0
        %v1186 = vpop.f32.mrf.mxu0
        %1187 = vdwg.mxu0
        %v1188 = vld [vmem:[#allocation8] sm:$0xf]
        %v1189 = vld [vmem:[#allocation8 + $0x4] sm:$0xf]
        %v1190 = vld [vmem:[#allocation8 + $0x8] sm:$0xf]
        %v1191 = vld [vmem:[#allocation8 + $0xc] sm:$0xf]
        %v1192 = vld [vmem:[#allocation8 + $0x10] sm:$0xf]
        %v1193 = vld [vmem:[#allocation8 + $0x14] sm:$0xf]
        %v1194 = vld [vmem:[#allocation8 + $0x18] sm:$0xf]
        %v1195 = vld [vmem:[#allocation8 + $0x1c] sm:$0xf]
        %v1197 = vlaneseq
        %v1198 = vshrl.u32 %v1197, 7
        %v1199 = vsub.s32 0, %v1198
        %v1200 = vrot.slane %v1105, %v1199
        %v1210 = vunpack.c.l.b16 %v1188
        %v1211 = vunpack.c.l.b16 %v1189
        %v1212 = vunpack.c.l.b16 %v1190
        %v1213 = vunpack.c.l.b16 %v1191
        %v1214 = vunpack.c.l.b16 %v1192
        %v1215 = vunpack.c.l.b16 %v1193
        %v1216 = vunpack.c.l.b16 %v1194
        %v1217 = vunpack.c.l.b16 %v1195
        %v1218 = vpack.c.b16 %v1211, %v1210
        %v1219 = vpack.c.b16 %v1213, %v1212
        %v1220 = vpack.c.b16 %v1215, %v1214
        %v1221 = vpack.c.b16 %v1217, %v1216
        %vm1226 = vcmask 523264
        %v1228 = vsel %vm1226, %v1121, 0
        %1230 = vmatprep.subr.bf16.mxu0 0
        %1231 = vmatpush1.bf16.msra.mxu0 0
        %1232 = vmatprep.subr.bf16.mxu0 0
        %1233 = vmatpush1.bf16.msra.mxu0 0
        %1234 = vmatprep.subr.bf16.mxu0 0
        %1235 = vmatpush1.bf16.msra.mxu0 0
        %1236 = vmatprep.subr.bf16.mxu0 0
        %1237 = vmatpush1.bf16.msra.mxu0 0
        %1238 = vmatprep.subr.bf16.mxu0 0
        %1239 = vmatpush1.bf16.msra.mxu0 %v1221
        %1240 = vmatprep.subr.bf16.mxu0 0
        %1241 = vmatpush1.bf16.msra.mxu0 %v1220
        %1242 = vmatprep.subr.bf16.mxu0 0
        %1243 = vmatpush1.bf16.msra.mxu0 %v1219
        %1244 = vmatprep.subr.bf16.mxu0 0
        %1245 = vmatpush1.bf16.msra.mxu0 %v1218
        %1246 = vmatprep.subr.bf16.mxu0 0
        %1247 = vmatpush2.bf16.msra.mxu0 0
        %1248 = vmatprep.subr.bf16.mxu0 0
        %1249 = vmatpush2.bf16.msra.mxu0 0
        %1250 = vmatprep.subr.bf16.mxu0 0
        %1251 = vmatpush2.bf16.msra.mxu0 0
        %1252 = vmatprep.subr.bf16.mxu0 0
        %1253 = vmatpush2.bf16.msra.mxu0 0
        %1254 = vmatprep.subr.bf16.mxu0 0
        %1255 = vmatpush2.bf16.msra.mxu0 0
        %1256 = vmatprep.subr.bf16.mxu0 0
        %1257 = vmatpush2.bf16.msra.mxu0 0
        %1258 = vmatprep.subr.bf16.mxu0 0
        %1259 = vmatpush2.bf16.msra.mxu0 0
        %1260 = vmatprep.subr.bf16.mxu0 0
        %1261 = vmatpush2.bf16.msra.mxu0 0
        %1262 = vmatprep.mubr.bf16.mxu0 0
        %1263 = vmatmul.mubr.bf16.gmra.mxu0 %v1228
        %v1264 = vpop.f32.mrf.mxu0
        %v1265 = vadd.f32 %v1200, %v1264
        %v1266 = vpop.f32.mrf.mxu0
        %v1267 = vpop.f32.mrf.mxu0
        %v1268 = vadd.f32 %v1200, %v1267
        %v1269 = vpop.f32.mrf.mxu0
        %1270 = vdwg.mxu0
        %v1272 = vlaneseq
        %v1273 = vshrl.u32 %v1272, 7
        %v1274 = vsub.s32 0, %v1273
        %v1275 = vrot.slane %v1103, %v1274
        %v1277 = vpack.c.bf16 %v1183, %v1183
        %v1278 = vpack.c.bf16 %v1268, %v1265
        %1280 = vrot.lane.b32.xlu0 %v1278, 96
        %v1281 = vpop.permute.xlu0 %1280
        %vm1282 = vcmask 130048
        %v1284 = vsel %vm1282, %v1277, 0
        %v1287 = vsel %vm1282, %v1281, 0
        %1289 = vmatprep.subr.bf16.mxu0 0
        %1290 = vmatpush1.bf16.xpose.msra.mxu0 0
        %1291 = vmatprep.subr.bf16.mxu0 0
        %1292 = vmatpush1.bf16.xpose.msra.mxu0 0
        %1293 = vmatprep.subr.bf16.mxu0 0
        %1294 = vmatpush1.bf16.xpose.msra.mxu0 0
        %1295 = vmatprep.subr.bf16.mxu0 0
        %1296 = vmatpush1.bf16.xpose.msra.mxu0 0
        %1297 = vmatprep.subr.bf16.mxu0 0
        %1298 = vmatpush1.bf16.xpose.msra.mxu0 0
        %1299 = vmatprep.subr.bf16.mxu0 0
        %1300 = vmatpush1.bf16.xpose.msra.mxu0 0
        %1301 = vmatprep.subr.bf16.mxu0 0
        %1302 = vmatpush1.bf16.xpose.msra.mxu0 0
        %1303 = vmatprep.subr.bf16.mxu0 0
        %1304 = vmatpush1.bf16.xpose.msra.mxu0 %v1287
        %1305 = vmatprep.subr.bf16.mxu0 0
        %1306 = vmatpush2.bf16.xpose.msra.mxu0 0
        %1307 = vmatprep.subr.bf16.mxu0 0
        %1308 = vmatpush2.bf16.xpose.msra.mxu0 0
        %1309 = vmatprep.subr.bf16.mxu0 0
        %1310 = vmatpush2.bf16.xpose.msra.mxu0 0
        %1311 = vmatprep.subr.bf16.mxu0 0
        %1312 = vmatpush2.bf16.xpose.msra.mxu0 0
        %1313 = vmatprep.subr.bf16.mxu0 0
        %1314 = vmatpush2.bf16.xpose.msra.mxu0 0
        %1315 = vmatprep.subr.bf16.mxu0 0
        %1316 = vmatpush2.bf16.xpose.msra.mxu0 0
        %1317 = vmatprep.subr.bf16.mxu0 0
        %1318 = vmatpush2.bf16.xpose.msra.mxu0 0
        %1319 = vmatprep.subr.bf16.mxu0 0
        %1320 = vmatpush2.bf16.xpose.msra.mxu0 0
        %1321 = vmatprep.mubr.bf16.mxu0 0
        %1322 = vmatmul.mubr.bf16.gmra.mxu0 %v1284
        %v1323 = vpop.f32.mrf.mxu0
        %v1324 = vadd.f32 0.0, %v1323
        %v1325 = vpop.f32.mrf.mxu0
        %v1326 = vpop.f32.mrf.mxu0
        %v1327 = vpop.f32.mrf.mxu0
        %1328 = vdwg.mxu0
        %v1329 = vmul.f32 %v1324, 0.25
        %v1330 = vadd.f32 %v1329, %v1275
        %v1331 = vsel %vm1282, %v1330, -inf
        %1332 = vmax.xlane.f32.xlu0 %v1331
        %v1333 = vpop.xlane.xlu0 %1332
        %v1334 = vsub.f32 %v1330, %v1333
        %v1335 = vmul.f32 %v1334, 1.442695
        %v1336 = vpow.pop %v1335
        %v1337 = vsel %vm1282, %v1336, 0.0
        %1338 = vadd.xlane.f32.xlu0 %v1337
        %v1339 = vpop.xlane.xlu0 %1338
        %v1340 = vrcp.pop %v1339
        %v1341 = vmul.f32 %v1336, %v1340
        %v1342 = vpack.c.bf16 %v1341, %v1341
        %1343 = vrot.lane.b32.xlu0 %v1278, 64
        %v1344 = vpop.permute.xlu0 %1343
        %v1347 = vsel %vm1282, %v1342, 0
        %1349 = vmatprep.subr.bf16.mxu0 0
        %1350 = vmatpush1.bf16.msra.mxu0 0
        %1351 = vmatprep.subr.bf16.mxu0 0
        %1352 = vmatpush1.bf16.msra.mxu0 0
        %1353 = vmatprep.subr.bf16.mxu0 0
        %1354 = vmatpush1.bf16.msra.mxu0 0
        %1355 = vmatprep.subr.bf16.mxu0 0
        %1356 = vmatpush1.bf16.msra.mxu0 0
        %1357 = vmatprep.subr.bf16.mxu0 0
        %1358 = vmatpush1.bf16.msra.mxu0 0
        %1359 = vmatprep.subr.bf16.mxu0 0
        %1360 = vmatpush1.bf16.msra.mxu0 0
        %1361 = vmatprep.subr.bf16.mxu0 0
        %1362 = vmatpush1.bf16.msra.mxu0 0
        %1363 = vmatprep.subr.bf16.mxu0 0
        %1364 = vmatpush1.bf16.msra.mxu0 %v1344
        %1365 = vmatprep.subr.bf16.mxu0 0
        %1366 = vmatpush2.bf16.msra.mxu0 0
        %1367 = vmatprep.subr.bf16.mxu0 0
        %1368 = vmatpush2.bf16.msra.mxu0 0
        %1369 = vmatprep.subr.bf16.mxu0 0
        %1370 = vmatpush2.bf16.msra.mxu0 0
        %1371 = vmatprep.subr.bf16.mxu0 0
        %1372 = vmatpush2.bf16.msra.mxu0 0
        %1373 = vmatprep.subr.bf16.mxu0 0
        %1374 = vmatpush2.bf16.msra.mxu0 0
        %1375 = vmatprep.subr.bf16.mxu0 0
        %1376 = vmatpush2.bf16.msra.mxu0 0
        %1377 = vmatprep.subr.bf16.mxu0 0
        %1378 = vmatpush2.bf16.msra.mxu0 0
        %1379 = vmatprep.subr.bf16.mxu0 0
        %1380 = vmatpush2.bf16.msra.mxu0 0
        %1381 = vmatprep.mubr.bf16.mxu0 0
        %1382 = vmatmul.mubr.bf16.gmra.mxu0 %v1347
        %v1383 = vpop.f32.mrf.mxu0
        %v1384 = vadd.f32 0.0, %v1383
        %v1385 = vpop.f32.mrf.mxu0
        %v1386 = vpop.f32.mrf.mxu0
        %v1387 = vpop.f32.mrf.mxu0
        %1388 = vdwg.mxu0
        %1390 = vrot.lane.b32.xlu0 %v1277, 112
        %v1391 = vpop.permute.xlu0 %1390
        %1392 = vrot.lane.b32.xlu0 %v1278, 80
        %v1393 = vpop.permute.xlu0 %1392
        %v1395 = vsel %vm1282, %v1391, 0
        %v1398 = vsel %vm1282, %v1393, 0
        %1400 = vmatprep.subr.bf16.mxu0 0
        %1401 = vmatpush1.bf16.xpose.msra.mxu0 0
        %1402 = vmatprep.subr.bf16.mxu0 0
        %1403 = vmatpush1.bf16.xpose.msra.mxu0 0
        %1404 = vmatprep.subr.bf16.mxu0 0
        %1405 = vmatpush1.bf16.xpose.msra.mxu0 0
        %1406 = vmatprep.subr.bf16.mxu0 0
        %1407 = vmatpush1.bf16.xpose.msra.mxu0 0
        %1408 = vmatprep.subr.bf16.mxu0 0
        %1409 = vmatpush1.bf16.xpose.msra.mxu0 0
        %1410 = vmatprep.subr.bf16.mxu0 0
        %1411 = vmatpush1.bf16.xpose.msra.mxu0 0
        %1412 = vmatprep.subr.bf16.mxu0 0
        %1413 = vmatpush1.bf16.xpose.msra.mxu0 0
        %1414 = vmatprep.subr.bf16.mxu0 0
        %1415 = vmatpush1.bf16.xpose.msra.mxu0 %v1398
        %1416 = vmatprep.subr.bf16.mxu0 0
        %1417 = vmatpush2.bf16.xpose.msra.mxu0 0
        %1418 = vmatprep.subr.bf16.mxu0 0
        %1419 = vmatpush2.bf16.xpose.msra.mxu0 0
        %1420 = vmatprep.subr.bf16.mxu0 0
        %1421 = vmatpush2.bf16.xpose.msra.mxu0 0
        %1422 = vmatprep.subr.bf16.mxu0 0
        %1423 = vmatpush2.bf16.xpose.msra.mxu0 0
        %1424 = vmatprep.subr.bf16.mxu0 0
        %1425 = vmatpush2.bf16.xpose.msra.mxu0 0
        %1426 = vmatprep.subr.bf16.mxu0 0
        %1427 = vmatpush2.bf16.xpose.msra.mxu0 0
        %1428 = vmatprep.subr.bf16.mxu0 0
        %1429 = vmatpush2.bf16.xpose.msra.mxu0 0
        %1430 = vmatprep.subr.bf16.mxu0 0
        %1431 = vmatpush2.bf16.xpose.msra.mxu0 0
        %1432 = vmatprep.mubr.bf16.mxu0 0
        %1433 = vmatmul.mubr.bf16.gmra.mxu0 %v1395
        %v1434 = vpop.f32.mrf.mxu0
        %v1435 = vadd.f32 0.0, %v1434
        %v1436 = vpop.f32.mrf.mxu0
        %v1437 = vpop.f32.mrf.mxu0
        %v1438 = vpop.f32.mrf.mxu0
        %1439 = vdwg.mxu0
        %v1440 = vmul.f32 %v1435, 0.25
        %v1441 = vadd.f32 %v1440, %v1275
        %v1442 = vsel %vm1282, %v1441, -inf
        %1443 = vmax.xlane.f32.xlu0 %v1442
        %v1444 = vpop.xlane.xlu0 %1443
        %v1445 = vsub.f32 %v1441, %v1444
        %v1446 = vmul.f32 %v1445, 1.442695
        %v1447 = vpow.pop %v1446
        %v1448 = vsel %vm1282, %v1447, 0.0
        %1449 = vadd.xlane.f32.xlu0 %v1448
        %v1450 = vpop.xlane.xlu0 %1449
        %v1451 = vrcp.pop %v1450
        %v1452 = vmul.f32 %v1447, %v1451
        %v1453 = vpack.c.bf16 %v1452, %v1452
        %1454 = vrot.lane.b32.xlu0 %v1278, 48
        %v1455 = vpop.permute.xlu0 %1454
        %v1458 = vsel %vm1282, %v1453, 0
        %1460 = vmatprep.subr.bf16.mxu0 0
        %1461 = vmatpush1.bf16.msra.mxu0 0
        %1462 = vmatprep.subr.bf16.mxu0 0
        %1463 = vmatpush1.bf16.msra.mxu0 0
        %1464 = vmatprep.subr.bf16.mxu0 0
        %1465 = vmatpush1.bf16.msra.mxu0 0
        %1466 = vmatprep.subr.bf16.mxu0 0
        %1467 = vmatpush1.bf16.msra.mxu0 0
        %1468 = vmatprep.subr.bf16.mxu0 0
        %1469 = vmatpush1.bf16.msra.mxu0 0
        %1470 = vmatprep.subr.bf16.mxu0 0
        %1471 = vmatpush1.bf16.msra.mxu0 0
        %1472 = vmatprep.subr.bf16.mxu0 0
        %1473 = vmatpush1.bf16.msra.mxu0 0
        %1474 = vmatprep.subr.bf16.mxu0 0
        %1475 = vmatpush1.bf16.msra.mxu0 %v1455
        %1476 = vmatprep.subr.bf16.mxu0 0
        %1477 = vmatpush2.bf16.msra.mxu0 0
        %1478 = vmatprep.subr.bf16.mxu0 0
        %1479 = vmatpush2.bf16.msra.mxu0 0
        %1480 = vmatprep.subr.bf16.mxu0 0
        %1481 = vmatpush2.bf16.msra.mxu0 0
        %1482 = vmatprep.subr.bf16.mxu0 0
        %1483 = vmatpush2.bf16.msra.mxu0 0
        %1484 = vmatprep.subr.bf16.mxu0 0
        %1485 = vmatpush2.bf16.msra.mxu0 0
        %1486 = vmatprep.subr.bf16.mxu0 0
        %1487 = vmatpush2.bf16.msra.mxu0 0
        %1488 = vmatprep.subr.bf16.mxu0 0
        %1489 = vmatpush2.bf16.msra.mxu0 0
        %1490 = vmatprep.subr.bf16.mxu0 0
        %1491 = vmatpush2.bf16.msra.mxu0 0
        %1492 = vmatprep.mubr.bf16.mxu0 0
        %1493 = vmatmul.mubr.bf16.gmra.mxu0 %v1458
        %v1494 = vpop.f32.mrf.mxu0
        %v1495 = vadd.f32 0.0, %v1494
        %v1496 = vpop.f32.mrf.mxu0
        %v1497 = vpop.f32.mrf.mxu0
        %v1498 = vpop.f32.mrf.mxu0
        %1499 = vdwg.mxu0
        %1501 = vrot.lane.b32.xlu0 %v1495, 16
        %v1502 = vpop.permute.xlu0 %1501
        %v1504 = vsel %vm1282, %v1384, %v1502
        %v1506 = vlaneseq
        %v1507 = vshrl.u32 %v1506, 7
        %v1508 = vsub.s32 0, %v1507
        %v1509 = vrot.slane %v1102, %v1508
        %1511 = vrot.lane.b32.xlu0 %v1277, 96
        %v1512 = vpop.permute.xlu0 %1511
        %v1514 = vsel %vm1282, %v1278, 0
        %v1517 = vsel %vm1282, %v1512, 0
        %1519 = vmatprep.subr.bf16.mxu0 0
        %1520 = vmatpush1.bf16.xpose.msra.mxu0 0
        %1521 = vmatprep.subr.bf16.mxu0 0
        %1522 = vmatpush1.bf16.xpose.msra.mxu0 0
        %1523 = vmatprep.subr.bf16.mxu0 0
        %1524 = vmatpush1.bf16.xpose.msra.mxu0 0
        %1525 = vmatprep.subr.bf16.mxu0 0
        %1526 = vmatpush1.bf16.xpose.msra.mxu0 0
        %1527 = vmatprep.subr.bf16.mxu0 0
        %1528 = vmatpush1.bf16.xpose.msra.mxu0 0
        %1529 = vmatprep.subr.bf16.mxu0 0
        %1530 = vmatpush1.bf16.xpose.msra.mxu0 0
        %1531 = vmatprep.subr.bf16.mxu0 0
        %1532 = vmatpush1.bf16.xpose.msra.mxu0 0
        %1533 = vmatprep.subr.bf16.mxu0 0
        %1534 = vmatpush1.bf16.xpose.msra.mxu0 %v1517
        %1535 = vmatprep.subr.bf16.mxu0 0
        %1536 = vmatpush2.bf16.xpose.msra.mxu0 0
        %1537 = vmatprep.subr.bf16.mxu0 0
        %1538 = vmatpush2.bf16.xpose.msra.mxu0 0
        %1539 = vmatprep.subr.bf16.mxu0 0
        %1540 = vmatpush2.bf16.xpose.msra.mxu0 0
        %1541 = vmatprep.subr.bf16.mxu0 0
        %1542 = vmatpush2.bf16.xpose.msra.mxu0 0
        %1543 = vmatprep.subr.bf16.mxu0 0
        %1544 = vmatpush2.bf16.xpose.msra.mxu0 0
        %1545 = vmatprep.subr.bf16.mxu0 0
        %1546 = vmatpush2.bf16.xpose.msra.mxu0 0
        %1547 = vmatprep.subr.bf16.mxu0 0
        %1548 = vmatpush2.bf16.xpose.msra.mxu0 0
        %1549 = vmatprep.subr.bf16.mxu0 0
        %1550 = vmatpush2.bf16.xpose.msra.mxu0 0
        %1551 = vmatprep.mubr.bf16.mxu0 0
        %1552 = vmatmul.mubr.bf16.gmra.mxu0 %v1514
        %v1553 = vpop.f32.mrf.mxu0
        %v1554 = vadd.f32 0.0, %v1553
        %v1555 = vpop.f32.mrf.mxu0
        %v1556 = vpop.f32.mrf.mxu0
        %v1557 = vadd.f32 0.0, %v1556
        %v1558 = vpop.f32.mrf.mxu0
        %1559 = vdwg.mxu0
        %v1560 = vmul.f32 %v1554, 0.25
        %v1561 = vmul.f32 %v1557, 0.25
        %v1562 = vadd.f32 %v1560, %v1509
        %v1563 = vadd.f32 %v1561, %v1509
        %vm1564 = vcmask 64512
        %v1565 = vsel %vm1564, %v1562, -inf
        %1566 = vmax.xlane.f32.xlu0 %v1565
        %v1567 = vpop.xlane.xlu0 %1566
        %v1568 = vsel %vm1564, %v1563, -inf
        %1569 = vmax.xlane.f32.xlu0 %v1568
        %v1570 = vpop.xlane.xlu0 %1569
        %v1571 = vsub.f32 %v1562, %v1567
        %v1572 = vsub.f32 %v1563, %v1570
        %v1573 = vmul.f32 %v1571, 1.442695
        %v1574 = vpow.pop %v1573
        %v1575 = vmul.f32 %v1572, 1.442695
        %v1576 = vpow.pop %v1575
        %v1577 = vsel %vm1564, %v1574, 0.0
        %1578 = vadd.xlane.f32.xlu0 %v1577
        %v1579 = vpop.xlane.xlu0 %1578
        %v1580 = vsel %vm1564, %v1576, 0.0
        %1581 = vadd.xlane.f32.xlu0 %v1580
        %v1582 = vpop.xlane.xlu0 %1581
        %v1583 = vrcp.pop %v1579
        %v1584 = vrcp.pop %v1582
        %v1585 = vmul.f32 %v1574, %v1583
        %v1586 = vmul.f32 %v1576, %v1584
        %v1587 = vpack.c.bf16 %v1586, %v1585
        %1588 = vrot.lane.b32.xlu0 %v1277, 64
        %v1589 = vpop.permute.xlu0 %1588
        %v1591 = vsel %vm1564, %v1587, 0
        %vm1593 = vcmask 1043456
        %v1595 = vsel %vm1593, %v1589, 0
        %1597 = vmatprep.subr.bf16.mxu0 0
        %1598 = vmatpush1.bf16.msra.mxu0 0
        %1599 = vmatprep.subr.bf16.mxu0 0
        %1600 = vmatpush1.bf16.msra.mxu0 0
        %1601 = vmatprep.subr.bf16.mxu0 0
        %1602 = vmatpush1.bf16.msra.mxu0 0
        %1603 = vmatprep.subr.bf16.mxu0 0
        %1604 = vmatpush1.bf16.msra.mxu0 0
        %1605 = vmatprep.subr.bf16.mxu0 0
        %1606 = vmatpush1.bf16.msra.mxu0 0
        %1607 = vmatprep.subr.bf16.mxu0 0
        %1608 = vmatpush1.bf16.msra.mxu0 0
        %1609 = vmatprep.subr.bf16.mxu0 0
        %1610 = vmatpush1.bf16.msra.mxu0 0
        %1611 = vmatprep.subr.bf16.mxu0 0
        %1612 = vmatpush1.bf16.msra.mxu0 %v1595
        %1613 = vmatprep.subr.bf16.mxu0 0
        %1614 = vmatpush2.bf16.msra.mxu0 0
        %1615 = vmatprep.subr.bf16.mxu0 0
        %1616 = vmatpush2.bf16.msra.mxu0 0
        %1617 = vmatprep.subr.bf16.mxu0 0
        %1618 = vmatpush2.bf16.msra.mxu0 0
        %1619 = vmatprep.subr.bf16.mxu0 0
        %1620 = vmatpush2.bf16.msra.mxu0 0
        %1621 = vmatprep.subr.bf16.mxu0 0
        %1622 = vmatpush2.bf16.msra.mxu0 0
        %1623 = vmatprep.subr.bf16.mxu0 0
        %1624 = vmatpush2.bf16.msra.mxu0 0
        %1625 = vmatprep.subr.bf16.mxu0 0
        %1626 = vmatpush2.bf16.msra.mxu0 0
        %1627 = vmatprep.subr.bf16.mxu0 0
        %1628 = vmatpush2.bf16.msra.mxu0 0
        %1629 = vmatprep.mubr.bf16.mxu0 0
        %1630 = vmatmul.mubr.bf16.gmra.mxu0 %v1591
        %v1631 = vpop.f32.mrf.mxu0
        %v1632 = vadd.f32 0.0, %v1631
        %v1633 = vpop.f32.mrf.mxu0
        %v1634 = vpop.f32.mrf.mxu0
        %v1635 = vadd.f32 0.0, %v1634
        %v1636 = vpop.f32.mrf.mxu0
        %1637 = vdwg.mxu0
        %1638 = vrot.lane.b32.xlu0 %v1278, 112
        %v1639 = vpop.permute.xlu0 %1638
        %1640 = vrot.lane.b32.xlu0 %v1277, 80
        %v1641 = vpop.permute.xlu0 %1640
        %v1643 = vsel %vm1282, %v1639, 0
        %v1646 = vsel %vm1282, %v1641, 0
        %1648 = vmatprep.subr.bf16.mxu0 0
        %1649 = vmatpush1.bf16.xpose.msra.mxu0 0
        %1650 = vmatprep.subr.bf16.mxu0 0
        %1651 = vmatpush1.bf16.xpose.msra.mxu0 0
        %1652 = vmatprep.subr.bf16.mxu0 0
        %1653 = vmatpush1.bf16.xpose.msra.mxu0 0
        %1654 = vmatprep.subr.bf16.mxu0 0
        %1655 = vmatpush1.bf16.xpose.msra.mxu0 0
        %1656 = vmatprep.subr.bf16.mxu0 0
        %1657 = vmatpush1.bf16.xpose.msra.mxu0 0
        %1658 = vmatprep.subr.bf16.mxu0 0
        %1659 = vmatpush1.bf16.xpose.msra.mxu0 0
        %1660 = vmatprep.subr.bf16.mxu0 0
        %1661 = vmatpush1.bf16.xpose.msra.mxu0 0
        %1662 = vmatprep.subr.bf16.mxu0 0
        %1663 = vmatpush1.bf16.xpose.msra.mxu0 %v1646
        %1664 = vmatprep.subr.bf16.mxu0 0
        %1665 = vmatpush2.bf16.xpose.msra.mxu0 0
        %1666 = vmatprep.subr.bf16.mxu0 0
        %1667 = vmatpush2.bf16.xpose.msra.mxu0 0
        %1668 = vmatprep.subr.bf16.mxu0 0
        %1669 = vmatpush2.bf16.xpose.msra.mxu0 0
        %1670 = vmatprep.subr.bf16.mxu0 0
        %1671 = vmatpush2.bf16.xpose.msra.mxu0 0
        %1672 = vmatprep.subr.bf16.mxu0 0
        %1673 = vmatpush2.bf16.xpose.msra.mxu0 0
        %1674 = vmatprep.subr.bf16.mxu0 0
        %1675 = vmatpush2.bf16.xpose.msra.mxu0 0
        %1676 = vmatprep.subr.bf16.mxu0 0
        %1677 = vmatpush2.bf16.xpose.msra.mxu0 0
        %1678 = vmatprep.subr.bf16.mxu0 0
        %1679 = vmatpush2.bf16.xpose.msra.mxu0 0
        %1680 = vmatprep.mubr.bf16.mxu0 0
        %1681 = vmatmul.mubr.bf16.gmra.mxu0 %v1643
        %v1682 = vpop.f32.mrf.mxu0
        %v1683 = vadd.f32 0.0, %v1682
        %v1684 = vpop.f32.mrf.mxu0
        %v1685 = vpop.f32.mrf.mxu0
        %v1686 = vadd.f32 0.0, %v1685
        %v1687 = vpop.f32.mrf.mxu0
        %1688 = vdwg.mxu0
        %v1689 = vmul.f32 %v1683, 0.25
        %v1690 = vmul.f32 %v1686, 0.25
        %v1691 = vadd.f32 %v1689, %v1509
        %v1692 = vadd.f32 %v1690, %v1509
        %v1693 = vsel %vm1564, %v1691, -inf
        %1694 = vmax.xlane.f32.xlu0 %v1693
        %v1695 = vpop.xlane.xlu0 %1694
        %v1696 = vsel %vm1564, %v1692, -inf
        %1697 = vmax.xlane.f32.xlu0 %v1696
        %v1698 = vpop.xlane.xlu0 %1697
        %v1699 = vsub.f32 %v1691, %v1695
        %v1700 = vsub.f32 %v1692, %v1698
        %v1701 = vmul.f32 %v1699, 1.442695
        %v1702 = vpow.pop %v1701
        %v1703 = vmul.f32 %v1700, 1.442695
        %v1704 = vpow.pop %v1703
        %v1705 = vsel %vm1564, %v1702, 0.0
        %1706 = vadd.xlane.f32.xlu0 %v1705
        %v1707 = vpop.xlane.xlu0 %1706
        %v1708 = vsel %vm1564, %v1704, 0.0
        %1709 = vadd.xlane.f32.xlu0 %v1708
        %v1710 = vpop.xlane.xlu0 %1709
        %v1711 = vrcp.pop %v1707
        %v1712 = vrcp.pop %v1710
        %v1713 = vmul.f32 %v1702, %v1711
        %v1714 = vmul.f32 %v1704, %v1712
        %v1715 = vpack.c.bf16 %v1714, %v1713
        %1716 = vrot.lane.b32.xlu0 %v1277, 48
        %v1717 = vpop.permute.xlu0 %1716
        %v1719 = vsel %vm1564, %v1715, 0
        %v1722 = vsel %vm1593, %v1717, 0
        %1724 = vmatprep.subr.bf16.mxu0 0
        %1725 = vmatpush1.bf16.msra.mxu0 0
        %1726 = vmatprep.subr.bf16.mxu0 0
        %1727 = vmatpush1.bf16.msra.mxu0 0
        %1728 = vmatprep.subr.bf16.mxu0 0
        %1729 = vmatpush1.bf16.msra.mxu0 0
        %1730 = vmatprep.subr.bf16.mxu0 0
        %1731 = vmatpush1.bf16.msra.mxu0 0
        %1732 = vmatprep.subr.bf16.mxu0 0
        %1733 = vmatpush1.bf16.msra.mxu0 0
        %1734 = vmatprep.subr.bf16.mxu0 0
        %1735 = vmatpush1.bf16.msra.mxu0 0
        %1736 = vmatprep.subr.bf16.mxu0 0
        %1737 = vmatpush1.bf16.msra.mxu0 0
        %1738 = vmatprep.subr.bf16.mxu0 0
        %1739 = vmatpush1.bf16.msra.mxu0 %v1722
        %1740 = vmatprep.subr.bf16.mxu0 0
        %1741 = vmatpush2.bf16.msra.mxu0 0
        %1742 = vmatprep.subr.bf16.mxu0 0
        %1743 = vmatpush2.bf16.msra.mxu0 0
        %1744 = vmatprep.subr.bf16.mxu0 0
        %1745 = vmatpush2.bf16.msra.mxu0 0
        %1746 = vmatprep.subr.bf16.mxu0 0
        %1747 = vmatpush2.bf16.msra.mxu0 0
        %1748 = vmatprep.subr.bf16.mxu0 0
        %1749 = vmatpush2.bf16.msra.mxu0 0
        %1750 = vmatprep.subr.bf16.mxu0 0
        %1751 = vmatpush2.bf16.msra.mxu0 0
        %1752 = vmatprep.subr.bf16.mxu0 0
        %1753 = vmatpush2.bf16.msra.mxu0 0
        %1754 = vmatprep.subr.bf16.mxu0 0
        %1755 = vmatpush2.bf16.msra.mxu0 0
        %1756 = vmatprep.mubr.bf16.mxu0 0
        %1757 = vmatmul.mubr.bf16.gmra.mxu0 %v1719
        %v1758 = vpop.f32.mrf.mxu0
        %v1759 = vadd.f32 0.0, %v1758
        %v1760 = vpop.f32.mrf.mxu0
        %v1761 = vpop.f32.mrf.mxu0
        %v1762 = vadd.f32 0.0, %v1761
        %v1763 = vpop.f32.mrf.mxu0
        %1764 = vdwg.mxu0
        %1767 = vrot.lane.b32.xlu0 %v1759, 16
        %v1768 = vpop.permute.xlu0 %1767
        %1769 = vrot.lane.b32.xlu0 %v1762, 16
        %v1770 = vpop.permute.xlu0 %1769
        %v1773 = vsel %vm1282, %v1632, %v1768
        %v1774 = vsel %vm1282, %v1635, %v1770
        %v1775 = vpack.c.bf16 %v1504, %v1504
        %v1776 = vld [vmem:[#allocation10] sm:$0xf]
        %v1777 = vld [vmem:[#allocation10 + $0x4] sm:$0xf]
        %v1778 = vld [vmem:[#allocation10 + $0x8] sm:$0xf]
        %v1779 = vld [vmem:[#allocation10 + $0xc] sm:$0xf]
        %v1781 = vlaneseq
        %v1782 = vshrl.u32 %v1781, 7
        %v1783 = vsub.s32 0, %v1782
        %v1784 = vrot.slane %v1106, %v1783
        %v1790 = vunpack.c.l.b16 %v1776
        %v1791 = vunpack.c.l.b16 %v1777
        %v1792 = vunpack.c.l.b16 %v1778
        %v1793 = vunpack.c.l.b16 %v1779
        %v1794 = vpack.c.b16 %v1791, %v1790
        %v1795 = vpack.c.b16 %v1793, %v1792
        %v1799 = vsel %vm1144, %v1775, 0
        %1801 = vmatprep.subr.bf16.mxu0 0
        %1802 = vmatpush1.bf16.msra.mxu0 0
        %1803 = vmatprep.subr.bf16.mxu0 0
        %1804 = vmatpush1.bf16.msra.mxu0 0
        %1805 = vmatprep.subr.bf16.mxu0 0
        %1806 = vmatpush1.bf16.msra.mxu0 0
        %1807 = vmatprep.subr.bf16.mxu0 0
        %1808 = vmatpush1.bf16.msra.mxu0 0
        %1809 = vmatprep.subr.bf16.mxu0 0
        %1810 = vmatpush1.bf16.msra.mxu0 0
        %1811 = vmatprep.subr.bf16.mxu0 0
        %1812 = vmatpush1.bf16.msra.mxu0 0
        %1813 = vmatprep.subr.bf16.mxu0 0
        %1814 = vmatpush1.bf16.msra.mxu0 %v1795
        %1815 = vmatprep.subr.bf16.mxu0 0
        %1816 = vmatpush1.bf16.msra.mxu0 %v1794
        %1817 = vmatprep.subr.bf16.mxu0 0
        %1818 = vmatpush2.bf16.msra.mxu0 0
        %1819 = vmatprep.subr.bf16.mxu0 0
        %1820 = vmatpush2.bf16.msra.mxu0 0
        %1821 = vmatprep.subr.bf16.mxu0 0
        %1822 = vmatpush2.bf16.msra.mxu0 0
        %1823 = vmatprep.subr.bf16.mxu0 0
        %1824 = vmatpush2.bf16.msra.mxu0 0
        %1825 = vmatprep.subr.bf16.mxu0 0
        %1826 = vmatpush2.bf16.msra.mxu0 0
        %1827 = vmatprep.subr.bf16.mxu0 0
        %1828 = vmatpush2.bf16.msra.mxu0 0
        %1829 = vmatprep.subr.bf16.mxu0 0
        %1830 = vmatpush2.bf16.msra.mxu0 0
        %1831 = vmatprep.subr.bf16.mxu0 0
        %1832 = vmatpush2.bf16.msra.mxu0 0
        %1833 = vmatprep.mubr.bf16.mxu0 0
        %1834 = vmatmul.mubr.bf16.gmra.mxu0 %v1799
        %v1835 = vpop.f32.mrf.mxu0
        %v1836 = vadd.f32 %v1784, %v1835
        %v1837 = vpop.f32.mrf.mxu0
        %v1838 = vpop.f32.mrf.mxu0
        %v1839 = vpop.f32.mrf.mxu0
        %1840 = vdwg.mxu0
        %v1841 = vadd.f32 %v1836, %v1099
        %v1842 = vsel %vm1144, %v1841, 0.0
        %1843 = vadd.xlane.f32.xlu0 %v1842
        %v1844 = vpop.xlane.xlu0 %1843
        %v1845 = vrcp.pop 32.0
        %v1846 = vmul.f32 %v1844, %v1845
        %v1847 = vsub.f32 %v1841, %v1846
        %v1848 = vmul.f32 %v1847, %v1847
        %v1849 = vsel %vm1144, %v1848, 0.0
        %1850 = vadd.xlane.f32.xlu0 %v1849
        %v1851 = vpop.xlane.xlu0 %1850
        %v1852 = vmul.f32 %v1851, %v1845
        %v1853 = vadd.f32 %v1852, 1e-12
        %v1854 = vrsqrt.pop %v1853
        %v1855 = vmul.f32 %v1847, %v1854
        %v1857 = vlaneseq
        %v1858 = vshrl.u32 %v1857, 7
        %v1859 = vsub.s32 0, %v1858
        %v1860 = vrot.slane %v1107, %v1859
        %v1862 = vmul.f32 %v1855, %v1860
        %v1864 = vlaneseq
        %v1865 = vshrl.u32 %v1864, 7
        %v1866 = vsub.s32 0, %v1865
        %v1867 = vrot.slane %v1108, %v1866
        %v1869 = vadd.f32 %v1862, %v1867
        %v1870 = vpack.c.bf16 %v1774, %v1773
        %v1871 = vld [vmem:[#allocation11] sm:$0xf]
        %v1872 = vld [vmem:[#allocation11 + $0x4] sm:$0xf]
        %v1873 = vld [vmem:[#allocation11 + $0x8] sm:$0xf]
        %v1874 = vld [vmem:[#allocation11 + $0xc] sm:$0xf]
        %v1876 = vlaneseq
        %v1877 = vshrl.u32 %v1876, 7
        %v1878 = vsub.s32 0, %v1877
        %v1879 = vrot.slane %v1109, %v1878
        %v1885 = vunpack.c.l.b16 %v1871
        %v1886 = vunpack.c.l.b16 %v1872
        %v1887 = vunpack.c.l.b16 %v1873
        %v1888 = vunpack.c.l.b16 %v1874
        %v1889 = vpack.c.b16 %v1886, %v1885
        %v1890 = vpack.c.b16 %v1888, %v1887
        %v1894 = vsel %vm1144, %v1870, 0
        %1896 = vmatprep.subr.bf16.mxu0 0
        %1897 = vmatpush1.bf16.msra.mxu0 0
        %1898 = vmatprep.subr.bf16.mxu0 0
        %1899 = vmatpush1.bf16.msra.mxu0 0
        %1900 = vmatprep.subr.bf16.mxu0 0
        %1901 = vmatpush1.bf16.msra.mxu0 0
        %1902 = vmatprep.subr.bf16.mxu0 0
        %1903 = vmatpush1.bf16.msra.mxu0 0
        %1904 = vmatprep.subr.bf16.mxu0 0
        %1905 = vmatpush1.bf16.msra.mxu0 0
        %1906 = vmatprep.subr.bf16.mxu0 0
        %1907 = vmatpush1.bf16.msra.mxu0 0
        %1908 = vmatprep.subr.bf16.mxu0 0
        %1909 = vmatpush1.bf16.msra.mxu0 %v1890
        %1910 = vmatprep.subr.bf16.mxu0 0
        %1911 = vmatpush1.bf16.msra.mxu0 %v1889
        %1912 = vmatprep.subr.bf16.mxu0 0
        %1913 = vmatpush2.bf16.msra.mxu0 0
        %1914 = vmatprep.subr.bf16.mxu0 0
        %1915 = vmatpush2.bf16.msra.mxu0 0
        %1916 = vmatprep.subr.bf16.mxu0 0
        %1917 = vmatpush2.bf16.msra.mxu0 0
        %1918 = vmatprep.subr.bf16.mxu0 0
        %1919 = vmatpush2.bf16.msra.mxu0 0
        %1920 = vmatprep.subr.bf16.mxu0 0
        %1921 = vmatpush2.bf16.msra.mxu0 0
        %1922 = vmatprep.subr.bf16.mxu0 0
        %1923 = vmatpush2.bf16.msra.mxu0 0
        %1924 = vmatprep.subr.bf16.mxu0 0
        %1925 = vmatpush2.bf16.msra.mxu0 0
        %1926 = vmatprep.subr.bf16.mxu0 0
        %1927 = vmatpush2.bf16.msra.mxu0 0
        %1928 = vmatprep.mubr.bf16.mxu0 0
        %1929 = vmatmul.mubr.bf16.gmra.mxu0 %v1894
        %v1930 = vpop.f32.mrf.mxu0
        %v1931 = vadd.f32 %v1879, %v1930
        %v1932 = vpop.f32.mrf.mxu0
        %v1933 = vpop.f32.mrf.mxu0
        %v1934 = vadd.f32 %v1879, %v1933
        %v1935 = vpop.f32.mrf.mxu0
        %1936 = vdwg.mxu0
        %v1937 = vadd.f32 %v1931, %v1100
        %v1938 = vadd.f32 %v1934, %v1101
        %v1939 = vsel %vm1226, %v1937, 0.0
        %1940 = vadd.xlane.f32.xlu0 %v1939
        %v1941 = vpop.xlane.xlu0 %1940
        %v1942 = vsel %vm1226, %v1938, 0.0
        %1943 = vadd.xlane.f32.xlu0 %v1942
        %v1944 = vpop.xlane.xlu0 %1943
        %v1945 = vrcp.pop 64.0
        %v1946 = vmul.f32 %v1941, %v1945
        %v1947 = vmul.f32 %v1944, %v1945
        %v1948 = vsub.f32 %v1937, %v1946
        %v1949 = vsub.f32 %v1938, %v1947
        %v1950 = vmul.f32 %v1948, %v1948
        %v1951 = vmul.f32 %v1949, %v1949
        %v1952 = vsel %vm1226, %v1950, 0.0
        %1953 = vadd.xlane.f32.xlu0 %v1952
        %v1954 = vpop.xlane.xlu0 %1953
        %v1955 = vsel %vm1226, %v1951, 0.0
        %1956 = vadd.xlane.f32.xlu0 %v1955
        %v1957 = vpop.xlane.xlu0 %1956
        %v1958 = vmul.f32 %v1954, %v1945
        %v1959 = vmul.f32 %v1957, %v1945
        %v1960 = vadd.f32 %v1958, 1e-12
        %v1961 = vadd.f32 %v1959, 1e-12
        %v1962 = vrsqrt.pop %v1960
        %v1963 = vrsqrt.pop %v1961
        %v1964 = vmul.f32 %v1948, %v1962
        %v1965 = vmul.f32 %v1949, %v1963
        %v1967 = vlaneseq
        %v1968 = vshrl.u32 %v1967, 7
        %v1969 = vsub.s32 0, %v1968
        %v1970 = vrot.slane %v1110, %v1969
        %v1972 = vmul.f32 %v1964, %v1970
        %v1973 = vmul.f32 %v1965, %v1970
        %v1975 = vlaneseq
        %v1976 = vshrl.u32 %v1975, 7
        %v1977 = vsub.s32 0, %v1976
        %v1978 = vrot.slane %v1111, %v1977
        %v1980 = vadd.f32 %v1972, %v1978
        %v1981 = vadd.f32 %v1973, %v1978
        %v1982 = vpack.c.bf16 %v1869, %v1869
        %v1983 = vld [vmem:[#allocation13] sm:$0xf]
        %v1984 = vld [vmem:[#allocation13 + $0x4] sm:$0xf]
        %v1985 = vld [vmem:[#allocation13 + $0x8] sm:$0xf]
        %v1986 = vld [vmem:[#allocation13 + $0xc] sm:$0xf]
        %v1988 = vlaneseq
        %v1989 = vshrl.u32 %v1988, 7
        %v1990 = vsub.s32 0, %v1989
        %v1991 = vrot.slane %v1112, %v1990
        %v1997 = vunpack.c.l.b16 %v1983
        %v1998 = vunpack.c.l.b16 %v1984
        %v1999 = vunpack.c.l.b16 %v1985
        %v2000 = vunpack.c.l.b16 %v1986
        %v2001 = vpack.c.b16 %v1998, %v1997
        %v2002 = vpack.c.b16 %v2000, %v1999
        %v2006 = vsel %vm1144, %v1982, 0
        %2008 = vmatprep.subr.bf16.mxu0 0
        %2009 = vmatpush1.bf16.msra.mxu0 0
        %2010 = vmatprep.subr.bf16.mxu0 0
        %2011 = vmatpush1.bf16.msra.mxu0 0
        %2012 = vmatprep.subr.bf16.mxu0 0
        %2013 = vmatpush1.bf16.msra.mxu0 0
        %2014 = vmatprep.subr.bf16.mxu0 0
        %2015 = vmatpush1.bf16.msra.mxu0 0
        %2016 = vmatprep.subr.bf16.mxu0 0
        %2017 = vmatpush1.bf16.msra.mxu0 0
        %2018 = vmatprep.subr.bf16.mxu0 0
        %2019 = vmatpush1.bf16.msra.mxu0 0
        %2020 = vmatprep.subr.bf16.mxu0 0
        %2021 = vmatpush1.bf16.msra.mxu0 %v2002
        %2022 = vmatprep.subr.bf16.mxu0 0
        %2023 = vmatpush1.bf16.msra.mxu0 %v2001
        %2024 = vmatprep.subr.bf16.mxu0 0
        %2025 = vmatpush2.bf16.msra.mxu0 0
        %2026 = vmatprep.subr.bf16.mxu0 0
        %2027 = vmatpush2.bf16.msra.mxu0 0
        %2028 = vmatprep.subr.bf16.mxu0 0
        %2029 = vmatpush2.bf16.msra.mxu0 0
        %2030 = vmatprep.subr.bf16.mxu0 0
        %2031 = vmatpush2.bf16.msra.mxu0 0
        %2032 = vmatprep.subr.bf16.mxu0 0
        %2033 = vmatpush2.bf16.msra.mxu0 0
        %2034 = vmatprep.subr.bf16.mxu0 0
        %2035 = vmatpush2.bf16.msra.mxu0 0
        %2036 = vmatprep.subr.bf16.mxu0 0
        %2037 = vmatpush2.bf16.msra.mxu0 0
        %2038 = vmatprep.subr.bf16.mxu0 0
        %2039 = vmatpush2.bf16.msra.mxu0 0
        %2040 = vmatprep.mubr.bf16.mxu0 0
        %2041 = vmatmul.mubr.bf16.gmra.mxu0 %v2006
        %v2042 = vpop.f32.mrf.mxu0
        %v2043 = vadd.f32 %v1991, %v2042
        %v2044 = vpop.f32.mrf.mxu0
        %v2045 = vpop.f32.mrf.mxu0
        %v2046 = vpop.f32.mrf.mxu0
        %2047 = vdwg.mxu0
        %v2048 = vmul.f32 %v2043, 0.5
        %v2049 = vmul.f32 %v2043, 0.044715
        %v2050 = vmul.f32 %v2049, %v2043
        %v2051 = vmul.f32 %v2050, %v2043
        %v2052 = vadd.f32 %v2043, %v2051
        %v2053 = vmul.f32 %v2052, 0.7978846
        %v2054 = vtanh.pop %v2053
        %v2055 = vadd.f32 %v2054, 1.0
        %v2056 = vmul.f32 %v2048, %v2055
        %v2057 = vpack.c.bf16 %v2056, %v2056
        %v2058 = vld [vmem:[#allocation14] sm:$0xf]
        %v2059 = vld [vmem:[#allocation14 + $0x4] sm:$0xf]
        %v2060 = vld [vmem:[#allocation14 + $0x8] sm:$0xf]
        %v2061 = vld [vmem:[#allocation14 + $0xc] sm:$0xf]
        %v2062 = vld [vmem:[#allocation14 + $0x10] sm:$0xf]
        %v2063 = vld [vmem:[#allocation14 + $0x14] sm:$0xf]
        %v2064 = vld [vmem:[#allocation14 + $0x18] sm:$0xf]
        %v2065 = vld [vmem:[#allocation14 + $0x1c] sm:$0xf]
        %v2067 = vlaneseq
        %v2068 = vshrl.u32 %v2067, 7
        %v2069 = vsub.s32 0, %v2068
        %v2070 = vrot.slane %v1113, %v2069
        %v2080 = vunpack.c.l.b16 %v2058
        %v2081 = vunpack.c.l.b16 %v2059
        %v2082 = vunpack.c.l.b16 %v2060
        %v2083 = vunpack.c.l.b16 %v2061
        %v2084 = vunpack.c.l.b16 %v2062
        %v2085 = vunpack.c.l.b16 %v2063
        %v2086 = vunpack.c.l.b16 %v2064
        %v2087 = vunpack.c.l.b16 %v2065
        %v2088 = vpack.c.b16 %v2081, %v2080
        %v2089 = vpack.c.b16 %v2083, %v2082
        %v2090 = vpack.c.b16 %v2085, %v2084
        %v2091 = vpack.c.b16 %v2087, %v2086
        %v2097 = vsel %vm1226, %v2057, 0
        %2099 = vmatprep.subr.bf16.mxu0 0
        %2100 = vmatpush1.bf16.msra.mxu0 0
        %2101 = vmatprep.subr.bf16.mxu0 0
        %2102 = vmatpush1.bf16.msra.mxu0 0
        %2103 = vmatprep.subr.bf16.mxu0 0
        %2104 = vmatpush1.bf16.msra.mxu0 0
        %2105 = vmatprep.subr.bf16.mxu0 0
        %2106 = vmatpush1.bf16.msra.mxu0 0
        %2107 = vmatprep.subr.bf16.mxu0 0
        %2108 = vmatpush1.bf16.msra.mxu0 %v2091
        %2109 = vmatprep.subr.bf16.mxu0 0
        %2110 = vmatpush1.bf16.msra.mxu0 %v2090
        %2111 = vmatprep.subr.bf16.mxu0 0
        %2112 = vmatpush1.bf16.msra.mxu0 %v2089
        %2113 = vmatprep.subr.bf16.mxu0 0
        %2114 = vmatpush1.bf16.msra.mxu0 %v2088
        %2115 = vmatprep.subr.bf16.mxu0 0
        %2116 = vmatpush2.bf16.msra.mxu0 0
        %2117 = vmatprep.subr.bf16.mxu0 0
        %2118 = vmatpush2.bf16.msra.mxu0 0
        %2119 = vmatprep.subr.bf16.mxu0 0
        %2120 = vmatpush2.bf16.msra.mxu0 0
        %2121 = vmatprep.subr.bf16.mxu0 0
        %2122 = vmatpush2.bf16.msra.mxu0 0
        %2123 = vmatprep.subr.bf16.mxu0 0
        %2124 = vmatpush2.bf16.msra.mxu0 0
        %2125 = vmatprep.subr.bf16.mxu0 0
        %2126 = vmatpush2.bf16.msra.mxu0 0
        %2127 = vmatprep.subr.bf16.mxu0 0
        %2128 = vmatpush2.bf16.msra.mxu0 0
        %2129 = vmatprep.subr.bf16.mxu0 0
        %2130 = vmatpush2.bf16.msra.mxu0 0
        %2131 = vmatprep.mubr.bf16.mxu0 0
        %2132 = vmatmul.mubr.bf16.gmra.mxu0 %v2097
        %v2133 = vpop.f32.mrf.mxu0
        %v2134 = vadd.f32 %v2070, %v2133
        %v2135 = vpop.f32.mrf.mxu0
        %v2136 = vpop.f32.mrf.mxu0
        %v2137 = vpop.f32.mrf.mxu0
        %2138 = vdwg.mxu0
        %v2139 = vadd.f32 %v2134, %v1869
        %v2140 = vsel %vm1144, %v2139, 0.0
        %2141 = vadd.xlane.f32.xlu0 %v2140
        %v2142 = vpop.xlane.xlu0 %2141
        %v2143 = vmul.f32 %v2142, %v1845
        %v2144 = vsub.f32 %v2139, %v2143
        %v2145 = vmul.f32 %v2144, %v2144
        %v2146 = vsel %vm1144, %v2145, 0.0
        %2147 = vadd.xlane.f32.xlu0 %v2146
        %v2148 = vpop.xlane.xlu0 %2147
        %v2149 = vmul.f32 %v2148, %v1845
        %v2150 = vadd.f32 %v2149, 1e-12
        %v2151 = vrsqrt.pop %v2150
        %v2152 = vmul.f32 %v2144, %v2151
        %v2154 = vlaneseq
        %v2155 = vshrl.u32 %v2154, 7
        %v2156 = vsub.s32 0, %v2155
        %v2157 = vrot.slane %v1114, %v2156
        %v2159 = vmul.f32 %v2152, %v2157
        %v2161 = vlaneseq
        %v2162 = vshrl.u32 %v2161, 7
        %v2163 = vsub.s32 0, %v2162
        %v2164 = vrot.slane %v1115, %v2163
        %v2166 = vadd.f32 %v2159, %v2164
        %v2167 = vpack.c.bf16 %v1981, %v1980
        %v2168 = vld [vmem:[%s45] sm:$0xf]
        %v2169 = vld [vmem:[%s45 + $0x4] sm:$0xf]
        %v2170 = vld [vmem:[%s45 + $0x8] sm:$0xf]
        %v2171 = vld [vmem:[%s45 + $0xc] sm:$0xf]
        %v2172 = vld [vmem:[%s45 + $0x10] sm:$0xf]
        %v2173 = vld [vmem:[%s45 + $0x14] sm:$0xf]
        %v2174 = vld [vmem:[%s45 + $0x18] sm:$0xf]
        %v2175 = vld [vmem:[%s45 + $0x1c] sm:$0xf]
        %v2177 = vlaneseq
        %v2178 = vshrl.u32 %v2177, 7
        %v2179 = vsub.s32 0, %v2178
        %v2180 = vrot.slane %v1116, %v2179
        %v2190 = vunpack.c.l.b16 %v2168
        %v2191 = vunpack.c.l.b16 %v2169
        %v2192 = vunpack.c.l.b16 %v2170
        %v2193 = vunpack.c.l.b16 %v2171
        %v2194 = vunpack.c.l.b16 %v2172
        %v2195 = vunpack.c.l.b16 %v2173
        %v2196 = vunpack.c.l.b16 %v2174
        %v2197 = vunpack.c.l.b16 %v2175
        %v2198 = vpack.c.b16 %v2191, %v2190
        %v2199 = vpack.c.b16 %v2193, %v2192
        %v2200 = vpack.c.b16 %v2195, %v2194
        %v2201 = vpack.c.b16 %v2197, %v2196
        %v2207 = vsel %vm1226, %v2167, 0
        %2209 = vmatprep.subr.bf16.mxu0 0
        %2210 = vmatpush1.bf16.msra.mxu0 0
        %2211 = vmatprep.subr.bf16.mxu0 0
        %2212 = vmatpush1.bf16.msra.mxu0 0
        %2213 = vmatprep.subr.bf16.mxu0 0
        %2214 = vmatpush1.bf16.msra.mxu0 0
        %2215 = vmatprep.subr.bf16.mxu0 0
        %2216 = vmatpush1.bf16.msra.mxu0 0
        %2217 = vmatprep.subr.bf16.mxu0 0
        %2218 = vmatpush1.bf16.msra.mxu0 %v2201
        %2219 = vmatprep.subr.bf16.mxu0 0
        %2220 = vmatpush1.bf16.msra.mxu0 %v2200
        %2221 = vmatprep.subr.bf16.mxu0 0
        %2222 = vmatpush1.bf16.msra.mxu0 %v2199
        %2223 = vmatprep.subr.bf16.mxu0 0
        %2224 = vmatpush1.bf16.msra.mxu0 %v2198
        %2225 = vmatprep.subr.bf16.mxu0 0
        %2226 = vmatpush2.bf16.msra.mxu0 0
        %2227 = vmatprep.subr.bf16.mxu0 0
        %2228 = vmatpush2.bf16.msra.mxu0 0
        %2229 = vmatprep.subr.bf16.mxu0 0
        %2230 = vmatpush2.bf16.msra.mxu0 0
        %2231 = vmatprep.subr.bf16.mxu0 0
        %2232 = vmatpush2.bf16.msra.mxu0 0
        %2233 = vmatprep.subr.bf16.mxu0 0
        %2234 = vmatpush2.bf16.msra.mxu0 0
        %2235 = vmatprep.subr.bf16.mxu0 0
        %2236 = vmatpush2.bf16.msra.mxu0 0
        %2237 = vmatprep.subr.bf16.mxu0 0
        %2238 = vmatpush2.bf16.msra.mxu0 0
        %2239 = vmatprep.subr.bf16.mxu0 0
        %2240 = vmatpush2.bf16.msra.mxu0 0
        %2241 = vmatprep.mubr.bf16.mxu0 0
        %2242 = vmatmul.mubr.bf16.gmra.mxu0 %v2207
        %v2243 = vpop.f32.mrf.mxu0
        %v2244 = vadd.f32 %v2180, %v2243
        %v2245 = vpop.f32.mrf.mxu0
        %v2246 = vpop.f32.mrf.mxu0
        %v2247 = vadd.f32 %v2180, %v2246
        %v2248 = vpop.f32.mrf.mxu0
        %2249 = vdwg.mxu0
        %v2250 = vmul.f32 %v2244, 0.5
        %v2251 = vmul.f32 %v2247, 0.5
        %v2252 = vmul.f32 %v2244, 0.044715
        %v2253 = vmul.f32 %v2247, 0.044715
        %v2254 = vmul.f32 %v2252, %v2244
        %v2255 = vmul.f32 %v2253, %v2247
        %v2256 = vmul.f32 %v2254, %v2244
        %v2257 = vmul.f32 %v2255, %v2247
        %v2258 = vadd.f32 %v2244, %v2256
        %v2259 = vadd.f32 %v2247, %v2257
        %v2260 = vmul.f32 %v2258, 0.7978846
        %v2261 = vmul.f32 %v2259, 0.7978846
        %v2262 = vtanh.pop %v2260
        %v2263 = vtanh.pop %v2261
        %v2264 = vadd.f32 %v2262, 1.0
        %v2265 = vadd.f32 %v2263, 1.0
        %v2266 = vmul.f32 %v2250, %v2264
        %v2267 = vmul.f32 %v2251, %v2265
        %v2268 = vpack.c.bf16 %v2267, %v2266
        %v2269 = vld [vmem:[#allocation16] sm:$0xf]
        %v2270 = vld [vmem:[#allocation16 + $0x4] sm:$0xf]
        %v2271 = vld [vmem:[#allocation16 + $0x8] sm:$0xf]
        %v2272 = vld [vmem:[#allocation16 + $0xc] sm:$0xf]
        %v2273 = vld [vmem:[#allocation16 + $0x10] sm:$0xf]
        %v2274 = vld [vmem:[#allocation16 + $0x14] sm:$0xf]
        %v2275 = vld [vmem:[#allocation16 + $0x18] sm:$0xf]
        %v2276 = vld [vmem:[#allocation16 + $0x1c] sm:$0xf]
        %v2277 = vld [vmem:[#allocation16 + $0x20] sm:$0xf]
        %v2278 = vld [vmem:[#allocation16 + $0x24] sm:$0xf]
        %v2279 = vld [vmem:[#allocation16 + $0x28] sm:$0xf]
        %v2280 = vld [vmem:[#allocation16 + $0x2c] sm:$0xf]
        %v2281 = vld [vmem:[#allocation16 + $0x30] sm:$0xf]
        %v2282 = vld [vmem:[#allocation16 + $0x34] sm:$0xf]
        %v2283 = vld [vmem:[#allocation16 + $0x38] sm:$0xf]
        %v2284 = vld [vmem:[#allocation16 + $0x3c] sm:$0xf]
        %v2286 = vlaneseq
        %v2287 = vshrl.u32 %v2286, 7
        %v2288 = vsub.s32 0, %v2287
        %v2289 = vrot.slane %v1117, %v2288
        %v2307 = vunpack.c.l.b16 %v2269
        %v2308 = vunpack.c.l.b16 %v2270
        %v2309 = vunpack.c.l.b16 %v2271
        %v2310 = vunpack.c.l.b16 %v2272
        %v2311 = vunpack.c.l.b16 %v2273
        %v2312 = vunpack.c.l.b16 %v2274
        %v2313 = vunpack.c.l.b16 %v2275
        %v2314 = vunpack.c.l.b16 %v2276
        %v2315 = vunpack.c.l.b16 %v2277
        %v2316 = vunpack.c.l.b16 %v2278
        %v2317 = vunpack.c.l.b16 %v2279
        %v2318 = vunpack.c.l.b16 %v2280
        %v2319 = vunpack.c.l.b16 %v2281
        %v2320 = vunpack.c.l.b16 %v2282
        %v2321 = vunpack.c.l.b16 %v2283
        %v2322 = vunpack.c.l.b16 %v2284
        %v2323 = vpack.c.b16 %v2308, %v2307
        %v2324 = vpack.c.b16 %v2310, %v2309
        %v2325 = vpack.c.b16 %v2312, %v2311
        %v2326 = vpack.c.b16 %v2314, %v2313
        %v2327 = vpack.c.b16 %v2316, %v2315
        %v2328 = vpack.c.b16 %v2318, %v2317
        %v2329 = vpack.c.b16 %v2320, %v2319
        %v2330 = vpack.c.b16 %v2322, %v2321
        %2339 = vmatprep.subr.bf16.mxu0 0
        %2340 = vmatpush1.bf16.msra.mxu0 %v2330
        %2341 = vmatprep.subr.bf16.mxu0 0
        %2342 = vmatpush1.bf16.msra.mxu0 %v2329
        %2343 = vmatprep.subr.bf16.mxu0 0
        %2344 = vmatpush1.bf16.msra.mxu0 %v2328
        %2345 = vmatprep.subr.bf16.mxu0 0
        %2346 = vmatpush1.bf16.msra.mxu0 %v2327
        %2347 = vmatprep.subr.bf16.mxu0 0
        %2348 = vmatpush1.bf16.msra.mxu0 %v2326
        %2349 = vmatprep.subr.bf16.mxu0 0
        %2350 = vmatpush1.bf16.msra.mxu0 %v2325
        %2351 = vmatprep.subr.bf16.mxu0 0
        %2352 = vmatpush1.bf16.msra.mxu0 %v2324
        %2353 = vmatprep.subr.bf16.mxu0 0
        %2354 = vmatpush1.bf16.msra.mxu0 %v2323
        %2355 = vmatprep.subr.bf16.mxu0 0
        %2356 = vmatpush2.bf16.msra.mxu0 0
        %2357 = vmatprep.subr.bf16.mxu0 0
        %2358 = vmatpush2.bf16.msra.mxu0 0
        %2359 = vmatprep.subr.bf16.mxu0 0
        %2360 = vmatpush2.bf16.msra.mxu0 0
        %2361 = vmatprep.subr.bf16.mxu0 0
        %2362 = vmatpush2.bf16.msra.mxu0 0
        %2363 = vmatprep.subr.bf16.mxu0 0
        %2364 = vmatpush2.bf16.msra.mxu0 0
        %2365 = vmatprep.subr.bf16.mxu0 0
        %2366 = vmatpush2.bf16.msra.mxu0 0
        %2367 = vmatprep.subr.bf16.mxu0 0
        %2368 = vmatpush2.bf16.msra.mxu0 0
        %2369 = vmatprep.subr.bf16.mxu0 0
        %2370 = vmatpush2.bf16.msra.mxu0 0
        %2371 = vmatprep.mubr.bf16.mxu0 0
        %2372 = vmatmul.mubr.bf16.gmra.mxu0 %v2268
        %v2373 = vpop.f32.mrf.mxu0
        %v2374 = vadd.f32 %v2289, %v2373
        %v2375 = vpop.f32.mrf.mxu0
        %v2376 = vpop.f32.mrf.mxu0
        %v2377 = vadd.f32 %v2289, %v2376
        %v2378 = vpop.f32.mrf.mxu0
        %2379 = vdwg.mxu0
        %v2380 = vadd.f32 %v2374, %v1980
        %v2381 = vadd.f32 %v2377, %v1981
        %v2382 = vsel %vm1226, %v2380, 0.0
        %2383 = vadd.xlane.f32.xlu0 %v2382
        %v2384 = vpop.xlane.xlu0 %2383
        %v2385 = vsel %vm1226, %v2381, 0.0
        %2386 = vadd.xlane.f32.xlu0 %v2385
        %v2387 = vpop.xlane.xlu0 %2386
        %v2388 = vmul.f32 %v2384, %v1945
        %v2389 = vmul.f32 %v2387, %v1945
        %v2390 = vsub.f32 %v2380, %v2388
        %v2391 = vsub.f32 %v2381, %v2389
        %v2392 = vmul.f32 %v2390, %v2390
        %v2393 = vmul.f32 %v2391, %v2391
        %v2394 = vsel %vm1226, %v2392, 0.0
        %2395 = vadd.xlane.f32.xlu0 %v2394
        %v2396 = vpop.xlane.xlu0 %2395
        %v2397 = vsel %vm1226, %v2393, 0.0
        %2398 = vadd.xlane.f32.xlu0 %v2397
        %v2399 = vpop.xlane.xlu0 %2398
        %v2400 = vmul.f32 %v2396, %v1945
        %v2401 = vmul.f32 %v2399, %v1945
        %v2402 = vadd.f32 %v2400, 1e-12
        %v2403 = vadd.f32 %v2401, 1e-12
        %v2404 = vrsqrt.pop %v2402
        %v2405 = vrsqrt.pop %v2403
        %v2406 = vmul.f32 %v2390, %v2404
        %v2407 = vmul.f32 %v2391, %v2405
        %v2409 = vlaneseq
        %v2410 = vshrl.u32 %v2409, 7
        %v2411 = vsub.s32 0, %v2410
        %v2412 = vrot.slane %v1118, %v2411
        %v2414 = vmul.f32 %v2406, %v2412
        %v2415 = vmul.f32 %v2407, %v2412
        %v2417 = vlaneseq
        %v2418 = vshrl.u32 %v2417, 7
        %v2419 = vsub.s32 0, %v2418
        %v2420 = vrot.slane %v1119, %v2419
        %v2422 = vadd.f32 %v2414, %v2420
        %v2423 = vadd.f32 %v2415, %v2420
        %2424 = vst.msk [vmem:[%s1084] sm:$0xff] %vm1144, %v2166
        %2425 = vst.msk [vmem:[%s1091] sm:$0xff] %vm1226, %v2422
        %2426 = vst.msk [vmem:[%s1091 + $0x8] sm:$0xff] %vm1226, %v2423
        %s2427 = sand.u32 %s702, 1
        %s2428 = scalar_lea.sflag [#allocation4], %s2427
        %s2429 = sand.u32 %s702, 1
        %s2430 = smul.addr %s2429, 8
        %s2431 = scalar_lea.vmem [#allocation17], %s2430
        %s2432 = sand.u32 %s728, 1
        %s2433 = scalar_lea.sflag [#allocation19], %s2432
        %s2434 = sand.u32 %s728, 1
        %s2435 = smul.addr %s2434, 16
        %s2436 = scalar_lea.vmem [#allocation18], %s2435
        // Predicated region
        $region169: #{bert_cross_layer_forward.1} parent=131 // pred_check
          %p2437 = pneg %p712
        $region170: #{bert_cross_layer_forward.1} parent=131 // pred_check_branch
          %2439 = sbr.rel (%p2437) target = $region172
        $region171: #{bert_cross_layer_forward.1} parent=131 // pred_region
          %s2441 = ssub.s32 128, 128
          %2442 = vsyncadd %s2428, %s2441
          %s2443 = smul.addr %s86, 128
          %s2444 = scalar_lea.hbm %s57, %s2443
          %s2446 = sshll.u32 %s2431, 4
          %s2447 = int_to_ptr.vmem [resolvable:$true] %s2446
          %2449 = dma.vmem_to_hbm [thread:$0]  %s2447, 128, %s2444, %s2428
        $region172: #{bert_cross_layer_forward.1} parent=131 // pred_fallthru
          _
        // Predicated region
        $region173: #{bert_cross_layer_forward.1} parent=131 // pred_check
          %p2450 = pneg %p738
        $region174: #{bert_cross_layer_forward.1} parent=131 // pred_check_branch
          %2452 = sbr.rel (%p2450) target = $region176
        $region175: #{bert_cross_layer_forward.1} parent=131 // pred_region
          %s2454 = ssub.s32 256, 256
          %2455 = vsyncadd %s2433, %s2454
          %s2456 = smul.addr %s86, 2
          %s2457 = smul.addr %s2456, 128
          %s2458 = scalar_lea.hbm %s59, %s2457
          %s2459 = sshll.u32 %s2436, 4
          %s2460 = int_to_ptr.vmem [resolvable:$true] %s2459
          %2465 = dma.vmem_to_hbm [thread:$0]  %s2460, 256, %s2458, %s2433, 128, 128, 8
        $region176: #{bert_cross_layer_forward.1} parent=131 // pred_fallthru
          _
      $region132: #{bert_cross_layer_forward.1} parent=5 // pred_fallthru
        _
      %p2466 = scmp.le.s32.totalorder 2, %s81
      // Predicated region
      $region177: #{bert_cross_layer_forward.1} parent=5 // pred_check
        %p2467 = pneg %p2466
      $region178: #{bert_cross_layer_forward.1} parent=5 // pred_check_branch
        %2469 = sbr.rel (%p2467) target = $region180
      $region179: #{bert_cross_layer_forward.1} parent=5 // pred_region
        %s2470 = ssub.s32 %s81, 2
        // Predicated region
        $region181: #{bert_cross_layer_forward.1} parent=179 // pred_check
          %p2471 = pneg %p718
        $region182: #{bert_cross_layer_forward.1} parent=179 // pred_check_branch
          %2473 = sbr.rel (%p2471) target = $region184
        $region183: #{bert_cross_layer_forward.1} parent=179 // pred_region
          %s2474 = sand.u32 %s703, 1
          %s2475 = scalar_lea.sflag [#allocation4], %s2474
          %s2476 = sand.u32 %s703, 1
          %s2477 = smul.addr %s2476, 8
          %s2478 = scalar_lea.vmem [#allocation17], %s2477
          %2479 = dma.done %s2475, 128
        $region184: #{bert_cross_layer_forward.1} parent=179 // pred_fallthru
          _
        // Predicated region
        $region185: #{bert_cross_layer_forward.1} parent=179 // pred_check
          %p2480 = pneg %p744
        $region186: #{bert_cross_layer_forward.1} parent=179 // pred_check_branch
          %2482 = sbr.rel (%p2480) target = $region188
        $region187: #{bert_cross_layer_forward.1} parent=179 // pred_region
          %s2483 = sand.u32 %s729, 1
          %s2484 = scalar_lea.sflag [#allocation19], %s2483
          %s2485 = sand.u32 %s729, 1
          %s2486 = smul.addr %s2485, 16
          %s2487 = scalar_lea.vmem [#allocation18], %s2486
          %2488 = dma.done %s2484, 256
        $region188: #{bert_cross_layer_forward.1} parent=179 // pred_fallthru
          _
      $region180: #{bert_cross_layer_forward.1} parent=5 // pred_fallthru
        _
    $region6: #{bert_cross_layer_forward.1} parent=1 // loop_footer
      %s85 = sadd.s32 1, %s81
    $region7: #{bert_cross_layer_forward.1} parent=1 // loop_footer_branch
      %80 = sbr.rel target = $region3
    $region8: #{bert_cross_layer_forward.1} parent=1 // loop_exit
      _
    %2489 = vsyncpa [#allocation3], 1
    %s2490 = scalar_lea.sflag [#allocation3], 1
    %2491 = vsyncpa %s2490, 1
    %2492 = vsyncpa [#allocation6], 1
    %s2493 = scalar_lea.sflag [#allocation6], 1
    %2494 = vsyncpa %s2493, 1
    %2495 = vsyncpa [#allocation9], 1
    %2496 = vsyncpa [#allocation12], 1
    %2497 = vsyncpa [#allocation15], 1
    %2498 = vsyncpa [#allocation4], 1
    %s2499 = scalar_lea.sflag [#allocation4], 1
    %2500 = vsyncpa %s2499, 1
    %2501 = vsyncpa [#allocation19], 1
    %s2502 = scalar_lea.sflag [#allocation19], 1
    %2503 = vsyncpa %s2502, 1

// kernel: bert_cross_layer_forward.1
$region0: #{bert_cross_layer_forward.1}
  #allocation0 [shape = 'u32[]', space=smem, size = 0x4, offset = 0x4, fixed_abs, tag = 'smem constant byte address 0x4 - core index']
  #allocation1 [shape = 'u32[144,128]{1,0:T(1,128)}', space=vmem, size = 0x12000, scoped, tag = 'internal scratch']
  %s0 = inlined_call_operand.smem [shape: u32[30], index: -1, kind: input, shape index: {}]
  %s1 = sld [smem:[%s0]]
  %s2 = scalar_lea.smem %s0, 1
  %s3 = sld [smem:[%s2]]
  %s4 = scalar_lea.smem %s0, 2
  %s5 = sld [smem:[%s4]]
  %s6 = scalar_lea.smem %s0, 3
  %s7 = sld [smem:[%s6]]
  %s8 = scalar_lea.smem %s0, 4
  %s9 = sld [smem:[%s8]]
  %s10 = scalar_lea.smem %s0, 5
  %s11 = sld [smem:[%s10]]
  %s12 = scalar_lea.smem %s0, 6
  %s13 = sld [smem:[%s12]]
  %s14 = scalar_lea.smem %s0, 7
  %s15 = sld [smem:[%s14]]
  %s16 = scalar_lea.smem %s0, 8
  %s17 = sld [smem:[%s16]]
  %s18 = scalar_lea.smem %s0, 9
  %s19 = sld [smem:[%s18]]
  %s20 = scalar_lea.smem %s0, 10
  %s21 = sld [smem:[%s20]]
  %s22 = scalar_lea.smem %s0, 11
  %s23 = sld [smem:[%s22]]
  %s24 = scalar_lea.smem %s0, 12
  %s25 = sld [smem:[%s24]]
  %s26 = scalar_lea.smem %s0, 13
  %s27 = sld [smem:[%s26]]
  %s28 = scalar_lea.smem %s0, 14
  %s29 = sld [smem:[%s28]]
  %s30 = scalar_lea.smem %s0, 15
  %s31 = sld [smem:[%s30]]
  %s32 = scalar_lea.smem %s0, 16
  %s33 = sld [smem:[%s32]]
  %s34 = scalar_lea.smem %s0, 17
  %s35 = sld [smem:[%s34]]
  %s36 = scalar_lea.smem %s0, 18
  %s37 = sld [smem:[%s36]]
  %s38 = scalar_lea.smem %s0, 19
  %s39 = sld [smem:[%s38]]
  %s40 = scalar_lea.smem %s0, 20
  %s41 = sld [smem:[%s40]]
  %s42 = scalar_lea.smem %s0, 21
  %s43 = sld [smem:[%s42]]
  %s44 = scalar_lea.smem %s0, 22
  %s45 = sld [smem:[%s44]]
  %s46 = scalar_lea.smem %s0, 23
  %s47 = sld [smem:[%s46]]
  %s48 = scalar_lea.smem %s0, 24
  %s49 = sld [smem:[%s48]]
  %s50 = scalar_lea.smem %s0, 25
  %s51 = sld [smem:[%s50]]
  %s52 = scalar_lea.smem %s0, 26
  %s53 = sld [smem:[%s52]]
  %s54 = scalar_lea.smem %s0, 27
  %s55 = sld [smem:[%s54]]
  %s56 = scalar_lea.smem %s0, 28
  %s57 = sld [smem:[%s56]]
  %s58 = scalar_lea.smem %s0, 29
  %s59 = sld [smem:[%s58]]
  %60 = xla_tuple %s57, %s59
  %s61 = sld [smem:[#allocation0]]
  $region189: #{bert_cross_layer_forward.1} parent=0
    _
  %s63 = ssub.s32 1, %s61
  %s64 = scalar_select 0, %s63, %s61
  $region1: #{bert_cross_layer_forward.1} parent=0
    #allocation2 [shape = 'u8[8192]{0}', space=vmem, size = 0x2000, scoped, tag = 'input window, operand 0']
    #allocation3 [shape = 's32[2]{0}', space=sflag, size = 0x8, scoped, tag = 'scoped memory for bert_cross_layer_forward.1']
    #allocation4 [shape = 's32[2]{0}', space=sflag, size = 0x8, scoped, tag = 'scoped memory for bert_cross_layer_forward.1']
    #allocation5 [shape = 'u8[16384]{0}', space=vmem, size = 0x4000, scoped, tag = 'input window, operand 1']
    #allocation6 [shape = 's32[2]{0}', space=sflag, size = 0x8, scoped, tag = 'scoped memory for bert_cross_layer_forward.1']
    #allocation7 [shape = 'u8[8192]{0}', space=vmem, size = 0x2000, scoped, tag = 'input window, operand 4, single buffered']
    #allocation8 [shape = 'u8[16384]{0}', space=vmem, size = 0x4000, scoped, tag = 'input window, operand 6, single buffered']
    #allocation9 [shape = 's32[1]{0}', space=sflag, size = 0x4, scoped, tag = 'scoped memory for bert_cross_layer_forward.1']
    #allocation10 [shape = 'u8[8192]{0}', space=vmem, size = 0x2000, scoped, tag = 'input window, operand 8, single buffered']
    #allocation11 [shape = 'u8[8192]{0}', space=vmem, size = 0x2000, scoped, tag = 'input window, operand 12, single buffered']
    #allocation12 [shape = 's32[1]{0}', space=sflag, size = 0x4, scoped, tag = 'scoped memory for bert_cross_layer_forward.1']
    #allocation13 [shape = 'u8[8192]{0}', space=vmem, size = 0x2000, scoped, tag = 'input window, operand 16, single buffered']
    #allocation14 [shape = 'u8[16384]{0}', space=vmem, size = 0x4000, scoped, tag = 'input window, operand 18, single buffered']
    #allocation15 [shape = 's32[1]{0}', space=sflag, size = 0x4, scoped, tag = 'scoped memory for bert_cross_layer_forward.1']
    #allocation16 [shape = 'u8[32768]{0}', space=vmem, size = 0x8000, scoped, tag = 'input window, operand 24, single buffered']
    #allocation17 [shape = 'u8[8192]{0}', space=vmem, size = 0x2000, scoped, tag = 'output window, operand 0']
    #allocation18 [shape = 'u8[16384]{0}', space=vmem, size = 0x4000, scoped, tag = 'output window, operand 1']
    #allocation19 [shape = 's32[2]{0}', space=sflag, size = 0x8, scoped, tag = 'scoped memory for bert_cross_layer_forward.1']
    %65 = vsyncpa [#allocation3], 0
    %s66 = scalar_lea.sflag [#allocation3], 1
    %67 = vsyncpa %s66, 0
    %68 = vsyncpa [#allocation6], 0
    %s69 = scalar_lea.sflag [#allocation6], 1
    %70 = vsyncpa %s69, 0
    %71 = vsyncpa [#allocation9], 0
    %72 = vsyncpa [#allocation12], 0
    %73 = vsyncpa [#allocation15], 0
    %74 = vsyncpa [#allocation4], 0
    %s75 = scalar_lea.sflag [#allocation4], 1
    %76 = vsyncpa %s75, 0
    %77 = vsyncpa [#allocation19], 0
    %s78 = scalar_lea.sflag [#allocation19], 1
    %79 = vsyncpa %s78, 0
    loop: start=0, step=1, limit=4
    $region2: #{bert_cross_layer_forward.1} parent=1 // loop_pre_header
      _
    $region3: #{bert_cross_layer_forward.1} parent=1 // loop_header
      %s81 = sphi 0, %s85
      %p82 = scmp.ge.s32.totalorder %s81, 4
      %s91 = sphi 0, %s93
      %s94 = sphi 0, %s91
      %s95 = sphi 0, %s94
      %s111 = sphi 0, %s95
      %s117 = sphi 0, %s119
      %s120 = sphi 0, %s117
      %s121 = sphi 0, %s120
      %s137 = sphi 0, %s121
      %s143 = sphi 0, %s145
      %s146 = sphi 0, %s143
      %s147 = sphi 0, %s146
      %s163 = sphi 0, %s147
      %s169 = sphi 0, %s171
      %s172 = sphi 0, %s169
      %s173 = sphi 0, %s172
      %s189 = sphi 0, %s173
      %s193 = sphi 0, %s193
      %s195 = sphi 0, %s193
      %s196 = sphi 0, %s195
      %s210 = sphi 0, %s196
      %s214 = sphi 0, %s214
      %s216 = sphi 0, %s214
      %s217 = sphi 0, %s216
      %s231 = sphi 0, %s217
      %s235 = sphi 0, %s235
      %s237 = sphi 0, %s235
      %s238 = sphi 0, %s237
      %s252 = sphi 0, %s238
      %s256 = sphi 0, %s256
      %s258 = sphi 0, %s256
      %s259 = sphi 0, %s258
      %s273 = sphi 0, %s259
      %s277 = sphi 0, %s277
      %s279 = sphi 0, %s277
      %s280 = sphi 0, %s279
      %s294 = sphi 0, %s280
      %s298 = sphi 0, %s298
      %s300 = sphi 0, %s298
      %s301 = sphi 0, %s300
      %s315 = sphi 0, %s301
      %s319 = sphi 0, %s319
      %s321 = sphi 0, %s319
      %s322 = sphi 0, %s321
      %s336 = sphi 0, %s322
      %s340 = sphi 0, %s340
      %s342 = sphi 0, %s340
      %s343 = sphi 0, %s342
      %s357 = sphi 0, %s343
      %s361 = sphi 0, %s361
      %s363 = sphi 0, %s361
      %s364 = sphi 0, %s363
      %s378 = sphi 0, %s364
      %s382 = sphi 0, %s382
      %s384 = sphi 0, %s382
      %s385 = sphi 0, %s384
      %s399 = sphi 0, %s385
      %s403 = sphi 0, %s403
      %s405 = sphi 0, %s403
      %s406 = sphi 0, %s405
      %s420 = sphi 0, %s406
      %s424 = sphi 0, %s424
      %s426 = sphi 0, %s424
      %s427 = sphi 0, %s426
      %s441 = sphi 0, %s427
      %s445 = sphi 0, %s445
      %s447 = sphi 0, %s445
      %s448 = sphi 0, %s447
      %s462 = sphi 0, %s448
      %s466 = sphi 0, %s466
      %s468 = sphi 0, %s466
      %s469 = sphi 0, %s468
      %s483 = sphi 0, %s469
      %s487 = sphi 0, %s487
      %s489 = sphi 0, %s487
      %s490 = sphi 0, %s489
      %s504 = sphi 0, %s490
      %s508 = sphi 0, %s508
      %s510 = sphi 0, %s508
      %s511 = sphi 0, %s510
      %s525 = sphi 0, %s511
      %s529 = sphi 0, %s529
      %s531 = sphi 0, %s529
      %s532 = sphi 0, %s531
      %s546 = sphi 0, %s532
      %s550 = sphi 0, %s550
      %s552 = sphi 0, %s550
      %s553 = sphi 0, %s552
      %s567 = sphi 0, %s553
      %s571 = sphi 0, %s571
      %s573 = sphi 0, %s571
      %s574 = sphi 0, %s573
      %s588 = sphi 0, %s574
      %s592 = sphi 0, %s592
      %s594 = sphi 0, %s592
      %s595 = sphi 0, %s594
      %s609 = sphi 0, %s595
      %s613 = sphi 0, %s613
      %s615 = sphi 0, %s613
      %s616 = sphi 0, %s615
      %s630 = sphi 0, %s616
      %s634 = sphi 0, %s634
      %s636 = sphi 0, %s634
      %s637 = sphi 0, %s636
      %s651 = sphi 0, %s637
      %s655 = sphi 0, %s655
      %s657 = sphi 0, %s655
      %s658 = sphi 0, %s657
      %s672 = sphi 0, %s658
      %s676 = sphi 0, %s676
      %s678 = sphi 0, %s676
      %s679 = sphi 0, %s678
      %s693 = sphi 0, %s679
      %s699 = sphi 0, %s701
      %s702 = sphi 0, %s699
      %s703 = sphi 0, %s702
      %s719 = sphi 0, %s703
      %s725 = sphi 0, %s727
      %s728 = sphi 0, %s725
      %s729 = sphi 0, %s728
      %s745 = sphi 0, %s729
    $region4: #{bert_cross_layer_forward.1} parent=1 // loop_header_branch
      %84 = sbr.rel (%p82) target = $region8
    $region5: #{bert_cross_layer_forward.1} parent=1 // loop_body
      %s86 = ssub.s32 %s81, 1
      %s87 = ssub.s32 %s81, 2
      %s88 = sadd.s32 %s81, 1
      %s89 = ssub.s32 %s81, %s88
      %p90 = scmp.eq.s32.totalorder %s89, 0
      %s92 = sadd.s32 %s91, 1
      %s93 = scalar_select %p90, %s91, %s92
      %p96 = pneg %p90
      %p97 = scmp.eq.s32.totalorder %s81, 1
      %p98 = por %p96, %p97
      %p99 = scmp.ne.s32.totalorder %s91, %s94
      %p100 = scmp.eq.s32.totalorder %s81, 0
      %p101 = por %p99, %p100
      %p102 = scmp.ne.s32.totalorder %s91, %s94
      %p103 = scmp.eq.s32.totalorder %s86, 1
      %p104 = por %p102, %p103
      %p105 = scmp.ne.s32.totalorder %s94, %s95
      %p106 = scmp.eq.s32.totalorder %s86, 0
      %p107 = por %p105, %p106
      %p108 = scmp.ne.s32.totalorder %s94, %s95
      %p109 = scmp.eq.s32.totalorder %s87, 1
      %p110 = por %p108, %p109
      %p112 = scmp.ne.s32.totalorder %s95, %s111
      %p113 = scmp.eq.s32.totalorder %s87, 0
      %p114 = por %p112, %p113
      %s115 = ssub.s32 %s81, %s88
      %p116 = scmp.eq.s32.totalorder %s115, 0
      %s118 = sadd.s32 %s117, 1
      %s119 = scalar_select %p116, %s117, %s118
      %p122 = pneg %p116
      %p123 = scmp.eq.s32.totalorder %s81, 1
      %p124 = por %p122, %p123
      %p125 = scmp.ne.s32.totalorder %s117, %s120
      %p126 = scmp.eq.s32.totalorder %s81, 0
      %p127 = por %p125, %p126
      %p128 = scmp.ne.s32.totalorder %s117, %s120
      %p129 = scmp.eq.s32.totalorder %s86, 1
      %p130 = por %p128, %p129
      %p131 = scmp.ne.s32.totalorder %s120, %s121
      %p132 = scmp.eq.s32.totalorder %s86, 0
      %p133 = por %p131, %p132
      %p134 = scmp.ne.s32.totalorder %s120, %s121
      %p135 = scmp.eq.s32.totalorder %s87, 1
      %p136 = por %p134, %p135
      %p138 = scmp.ne.s32.totalorder %s121, %s137
      %p139 = scmp.eq.s32.totalorder %s87, 0
      %p140 = por %p138, %p139
      %s141 = ssub.s32 %s81, %s88
      %p142 = scmp.eq.s32.totalorder %s141, 0
      %s144 = sadd.s32 %s143, 1
      %s145 = scalar_select %p142, %s143, %s144
      %p148 = pneg %p142
      %p149 = scmp.eq.s32.totalorder %s81, 1
      %p150 = por %p148, %p149
      %p151 = scmp.ne.s32.totalorder %s143, %s146
      %p152 = scmp.eq.s32.totalorder %s81, 0
      %p153 = por %p151, %p152
      %p154 = scmp.ne.s32.totalorder %s143, %s146
      %p155 = scmp.eq.s32.totalorder %s86, 1
      %p156 = por %p154, %p155
      %p157 = scmp.ne.s32.totalorder %s146, %s147
      %p158 = scmp.eq.s32.totalorder %s86, 0
      %p159 = por %p157, %p158
      %p160 = scmp.ne.s32.totalorder %s146, %s147
      %p161 = scmp.eq.s32.totalorder %s87, 1
      %p162 = por %p160, %p161
      %p164 = scmp.ne.s32.totalorder %s147, %s163
      %p165 = scmp.eq.s32.totalorder %s87, 0
      %p166 = por %p164, %p165
      %s167 = ssub.s32 %s81, %s88
      %p168 = scmp.eq.s32.totalorder %s167, 0
      %s170 = sadd.s32 %s169, 1
      %s171 = scalar_select %p168, %s169, %s170
      %p174 = pneg %p168
      %p175 = scmp.eq.s32.totalorder %s81, 1
      %p176 = por %p174, %p175
      %p177 = scmp.ne.s32.totalorder %s169, %s172
      %p178 = scmp.eq.s32.totalorder %s81, 0
      %p179 = por %p177, %p178
      %p180 = scmp.ne.s32.totalorder %s169, %s172
      %p181 = scmp.eq.s32.totalorder %s86, 1
      %p182 = por %p180, %p181
      %p183 = scmp.ne.s32.totalorder %s172, %s173
      %p184 = scmp.eq.s32.totalorder %s86, 0
      %p185 = por %p183, %p184
      %p186 = scmp.ne.s32.totalorder %s172, %s173
      %p187 = scmp.eq.s32.totalorder %s87, 1
      %p188 = por %p186, %p187
      %p190 = scmp.ne.s32.totalorder %s173, %s189
      %p191 = scmp.eq.s32.totalorder %s87, 0
      %p192 = por %p190, %p191
      %s194 = sadd.s32 %s193, 1
      %p197 = scmp.eq.s32.totalorder %s81, 1
      %p198 = scmp.ne.s32.totalorder %s193, %s195
      %p199 = scmp.eq.s32.totalorder %s81, 0
      %p200 = por %p198, %p199
      %p201 = scmp.ne.s32.totalorder %s193, %s195
      %p202 = scmp.eq.s32.totalorder %s86, 1
      %p203 = por %p201, %p202
      %p204 = scmp.ne.s32.totalorder %s195, %s196
      %p205 = scmp.eq.s32.totalorder %s86, 0
      %p206 = por %p204, %p205
      %p207 = scmp.ne.s32.totalorder %s195, %s196
      %p208 = scmp.eq.s32.totalorder %s87, 1
      %p209 = por %p207, %p208
      %p211 = scmp.ne.s32.totalorder %s196, %s210
      %p212 = scmp.eq.s32.totalorder %s87, 0
      %p213 = por %p211, %p212
      %s215 = sadd.s32 %s214, 1
      %p218 = scmp.eq.s32.totalorder %s81, 1
      %p219 = scmp.ne.s32.totalorder %s214, %s216
      %p220 = scmp.eq.s32.totalorder %s81, 0
      %p221 = por %p219, %p220
      %p222 = scmp.ne.s32.totalorder %s214, %s216
      %p223 = scmp.eq.s32.totalorder %s86, 1
      %p224 = por %p222, %p223
      %p225 = scmp.ne.s32.totalorder %s216, %s217
      %p226 = scmp.eq.s32.totalorder %s86, 0
      %p227 = por %p225, %p226
      %p228 = scmp.ne.s32.totalorder %s216, %s217
      %p229 = scmp.eq.s32.totalorder %s87, 1
      %p230 = por %p228, %p229
      %p232 = scmp.ne.s32.totalorder %s217, %s231
      %p233 = scmp.eq.s32.totalorder %s87, 0
      %p234 = por %p232, %p233
      %s236 = sadd.s32 %s235, 1
      %p239 = scmp.eq.s32.totalorder %s81, 1
      %p240 = scmp.ne.s32.totalorder %s235, %s237
      %p241 = scmp.eq.s32.totalorder %s81, 0
      %p242 = por %p240, %p241
      %p243 = scmp.ne.s32.totalorder %s235, %s237
      %p244 = scmp.eq.s32.totalorder %s86, 1
      %p245 = por %p243, %p244
      %p246 = scmp.ne.s32.totalorder %s237, %s238
      %p247 = scmp.eq.s32.totalorder %s86, 0
      %p248 = por %p246, %p247
      %p249 = scmp.ne.s32.totalorder %s237, %s238
      %p250 = scmp.eq.s32.totalorder %s87, 1
      %p251 = por %p249, %p250
      %p253 = scmp.ne.s32.totalorder %s238, %s252
      %p254 = scmp.eq.s32.totalorder %s87, 0
      %p255 = por %p253, %p254
      %s257 = sadd.s32 %s256, 1
      %p260 = scmp.eq.s32.totalorder %s81, 1
      %p261 = scmp.ne.s32.totalorder %s256, %s258
      %p262 = scmp.eq.s32.totalorder %s81, 0
      %p263 = por %p261, %p262
      %p264 = scmp.ne.s32.totalorder %s256, %s258
      %p265 = scmp.eq.s32.totalorder %s86, 1
      %p266 = por %p264, %p265
      %p267 = scmp.ne.s32.totalorder %s258, %s259
      %p268 = scmp.eq.s32.totalorder %s86, 0
      %p269 = por %p267, %p268
      %p270 = scmp.ne.s32.totalorder %s258, %s259
      %p271 = scmp.eq.s32.totalorder %s87, 1
      %p272 = por %p270, %p271
      %p274 = scmp.ne.s32.totalorder %s259, %s273
      %p275 = scmp.eq.s32.totalorder %s87, 0
      %p276 = por %p274, %p275
      %s278 = sadd.s32 %s277, 1
      %p281 = scmp.eq.s32.totalorder %s81, 1
      %p282 = scmp.ne.s32.totalorder %s277, %s279
      %p283 = scmp.eq.s32.totalorder %s81, 0
      %p284 = por %p282, %p283
      %p285 = scmp.ne.s32.totalorder %s277, %s279
      %p286 = scmp.eq.s32.totalorder %s86, 1
      %p287 = por %p285, %p286
      %p288 = scmp.ne.s32.totalorder %s279, %s280
      %p289 = scmp.eq.s32.totalorder %s86, 0
      %p290 = por %p288, %p289
      %p291 = scmp.ne.s32.totalorder %s279, %s280
      %p292 = scmp.eq.s32.totalorder %s87, 1
      %p293 = por %p291, %p292
      %p295 = scmp.ne.s32.totalorder %s280, %s294
      %p296 = scmp.eq.s32.totalorder %s87, 0
      %p297 = por %p295, %p296
      %s299 = sadd.s32 %s298, 1
      %p302 = scmp.eq.s32.totalorder %s81, 1
      %p303 = scmp.ne.s32.totalorder %s298, %s300
      %p304 = scmp.eq.s32.totalorder %s81, 0
      %p305 = por %p303, %p304
      %p306 = scmp.ne.s32.totalorder %s298, %s300
      %p307 = scmp.eq.s32.totalorder %s86, 1
      %p308 = por %p306, %p307
      %p309 = scmp.ne.s32.totalorder %s300, %s301
      %p310 = scmp.eq.s32.totalorder %s86, 0
      %p311 = por %p309, %p310
      %p312 = scmp.ne.s32.totalorder %s300, %s301
      %p313 = scmp.eq.s32.totalorder %s87, 1
      %p314 = por %p312, %p313
      %p316 = scmp.ne.s32.totalorder %s301, %s315
      %p317 = scmp.eq.s32.totalorder %s87, 0
      %p318 = por %p316, %p317
      %s320 = sadd.s32 %s319, 1
      %p323 = scmp.eq.s32.totalorder %s81, 1
      %p324 = scmp.ne.s32.totalorder %s319, %s321
      %p325 = scmp.eq.s32.totalorder %s81, 0
      %p326 = por %p324, %p325
      %p327 = scmp.ne.s32.totalorder %s319, %s321
      %p328 = scmp.eq.s32.totalorder %s86, 1
      %p329 = por %p327, %p328
      %p330 = scmp.ne.s32.totalorder %s321, %s322
      %p331 = scmp.eq.s32.totalorder %s86, 0
      %p332 = por %p330, %p331
      %p333 = scmp.ne.s32.totalorder %s321, %s322
      %p334 = scmp.eq.s32.totalorder %s87, 1
      %p335 = por %p333, %p334
      %p337 = scmp.ne.s32.totalorder %s322, %s336
      %p338 = scmp.eq.s32.totalorder %s87, 0
      %p339 = por %p337, %p338
      %s341 = sadd.s32 %s340, 1
      %p344 = scmp.eq.s32.totalorder %s81, 1
      %p345 = scmp.ne.s32.totalorder %s340, %s342
      %p346 = scmp.eq.s32.totalorder %s81, 0
      %p347 = por %p345, %p346
      %p348 = scmp.ne.s32.totalorder %s340, %s342
      %p349 = scmp.eq.s32.totalorder %s86, 1
      %p350 = por %p348, %p349
      %p351 = scmp.ne.s32.totalorder %s342, %s343
      %p352 = scmp.eq.s32.totalorder %s86, 0
      %p353 = por %p351, %p352
      %p354 = scmp.ne.s32.totalorder %s342, %s343
      %p355 = scmp.eq.s32.totalorder %s87, 1
      %p356 = por %p354, %p355
      %p358 = scmp.ne.s32.totalorder %s343, %s357
      %p359 = scmp.eq.s32.totalorder %s87, 0
      %p360 = por %p358, %p359
      %s362 = sadd.s32 %s361, 1
      %p365 = scmp.eq.s32.totalorder %s81, 1
      %p366 = scmp.ne.s32.totalorder %s361, %s363
      %p367 = scmp.eq.s32.totalorder %s81, 0
      %p368 = por %p366, %p367
      %p369 = scmp.ne.s32.totalorder %s361, %s363
      %p370 = scmp.eq.s32.totalorder %s86, 1
      %p371 = por %p369, %p370
      %p372 = scmp.ne.s32.totalorder %s363, %s364
      %p373 = scmp.eq.s32.totalorder %s86, 0
      %p374 = por %p372, %p373
      %p375 = scmp.ne.s32.totalorder %s363, %s364
      %p376 = scmp.eq.s32.totalorder %s87, 1
      %p377 = por %p375, %p376
      %p379 = scmp.ne.s32.totalorder %s364, %s378
      %p380 = scmp.eq.s32.totalorder %s87, 0
      %p381 = por %p379, %p380
      %s383 = sadd.s32 %s382, 1
      %p386 = scmp.eq.s32.totalorder %s81, 1
      %p387 = scmp.ne.s32.totalorder %s382, %s384
      %p388 = scmp.eq.s32.totalorder %s81, 0
      %p389 = por %p387, %p388
      %p390 = scmp.ne.s32.totalorder %s382, %s384
      %p391 = scmp.eq.s32.totalorder %s86, 1
      %p392 = por %p390, %p391
      %p393 = scmp.ne.s32.totalorder %s384, %s385
      %p394 = scmp.eq.s32.totalorder %s86, 0
      %p395 = por %p393, %p394
      %p396 = scmp.ne.s32.totalorder %s384, %s385
      %p397 = scmp.eq.s32.totalorder %s87, 1
      %p398 = por %p396, %p397
      %p400 = scmp.ne.s32.totalorder %s385, %s399
      %p401 = scmp.eq.s32.totalorder %s87, 0
      %p402 = por %p400, %p401
      %s404 = sadd.s32 %s403, 1
      %p407 = scmp.eq.s32.totalorder %s81, 1
      %p408 = scmp.ne.s32.totalorder %s403, %s405
      %p409 = scmp.eq.s32.totalorder %s81, 0
      %p410 = por %p408, %p409
      %p411 = scmp.ne.s32.totalorder %s403, %s405
      %p412 = scmp.eq.s32.totalorder %s86, 1
      %p413 = por %p411, %p412
      %p414 = scmp.ne.s32.totalorder %s405, %s406
      %p415 = scmp.eq.s32.totalorder %s86, 0
      %p416 = por %p414, %p415
      %p417 = scmp.ne.s32.totalorder %s405, %s406
      %p418 = scmp.eq.s32.totalorder %s87, 1
      %p419 = por %p417, %p418
      %p421 = scmp.ne.s32.totalorder %s406, %s420
      %p422 = scmp.eq.s32.totalorder %s87, 0
      %p423 = por %p421, %p422
      %s425 = sadd.s32 %s424, 1
      %p428 = scmp.eq.s32.totalorder %s81, 1
      %p429 = scmp.ne.s32.totalorder %s424, %s426
      %p430 = scmp.eq.s32.totalorder %s81, 0
      %p431 = por %p429, %p430
      %p432 = scmp.ne.s32.totalorder %s424, %s426
      %p433 = scmp.eq.s32.totalorder %s86, 1
      %p434 = por %p432, %p433
      %p435 = scmp.ne.s32.totalorder %s426, %s427
      %p436 = scmp.eq.s32.totalorder %s86, 0
      %p437 = por %p435, %p436
      %p438 = scmp.ne.s32.totalorder %s426, %s427
      %p439 = scmp.eq.s32.totalorder %s87, 1
      %p440 = por %p438, %p439
      %p442 = scmp.ne.s32.totalorder %s427, %s441
      %p443 = scmp.eq.s32.totalorder %s87, 0
      %p444 = por %p442, %p443
      %s446 = sadd.s32 %s445, 1
      %p449 = scmp.eq.s32.totalorder %s81, 1
      %p450 = scmp.ne.s32.totalorder %s445, %s447
      %p451 = scmp.eq.s32.totalorder %s81, 0
      %p452 = por %p450, %p451
      %p453 = scmp.ne.s32.totalorder %s445, %s447
      %p454 = scmp.eq.s32.totalorder %s86, 1
      %p455 = por %p453, %p454
      %p456 = scmp.ne.s32.totalorder %s447, %s448
      %p457 = scmp.eq.s32.totalorder %s86, 0
      %p458 = por %p456, %p457
      %p459 = scmp.ne.s32.totalorder %s447, %s448
      %p460 = scmp.eq.s32.totalorder %s87, 1
      %p461 = por %p459, %p460
      %p463 = scmp.ne.s32.totalorder %s448, %s462
      %p464 = scmp.eq.s32.totalorder %s87, 0
      %p465 = por %p463, %p464
      %s467 = sadd.s32 %s466, 1
      %p470 = scmp.eq.s32.totalorder %s81, 1
      %p471 = scmp.ne.s32.totalorder %s466, %s468
      %p472 = scmp.eq.s32.totalorder %s81, 0
      %p473 = por %p471, %p472
      %p474 = scmp.ne.s32.totalorder %s466, %s468
      %p475 = scmp.eq.s32.totalorder %s86, 1
      %p476 = por %p474, %p475
      %p477 = scmp.ne.s32.totalorder %s468, %s469
      %p478 = scmp.eq.s32.totalorder %s86, 0
      %p479 = por %p477, %p478
      %p480 = scmp.ne.s32.totalorder %s468, %s469
      %p481 = scmp.eq.s32.totalorder %s87, 1
      %p482 = por %p480, %p481
      %p484 = scmp.ne.s32.totalorder %s469, %s483
      %p485 = scmp.eq.s32.totalorder %s87, 0
      %p486 = por %p484, %p485
      %s488 = sadd.s32 %s487, 1
      %p491 = scmp.eq.s32.totalorder %s81, 1
      %p492 = scmp.ne.s32.totalorder %s487, %s489
      %p493 = scmp.eq.s32.totalorder %s81, 0
      %p494 = por %p492, %p493
      %p495 = scmp.ne.s32.totalorder %s487, %s489
      %p496 = scmp.eq.s32.totalorder %s86, 1
      %p497 = por %p495, %p496
      %p498 = scmp.ne.s32.totalorder %s489, %s490
      %p499 = scmp.eq.s32.totalorder %s86, 0
      %p500 = por %p498, %p499
      %p501 = scmp.ne.s32.totalorder %s489, %s490
      %p502 = scmp.eq.s32.totalorder %s87, 1
      %p503 = por %p501, %p502
      %p505 = scmp.ne.s32.totalorder %s490, %s504
      %p506 = scmp.eq.s32.totalorder %s87, 0
      %p507 = por %p505, %p506
      %s509 = sadd.s32 %s508, 1
      %p512 = scmp.eq.s32.totalorder %s81, 1
      %p513 = scmp.ne.s32.totalorder %s508, %s510
      %p514 = scmp.eq.s32.totalorder %s81, 0
      %p515 = por %p513, %p514
      %p516 = scmp.ne.s32.totalorder %s508, %s510
      %p517 = scmp.eq.s32.totalorder %s86, 1
      %p518 = por %p516, %p517
      %p519 = scmp.ne.s32.totalorder %s510, %s511
      %p520 = scmp.eq.s32.totalorder %s86, 0
      %p521 = por %p519, %p520
      %p522 = scmp.ne.s32.totalorder %s510, %s511
      %p523 = scmp.eq.s32.totalorder %s87, 1
      %p524 = por %p522, %p523
      %p526 = scmp.ne.s32.totalorder %s511, %s525
      %p527 = scmp.eq.s32.totalorder %s87, 0
      %p528 = por %p526, %p527
      %s530 = sadd.s32 %s529, 1
      %p533 = scmp.eq.s32.totalorder %s81, 1
      %p534 = scmp.ne.s32.totalorder %s529, %s531
      %p535 = scmp.eq.s32.totalorder %s81, 0
      %p536 = por %p534, %p535
      %p537 = scmp.ne.s32.totalorder %s529, %s531
      %p538 = scmp.eq.s32.totalorder %s86, 1
      %p539 = por %p537, %p538
      %p540 = scmp.ne.s32.totalorder %s531, %s532
      %p541 = scmp.eq.s32.totalorder %s86, 0
      %p542 = por %p540, %p541
      %p543 = scmp.ne.s32.totalorder %s531, %s532
      %p544 = scmp.eq.s32.totalorder %s87, 1
      %p545 = por %p543, %p544
      %p547 = scmp.ne.s32.totalorder %s532, %s546
      %p548 = scmp.eq.s32.totalorder %s87, 0
      %p549 = por %p547, %p548
      %s551 = sadd.s32 %s550, 1
      %p554 = scmp.eq.s32.totalorder %s81, 1
      %p555 = scmp.ne.s32.totalorder %s550, %s552
      %p556 = scmp.eq.s32.totalorder %s81, 0
      %p557 = por %p555, %p556
      %p558 = scmp.ne.s32.totalorder %s550, %s552
      %p559 = scmp.eq.s32.totalorder %s86, 1
      %p560 = por %p558, %p559
      %p561 = scmp.ne.s32.totalorder %s552, %s553
      %p562 = scmp.eq.s32.totalorder %s86, 0
      %p563 = por %p561, %p562
      %p564 = scmp.ne.s32.totalorder %s552, %s553
      %p565 = scmp.eq.s32.totalorder %s87, 1
      %p566 = por %p564, %p565
      %p568 = scmp.ne.s32.totalorder %s553, %s567
      %p569 = scmp.eq.s32.totalorder %s87, 0
      %p570 = por %p568, %p569
      %s572 = sadd.s32 %s571, 1
      %p575 = scmp.eq.s32.totalorder %s81, 1
      %p576 = scmp.ne.s32.totalorder %s571, %s573
      %p577 = scmp.eq.s32.totalorder %s81, 0
      %p578 = por %p576, %p577
      %p579 = scmp.ne.s32.totalorder %s571, %s573
      %p580 = scmp.eq.s32.totalorder %s86, 1
      %p581 = por %p579, %p580
      %p582 = scmp.ne.s32.totalorder %s573, %s574
      %p583 = scmp.eq.s32.totalorder %s86, 0
      %p584 = por %p582, %p583
      %p585 = scmp.ne.s32.totalorder %s573, %s574
      %p586 = scmp.eq.s32.totalorder %s87, 1
      %p587 = por %p585, %p586
      %p589 = scmp.ne.s32.totalorder %s574, %s588
      %p590 = scmp.eq.s32.totalorder %s87, 0
      %p591 = por %p589, %p590
      %s593 = sadd.s32 %s592, 1
      %p596 = scmp.eq.s32.totalorder %s81, 1
      %p597 = scmp.ne.s32.totalorder %s592, %s594
      %p598 = scmp.eq.s32.totalorder %s81, 0
      %p599 = por %p597, %p598
      %p600 = scmp.ne.s32.totalorder %s592, %s594
      %p601 = scmp.eq.s32.totalorder %s86, 1
      %p602 = por %p600, %p601
      %p603 = scmp.ne.s32.totalorder %s594, %s595
      %p604 = scmp.eq.s32.totalorder %s86, 0
      %p605 = por %p603, %p604
      %p606 = scmp.ne.s32.totalorder %s594, %s595
      %p607 = scmp.eq.s32.totalorder %s87, 1
      %p608 = por %p606, %p607
      %p610 = scmp.ne.s32.totalorder %s595, %s609
      %p611 = scmp.eq.s32.totalorder %s87, 0
      %p612 = por %p610, %p611
      %s614 = sadd.s32 %s613, 1
      %p617 = scmp.eq.s32.totalorder %s81, 1
      %p618 = scmp.ne.s32.totalorder %s613, %s615
      %p619 = scmp.eq.s32.totalorder %s81, 0
      %p620 = por %p618, %p619
      %p621 = scmp.ne.s32.totalorder %s613, %s615
      %p622 = scmp.eq.s32.totalorder %s86, 1
      %p623 = por %p621, %p622
      %p624 = scmp.ne.s32.totalorder %s615, %s616
      %p625 = scmp.eq.s32.totalorder %s86, 0
      %p626 = por %p624, %p625
      %p627 = scmp.ne.s32.totalorder %s615, %s616
      %p628 = scmp.eq.s32.totalorder %s87, 1
      %p629 = por %p627, %p628
      %p631 = scmp.ne.s32.totalorder %s616, %s630
      %p632 = scmp.eq.s32.totalorder %s87, 0
      %p633 = por %p631, %p632
      %s635 = sadd.s32 %s634, 1
      %p638 = scmp.eq.s32.totalorder %s81, 1
      %p639 = scmp.ne.s32.totalorder %s634, %s636
      %p640 = scmp.eq.s32.totalorder %s81, 0
      %p641 = por %p639, %p640
      %p642 = scmp.ne.s32.totalorder %s634, %s636
      %p643 = scmp.eq.s32.totalorder %s86, 1
      %p644 = por %p642, %p643
      %p645 = scmp.ne.s32.totalorder %s636, %s637
      %p646 = scmp.eq.s32.totalorder %s86, 0
      %p647 = por %p645, %p646
      %p648 = scmp.ne.s32.totalorder %s636, %s637
      %p649 = scmp.eq.s32.totalorder %s87, 1
      %p650 = por %p648, %p649
      %p652 = scmp.ne.s32.totalorder %s637, %s651
      %p653 = scmp.eq.s32.totalorder %s87, 0
      %p654 = por %p652, %p653
      %s656 = sadd.s32 %s655, 1
      %p659 = scmp.eq.s32.totalorder %s81, 1
      %p660 = scmp.ne.s32.totalorder %s655, %s657
      %p661 = scmp.eq.s32.totalorder %s81, 0
      %p662 = por %p660, %p661
      %p663 = scmp.ne.s32.totalorder %s655, %s657
      %p664 = scmp.eq.s32.totalorder %s86, 1
      %p665 = por %p663, %p664
      %p666 = scmp.ne.s32.totalorder %s657, %s658
      %p667 = scmp.eq.s32.totalorder %s86, 0
      %p668 = por %p666, %p667
      %p669 = scmp.ne.s32.totalorder %s657, %s658
      %p670 = scmp.eq.s32.totalorder %s87, 1
      %p671 = por %p669, %p670
      %p673 = scmp.ne.s32.totalorder %s658, %s672
      %p674 = scmp.eq.s32.totalorder %s87, 0
      %p675 = por %p673, %p674
      %s677 = sadd.s32 %s676, 1
      %p680 = scmp.eq.s32.totalorder %s81, 1
      %p681 = scmp.ne.s32.totalorder %s676, %s678
      %p682 = scmp.eq.s32.totalorder %s81, 0
      %p683 = por %p681, %p682
      %p684 = scmp.ne.s32.totalorder %s676, %s678
      %p685 = scmp.eq.s32.totalorder %s86, 1
      %p686 = por %p684, %p685
      %p687 = scmp.ne.s32.totalorder %s678, %s679
      %p688 = scmp.eq.s32.totalorder %s86, 0
      %p689 = por %p687, %p688
      %p690 = scmp.ne.s32.totalorder %s678, %s679
      %p691 = scmp.eq.s32.totalorder %s87, 1
      %p692 = por %p690, %p691
      %p694 = scmp.ne.s32.totalorder %s679, %s693
      %p695 = scmp.eq.s32.totalorder %s87, 0
      %p696 = por %p694, %p695
      %s697 = ssub.s32 %s81, %s88
      %p698 = scmp.eq.s32.totalorder %s697, 0
      %s700 = sadd.s32 %s699, 1
      %s701 = scalar_select %p698, %s699, %s700
      %p704 = pneg %p698
      %p705 = scmp.eq.s32.totalorder %s81, 1
      %p706 = por %p704, %p705
      %p707 = scmp.ne.s32.totalorder %s699, %s702
      %p708 = scmp.eq.s32.totalorder %s81, 0
      %p709 = por %p707, %p708
      %p710 = scmp.ne.s32.totalorder %s699, %s702
      %p711 = scmp.eq.s32.totalorder %s86, 1
      %p712 = por %p710, %p711
      %p713 = scmp.ne.s32.totalorder %s702, %s703
      %p714 = scmp.eq.s32.totalorder %s86, 0
      %p715 = por %p713, %p714
      %p716 = scmp.ne.s32.totalorder %s702, %s703
      %p717 = scmp.eq.s32.totalorder %s87, 1
      %p718 = por %p716, %p717
      %p720 = scmp.ne.s32.totalorder %s703, %s719
      %p721 = scmp.eq.s32.totalorder %s87, 0
      %p722 = por %p720, %p721
      %s723 = ssub.s32 %s81, %s88
      %p724 = scmp.eq.s32.totalorder %s723, 0
      %s726 = sadd.s32 %s725, 1
      %s727 = scalar_select %p724, %s725, %s726
      %p730 = pneg %p724
      %p731 = scmp.eq.s32.totalorder %s81, 1
      %p732 = por %p730, %p731
      %p733 = scmp.ne.s32.totalorder %s725, %s728
      %p734 = scmp.eq.s32.totalorder %s81, 0
      %p735 = por %p733, %p734
      %p736 = scmp.ne.s32.totalorder %s725, %s728
      %p737 = scmp.eq.s32.totalorder %s86, 1
      %p738 = por %p736, %p737
      %p739 = scmp.ne.s32.totalorder %s728, %s729
      %p740 = scmp.eq.s32.totalorder %s86, 0
      %p741 = por %p739, %p740
      %p742 = scmp.ne.s32.totalorder %s728, %s729
      %p743 = scmp.eq.s32.totalorder %s87, 1
      %p744 = por %p742, %p743
      %p746 = scmp.ne.s32.totalorder %s729, %s745
      %p747 = scmp.eq.s32.totalorder %s87, 0
      %p748 = por %p746, %p747
      %p749 = scmp.le.s32.totalorder 1, %s81
      %p750 = scmp.lt.s32.totalorder %s81, 3
      %p751 = pnand %p749, %p750
      %p752 = pneg %p751
      // Predicated region
      $region9: #{bert_cross_layer_forward.1} parent=5 // pred_check
        _
      $region10: #{bert_cross_layer_forward.1} parent=5 // pred_check_branch
        %754 = sbr.rel (%p751) target = $region12
      $region11: #{bert_cross_layer_forward.1} parent=5 // pred_region
        %s755 = ssub.s32 %s81, 1
        // Predicated region
        $region13: #{bert_cross_layer_forward.1} parent=11 // pred_check
          %p756 = pneg %p206
        $region14: #{bert_cross_layer_forward.1} parent=11 // pred_check_branch
          %758 = sbr.rel (%p756) target = $region16
        $region15: #{bert_cross_layer_forward.1} parent=11 // pred_region
          %s760 = ssub.s32 256, 256
          %761 = vsyncadd [#allocation6], %s760
          %s762 = sshll.u32 [#allocation7], 4
          %s763 = int_to_ptr.vmem [resolvable:$true] %s762
          %768 = dma.hbm_to_vmem [thread:$0]  %s9, 256, %s763, [#allocation6], 64, 64, 4
        $region16: #{bert_cross_layer_forward.1} parent=11 // pred_fallthru
          _
        // Predicated region
        $region17: #{bert_cross_layer_forward.1} parent=11 // pred_check
          %p769 = pneg %p227
        $region18: #{bert_cross_layer_forward.1} parent=11 // pred_check_branch
          %771 = sbr.rel (%p769) target = $region20
        $region19: #{bert_cross_layer_forward.1} parent=11 // pred_region
          _
        $region20: #{bert_cross_layer_forward.1} parent=11 // pred_fallthru
          _
        // Predicated region
        $region21: #{bert_cross_layer_forward.1} parent=11 // pred_check
          %p772 = pneg %p248
        $region22: #{bert_cross_layer_forward.1} parent=11 // pred_check_branch
          %774 = sbr.rel (%p772) target = $region24
        $region23: #{bert_cross_layer_forward.1} parent=11 // pred_region
          %s776 = ssub.s32 512, 512
          %777 = vsyncadd [#allocation9], %s776
          %s778 = sshll.u32 [#allocation8], 4
          %s779 = int_to_ptr.vmem [resolvable:$true] %s778
          %784 = dma.hbm_to_vmem [thread:$0]  %s13, 512, %s779, [#allocation9], 64, 64, 4
        $region24: #{bert_cross_layer_forward.1} parent=11 // pred_fallthru
          _
        // Predicated region
        $region25: #{bert_cross_layer_forward.1} parent=11 // pred_check
          %p785 = pneg %p269
        $region26: #{bert_cross_layer_forward.1} parent=11 // pred_check_branch
          %787 = sbr.rel (%p785) target = $region28
        $region27: #{bert_cross_layer_forward.1} parent=11 // pred_region
          _
        $region28: #{bert_cross_layer_forward.1} parent=11 // pred_fallthru
          _
        // Predicated region
        $region29: #{bert_cross_layer_forward.1} parent=11 // pred_check
          %p788 = pneg %p290
        $region30: #{bert_cross_layer_forward.1} parent=11 // pred_check_branch
          %790 = sbr.rel (%p788) target = $region32
        $region31: #{bert_cross_layer_forward.1} parent=11 // pred_region
          %s792 = ssub.s32 256, 256
          %793 = vsyncadd [#allocation9], %s792
          %s794 = sshll.u32 [#allocation10], 4
          %s795 = int_to_ptr.vmem [resolvable:$true] %s794
          %800 = dma.hbm_to_vmem [thread:$0]  %s17, 256, %s795, [#allocation9], 64, 64, 4
        $region32: #{bert_cross_layer_forward.1} parent=11 // pred_fallthru
          _
        // Predicated region
        $region33: #{bert_cross_layer_forward.1} parent=11 // pred_check
          %p801 = pneg %p311
        $region34: #{bert_cross_layer_forward.1} parent=11 // pred_check_branch
          %803 = sbr.rel (%p801) target = $region36
        $region35: #{bert_cross_layer_forward.1} parent=11 // pred_region
          _
        $region36: #{bert_cross_layer_forward.1} parent=11 // pred_fallthru
          _
        // Predicated region
        $region37: #{bert_cross_layer_forward.1} parent=11 // pred_check
          %p804 = pneg %p332
        $region38: #{bert_cross_layer_forward.1} parent=11 // pred_check_branch
          %806 = sbr.rel (%p804) target = $region40
        $region39: #{bert_cross_layer_forward.1} parent=11 // pred_region
          _
        $region40: #{bert_cross_layer_forward.1} parent=11 // pred_fallthru
          _
        // Predicated region
        $region41: #{bert_cross_layer_forward.1} parent=11 // pred_check
          %p807 = pneg %p353
        $region42: #{bert_cross_layer_forward.1} parent=11 // pred_check_branch
          %809 = sbr.rel (%p807) target = $region44
        $region43: #{bert_cross_layer_forward.1} parent=11 // pred_region
          _
        $region44: #{bert_cross_layer_forward.1} parent=11 // pred_fallthru
          _
        // Predicated region
        $region45: #{bert_cross_layer_forward.1} parent=11 // pred_check
          %p810 = pneg %p374
        $region46: #{bert_cross_layer_forward.1} parent=11 // pred_check_branch
          %812 = sbr.rel (%p810) target = $region48
        $region47: #{bert_cross_layer_forward.1} parent=11 // pred_region
          %s814 = ssub.s32 256, 256
          %815 = vsyncadd [#allocation12], %s814
          %s816 = sshll.u32 [#allocation11], 4
          %s817 = int_to_ptr.vmem [resolvable:$true] %s816
          %822 = dma.hbm_to_vmem [thread:$0]  %s25, 256, %s817, [#allocation12], 64, 64, 4
        $region48: #{bert_cross_layer_forward.1} parent=11 // pred_fallthru
          _
        // Predicated region
        $region49: #{bert_cross_layer_forward.1} parent=11 // pred_check
          %p823 = pneg %p395
        $region50: #{bert_cross_layer_forward.1} parent=11 // pred_check_branch
          %825 = sbr.rel (%p823) target = $region52
        $region51: #{bert_cross_layer_forward.1} parent=11 // pred_region
          _
        $region52: #{bert_cross_layer_forward.1} parent=11 // pred_fallthru
          _
        // Predicated region
        $region53: #{bert_cross_layer_forward.1} parent=11 // pred_check
          %p826 = pneg %p416
        $region54: #{bert_cross_layer_forward.1} parent=11 // pred_check_branch
          %828 = sbr.rel (%p826) target = $region56
        $region55: #{bert_cross_layer_forward.1} parent=11 // pred_region
          _
        $region56: #{bert_cross_layer_forward.1} parent=11 // pred_fallthru
          _
        // Predicated region
        $region57: #{bert_cross_layer_forward.1} parent=11 // pred_check
          %p829 = pneg %p437
        $region58: #{bert_cross_layer_forward.1} parent=11 // pred_check_branch
          %831 = sbr.rel (%p829) target = $region60
        $region59: #{bert_cross_layer_forward.1} parent=11 // pred_region
          _
        $region60: #{bert_cross_layer_forward.1} parent=11 // pred_fallthru
          _
        // Predicated region
        $region61: #{bert_cross_layer_forward.1} parent=11 // pred_check
          %p832 = pneg %p458
        $region62: #{bert_cross_layer_forward.1} parent=11 // pred_check_branch
          %834 = sbr.rel (%p832) target = $region64
        $region63: #{bert_cross_layer_forward.1} parent=11 // pred_region
          %s836 = ssub.s32 256, 256
          %837 = vsyncadd [#allocation12], %s836
          %s838 = sshll.u32 [#allocation13], 4
          %s839 = int_to_ptr.vmem [resolvable:$true] %s838
          %844 = dma.hbm_to_vmem [thread:$0]  %s33, 256, %s839, [#allocation12], 64, 64, 4
        $region64: #{bert_cross_layer_forward.1} parent=11 // pred_fallthru
          _
        // Predicated region
        $region65: #{bert_cross_layer_forward.1} parent=11 // pred_check
          %p845 = pneg %p479
        $region66: #{bert_cross_layer_forward.1} parent=11 // pred_check_branch
          %847 = sbr.rel (%p845) target = $region68
        $region67: #{bert_cross_layer_forward.1} parent=11 // pred_region
          _
        $region68: #{bert_cross_layer_forward.1} parent=11 // pred_fallthru
          _
        // Predicated region
        $region69: #{bert_cross_layer_forward.1} parent=11 // pred_check
          %p848 = pneg %p500
        $region70: #{bert_cross_layer_forward.1} parent=11 // pred_check_branch
          %850 = sbr.rel (%p848) target = $region72
        $region71: #{bert_cross_layer_forward.1} parent=11 // pred_region
          %s852 = ssub.s32 512, 512
          %853 = vsyncadd [#allocation15], %s852
          %s854 = sshll.u32 [#allocation14], 4
          %s855 = int_to_ptr.vmem [resolvable:$true] %s854
          %860 = dma.hbm_to_vmem [thread:$0]  %s37, 512, %s855, [#allocation15], 64, 64, 4
        $region72: #{bert_cross_layer_forward.1} parent=11 // pred_fallthru
          _
        // Predicated region
        $region73: #{bert_cross_layer_forward.1} parent=11 // pred_check
          %p861 = pneg %p521
        $region74: #{bert_cross_layer_forward.1} parent=11 // pred_check_branch
          %863 = sbr.rel (%p861) target = $region76
        $region75: #{bert_cross_layer_forward.1} parent=11 // pred_region
          _
        $region76: #{bert_cross_layer_forward.1} parent=11 // pred_fallthru
          _
        // Predicated region
        $region77: #{bert_cross_layer_forward.1} parent=11 // pred_check
          %p864 = pneg %p542
        $region78: #{bert_cross_layer_forward.1} parent=11 // pred_check_branch
          %866 = sbr.rel (%p864) target = $region80
        $region79: #{bert_cross_layer_forward.1} parent=11 // pred_region
          _
        $region80: #{bert_cross_layer_forward.1} parent=11 // pred_fallthru
          _
        // Predicated region
        $region81: #{bert_cross_layer_forward.1} parent=11 // pred_check
          %p867 = pneg %p563
        $region82: #{bert_cross_layer_forward.1} parent=11 // pred_check_branch
          %869 = sbr.rel (%p867) target = $region84
        $region83: #{bert_cross_layer_forward.1} parent=11 // pred_region
          _
        $region84: #{bert_cross_layer_forward.1} parent=11 // pred_fallthru
          _
        // Predicated region
        $region85: #{bert_cross_layer_forward.1} parent=11 // pred_check
          %p870 = pneg %p584
        $region86: #{bert_cross_layer_forward.1} parent=11 // pred_check_branch
          %872 = sbr.rel (%p870) target = $region88
        $region87: #{bert_cross_layer_forward.1} parent=11 // pred_region
          _
        $region88: #{bert_cross_layer_forward.1} parent=11 // pred_fallthru
          _
        // Predicated region
        $region89: #{bert_cross_layer_forward.1} parent=11 // pred_check
          %p873 = pneg %p605
        $region90: #{bert_cross_layer_forward.1} parent=11 // pred_check_branch
          %875 = sbr.rel (%p873) target = $region92
        $region91: #{bert_cross_layer_forward.1} parent=11 // pred_region
          _
        $region92: #{bert_cross_layer_forward.1} parent=11 // pred_fallthru
          _
        // Predicated region
        $region93: #{bert_cross_layer_forward.1} parent=11 // pred_check
          %p876 = pneg %p626
        $region94: #{bert_cross_layer_forward.1} parent=11 // pred_check_branch
          %878 = sbr.rel (%p876) target = $region96
        $region95: #{bert_cross_layer_forward.1} parent=11 // pred_region
          %s880 = ssub.s32 1024, 1024
          %881 = vsyncadd [#allocation15], %s880
          %s882 = sshll.u32 [#allocation16], 4
          %s883 = int_to_ptr.vmem [resolvable:$true] %s882
          %888 = dma.hbm_to_vmem [thread:$0]  %s49, 1024, %s883, [#allocation15], 64, 64, 4
        $region96: #{bert_cross_layer_forward.1} parent=11 // pred_fallthru
          _
        // Predicated region
        $region97: #{bert_cross_layer_forward.1} parent=11 // pred_check
          %p889 = pneg %p647
        $region98: #{bert_cross_layer_forward.1} parent=11 // pred_check_branch
          %891 = sbr.rel (%p889) target = $region100
        $region99: #{bert_cross_layer_forward.1} parent=11 // pred_region
          _
        $region100: #{bert_cross_layer_forward.1} parent=11 // pred_fallthru
          _
        // Predicated region
        $region101: #{bert_cross_layer_forward.1} parent=11 // pred_check
          %p892 = pneg %p668
        $region102: #{bert_cross_layer_forward.1} parent=11 // pred_check_branch
          %894 = sbr.rel (%p892) target = $region104
        $region103: #{bert_cross_layer_forward.1} parent=11 // pred_region
          _
        $region104: #{bert_cross_layer_forward.1} parent=11 // pred_fallthru
          _
        // Predicated region
        $region105: #{bert_cross_layer_forward.1} parent=11 // pred_check
          %p895 = pneg %p689
        $region106: #{bert_cross_layer_forward.1} parent=11 // pred_check_branch
          %897 = sbr.rel (%p895) target = $region108
        $region107: #{bert_cross_layer_forward.1} parent=11 // pred_region
          _
        $region108: #{bert_cross_layer_forward.1} parent=11 // pred_fallthru
          _
      $region12: #{bert_cross_layer_forward.1} parent=5 // pred_fallthru
        _
      %p898 = scmp.lt.s32.totalorder %s81, 2
      // Predicated region
      $region109: #{bert_cross_layer_forward.1} parent=5 // pred_check
        %p899 = pneg %p898
      $region110: #{bert_cross_layer_forward.1} parent=5 // pred_check_branch
        %901 = sbr.rel (%p899) target = $region112
      $region111: #{bert_cross_layer_forward.1} parent=5 // pred_region
        // Predicated region
        $region113: #{bert_cross_layer_forward.1} parent=111 // pred_check
          %p902 = pneg %p101
        $region114: #{bert_cross_layer_forward.1} parent=111 // pred_check_branch
          %904 = sbr.rel (%p902) target = $region116
        $region115: #{bert_cross_layer_forward.1} parent=111 // pred_region
          %s905 = sand.u32 %s91, 1
          %s906 = scalar_lea.sflag [#allocation3], %s905
          %s907 = sand.u32 %s91, 1
          %s908 = smul.addr %s907, 8
          %s909 = scalar_lea.vmem [#allocation2], %s908
          %s911 = ssub.s32 128, 128
          %912 = vsyncadd %s906, %s911
          %s913 = smul.addr %s81, 128
          %s914 = scalar_lea.hbm %s1, %s913
          %s916 = sshll.u32 %s909, 4
          %s917 = int_to_ptr.vmem [resolvable:$true] %s916
          %919 = dma.hbm_to_vmem [thread:$0]  %s914, 128, %s917, %s906
        $region116: #{bert_cross_layer_forward.1} parent=111 // pred_fallthru
          _
        // Predicated region
        $region117: #{bert_cross_layer_forward.1} parent=111 // pred_check
          %p920 = pneg %p127
        $region118: #{bert_cross_layer_forward.1} parent=111 // pred_check_branch
          %922 = sbr.rel (%p920) target = $region120
        $region119: #{bert_cross_layer_forward.1} parent=111 // pred_region
          %s923 = sand.u32 %s81, 1
          %s924 = scalar_lea.sflag [#allocation6], %s923
          %s925 = sand.u32 %s117, 1
          %s926 = smul.addr %s925, 16
          %s927 = scalar_lea.vmem [#allocation5], %s926
          %s929 = ssub.s32 256, 256
          %930 = vsyncadd %s924, %s929
          %s931 = smul.addr %s81, 2
          %s932 = smul.addr %s931, 128
          %s933 = scalar_lea.hbm %s3, %s932
          %s934 = sshll.u32 %s927, 4
          %s935 = int_to_ptr.vmem [resolvable:$true] %s934
          %940 = dma.hbm_to_vmem [thread:$0]  %s933, 256, %s935, %s924, 128, 128, 8
        $region120: #{bert_cross_layer_forward.1} parent=111 // pred_fallthru
          _
        // Predicated region
        $region121: #{bert_cross_layer_forward.1} parent=111 // pred_check
          %p941 = pneg %p153
        $region122: #{bert_cross_layer_forward.1} parent=111 // pred_check_branch
          %943 = sbr.rel (%p941) target = $region124
        $region123: #{bert_cross_layer_forward.1} parent=111 // pred_region
          %p944 = scmp.lt.s32.totalorder %s81, 1
          %s945 = scalar_select %p944, %s81, 1
          %s946 = scalar_lea.vmem %s5, %s945
        $region124: #{bert_cross_layer_forward.1} parent=111 // pred_fallthru
          _
        // Predicated region
        $region125: #{bert_cross_layer_forward.1} parent=111 // pred_check
          %p947 = pneg %p179
        $region126: #{bert_cross_layer_forward.1} parent=111 // pred_check_branch
          %949 = sbr.rel (%p947) target = $region128
        $region127: #{bert_cross_layer_forward.1} parent=111 // pred_region
          %p950 = scmp.lt.s32.totalorder %s81, 1
          %s951 = scalar_select %p950, %s81, 1
          %s952 = scalar_lea.vmem %s7, %s951
        $region128: #{bert_cross_layer_forward.1} parent=111 // pred_fallthru
          _
      $region112: #{bert_cross_layer_forward.1} parent=5 // pred_fallthru
        _
      %p953 = scmp.le.s32.totalorder 1, %s81
      %p954 = scmp.lt.s32.totalorder %s81, 3
      %p955 = pnand %p953, %p954
      %p956 = pneg %p955
      // Predicated region
      $region129: #{bert_cross_layer_forward.1} parent=5 // pred_check
        _
      $region130: #{bert_cross_layer_forward.1} parent=5 // pred_check_branch
        %958 = sbr.rel (%p955) target = $region132
      $region131: #{bert_cross_layer_forward.1} parent=5 // pred_region
        %s959 = ssub.s32 %s81, 1
        %s960 = sand.u32 %s94, 1
        %s961 = scalar_lea.sflag [#allocation3], %s960
        %s962 = sand.u32 %s94, 1
        %s963 = smul.addr %s962, 8
        %s964 = scalar_lea.vmem [#allocation2], %s963
        // Predicated region
        $region133: #{bert_cross_layer_forward.1} parent=131 // pred_check
          %p965 = pneg %p107
        $region134: #{bert_cross_layer_forward.1} parent=131 // pred_check_branch
          %967 = sbr.rel (%p965) target = $region136
        $region135: #{bert_cross_layer_forward.1} parent=131 // pred_region
          %968 = dma.done %s961, 128
        $region136: #{bert_cross_layer_forward.1} parent=131 // pred_fallthru
          _
        %s969 = sand.u32 %s86, 1
        %s970 = scalar_lea.sflag [#allocation6], %s969
        %s971 = sand.u32 %s120, 1
        %s972 = smul.addr %s971, 16
        %s973 = scalar_lea.vmem [#allocation5], %s972
        // Predicated region
        $region137: #{bert_cross_layer_forward.1} parent=131 // pred_check
          %p974 = pneg %p133
        $region138: #{bert_cross_layer_forward.1} parent=131 // pred_check_branch
          %976 = sbr.rel (%p974) target = $region140
        $region139: #{bert_cross_layer_forward.1} parent=131 // pred_region
          %977 = dma.done %s970, 256
        $region140: #{bert_cross_layer_forward.1} parent=131 // pred_fallthru
          _
        // Predicated region
        $region141: #{bert_cross_layer_forward.1} parent=131 // pred_check
          %p978 = pneg %p206
        $region142: #{bert_cross_layer_forward.1} parent=131 // pred_check_branch
          %980 = sbr.rel (%p978) target = $region144
        $region143: #{bert_cross_layer_forward.1} parent=131 // pred_region
          %981 = dma.done [#allocation6], 256
        $region144: #{bert_cross_layer_forward.1} parent=131 // pred_fallthru
          _
        // Predicated region
        $region145: #{bert_cross_layer_forward.1} parent=131 // pred_check
          %p982 = pneg %p248
        $region146: #{bert_cross_layer_forward.1} parent=131 // pred_check_branch
          %984 = sbr.rel (%p982) target = $region148
        $region147: #{bert_cross_layer_forward.1} parent=131 // pred_region
          %985 = dma.done [#allocation9], 512
        $region148: #{bert_cross_layer_forward.1} parent=131 // pred_fallthru
          _
        // Predicated region
        $region149: #{bert_cross_layer_forward.1} parent=131 // pred_check
          %p986 = pneg %p290
        $region150: #{bert_cross_layer_forward.1} parent=131 // pred_check_branch
          %988 = sbr.rel (%p986) target = $region152
        $region151: #{bert_cross_layer_forward.1} parent=131 // pred_region
          %989 = dma.done [#allocation9], 256
        $region152: #{bert_cross_layer_forward.1} parent=131 // pred_fallthru
          _
        // Predicated region
        $region153: #{bert_cross_layer_forward.1} parent=131 // pred_check
          %p990 = pneg %p374
        $region154: #{bert_cross_layer_forward.1} parent=131 // pred_check_branch
          %992 = sbr.rel (%p990) target = $region156
        $region155: #{bert_cross_layer_forward.1} parent=131 // pred_region
          %993 = dma.done [#allocation12], 256
        $region156: #{bert_cross_layer_forward.1} parent=131 // pred_fallthru
          _
        // Predicated region
        $region157: #{bert_cross_layer_forward.1} parent=131 // pred_check
          %p994 = pneg %p458
        $region158: #{bert_cross_layer_forward.1} parent=131 // pred_check_branch
          %996 = sbr.rel (%p994) target = $region160
        $region159: #{bert_cross_layer_forward.1} parent=131 // pred_region
          %997 = dma.done [#allocation12], 256
        $region160: #{bert_cross_layer_forward.1} parent=131 // pred_fallthru
          _
        // Predicated region
        $region161: #{bert_cross_layer_forward.1} parent=131 // pred_check
          %p998 = pneg %p500
        $region162: #{bert_cross_layer_forward.1} parent=131 // pred_check_branch
          %1000 = sbr.rel (%p998) target = $region164
        $region163: #{bert_cross_layer_forward.1} parent=131 // pred_region
          %1001 = dma.done [#allocation15], 512
        $region164: #{bert_cross_layer_forward.1} parent=131 // pred_fallthru
          _
        // Predicated region
        $region165: #{bert_cross_layer_forward.1} parent=131 // pred_check
          %p1002 = pneg %p626
        $region166: #{bert_cross_layer_forward.1} parent=131 // pred_check_branch
          %1004 = sbr.rel (%p1002) target = $region168
        $region167: #{bert_cross_layer_forward.1} parent=131 // pred_region
          %1005 = dma.done [#allocation15], 1024
        $region168: #{bert_cross_layer_forward.1} parent=131 // pred_fallthru
          _
        %s1006 = sand.u32 %s94, 1
        %s1007 = scalar_lea.sflag [#allocation3], %s1006
        %s1008 = sand.u32 %s94, 1
        %s1009 = smul.addr %s1008, 8
        %s1010 = scalar_lea.vmem [#allocation2], %s1009
        %p1011 = pneg %p107
        %p1012 = pneg %p104
        %s1013 = sand.u32 %s86, 1
        %s1014 = scalar_lea.sflag [#allocation6], %s1013
        %s1015 = sand.u32 %s120, 1
        %s1016 = smul.addr %s1015, 16
        %s1017 = scalar_lea.vmem [#allocation5], %s1016
        %p1018 = pneg %p133
        %p1019 = pneg %p130
        %p1020 = scmp.lt.s32.totalorder %s86, 1
        %s1021 = scalar_select %p1020, %s86, 1
        %s1022 = scalar_lea.vmem %s5, %s1021
        %p1023 = pneg %p159
        %p1024 = pneg %p156
        %p1025 = scmp.lt.s32.totalorder %s86, 1
        %s1026 = scalar_select %p1025, %s86, 1
        %s1027 = scalar_lea.vmem %s7, %s1026
        %p1028 = pneg %p185
        %p1029 = pneg %p182
        %p1030 = pneg %p206
        %p1031 = pneg %p203
        %p1032 = pneg %p227
        %p1033 = pneg %p224
        %p1034 = pneg %p248
        %p1035 = pneg %p245
        %p1036 = pneg %p269
        %p1037 = pneg %p266
        %p1038 = pneg %p290
        %p1039 = pneg %p287
        %p1040 = pneg %p311
        %p1041 = pneg %p308
        %p1042 = pneg %p332
        %p1043 = pneg %p329
        %p1044 = pneg %p353
        %p1045 = pneg %p350
        %p1046 = pneg %p374
        %p1047 = pneg %p371
        %p1048 = pneg %p395
        %p1049 = pneg %p392
        %p1050 = pneg %p416
        %p1051 = pneg %p413
        %p1052 = pneg %p437
        %p1053 = pneg %p434
        %p1054 = pneg %p458
        %p1055 = pneg %p455
        %p1056 = pneg %p479
        %p1057 = pneg %p476
        %p1058 = pneg %p500
        %p1059 = pneg %p497
        %p1060 = pneg %p521
        %p1061 = pneg %p518
        %p1062 = pneg %p542
        %p1063 = pneg %p539
        %p1064 = pneg %p563
        %p1065 = pneg %p560
        %p1066 = pneg %p584
        %p1067 = pneg %p581
        %p1068 = pneg %p605
        %p1069 = pneg %p602
        %p1070 = pneg %p626
        %p1071 = pneg %p623
        %p1072 = pneg %p647
        %p1073 = pneg %p644
        %p1074 = pneg %p668
        %p1075 = pneg %p665
        %p1076 = pneg %p689
        %p1077 = pneg %p686
        %p1078 = pneg %p715
        %p1079 = pneg %p712
        %s1080 = sand.u32 %s702, 1
        %s1081 = scalar_lea.sflag [#allocation4], %s1080
        %s1082 = sand.u32 %s702, 1
        %s1083 = smul.addr %s1082, 8
        %s1084 = scalar_lea.vmem [#allocation17], %s1083
        %p1085 = pneg %p741
        %p1086 = pneg %p738
        %s1087 = sand.u32 %s728, 1
        %s1088 = scalar_lea.sflag [#allocation19], %s1087
        %s1089 = sand.u32 %s728, 1
        %s1090 = smul.addr %s1089, 16
        %s1091 = scalar_lea.vmem [#allocation18], %s1090
        %p1092 = scmp.lt.s32.totalorder %s86, 1
        %s1093 = scalar_select %p1092, %s86, 1
        %s1094 = scalar_lea.vmem %s5, %s1093
        %p1095 = scmp.lt.s32.totalorder %s86, 1
        %s1096 = scalar_select %p1095, %s86, 1
        %s1097 = scalar_lea.vmem %s7, %s1096
        %v1099 = vld [vmem:[%s964] sm:$0xff]
        %v1100 = vld [vmem:[%s973] sm:$0xff]
        %v1101 = vld [vmem:[%s973 + $0x8] sm:$0xff]
        %v1102 = vld [vmem:[%s1094] sm:$0x1]
        %v1103 = vld [vmem:[%s1097] sm:$0x1]
        %v1104 = vld [vmem:[%s11] sm:$0x1]
        %v1105 = vld [vmem:[%s15] sm:$0x1]
        %v1106 = vld [vmem:[%s19] sm:$0x1]
        %v1107 = vld [vmem:[%s21] sm:$0x1]
        %v1108 = vld [vmem:[%s23] sm:$0x1]
        %v1109 = vld [vmem:[%s27] sm:$0x1]
        %v1110 = vld [vmem:[%s29] sm:$0x1]
        %v1111 = vld [vmem:[%s31] sm:$0x1]
        %v1112 = vld [vmem:[%s35] sm:$0x1]
        %v1113 = vld [vmem:[%s39] sm:$0x1]
        %v1114 = vld [vmem:[%s41] sm:$0x1]
        %v1115 = vld [vmem:[%s43] sm:$0x1]
        %v1116 = vld [vmem:[%s47] sm:$0x1]
        %v1117 = vld [vmem:[%s51] sm:$0x1]
        %v1118 = vld [vmem:[%s53] sm:$0x1]
        %v1119 = vld [vmem:[%s55] sm:$0x1]
        %v1120 = vpack.c.bf16 %v1099, %v1099
        %v1121 = vpack.c.bf16 %v1101, %v1100
        %v1122 = vld [vmem:[#allocation7] sm:$0xf]
        %v1123 = vld [vmem:[#allocation7 + $0x4] sm:$0xf]
        %v1124 = vld [vmem:[#allocation7 + $0x8] sm:$0xf]
        %v1125 = vld [vmem:[#allocation7 + $0xc] sm:$0xf]
        %v1127 = vlaneseq
        %v1128 = vshrl.u32 %v1127, 7
        %v1129 = vsub.s32 0, %v1128
        %v1130 = vrot.slane %v1104, %v1129
        %v1136 = vunpack.c.l.b16 %v1122
        %v1137 = vunpack.c.l.b16 %v1123
        %v1138 = vunpack.c.l.b16 %v1124
        %v1139 = vunpack.c.l.b16 %v1125
        %v1140 = vpack.c.b16 %v1137, %v1136
        %v1141 = vpack.c.b16 %v1139, %v1138
        %vm1144 = vcmask 261120
        %v1146 = vsel %vm1144, %v1120, 0
        %1148 = vmatprep.subr.bf16.mxu0 0
        %1149 = vmatpush1.bf16.msra.mxu0 0
        %1150 = vmatprep.subr.bf16.mxu0 0
        %1151 = vmatpush1.bf16.msra.mxu0 0
        %1152 = vmatprep.subr.bf16.mxu0 0
        %1153 = vmatpush1.bf16.msra.mxu0 0
        %1154 = vmatprep.subr.bf16.mxu0 0
        %1155 = vmatpush1.bf16.msra.mxu0 0
        %1156 = vmatprep.subr.bf16.mxu0 0
        %1157 = vmatpush1.bf16.msra.mxu0 0
        %1158 = vmatprep.subr.bf16.mxu0 0
        %1159 = vmatpush1.bf16.msra.mxu0 0
        %1160 = vmatprep.subr.bf16.mxu0 0
        %1161 = vmatpush1.bf16.msra.mxu0 %v1141
        %1162 = vmatprep.subr.bf16.mxu0 0
        %1163 = vmatpush1.bf16.msra.mxu0 %v1140
        %1164 = vmatprep.subr.bf16.mxu0 0
        %1165 = vmatpush2.bf16.msra.mxu0 0
        %1166 = vmatprep.subr.bf16.mxu0 0
        %1167 = vmatpush2.bf16.msra.mxu0 0
        %1168 = vmatprep.subr.bf16.mxu0 0
        %1169 = vmatpush2.bf16.msra.mxu0 0
        %1170 = vmatprep.subr.bf16.mxu0 0
        %1171 = vmatpush2.bf16.msra.mxu0 0
        %1172 = vmatprep.subr.bf16.mxu0 0
        %1173 = vmatpush2.bf16.msra.mxu0 0
        %1174 = vmatprep.subr.bf16.mxu0 0
        %1175 = vmatpush2.bf16.msra.mxu0 0
        %1176 = vmatprep.subr.bf16.mxu0 0
        %1177 = vmatpush2.bf16.msra.mxu0 0
        %1178 = vmatprep.subr.bf16.mxu0 0
        %1179 = vmatpush2.bf16.msra.mxu0 0
        %1180 = vmatprep.mubr.bf16.mxu0 0
        %1181 = vmatmul.mubr.bf16.gmra.mxu0 %v1146
        %v1182 = vpop.f32.mrf.mxu0
        %v1183 = vadd.f32 %v1130, %v1182
        %v1184 = vpop.f32.mrf.mxu0
        %v1185 = vpop.f32.mrf.mxu0
        %v1186 = vpop.f32.mrf.mxu0
        %1187 = vdwg.mxu0
        %v1188 = vld [vmem:[#allocation8] sm:$0xf]
        %v1189 = vld [vmem:[#allocation8 + $0x4] sm:$0xf]
        %v1190 = vld [vmem:[#allocation8 + $0x8] sm:$0xf]
        %v1191 = vld [vmem:[#allocation8 + $0xc] sm:$0xf]
        %v1192 = vld [vmem:[#allocation8 + $0x10] sm:$0xf]
        %v1193 = vld [vmem:[#allocation8 + $0x14] sm:$0xf]
        %v1194 = vld [vmem:[#allocation8 + $0x18] sm:$0xf]
        %v1195 = vld [vmem:[#allocation8 + $0x1c] sm:$0xf]
        %v1197 = vlaneseq
        %v1198 = vshrl.u32 %v1197, 7
        %v1199 = vsub.s32 0, %v1198
        %v1200 = vrot.slane %v1105, %v1199
        %v1210 = vunpack.c.l.b16 %v1188
        %v1211 = vunpack.c.l.b16 %v1189
        %v1212 = vunpack.c.l.b16 %v1190
        %v1213 = vunpack.c.l.b16 %v1191
        %v1214 = vunpack.c.l.b16 %v1192
        %v1215 = vunpack.c.l.b16 %v1193
        %v1216 = vunpack.c.l.b16 %v1194
        %v1217 = vunpack.c.l.b16 %v1195
        %v1218 = vpack.c.b16 %v1211, %v1210
        %v1219 = vpack.c.b16 %v1213, %v1212
        %v1220 = vpack.c.b16 %v1215, %v1214
        %v1221 = vpack.c.b16 %v1217, %v1216
        %vm1226 = vcmask 523264
        %v1228 = vsel %vm1226, %v1121, 0
        %1230 = vmatprep.subr.bf16.mxu0 0
        %1231 = vmatpush1.bf16.msra.mxu0 0
        %1232 = vmatprep.subr.bf16.mxu0 0
        %1233 = vmatpush1.bf16.msra.mxu0 0
        %1234 = vmatprep.subr.bf16.mxu0 0
        %1235 = vmatpush1.bf16.msra.mxu0 0
        %1236 = vmatprep.subr.bf16.mxu0 0
        %1237 = vmatpush1.bf16.msra.mxu0 0
        %1238 = vmatprep.subr.bf16.mxu0 0
        %1239 = vmatpush1.bf16.msra.mxu0 %v1221
        %1240 = vmatprep.subr.bf16.mxu0 0
        %1241 = vmatpush1.bf16.msra.mxu0 %v1220
        %1242 = vmatprep.subr.bf16.mxu0 0
        %1243 = vmatpush1.bf16.msra.mxu0 %v1219
        %1244 = vmatprep.subr.bf16.mxu0 0
        %1245 = vmatpush1.bf16.msra.mxu0 %v1218
        %1246 = vmatprep.subr.bf16.mxu0 0
        %1247 = vmatpush2.bf16.msra.mxu0 0
        %1248 = vmatprep.subr.bf16.mxu0 0
        %1249 = vmatpush2.bf16.msra.mxu0 0
        %1250 = vmatprep.subr.bf16.mxu0 0
        %1251 = vmatpush2.bf16.msra.mxu0 0
        %1252 = vmatprep.subr.bf16.mxu0 0
        %1253 = vmatpush2.bf16.msra.mxu0 0
        %1254 = vmatprep.subr.bf16.mxu0 0
        %1255 = vmatpush2.bf16.msra.mxu0 0
        %1256 = vmatprep.subr.bf16.mxu0 0
        %1257 = vmatpush2.bf16.msra.mxu0 0
        %1258 = vmatprep.subr.bf16.mxu0 0
        %1259 = vmatpush2.bf16.msra.mxu0 0
        %1260 = vmatprep.subr.bf16.mxu0 0
        %1261 = vmatpush2.bf16.msra.mxu0 0
        %1262 = vmatprep.mubr.bf16.mxu0 0
        %1263 = vmatmul.mubr.bf16.gmra.mxu0 %v1228
        %v1264 = vpop.f32.mrf.mxu0
        %v1265 = vadd.f32 %v1200, %v1264
        %v1266 = vpop.f32.mrf.mxu0
        %v1267 = vpop.f32.mrf.mxu0
        %v1268 = vadd.f32 %v1200, %v1267
        %v1269 = vpop.f32.mrf.mxu0
        %1270 = vdwg.mxu0
        %v1272 = vlaneseq
        %v1273 = vshrl.u32 %v1272, 7
        %v1274 = vsub.s32 0, %v1273
        %v1275 = vrot.slane %v1103, %v1274
        %v1277 = vpack.c.bf16 %v1183, %v1183
        %v1278 = vpack.c.bf16 %v1268, %v1265
        %1280 = vrot.lane.b32.xlu0 %v1278, 96
        %v1281 = vpop.permute.xlu0 %1280
        %vm1282 = vcmask 130048
        %v1284 = vsel %vm1282, %v1277, 0
        %v1287 = vsel %vm1282, %v1281, 0
        %1289 = vmatprep.subr.bf16.mxu0 0
        %1290 = vmatpush1.bf16.xpose.msra.mxu0 0
        %1291 = vmatprep.subr.bf16.mxu0 0
        %1292 = vmatpush1.bf16.xpose.msra.mxu0 0
        %1293 = vmatprep.subr.bf16.mxu0 0
        %1294 = vmatpush1.bf16.xpose.msra.mxu0 0
        %1295 = vmatprep.subr.bf16.mxu0 0
        %1296 = vmatpush1.bf16.xpose.msra.mxu0 0
        %1297 = vmatprep.subr.bf16.mxu0 0
        %1298 = vmatpush1.bf16.xpose.msra.mxu0 0
        %1299 = vmatprep.subr.bf16.mxu0 0
        %1300 = vmatpush1.bf16.xpose.msra.mxu0 0
        %1301 = vmatprep.subr.bf16.mxu0 0
        %1302 = vmatpush1.bf16.xpose.msra.mxu0 0
        %1303 = vmatprep.subr.bf16.mxu0 0
        %1304 = vmatpush1.bf16.xpose.msra.mxu0 %v1287
        %1305 = vmatprep.subr.bf16.mxu0 0
        %1306 = vmatpush2.bf16.xpose.msra.mxu0 0
        %1307 = vmatprep.subr.bf16.mxu0 0
        %1308 = vmatpush2.bf16.xpose.msra.mxu0 0
        %1309 = vmatprep.subr.bf16.mxu0 0
        %1310 = vmatpush2.bf16.xpose.msra.mxu0 0
        %1311 = vmatprep.subr.bf16.mxu0 0
        %1312 = vmatpush2.bf16.xpose.msra.mxu0 0
        %1313 = vmatprep.subr.bf16.mxu0 0
        %1314 = vmatpush2.bf16.xpose.msra.mxu0 0
        %1315 = vmatprep.subr.bf16.mxu0 0
        %1316 = vmatpush2.bf16.xpose.msra.mxu0 0
        %1317 = vmatprep.subr.bf16.mxu0 0
        %1318 = vmatpush2.bf16.xpose.msra.mxu0 0
        %1319 = vmatprep.subr.bf16.mxu0 0
        %1320 = vmatpush2.bf16.xpose.msra.mxu0 0
        %1321 = vmatprep.mubr.bf16.mxu0 0
        %1322 = vmatmul.mubr.bf16.gmra.mxu0 %v1284
        %v1323 = vpop.f32.mrf.mxu0
        %v1324 = vadd.f32 0.0, %v1323
        %v1325 = vpop.f32.mrf.mxu0
        %v1326 = vpop.f32.mrf.mxu0
        %v1327 = vpop.f32.mrf.mxu0
        %1328 = vdwg.mxu0
        %v1329 = vmul.f32 %v1324, 0.25
        %v1330 = vadd.f32 %v1329, %v1275
        %v1331 = vsel %vm1282, %v1330, -inf
        %1332 = vmax.xlane.f32.xlu0 %v1331
        %v1333 = vpop.xlane.xlu0 %1332
        %v1334 = vsub.f32 %v1330, %v1333
        %v1335 = vmul.f32 %v1334, 1.442695
        %v1336 = vpow.pop %v1335
        %v1337 = vsel %vm1282, %v1336, 0.0
        %1338 = vadd.xlane.f32.xlu0 %v1337
        %v1339 = vpop.xlane.xlu0 %1338
        %v1340 = vrcp.pop %v1339
        %v1341 = vmul.f32 %v1336, %v1340
        %v1342 = vpack.c.bf16 %v1341, %v1341
        %1343 = vrot.lane.b32.xlu0 %v1278, 64
        %v1344 = vpop.permute.xlu0 %1343
        %v1347 = vsel %vm1282, %v1342, 0
        %1349 = vmatprep.subr.bf16.mxu0 0
        %1350 = vmatpush1.bf16.msra.mxu0 0
        %1351 = vmatprep.subr.bf16.mxu0 0
        %1352 = vmatpush1.bf16.msra.mxu0 0
        %1353 = vmatprep.subr.bf16.mxu0 0
        %1354 = vmatpush1.bf16.msra.mxu0 0
        %1355 = vmatprep.subr.bf16.mxu0 0
        %1356 = vmatpush1.bf16.msra.mxu0 0
        %1357 = vmatprep.subr.bf16.mxu0 0
        %1358 = vmatpush1.bf16.msra.mxu0 0
        %1359 = vmatprep.subr.bf16.mxu0 0
        %1360 = vmatpush1.bf16.msra.mxu0 0
        %1361 = vmatprep.subr.bf16.mxu0 0
        %1362 = vmatpush1.bf16.msra.mxu0 0
        %1363 = vmatprep.subr.bf16.mxu0 0
        %1364 = vmatpush1.bf16.msra.mxu0 %v1344
        %1365 = vmatprep.subr.bf16.mxu0 0
        %1366 = vmatpush2.bf16.msra.mxu0 0
        %1367 = vmatprep.subr.bf16.mxu0 0
        %1368 = vmatpush2.bf16.msra.mxu0 0
        %1369 = vmatprep.subr.bf16.mxu0 0
        %1370 = vmatpush2.bf16.msra.mxu0 0
        %1371 = vmatprep.subr.bf16.mxu0 0
        %1372 = vmatpush2.bf16.msra.mxu0 0
        %1373 = vmatprep.subr.bf16.mxu0 0
        %1374 = vmatpush2.bf16.msra.mxu0 0
        %1375 = vmatprep.subr.bf16.mxu0 0
        %1376 = vmatpush2.bf16.msra.mxu0 0
        %1377 = vmatprep.subr.bf16.mxu0 0
        %1378 = vmatpush2.bf16.msra.mxu0 0
        %1379 = vmatprep.subr.bf16.mxu0 0
        %1380 = vmatpush2.bf16.msra.mxu0 0
        %1381 = vmatprep.mubr.bf16.mxu0 0
        %1382 = vmatmul.mubr.bf16.gmra.mxu0 %v1347
        %v1383 = vpop.f32.mrf.mxu0
        %v1384 = vadd.f32 0.0, %v1383
        %v1385 = vpop.f32.mrf.mxu0
        %v1386 = vpop.f32.mrf.mxu0
        %v1387 = vpop.f32.mrf.mxu0
        %1388 = vdwg.mxu0
        %1390 = vrot.lane.b32.xlu0 %v1277, 112
        %v1391 = vpop.permute.xlu0 %1390
        %1392 = vrot.lane.b32.xlu0 %v1278, 80
        %v1393 = vpop.permute.xlu0 %1392
        %v1395 = vsel %vm1282, %v1391, 0
        %v1398 = vsel %vm1282, %v1393, 0
        %1400 = vmatprep.subr.bf16.mxu0 0
        %1401 = vmatpush1.bf16.xpose.msra.mxu0 0
        %1402 = vmatprep.subr.bf16.mxu0 0
        %1403 = vmatpush1.bf16.xpose.msra.mxu0 0
        %1404 = vmatprep.subr.bf16.mxu0 0
        %1405 = vmatpush1.bf16.xpose.msra.mxu0 0
        %1406 = vmatprep.subr.bf16.mxu0 0
        %1407 = vmatpush1.bf16.xpose.msra.mxu0 0
        %1408 = vmatprep.subr.bf16.mxu0 0
        %1409 = vmatpush1.bf16.xpose.msra.mxu0 0
        %1410 = vmatprep.subr.bf16.mxu0 0
        %1411 = vmatpush1.bf16.xpose.msra.mxu0 0
        %1412 = vmatprep.subr.bf16.mxu0 0
        %1413 = vmatpush1.bf16.xpose.msra.mxu0 0
        %1414 = vmatprep.subr.bf16.mxu0 0
        %1415 = vmatpush1.bf16.xpose.msra.mxu0 %v1398
        %1416 = vmatprep.subr.bf16.mxu0 0
        %1417 = vmatpush2.bf16.xpose.msra.mxu0 0
        %1418 = vmatprep.subr.bf16.mxu0 0
        %1419 = vmatpush2.bf16.xpose.msra.mxu0 0
        %1420 = vmatprep.subr.bf16.mxu0 0
        %1421 = vmatpush2.bf16.xpose.msra.mxu0 0
        %1422 = vmatprep.subr.bf16.mxu0 0
        %1423 = vmatpush2.bf16.xpose.msra.mxu0 0
        %1424 = vmatprep.subr.bf16.mxu0 0
        %1425 = vmatpush2.bf16.xpose.msra.mxu0 0
        %1426 = vmatprep.subr.bf16.mxu0 0
        %1427 = vmatpush2.bf16.xpose.msra.mxu0 0
        %1428 = vmatprep.subr.bf16.mxu0 0
        %1429 = vmatpush2.bf16.xpose.msra.mxu0 0
        %1430 = vmatprep.subr.bf16.mxu0 0
        %1431 = vmatpush2.bf16.xpose.msra.mxu0 0
        %1432 = vmatprep.mubr.bf16.mxu0 0
        %1433 = vmatmul.mubr.bf16.gmra.mxu0 %v1395
        %v1434 = vpop.f32.mrf.mxu0
        %v1435 = vadd.f32 0.0, %v1434
        %v1436 = vpop.f32.mrf.mxu0
        %v1437 = vpop.f32.mrf.mxu0
        %v1438 = vpop.f32.mrf.mxu0
        %1439 = vdwg.mxu0
        %v1440 = vmul.f32 %v1435, 0.25
        %v1441 = vadd.f32 %v1440, %v1275
        %v1442 = vsel %vm1282, %v1441, -inf
        %1443 = vmax.xlane.f32.xlu0 %v1442
        %v1444 = vpop.xlane.xlu0 %1443
        %v1445 = vsub.f32 %v1441, %v1444
        %v1446 = vmul.f32 %v1445, 1.442695
        %v1447 = vpow.pop %v1446
        %v1448 = vsel %vm1282, %v1447, 0.0
        %1449 = vadd.xlane.f32.xlu0 %v1448
        %v1450 = vpop.xlane.xlu0 %1449
        %v1451 = vrcp.pop %v1450
        %v1452 = vmul.f32 %v1447, %v1451
        %v1453 = vpack.c.bf16 %v1452, %v1452
        %1454 = vrot.lane.b32.xlu0 %v1278, 48
        %v1455 = vpop.permute.xlu0 %1454
        %v1458 = vsel %vm1282, %v1453, 0
        %1460 = vmatprep.subr.bf16.mxu0 0
        %1461 = vmatpush1.bf16.msra.mxu0 0
        %1462 = vmatprep.subr.bf16.mxu0 0
        %1463 = vmatpush1.bf16.msra.mxu0 0
        %1464 = vmatprep.subr.bf16.mxu0 0
        %1465 = vmatpush1.bf16.msra.mxu0 0
        %1466 = vmatprep.subr.bf16.mxu0 0
        %1467 = vmatpush1.bf16.msra.mxu0 0
        %1468 = vmatprep.subr.bf16.mxu0 0
        %1469 = vmatpush1.bf16.msra.mxu0 0
        %1470 = vmatprep.subr.bf16.mxu0 0
        %1471 = vmatpush1.bf16.msra.mxu0 0
        %1472 = vmatprep.subr.bf16.mxu0 0
        %1473 = vmatpush1.bf16.msra.mxu0 0
        %1474 = vmatprep.subr.bf16.mxu0 0
        %1475 = vmatpush1.bf16.msra.mxu0 %v1455
        %1476 = vmatprep.subr.bf16.mxu0 0
        %1477 = vmatpush2.bf16.msra.mxu0 0
        %1478 = vmatprep.subr.bf16.mxu0 0
        %1479 = vmatpush2.bf16.msra.mxu0 0
        %1480 = vmatprep.subr.bf16.mxu0 0
        %1481 = vmatpush2.bf16.msra.mxu0 0
        %1482 = vmatprep.subr.bf16.mxu0 0
        %1483 = vmatpush2.bf16.msra.mxu0 0
        %1484 = vmatprep.subr.bf16.mxu0 0
        %1485 = vmatpush2.bf16.msra.mxu0 0
        %1486 = vmatprep.subr.bf16.mxu0 0
        %1487 = vmatpush2.bf16.msra.mxu0 0
        %1488 = vmatprep.subr.bf16.mxu0 0
        %1489 = vmatpush2.bf16.msra.mxu0 0
        %1490 = vmatprep.subr.bf16.mxu0 0
        %1491 = vmatpush2.bf16.msra.mxu0 0
        %1492 = vmatprep.mubr.bf16.mxu0 0
        %1493 = vmatmul.mubr.bf16.gmra.mxu0 %v1458
        %v1494 = vpop.f32.mrf.mxu0
        %v1495 = vadd.f32 0.0, %v1494
        %v1496 = vpop.f32.mrf.mxu0
        %v1497 = vpop.f32.mrf.mxu0
        %v1498 = vpop.f32.mrf.mxu0
        %1499 = vdwg.mxu0
        %1501 = vrot.lane.b32.xlu0 %v1495, 16
        %v1502 = vpop.permute.xlu0 %1501
        %v1504 = vsel %vm1282, %v1384, %v1502
        %v1506 = vlaneseq
        %v1507 = vshrl.u32 %v1506, 7
        %v1508 = vsub.s32 0, %v1507
        %v1509 = vrot.slane %v1102, %v1508
        %1511 = vrot.lane.b32.xlu0 %v1277, 96
        %v1512 = vpop.permute.xlu0 %1511
        %v1514 = vsel %vm1282, %v1278, 0
        %v1517 = vsel %vm1282, %v1512, 0
        %1519 = vmatprep.subr.bf16.mxu0 0
        %1520 = vmatpush1.bf16.xpose.msra.mxu0 0
        %1521 = vmatprep.subr.bf16.mxu0 0
        %1522 = vmatpush1.bf16.xpose.msra.mxu0 0
        %1523 = vmatprep.subr.bf16.mxu0 0
        %1524 = vmatpush1.bf16.xpose.msra.mxu0 0
        %1525 = vmatprep.subr.bf16.mxu0 0
        %1526 = vmatpush1.bf16.xpose.msra.mxu0 0
        %1527 = vmatprep.subr.bf16.mxu0 0
        %1528 = vmatpush1.bf16.xpose.msra.mxu0 0
        %1529 = vmatprep.subr.bf16.mxu0 0
        %1530 = vmatpush1.bf16.xpose.msra.mxu0 0
        %1531 = vmatprep.subr.bf16.mxu0 0
        %1532 = vmatpush1.bf16.xpose.msra.mxu0 0
        %1533 = vmatprep.subr.bf16.mxu0 0
        %1534 = vmatpush1.bf16.xpose.msra.mxu0 %v1517
        %1535 = vmatprep.subr.bf16.mxu0 0
        %1536 = vmatpush2.bf16.xpose.msra.mxu0 0
        %1537 = vmatprep.subr.bf16.mxu0 0
        %1538 = vmatpush2.bf16.xpose.msra.mxu0 0
        %1539 = vmatprep.subr.bf16.mxu0 0
        %1540 = vmatpush2.bf16.xpose.msra.mxu0 0
        %1541 = vmatprep.subr.bf16.mxu0 0
        %1542 = vmatpush2.bf16.xpose.msra.mxu0 0
        %1543 = vmatprep.subr.bf16.mxu0 0
        %1544 = vmatpush2.bf16.xpose.msra.mxu0 0
        %1545 = vmatprep.subr.bf16.mxu0 0
        %1546 = vmatpush2.bf16.xpose.msra.mxu0 0
        %1547 = vmatprep.subr.bf16.mxu0 0
        %1548 = vmatpush2.bf16.xpose.msra.mxu0 0
        %1549 = vmatprep.subr.bf16.mxu0 0
        %1550 = vmatpush2.bf16.xpose.msra.mxu0 0
        %1551 = vmatprep.mubr.bf16.mxu0 0
        %1552 = vmatmul.mubr.bf16.gmra.mxu0 %v1514
        %v1553 = vpop.f32.mrf.mxu0
        %v1554 = vadd.f32 0.0, %v1553
        %v1555 = vpop.f32.mrf.mxu0
        %v1556 = vpop.f32.mrf.mxu0
        %v1557 = vadd.f32 0.0, %v1556
        %v1558 = vpop.f32.mrf.mxu0
        %1559 = vdwg.mxu0
        %v1560 = vmul.f32 %v1554, 0.25
        %v1561 = vmul.f32 %v1557, 0.25
        %v1562 = vadd.f32 %v1560, %v1509
        %v1563 = vadd.f32 %v1561, %v1509
        %vm1564 = vcmask 64512
        %v1565 = vsel %vm1564, %v1562, -inf
        %1566 = vmax.xlane.f32.xlu0 %v1565
        %v1567 = vpop.xlane.xlu0 %1566
        %v1568 = vsel %vm1564, %v1563, -inf
        %1569 = vmax.xlane.f32.xlu0 %v1568
        %v1570 = vpop.xlane.xlu0 %1569
        %v1571 = vsub.f32 %v1562, %v1567
        %v1572 = vsub.f32 %v1563, %v1570
        %v1573 = vmul.f32 %v1571, 1.442695
        %v1574 = vpow.pop %v1573
        %v1575 = vmul.f32 %v1572, 1.442695
        %v1576 = vpow.pop %v1575
        %v1577 = vsel %vm1564, %v1574, 0.0
        %1578 = vadd.xlane.f32.xlu0 %v1577
        %v1579 = vpop.xlane.xlu0 %1578
        %v1580 = vsel %vm1564, %v1576, 0.0
        %1581 = vadd.xlane.f32.xlu0 %v1580
        %v1582 = vpop.xlane.xlu0 %1581
        %v1583 = vrcp.pop %v1579
        %v1584 = vrcp.pop %v1582
        %v1585 = vmul.f32 %v1574, %v1583
        %v1586 = vmul.f32 %v1576, %v1584
        %v1587 = vpack.c.bf16 %v1586, %v1585
        %1588 = vrot.lane.b32.xlu0 %v1277, 64
        %v1589 = vpop.permute.xlu0 %1588
        %v1591 = vsel %vm1564, %v1587, 0
        %vm1593 = vcmask 1043456
        %v1595 = vsel %vm1593, %v1589, 0
        %1597 = vmatprep.subr.bf16.mxu0 0
        %1598 = vmatpush1.bf16.msra.mxu0 0
        %1599 = vmatprep.subr.bf16.mxu0 0
        %1600 = vmatpush1.bf16.msra.mxu0 0
        %1601 = vmatprep.subr.bf16.mxu0 0
        %1602 = vmatpush1.bf16.msra.mxu0 0
        %1603 = vmatprep.subr.bf16.mxu0 0
        %1604 = vmatpush1.bf16.msra.mxu0 0
        %1605 = vmatprep.subr.bf16.mxu0 0
        %1606 = vmatpush1.bf16.msra.mxu0 0
        %1607 = vmatprep.subr.bf16.mxu0 0
        %1608 = vmatpush1.bf16.msra.mxu0 0
        %1609 = vmatprep.subr.bf16.mxu0 0
        %1610 = vmatpush1.bf16.msra.mxu0 0
        %1611 = vmatprep.subr.bf16.mxu0 0
        %1612 = vmatpush1.bf16.msra.mxu0 %v1595
        %1613 = vmatprep.subr.bf16.mxu0 0
        %1614 = vmatpush2.bf16.msra.mxu0 0
        %1615 = vmatprep.subr.bf16.mxu0 0
        %1616 = vmatpush2.bf16.msra.mxu0 0
        %1617 = vmatprep.subr.bf16.mxu0 0
        %1618 = vmatpush2.bf16.msra.mxu0 0
        %1619 = vmatprep.subr.bf16.mxu0 0
        %1620 = vmatpush2.bf16.msra.mxu0 0
        %1621 = vmatprep.subr.bf16.mxu0 0
        %1622 = vmatpush2.bf16.msra.mxu0 0
        %1623 = vmatprep.subr.bf16.mxu0 0
        %1624 = vmatpush2.bf16.msra.mxu0 0
        %1625 = vmatprep.subr.bf16.mxu0 0
        %1626 = vmatpush2.bf16.msra.mxu0 0
        %1627 = vmatprep.subr.bf16.mxu0 0
        %1628 = vmatpush2.bf16.msra.mxu0 0
        %1629 = vmatprep.mubr.bf16.mxu0 0
        %1630 = vmatmul.mubr.bf16.gmra.mxu0 %v1591
        %v1631 = vpop.f32.mrf.mxu0
        %v1632 = vadd.f32 0.0, %v1631
        %v1633 = vpop.f32.mrf.mxu0
        %v1634 = vpop.f32.mrf.mxu0
        %v1635 = vadd.f32 0.0, %v1634
        %v1636 = vpop.f32.mrf.mxu0
        %1637 = vdwg.mxu0
        %1638 = vrot.lane.b32.xlu0 %v1278, 112
        %v1639 = vpop.permute.xlu0 %1638
        %1640 = vrot.lane.b32.xlu0 %v1277, 80
        %v1641 = vpop.permute.xlu0 %1640
        %v1643 = vsel %vm1282, %v1639, 0
        %v1646 = vsel %vm1282, %v1641, 0
        %1648 = vmatprep.subr.bf16.mxu0 0
        %1649 = vmatpush1.bf16.xpose.msra.mxu0 0
        %1650 = vmatprep.subr.bf16.mxu0 0
        %1651 = vmatpush1.bf16.xpose.msra.mxu0 0
        %1652 = vmatprep.subr.bf16.mxu0 0
        %1653 = vmatpush1.bf16.xpose.msra.mxu0 0
        %1654 = vmatprep.subr.bf16.mxu0 0
        %1655 = vmatpush1.bf16.xpose.msra.mxu0 0
        %1656 = vmatprep.subr.bf16.mxu0 0
        %1657 = vmatpush1.bf16.xpose.msra.mxu0 0
        %1658 = vmatprep.subr.bf16.mxu0 0
        %1659 = vmatpush1.bf16.xpose.msra.mxu0 0
        %1660 = vmatprep.subr.bf16.mxu0 0
        %1661 = vmatpush1.bf16.xpose.msra.mxu0 0
        %1662 = vmatprep.subr.bf16.mxu0 0
        %1663 = vmatpush1.bf16.xpose.msra.mxu0 %v1646
        %1664 = vmatprep.subr.bf16.mxu0 0
        %1665 = vmatpush2.bf16.xpose.msra.mxu0 0
        %1666 = vmatprep.subr.bf16.mxu0 0
        %1667 = vmatpush2.bf16.xpose.msra.mxu0 0
        %1668 = vmatprep.subr.bf16.mxu0 0
        %1669 = vmatpush2.bf16.xpose.msra.mxu0 0
        %1670 = vmatprep.subr.bf16.mxu0 0
        %1671 = vmatpush2.bf16.xpose.msra.mxu0 0
        %1672 = vmatprep.subr.bf16.mxu0 0
        %1673 = vmatpush2.bf16.xpose.msra.mxu0 0
        %1674 = vmatprep.subr.bf16.mxu0 0
        %1675 = vmatpush2.bf16.xpose.msra.mxu0 0
        %1676 = vmatprep.subr.bf16.mxu0 0
        %1677 = vmatpush2.bf16.xpose.msra.mxu0 0
        %1678 = vmatprep.subr.bf16.mxu0 0
        %1679 = vmatpush2.bf16.xpose.msra.mxu0 0
        %1680 = vmatprep.mubr.bf16.mxu0 0
        %1681 = vmatmul.mubr.bf16.gmra.mxu0 %v1643
        %v1682 = vpop.f32.mrf.mxu0
        %v1683 = vadd.f32 0.0, %v1682
        %v1684 = vpop.f32.mrf.mxu0
        %v1685 = vpop.f32.mrf.mxu0
        %v1686 = vadd.f32 0.0, %v1685
        %v1687 = vpop.f32.mrf.mxu0
        %1688 = vdwg.mxu0
        %v1689 = vmul.f32 %v1683, 0.25
        %v1690 = vmul.f32 %v1686, 0.25
        %v1691 = vadd.f32 %v1689, %v1509
        %v1692 = vadd.f32 %v1690, %v1509
        %v1693 = vsel %vm1564, %v1691, -inf
        %1694 = vmax.xlane.f32.xlu0 %v1693
        %v1695 = vpop.xlane.xlu0 %1694
        %v1696 = vsel %vm1564, %v1692, -inf
        %1697 = vmax.xlane.f32.xlu0 %v1696
        %v1698 = vpop.xlane.xlu0 %1697
        %v1699 = vsub.f32 %v1691, %v1695
        %v1700 = vsub.f32 %v1692, %v1698
        %v1701 = vmul.f32 %v1699, 1.442695
        %v1702 = vpow.pop %v1701
        %v1703 = vmul.f32 %v1700, 1.442695
        %v1704 = vpow.pop %v1703
        %v1705 = vsel %vm1564, %v1702, 0.0
        %1706 = vadd.xlane.f32.xlu0 %v1705
        %v1707 = vpop.xlane.xlu0 %1706
        %v1708 = vsel %vm1564, %v1704, 0.0
        %1709 = vadd.xlane.f32.xlu0 %v1708
        %v1710 = vpop.xlane.xlu0 %1709
        %v1711 = vrcp.pop %v1707
        %v1712 = vrcp.pop %v1710
        %v1713 = vmul.f32 %v1702, %v1711
        %v1714 = vmul.f32 %v1704, %v1712
        %v1715 = vpack.c.bf16 %v1714, %v1713
        %1716 = vrot.lane.b32.xlu0 %v1277, 48
        %v1717 = vpop.permute.xlu0 %1716
        %v1719 = vsel %vm1564, %v1715, 0
        %v1722 = vsel %vm1593, %v1717, 0
        %1724 = vmatprep.subr.bf16.mxu0 0
        %1725 = vmatpush1.bf16.msra.mxu0 0
        %1726 = vmatprep.subr.bf16.mxu0 0
        %1727 = vmatpush1.bf16.msra.mxu0 0
        %1728 = vmatprep.subr.bf16.mxu0 0
        %1729 = vmatpush1.bf16.msra.mxu0 0
        %1730 = vmatprep.subr.bf16.mxu0 0
        %1731 = vmatpush1.bf16.msra.mxu0 0
        %1732 = vmatprep.subr.bf16.mxu0 0
        %1733 = vmatpush1.bf16.msra.mxu0 0
        %1734 = vmatprep.subr.bf16.mxu0 0
        %1735 = vmatpush1.bf16.msra.mxu0 0
        %1736 = vmatprep.subr.bf16.mxu0 0
        %1737 = vmatpush1.bf16.msra.mxu0 0
        %1738 = vmatprep.subr.bf16.mxu0 0
        %1739 = vmatpush1.bf16.msra.mxu0 %v1722
        %1740 = vmatprep.subr.bf16.mxu0 0
        %1741 = vmatpush2.bf16.msra.mxu0 0
        %1742 = vmatprep.subr.bf16.mxu0 0
        %1743 = vmatpush2.bf16.msra.mxu0 0
        %1744 = vmatprep.subr.bf16.mxu0 0
        %1745 = vmatpush2.bf16.msra.mxu0 0
        %1746 = vmatprep.subr.bf16.mxu0 0
        %1747 = vmatpush2.bf16.msra.mxu0 0
        %1748 = vmatprep.subr.bf16.mxu0 0
        %1749 = vmatpush2.bf16.msra.mxu0 0
        %1750 = vmatprep.subr.bf16.mxu0 0
        %1751 = vmatpush2.bf16.msra.mxu0 0
        %1752 = vmatprep.subr.bf16.mxu0 0
        %1753 = vmatpush2.bf16.msra.mxu0 0
        %1754 = vmatprep.subr.bf16.mxu0 0
        %1755 = vmatpush2.bf16.msra.mxu0 0
        %1756 = vmatprep.mubr.bf16.mxu0 0
        %1757 = vmatmul.mubr.bf16.gmra.mxu0 %v1719
        %v1758 = vpop.f32.mrf.mxu0
        %v1759 = vadd.f32 0.0, %v1758
        %v1760 = vpop.f32.mrf.mxu0
        %v1761 = vpop.f32.mrf.mxu0
        %v1762 = vadd.f32 0.0, %v1761
        %v1763 = vpop.f32.mrf.mxu0
        %1764 = vdwg.mxu0
        %1767 = vrot.lane.b32.xlu0 %v1759, 16
        %v1768 = vpop.permute.xlu0 %1767
        %1769 = vrot.lane.b32.xlu0 %v1762, 16
        %v1770 = vpop.permute.xlu0 %1769
        %v1773 = vsel %vm1282, %v1632, %v1768
        %v1774 = vsel %vm1282, %v1635, %v1770
        %v1775 = vpack.c.bf16 %v1504, %v1504
        %v1776 = vld [vmem:[#allocation10] sm:$0xf]
        %v1777 = vld [vmem:[#allocation10 + $0x4] sm:$0xf]
        %v1778 = vld [vmem:[#allocation10 + $0x8] sm:$0xf]
        %v1779 = vld [vmem:[#allocation10 + $0xc] sm:$0xf]
        %v1781 = vlaneseq
        %v1782 = vshrl.u32 %v1781, 7
        %v1783 = vsub.s32 0, %v1782
        %v1784 = vrot.slane %v1106, %v1783
        %v1790 = vunpack.c.l.b16 %v1776
        %v1791 = vunpack.c.l.b16 %v1777
        %v1792 = vunpack.c.l.b16 %v1778
        %v1793 = vunpack.c.l.b16 %v1779
        %v1794 = vpack.c.b16 %v1791, %v1790
        %v1795 = vpack.c.b16 %v1793, %v1792
        %v1799 = vsel %vm1144, %v1775, 0
        %1801 = vmatprep.subr.bf16.mxu0 0
        %1802 = vmatpush1.bf16.msra.mxu0 0
        %1803 = vmatprep.subr.bf16.mxu0 0
        %1804 = vmatpush1.bf16.msra.mxu0 0
        %1805 = vmatprep.subr.bf16.mxu0 0
        %1806 = vmatpush1.bf16.msra.mxu0 0
        %1807 = vmatprep.subr.bf16.mxu0 0
        %1808 = vmatpush1.bf16.msra.mxu0 0
        %1809 = vmatprep.subr.bf16.mxu0 0
        %1810 = vmatpush1.bf16.msra.mxu0 0
        %1811 = vmatprep.subr.bf16.mxu0 0
        %1812 = vmatpush1.bf16.msra.mxu0 0
        %1813 = vmatprep.subr.bf16.mxu0 0
        %1814 = vmatpush1.bf16.msra.mxu0 %v1795
        %1815 = vmatprep.subr.bf16.mxu0 0
        %1816 = vmatpush1.bf16.msra.mxu0 %v1794
        %1817 = vmatprep.subr.bf16.mxu0 0
        %1818 = vmatpush2.bf16.msra.mxu0 0
        %1819 = vmatprep.subr.bf16.mxu0 0
        %1820 = vmatpush2.bf16.msra.mxu0 0
        %1821 = vmatprep.subr.bf16.mxu0 0
        %1822 = vmatpush2.bf16.msra.mxu0 0
        %1823 = vmatprep.subr.bf16.mxu0 0
        %1824 = vmatpush2.bf16.msra.mxu0 0
        %1825 = vmatprep.subr.bf16.mxu0 0
        %1826 = vmatpush2.bf16.msra.mxu0 0
        %1827 = vmatprep.subr.bf16.mxu0 0
        %1828 = vmatpush2.bf16.msra.mxu0 0
        %1829 = vmatprep.subr.bf16.mxu0 0
        %1830 = vmatpush2.bf16.msra.mxu0 0
        %1831 = vmatprep.subr.bf16.mxu0 0
        %1832 = vmatpush2.bf16.msra.mxu0 0
        %1833 = vmatprep.mubr.bf16.mxu0 0
        %1834 = vmatmul.mubr.bf16.gmra.mxu0 %v1799
        %v1835 = vpop.f32.mrf.mxu0
        %v1836 = vadd.f32 %v1784, %v1835
        %v1837 = vpop.f32.mrf.mxu0
        %v1838 = vpop.f32.mrf.mxu0
        %v1839 = vpop.f32.mrf.mxu0
        %1840 = vdwg.mxu0
        %v1841 = vadd.f32 %v1836, %v1099
        %v1842 = vsel %vm1144, %v1841, 0.0
        %1843 = vadd.xlane.f32.xlu0 %v1842
        %v1844 = vpop.xlane.xlu0 %1843
        %v1845 = vrcp.pop 32.0
        %v1846 = vmul.f32 %v1844, %v1845
        %v1847 = vsub.f32 %v1841, %v1846
        %v1848 = vmul.f32 %v1847, %v1847
        %v1849 = vsel %vm1144, %v1848, 0.0
        %1850 = vadd.xlane.f32.xlu0 %v1849
        %v1851 = vpop.xlane.xlu0 %1850
        %v1852 = vmul.f32 %v1851, %v1845
        %v1853 = vadd.f32 %v1852, 1e-12
        %v1854 = vrsqrt.pop %v1853
        %v1855 = vmul.f32 %v1847, %v1854
        %v1857 = vlaneseq
        %v1858 = vshrl.u32 %v1857, 7
        %v1859 = vsub.s32 0, %v1858
        %v1860 = vrot.slane %v1107, %v1859
        %v1862 = vmul.f32 %v1855, %v1860
        %v1864 = vlaneseq
        %v1865 = vshrl.u32 %v1864, 7
        %v1866 = vsub.s32 0, %v1865
        %v1867 = vrot.slane %v1108, %v1866
        %v1869 = vadd.f32 %v1862, %v1867
        %v1870 = vpack.c.bf16 %v1774, %v1773
        %v1871 = vld [vmem:[#allocation11] sm:$0xf]
        %v1872 = vld [vmem:[#allocation11 + $0x4] sm:$0xf]
        %v1873 = vld [vmem:[#allocation11 + $0x8] sm:$0xf]
        %v1874 = vld [vmem:[#allocation11 + $0xc] sm:$0xf]
        %v1876 = vlaneseq
        %v1877 = vshrl.u32 %v1876, 7
        %v1878 = vsub.s32 0, %v1877
        %v1879 = vrot.slane %v1109, %v1878
        %v1885 = vunpack.c.l.b16 %v1871
        %v1886 = vunpack.c.l.b16 %v1872
        %v1887 = vunpack.c.l.b16 %v1873
        %v1888 = vunpack.c.l.b16 %v1874
        %v1889 = vpack.c.b16 %v1886, %v1885
        %v1890 = vpack.c.b16 %v1888, %v1887
        %v1894 = vsel %vm1144, %v1870, 0
        %1896 = vmatprep.subr.bf16.mxu0 0
        %1897 = vmatpush1.bf16.msra.mxu0 0
        %1898 = vmatprep.subr.bf16.mxu0 0
        %1899 = vmatpush1.bf16.msra.mxu0 0
        %1900 = vmatprep.subr.bf16.mxu0 0
        %1901 = vmatpush1.bf16.msra.mxu0 0
        %1902 = vmatprep.subr.bf16.mxu0 0
        %1903 = vmatpush1.bf16.msra.mxu0 0
        %1904 = vmatprep.subr.bf16.mxu0 0
        %1905 = vmatpush1.bf16.msra.mxu0 0
        %1906 = vmatprep.subr.bf16.mxu0 0
        %1907 = vmatpush1.bf16.msra.mxu0 0
        %1908 = vmatprep.subr.bf16.mxu0 0
        %1909 = vmatpush1.bf16.msra.mxu0 %v1890
        %1910 = vmatprep.subr.bf16.mxu0 0
        %1911 = vmatpush1.bf16.msra.mxu0 %v1889
        %1912 = vmatprep.subr.bf16.mxu0 0
        %1913 = vmatpush2.bf16.msra.mxu0 0
        %1914 = vmatprep.subr.bf16.mxu0 0
        %1915 = vmatpush2.bf16.msra.mxu0 0
        %1916 = vmatprep.subr.bf16.mxu0 0
        %1917 = vmatpush2.bf16.msra.mxu0 0
        %1918 = vmatprep.subr.bf16.mxu0 0
        %1919 = vmatpush2.bf16.msra.mxu0 0
        %1920 = vmatprep.subr.bf16.mxu0 0
        %1921 = vmatpush2.bf16.msra.mxu0 0
        %1922 = vmatprep.subr.bf16.mxu0 0
        %1923 = vmatpush2.bf16.msra.mxu0 0
        %1924 = vmatprep.subr.bf16.mxu0 0
        %1925 = vmatpush2.bf16.msra.mxu0 0
        %1926 = vmatprep.subr.bf16.mxu0 0
        %1927 = vmatpush2.bf16.msra.mxu0 0
        %1928 = vmatprep.mubr.bf16.mxu0 0
        %1929 = vmatmul.mubr.bf16.gmra.mxu0 %v1894
        %v1930 = vpop.f32.mrf.mxu0
        %v1931 = vadd.f32 %v1879, %v1930
        %v1932 = vpop.f32.mrf.mxu0
        %v1933 = vpop.f32.mrf.mxu0
        %v1934 = vadd.f32 %v1879, %v1933
        %v1935 = vpop.f32.mrf.mxu0
        %1936 = vdwg.mxu0
        %v1937 = vadd.f32 %v1931, %v1100
        %v1938 = vadd.f32 %v1934, %v1101
        %v1939 = vsel %vm1226, %v1937, 0.0
        %1940 = vadd.xlane.f32.xlu0 %v1939
        %v1941 = vpop.xlane.xlu0 %1940
        %v1942 = vsel %vm1226, %v1938, 0.0
        %1943 = vadd.xlane.f32.xlu0 %v1942
        %v1944 = vpop.xlane.xlu0 %1943
        %v1945 = vrcp.pop 64.0
        %v1946 = vmul.f32 %v1941, %v1945
        %v1947 = vmul.f32 %v1944, %v1945
        %v1948 = vsub.f32 %v1937, %v1946
        %v1949 = vsub.f32 %v1938, %v1947
        %v1950 = vmul.f32 %v1948, %v1948
        %v1951 = vmul.f32 %v1949, %v1949
        %v1952 = vsel %vm1226, %v1950, 0.0
        %1953 = vadd.xlane.f32.xlu0 %v1952
        %v1954 = vpop.xlane.xlu0 %1953
        %v1955 = vsel %vm1226, %v1951, 0.0
        %1956 = vadd.xlane.f32.xlu0 %v1955
        %v1957 = vpop.xlane.xlu0 %1956
        %v1958 = vmul.f32 %v1954, %v1945
        %v1959 = vmul.f32 %v1957, %v1945
        %v1960 = vadd.f32 %v1958, 1e-12
        %v1961 = vadd.f32 %v1959, 1e-12
        %v1962 = vrsqrt.pop %v1960
        %v1963 = vrsqrt.pop %v1961
        %v1964 = vmul.f32 %v1948, %v1962
        %v1965 = vmul.f32 %v1949, %v1963
        %v1967 = vlaneseq
        %v1968 = vshrl.u32 %v1967, 7
        %v1969 = vsub.s32 0, %v1968
        %v1970 = vrot.slane %v1110, %v1969
        %v1972 = vmul.f32 %v1964, %v1970
        %v1973 = vmul.f32 %v1965, %v1970
        %v1975 = vlaneseq
        %v1976 = vshrl.u32 %v1975, 7
        %v1977 = vsub.s32 0, %v1976
        %v1978 = vrot.slane %v1111, %v1977
        %v1980 = vadd.f32 %v1972, %v1978
        %v1981 = vadd.f32 %v1973, %v1978
        %v1982 = vpack.c.bf16 %v1869, %v1869
        %v1983 = vld [vmem:[#allocation13] sm:$0xf]
        %v1984 = vld [vmem:[#allocation13 + $0x4] sm:$0xf]
        %v1985 = vld [vmem:[#allocation13 + $0x8] sm:$0xf]
        %v1986 = vld [vmem:[#allocation13 + $0xc] sm:$0xf]
        %v1988 = vlaneseq
        %v1989 = vshrl.u32 %v1988, 7
        %v1990 = vsub.s32 0, %v1989
        %v1991 = vrot.slane %v1112, %v1990
        %v1997 = vunpack.c.l.b16 %v1983
        %v1998 = vunpack.c.l.b16 %v1984
        %v1999 = vunpack.c.l.b16 %v1985
        %v2000 = vunpack.c.l.b16 %v1986
        %v2001 = vpack.c.b16 %v1998, %v1997
        %v2002 = vpack.c.b16 %v2000, %v1999
        %v2006 = vsel %vm1144, %v1982, 0
        %2008 = vmatprep.subr.bf16.mxu0 0
        %2009 = vmatpush1.bf16.msra.mxu0 0
        %2010 = vmatprep.subr.bf16.mxu0 0
        %2011 = vmatpush1.bf16.msra.mxu0 0
        %2012 = vmatprep.subr.bf16.mxu0 0
        %2013 = vmatpush1.bf16.msra.mxu0 0
        %2014 = vmatprep.subr.bf16.mxu0 0
        %2015 = vmatpush1.bf16.msra.mxu0 0
        %2016 = vmatprep.subr.bf16.mxu0 0
        %2017 = vmatpush1.bf16.msra.mxu0 0
        %2018 = vmatprep.subr.bf16.mxu0 0
        %2019 = vmatpush1.bf16.msra.mxu0 0
        %2020 = vmatprep.subr.bf16.mxu0 0
        %2021 = vmatpush1.bf16.msra.mxu0 %v2002
        %2022 = vmatprep.subr.bf16.mxu0 0
        %2023 = vmatpush1.bf16.msra.mxu0 %v2001
        %2024 = vmatprep.subr.bf16.mxu0 0
        %2025 = vmatpush2.bf16.msra.mxu0 0
        %2026 = vmatprep.subr.bf16.mxu0 0
        %2027 = vmatpush2.bf16.msra.mxu0 0
        %2028 = vmatprep.subr.bf16.mxu0 0
        %2029 = vmatpush2.bf16.msra.mxu0 0
        %2030 = vmatprep.subr.bf16.mxu0 0
        %2031 = vmatpush2.bf16.msra.mxu0 0
        %2032 = vmatprep.subr.bf16.mxu0 0
        %2033 = vmatpush2.bf16.msra.mxu0 0
        %2034 = vmatprep.subr.bf16.mxu0 0
        %2035 = vmatpush2.bf16.msra.mxu0 0
        %2036 = vmatprep.subr.bf16.mxu0 0
        %2037 = vmatpush2.bf16.msra.mxu0 0
        %2038 = vmatprep.subr.bf16.mxu0 0
        %2039 = vmatpush2.bf16.msra.mxu0 0
        %2040 = vmatprep.mubr.bf16.mxu0 0
        %2041 = vmatmul.mubr.bf16.gmra.mxu0 %v2006
        %v2042 = vpop.f32.mrf.mxu0
        %v2043 = vadd.f32 %v1991, %v2042
        %v2044 = vpop.f32.mrf.mxu0
        %v2045 = vpop.f32.mrf.mxu0
        %v2046 = vpop.f32.mrf.mxu0
        %2047 = vdwg.mxu0
        %v2048 = vmul.f32 %v2043, 0.5
        %v2049 = vmul.f32 %v2043, 0.044715
        %v2050 = vmul.f32 %v2049, %v2043
        %v2051 = vmul.f32 %v2050, %v2043
        %v2052 = vadd.f32 %v2043, %v2051
        %v2053 = vmul.f32 %v2052, 0.7978846
        %v2054 = vtanh.pop %v2053
        %v2055 = vadd.f32 %v2054, 1.0
        %v2056 = vmul.f32 %v2048, %v2055
        %v2057 = vpack.c.bf16 %v2056, %v2056
        %v2058 = vld [vmem:[#allocation14] sm:$0xf]
        %v2059 = vld [vmem:[#allocation14 + $0x4] sm:$0xf]
        %v2060 = vld [vmem:[#allocation14 + $0x8] sm:$0xf]
        %v2061 = vld [vmem:[#allocation14 + $0xc] sm:$0xf]
        %v2062 = vld [vmem:[#allocation14 + $0x10] sm:$0xf]
        %v2063 = vld [vmem:[#allocation14 + $0x14] sm:$0xf]
        %v2064 = vld [vmem:[#allocation14 + $0x18] sm:$0xf]
        %v2065 = vld [vmem:[#allocation14 + $0x1c] sm:$0xf]
        %v2067 = vlaneseq
        %v2068 = vshrl.u32 %v2067, 7
        %v2069 = vsub.s32 0, %v2068
        %v2070 = vrot.slane %v1113, %v2069
        %v2080 = vunpack.c.l.b16 %v2058
        %v2081 = vunpack.c.l.b16 %v2059
        %v2082 = vunpack.c.l.b16 %v2060
        %v2083 = vunpack.c.l.b16 %v2061
        %v2084 = vunpack.c.l.b16 %v2062
        %v2085 = vunpack.c.l.b16 %v2063
        %v2086 = vunpack.c.l.b16 %v2064
        %v2087 = vunpack.c.l.b16 %v2065
        %v2088 = vpack.c.b16 %v2081, %v2080
        %v2089 = vpack.c.b16 %v2083, %v2082
        %v2090 = vpack.c.b16 %v2085, %v2084
        %v2091 = vpack.c.b16 %v2087, %v2086
        %v2097 = vsel %vm1226, %v2057, 0
        %2099 = vmatprep.subr.bf16.mxu0 0
        %2100 = vmatpush1.bf16.msra.mxu0 0
        %2101 = vmatprep.subr.bf16.mxu0 0
        %2102 = vmatpush1.bf16.msra.mxu0 0
        %2103 = vmatprep.subr.bf16.mxu0 0
        %2104 = vmatpush1.bf16.msra.mxu0 0
        %2105 = vmatprep.subr.bf16.mxu0 0
        %2106 = vmatpush1.bf16.msra.mxu0 0
        %2107 = vmatprep.subr.bf16.mxu0 0
        %2108 = vmatpush1.bf16.msra.mxu0 %v2091
        %2109 = vmatprep.subr.bf16.mxu0 0
        %2110 = vmatpush1.bf16.msra.mxu0 %v2090
        %2111 = vmatprep.subr.bf16.mxu0 0
        %2112 = vmatpush1.bf16.msra.mxu0 %v2089
        %2113 = vmatprep.subr.bf16.mxu0 0
        %2114 = vmatpush1.bf16.msra.mxu0 %v2088
        %2115 = vmatprep.subr.bf16.mxu0 0
        %2116 = vmatpush2.bf16.msra.mxu0 0
        %2117 = vmatprep.subr.bf16.mxu0 0
        %2118 = vmatpush2.bf16.msra.mxu0 0
        %2119 = vmatprep.subr.bf16.mxu0 0
        %2120 = vmatpush2.bf16.msra.mxu0 0
        %2121 = vmatprep.subr.bf16.mxu0 0
        %2122 = vmatpush2.bf16.msra.mxu0 0
        %2123 = vmatprep.subr.bf16.mxu0 0
        %2124 = vmatpush2.bf16.msra.mxu0 0
        %2125 = vmatprep.subr.bf16.mxu0 0
        %2126 = vmatpush2.bf16.msra.mxu0 0
        %2127 = vmatprep.subr.bf16.mxu0 0
        %2128 = vmatpush2.bf16.msra.mxu0 0
        %2129 = vmatprep.subr.bf16.mxu0 0
        %2130 = vmatpush2.bf16.msra.mxu0 0
        %2131 = vmatprep.mubr.bf16.mxu0 0
        %2132 = vmatmul.mubr.bf16.gmra.mxu0 %v2097
        %v2133 = vpop.f32.mrf.mxu0
        %v2134 = vadd.f32 %v2070, %v2133
        %v2135 = vpop.f32.mrf.mxu0
        %v2136 = vpop.f32.mrf.mxu0
        %v2137 = vpop.f32.mrf.mxu0
        %2138 = vdwg.mxu0
        %v2139 = vadd.f32 %v2134, %v1869
        %v2140 = vsel %vm1144, %v2139, 0.0
        %2141 = vadd.xlane.f32.xlu0 %v2140
        %v2142 = vpop.xlane.xlu0 %2141
        %v2143 = vmul.f32 %v2142, %v1845
        %v2144 = vsub.f32 %v2139, %v2143
        %v2145 = vmul.f32 %v2144, %v2144
        %v2146 = vsel %vm1144, %v2145, 0.0
        %2147 = vadd.xlane.f32.xlu0 %v2146
        %v2148 = vpop.xlane.xlu0 %2147
        %v2149 = vmul.f32 %v2148, %v1845
        %v2150 = vadd.f32 %v2149, 1e-12
        %v2151 = vrsqrt.pop %v2150
        %v2152 = vmul.f32 %v2144, %v2151
        %v2154 = vlaneseq
        %v2155 = vshrl.u32 %v2154, 7
        %v2156 = vsub.s32 0, %v2155
        %v2157 = vrot.slane %v1114, %v2156
        %v2159 = vmul.f32 %v2152, %v2157
        %v2161 = vlaneseq
        %v2162 = vshrl.u32 %v2161, 7
        %v2163 = vsub.s32 0, %v2162
        %v2164 = vrot.slane %v1115, %v2163
        %v2166 = vadd.f32 %v2159, %v2164
        %v2167 = vpack.c.bf16 %v1981, %v1980
        %v2168 = vld [vmem:[%s45] sm:$0xf]
        %v2169 = vld [vmem:[%s45 + $0x4] sm:$0xf]
        %v2170 = vld [vmem:[%s45 + $0x8] sm:$0xf]
        %v2171 = vld [vmem:[%s45 + $0xc] sm:$0xf]
        %v2172 = vld [vmem:[%s45 + $0x10] sm:$0xf]
        %v2173 = vld [vmem:[%s45 + $0x14] sm:$0xf]
        %v2174 = vld [vmem:[%s45 + $0x18] sm:$0xf]
        %v2175 = vld [vmem:[%s45 + $0x1c] sm:$0xf]
        %v2177 = vlaneseq
        %v2178 = vshrl.u32 %v2177, 7
        %v2179 = vsub.s32 0, %v2178
        %v2180 = vrot.slane %v1116, %v2179
        %v2190 = vunpack.c.l.b16 %v2168
        %v2191 = vunpack.c.l.b16 %v2169
        %v2192 = vunpack.c.l.b16 %v2170
        %v2193 = vunpack.c.l.b16 %v2171
        %v2194 = vunpack.c.l.b16 %v2172
        %v2195 = vunpack.c.l.b16 %v2173
        %v2196 = vunpack.c.l.b16 %v2174
        %v2197 = vunpack.c.l.b16 %v2175
        %v2198 = vpack.c.b16 %v2191, %v2190
        %v2199 = vpack.c.b16 %v2193, %v2192
        %v2200 = vpack.c.b16 %v2195, %v2194
        %v2201 = vpack.c.b16 %v2197, %v2196
        %v2207 = vsel %vm1226, %v2167, 0
        %2209 = vmatprep.subr.bf16.mxu0 0
        %2210 = vmatpush1.bf16.msra.mxu0 0
        %2211 = vmatprep.subr.bf16.mxu0 0
        %2212 = vmatpush1.bf16.msra.mxu0 0
        %2213 = vmatprep.subr.bf16.mxu0 0
        %2214 = vmatpush1.bf16.msra.mxu0 0
        %2215 = vmatprep.subr.bf16.mxu0 0
        %2216 = vmatpush1.bf16.msra.mxu0 0
        %2217 = vmatprep.subr.bf16.mxu0 0
        %2218 = vmatpush1.bf16.msra.mxu0 %v2201
        %2219 = vmatprep.subr.bf16.mxu0 0
        %2220 = vmatpush1.bf16.msra.mxu0 %v2200
        %2221 = vmatprep.subr.bf16.mxu0 0
        %2222 = vmatpush1.bf16.msra.mxu0 %v2199
        %2223 = vmatprep.subr.bf16.mxu0 0
        %2224 = vmatpush1.bf16.msra.mxu0 %v2198
        %2225 = vmatprep.subr.bf16.mxu0 0
        %2226 = vmatpush2.bf16.msra.mxu0 0
        %2227 = vmatprep.subr.bf16.mxu0 0
        %2228 = vmatpush2.bf16.msra.mxu0 0
        %2229 = vmatprep.subr.bf16.mxu0 0
        %2230 = vmatpush2.bf16.msra.mxu0 0
        %2231 = vmatprep.subr.bf16.mxu0 0
        %2232 = vmatpush2.bf16.msra.mxu0 0
        %2233 = vmatprep.subr.bf16.mxu0 0
        %2234 = vmatpush2.bf16.msra.mxu0 0
        %2235 = vmatprep.subr.bf16.mxu0 0
        %2236 = vmatpush2.bf16.msra.mxu0 0
        %2237 = vmatprep.subr.bf16.mxu0 0
        %2238 = vmatpush2.bf16.msra.mxu0 0
        %2239 = vmatprep.subr.bf16.mxu0 0
        %2240 = vmatpush2.bf16.msra.mxu0 0
        %2241 = vmatprep.mubr.bf16.mxu0 0
        %2242 = vmatmul.mubr.bf16.gmra.mxu0 %v2207
        %v2243 = vpop.f32.mrf.mxu0
        %v2244 = vadd.f32 %v2180, %v2243
        %v2245 = vpop.f32.mrf.mxu0
        %v2246 = vpop.f32.mrf.mxu0
        %v2247 = vadd.f32 %v2180, %v2246
        %v2248 = vpop.f32.mrf.mxu0
        %2249 = vdwg.mxu0
        %v2250 = vmul.f32 %v2244, 0.5
        %v2251 = vmul.f32 %v2247, 0.5
        %v2252 = vmul.f32 %v2244, 0.044715
        %v2253 = vmul.f32 %v2247, 0.044715
        %v2254 = vmul.f32 %v2252, %v2244
        %v2255 = vmul.f32 %v2253, %v2247
        %v2256 = vmul.f32 %v2254, %v2244
        %v2257 = vmul.f32 %v2255, %v2247
        %v2258 = vadd.f32 %v2244, %v2256
        %v2259 = vadd.f32 %v2247, %v2257
        %v2260 = vmul.f32 %v2258, 0.7978846
        %v2261 = vmul.f32 %v2259, 0.7978846
        %v2262 = vtanh.pop %v2260
        %v2263 = vtanh.pop %v2261
        %v2264 = vadd.f32 %v2262, 1.0
        %v2265 = vadd.f32 %v2263, 1.0
        %v2266 = vmul.f32 %v2250, %v2264
        %v2267 = vmul.f32 %v2251, %v2265
        %v2268 = vpack.c.bf16 %v2267, %v2266
        %v2269 = vld [vmem:[#allocation16] sm:$0xf]
        %v2270 = vld [vmem:[#allocation16 + $0x4] sm:$0xf]
        %v2271 = vld [vmem:[#allocation16 + $0x8] sm:$0xf]
        %v2272 = vld [vmem:[#allocation16 + $0xc] sm:$0xf]
        %v2273 = vld [vmem:[#allocation16 + $0x10] sm:$0xf]
        %v2274 = vld [vmem:[#allocation16 + $0x14] sm:$0xf]
        %v2275 = vld [vmem:[#allocation16 + $0x18] sm:$0xf]
        %v2276 = vld [vmem:[#allocation16 + $0x1c] sm:$0xf]
        %v2277 = vld [vmem:[#allocation16 + $0x20] sm:$0xf]
        %v2278 = vld [vmem:[#allocation16 + $0x24] sm:$0xf]
        %v2279 = vld [vmem:[#allocation16 + $0x28] sm:$0xf]
        %v2280 = vld [vmem:[#allocation16 + $0x2c] sm:$0xf]
        %v2281 = vld [vmem:[#allocation16 + $0x30] sm:$0xf]
        %v2282 = vld [vmem:[#allocation16 + $0x34] sm:$0xf]
        %v2283 = vld [vmem:[#allocation16 + $0x38] sm:$0xf]
        %v2284 = vld [vmem:[#allocation16 + $0x3c] sm:$0xf]
        %v2286 = vlaneseq
        %v2287 = vshrl.u32 %v2286, 7
        %v2288 = vsub.s32 0, %v2287
        %v2289 = vrot.slane %v1117, %v2288
        %v2307 = vunpack.c.l.b16 %v2269
        %v2308 = vunpack.c.l.b16 %v2270
        %v2309 = vunpack.c.l.b16 %v2271
        %v2310 = vunpack.c.l.b16 %v2272
        %v2311 = vunpack.c.l.b16 %v2273
        %v2312 = vunpack.c.l.b16 %v2274
        %v2313 = vunpack.c.l.b16 %v2275
        %v2314 = vunpack.c.l.b16 %v2276
        %v2315 = vunpack.c.l.b16 %v2277
        %v2316 = vunpack.c.l.b16 %v2278
        %v2317 = vunpack.c.l.b16 %v2279
        %v2318 = vunpack.c.l.b16 %v2280
        %v2319 = vunpack.c.l.b16 %v2281
        %v2320 = vunpack.c.l.b16 %v2282
        %v2321 = vunpack.c.l.b16 %v2283
        %v2322 = vunpack.c.l.b16 %v2284
        %v2323 = vpack.c.b16 %v2308, %v2307
        %v2324 = vpack.c.b16 %v2310, %v2309
        %v2325 = vpack.c.b16 %v2312, %v2311
        %v2326 = vpack.c.b16 %v2314, %v2313
        %v2327 = vpack.c.b16 %v2316, %v2315
        %v2328 = vpack.c.b16 %v2318, %v2317
        %v2329 = vpack.c.b16 %v2320, %v2319
        %v2330 = vpack.c.b16 %v2322, %v2321
        %2339 = vmatprep.subr.bf16.mxu0 0
        %2340 = vmatpush1.bf16.msra.mxu0 %v2330
        %2341 = vmatprep.subr.bf16.mxu0 0
        %2342 = vmatpush1.bf16.msra.mxu0 %v2329
        %2343 = vmatprep.subr.bf16.mxu0 0
        %2344 = vmatpush1.bf16.msra.mxu0 %v2328
        %2345 = vmatprep.subr.bf16.mxu0 0
        %2346 = vmatpush1.bf16.msra.mxu0 %v2327
        %2347 = vmatprep.subr.bf16.mxu0 0
        %2348 = vmatpush1.bf16.msra.mxu0 %v2326
        %2349 = vmatprep.subr.bf16.mxu0 0
        %2350 = vmatpush1.bf16.msra.mxu0 %v2325
        %2351 = vmatprep.subr.bf16.mxu0 0
        %2352 = vmatpush1.bf16.msra.mxu0 %v2324
        %2353 = vmatprep.subr.bf16.mxu0 0
        %2354 = vmatpush1.bf16.msra.mxu0 %v2323
        %2355 = vmatprep.subr.bf16.mxu0 0
        %2356 = vmatpush2.bf16.msra.mxu0 0
        %2357 = vmatprep.subr.bf16.mxu0 0
        %2358 = vmatpush2.bf16.msra.mxu0 0
        %2359 = vmatprep.subr.bf16.mxu0 0
        %2360 = vmatpush2.bf16.msra.mxu0 0
        %2361 = vmatprep.subr.bf16.mxu0 0
        %2362 = vmatpush2.bf16.msra.mxu0 0
        %2363 = vmatprep.subr.bf16.mxu0 0
        %2364 = vmatpush2.bf16.msra.mxu0 0
        %2365 = vmatprep.subr.bf16.mxu0 0
        %2366 = vmatpush2.bf16.msra.mxu0 0
        %2367 = vmatprep.subr.bf16.mxu0 0
        %2368 = vmatpush2.bf16.msra.mxu0 0
        %2369 = vmatprep.subr.bf16.mxu0 0
        %2370 = vmatpush2.bf16.msra.mxu0 0
        %2371 = vmatprep.mubr.bf16.mxu0 0
        %2372 = vmatmul.mubr.bf16.gmra.mxu0 %v2268
        %v2373 = vpop.f32.mrf.mxu0
        %v2374 = vadd.f32 %v2289, %v2373
        %v2375 = vpop.f32.mrf.mxu0
        %v2376 = vpop.f32.mrf.mxu0
        %v2377 = vadd.f32 %v2289, %v2376
        %v2378 = vpop.f32.mrf.mxu0
        %2379 = vdwg.mxu0
        %v2380 = vadd.f32 %v2374, %v1980
        %v2381 = vadd.f32 %v2377, %v1981
        %v2382 = vsel %vm1226, %v2380, 0.0
        %2383 = vadd.xlane.f32.xlu0 %v2382
        %v2384 = vpop.xlane.xlu0 %2383
        %v2385 = vsel %vm1226, %v2381, 0.0
        %2386 = vadd.xlane.f32.xlu0 %v2385
        %v2387 = vpop.xlane.xlu0 %2386
        %v2388 = vmul.f32 %v2384, %v1945
        %v2389 = vmul.f32 %v2387, %v1945
        %v2390 = vsub.f32 %v2380, %v2388
        %v2391 = vsub.f32 %v2381, %v2389
        %v2392 = vmul.f32 %v2390, %v2390
        %v2393 = vmul.f32 %v2391, %v2391
        %v2394 = vsel %vm1226, %v2392, 0.0
        %2395 = vadd.xlane.f32.xlu0 %v2394
        %v2396 = vpop.xlane.xlu0 %2395
        %v2397 = vsel %vm1226, %v2393, 0.0
        %2398 = vadd.xlane.f32.xlu0 %v2397
        %v2399 = vpop.xlane.xlu0 %2398
        %v2400 = vmul.f32 %v2396, %v1945
        %v2401 = vmul.f32 %v2399, %v1945
        %v2402 = vadd.f32 %v2400, 1e-12
        %v2403 = vadd.f32 %v2401, 1e-12
        %v2404 = vrsqrt.pop %v2402
        %v2405 = vrsqrt.pop %v2403
        %v2406 = vmul.f32 %v2390, %v2404
        %v2407 = vmul.f32 %v2391, %v2405
        %v2409 = vlaneseq
        %v2410 = vshrl.u32 %v2409, 7
        %v2411 = vsub.s32 0, %v2410
        %v2412 = vrot.slane %v1118, %v2411
        %v2414 = vmul.f32 %v2406, %v2412
        %v2415 = vmul.f32 %v2407, %v2412
        %v2417 = vlaneseq
        %v2418 = vshrl.u32 %v2417, 7
        %v2419 = vsub.s32 0, %v2418
        %v2420 = vrot.slane %v1119, %v2419
        %v2422 = vadd.f32 %v2414, %v2420
        %v2423 = vadd.f32 %v2415, %v2420
        %2424 = vst.msk [vmem:[%s1084] sm:$0xff] %vm1144, %v2166
        %2425 = vst.msk [vmem:[%s1091] sm:$0xff] %vm1226, %v2422
        %2426 = vst.msk [vmem:[%s1091 + $0x8] sm:$0xff] %vm1226, %v2423
        %s2427 = sand.u32 %s702, 1
        %s2428 = scalar_lea.sflag [#allocation4], %s2427
        %s2429 = sand.u32 %s702, 1
        %s2430 = smul.addr %s2429, 8
        %s2431 = scalar_lea.vmem [#allocation17], %s2430
        %s2432 = sand.u32 %s728, 1
        %s2433 = scalar_lea.sflag [#allocation19], %s2432
        %s2434 = sand.u32 %s728, 1
        %s2435 = smul.addr %s2434, 16
        %s2436 = scalar_lea.vmem [#allocation18], %s2435
        // Predicated region
        $region169: #{bert_cross_layer_forward.1} parent=131 // pred_check
          %p2437 = pneg %p712
        $region170: #{bert_cross_layer_forward.1} parent=131 // pred_check_branch
          %2439 = sbr.rel (%p2437) target = $region172
        $region171: #{bert_cross_layer_forward.1} parent=131 // pred_region
          %s2441 = ssub.s32 128, 128
          %2442 = vsyncadd %s2428, %s2441
          %s2443 = smul.addr %s86, 128
          %s2444 = scalar_lea.hbm %s57, %s2443
          %s2446 = sshll.u32 %s2431, 4
          %s2447 = int_to_ptr.vmem [resolvable:$true] %s2446
          %2449 = dma.vmem_to_hbm [thread:$0]  %s2447, 128, %s2444, %s2428
        $region172: #{bert_cross_layer_forward.1} parent=131 // pred_fallthru
          _
        // Predicated region
        $region173: #{bert_cross_layer_forward.1} parent=131 // pred_check
          %p2450 = pneg %p738
        $region174: #{bert_cross_layer_forward.1} parent=131 // pred_check_branch
          %2452 = sbr.rel (%p2450) target = $region176
        $region175: #{bert_cross_layer_forward.1} parent=131 // pred_region
          %s2454 = ssub.s32 256, 256
          %2455 = vsyncadd %s2433, %s2454
          %s2456 = smul.addr %s86, 2
          %s2457 = smul.addr %s2456, 128
          %s2458 = scalar_lea.hbm %s59, %s2457
          %s2459 = sshll.u32 %s2436, 4
          %s2460 = int_to_ptr.vmem [resolvable:$true] %s2459
          %2465 = dma.vmem_to_hbm [thread:$0]  %s2460, 256, %s2458, %s2433, 128, 128, 8
        $region176: #{bert_cross_layer_forward.1} parent=131 // pred_fallthru
          _
      $region132: #{bert_cross_layer_forward.1} parent=5 // pred_fallthru
        _
      %p2466 = scmp.le.s32.totalorder 2, %s81
      // Predicated region
      $region177: #{bert_cross_layer_forward.1} parent=5 // pred_check
        %p2467 = pneg %p2466
      $region178: #{bert_cross_layer_forward.1} parent=5 // pred_check_branch
        %2469 = sbr.rel (%p2467) target = $region180
      $region179: #{bert_cross_layer_forward.1} parent=5 // pred_region
        %s2470 = ssub.s32 %s81, 2
        // Predicated region
        $region181: #{bert_cross_layer_forward.1} parent=179 // pred_check
          %p2471 = pneg %p718
        $region182: #{bert_cross_layer_forward.1} parent=179 // pred_check_branch
          %2473 = sbr.rel (%p2471) target = $region184
        $region183: #{bert_cross_layer_forward.1} parent=179 // pred_region
          %s2474 = sand.u32 %s703, 1
          %s2475 = scalar_lea.sflag [#allocation4], %s2474
          %s2476 = sand.u32 %s703, 1
          %s2477 = smul.addr %s2476, 8
          %s2478 = scalar_lea.vmem [#allocation17], %s2477
          %2479 = dma.done %s2475, 128
        $region184: #{bert_cross_layer_forward.1} parent=179 // pred_fallthru
          _
        // Predicated region
        $region185: #{bert_cross_layer_forward.1} parent=179 // pred_check
          %p2480 = pneg %p744
        $region186: #{bert_cross_layer_forward.1} parent=179 // pred_check_branch
          %2482 = sbr.rel (%p2480) target = $region188
        $region187: #{bert_cross_layer_forward.1} parent=179 // pred_region
          %s2483 = sand.u32 %s729, 1
          %s2484 = scalar_lea.sflag [#allocation19], %s2483
          %s2485 = sand.u32 %s729, 1
          %s2486 = smul.addr %s2485, 16
          %s2487 = scalar_lea.vmem [#allocation18], %s2486
          %2488 = dma.done %s2484, 256
        $region188: #{bert_cross_layer_forward.1} parent=179 // pred_fallthru
          _
      $region180: #{bert_cross_layer_forward.1} parent=5 // pred_fallthru
        _
    $region6: #{bert_cross_layer_forward.1} parent=1 // loop_footer
      %s85 = sadd.s32 1, %s81
    $region7: #{bert_cross_layer_forward.1} parent=1 // loop_footer_branch
      %80 = sbr.rel target = $region3
    $region8: #{bert_cross_layer_forward.1} parent=1 // loop_exit
      _
    %2489 = vsyncpa [#allocation3], 1
    %s2490 = scalar_lea.sflag [#allocation3], 1
    %2491 = vsyncpa %s2490, 1
    %2492 = vsyncpa [#allocation6], 1
    %s2493 = scalar_lea.sflag [#allocation6], 1
    %2494 = vsyncpa %s2493, 1
    %2495 = vsyncpa [#allocation9], 1
    %2496 = vsyncpa [#allocation12], 1
    %2497 = vsyncpa [#allocation15], 1
    %2498 = vsyncpa [#allocation4], 1
    %s2499 = scalar_lea.sflag [#allocation4], 1
    %2500 = vsyncpa %s2499, 1
    %2501 = vsyncpa [#allocation19], 1
    %s2502 = scalar_lea.sflag [#allocation19], 1
    %2503 = vsyncpa %s2502, 1

</llo_original>
